<compile_context>
chip_gen: v5e
topology: v5e:2x2
jax: 0.10.0
libtpu: 0.0.40
codegen_flags: <defaults>
</compile_context>

<pallas_src>
import functools
import math

import jax
import jax.numpy as jnp
from jax import lax
from jax.experimental import pallas as pl
from jax.experimental.pallas import tpu as pltpu


# ----------------------------- fused Pallas kernel -----------------------------

def _fused_forward_kernel(*refs, n_in, num_layers, num_heads, inv_sigma_d2):
    in_refs = refs[:n_in]
    (sd_ref, td_ref, comp_ref, feat_ref, normed_ref, gram_ref, conf_ref) = refs[n_in:]

    it = iter(in_refs)

    def nxt():
        return next(it)[...]

    src = nxt()                    # [N, 3]
    tgt = nxt()                    # [N, 3]
    x = nxt()                      # [N, in_pad]  (corr_pos zero-padded to 8 cols)

    N = src.shape[0]
    ri = lax.broadcasted_iota(jnp.int32, (N, N), 0)
    ci = lax.broadcasted_iota(jnp.int32, (N, N), 1)
    off_diag = ri != ci

    # ---- spatial compatibility: Gram-form pairwise distances on the MXU ----
    ones3 = jnp.ones((1, src.shape[1]), jnp.float32)

    def pdist(p):
        pp = p * p
        sq_col = jnp.sum(pp, axis=-1, keepdims=True)                         # [N, 1]
        # row vector of squared norms via ones-matmul (avoids a cross-lane transpose)
        sq_row = lax.dot_general(ones3, pp, (((1,), (1,)), ((), ())),
                                 preferred_element_type=jnp.float32)         # [1, N]
        g = lax.dot_general(p, p, (((1,), (1,)), ((), ())),
                            preferred_element_type=jnp.float32)              # [N, N]
        d2 = jnp.maximum(sq_col + sq_row - 2.0 * g, 0.0)
        d2 = jnp.where(off_diag, d2, 0.0)                                    # exact 0 diag
        return jnp.sqrt(d2)

    sd = pdist(src)
    td = pdist(tgt)
    sd_ref[...] = sd
    td_ref[...] = td
    dd = sd - td
    compat = jnp.maximum(1.0 - dd * dd * inv_sigma_d2, 0.0)
    comp_ref[...] = compat

    # ---- helpers (weights consumed in flatten order) ----
    def linear(h):
        w = nxt()
        b = nxt()
        return jnp.dot(h, w, preferred_element_type=jnp.float32) + b

    def bn(h):                     # training-mode BatchNorm1d (B = 1 -> stats over N)
        gb = nxt()                 # [2, C']: row 0 = gamma, row 1 = beta
        mean = jnp.mean(h, axis=0, keepdims=True)
        var = jnp.mean((h - mean) ** 2, axis=0, keepdims=True)
        return (h - mean) * lax.rsqrt(var + 1e-5) * gb[0:1, :] + gb[1:2, :]

    # ---- NonLocalNet encoder ----
    x = linear(x)                  # init_mlp -> [N, C]
    C = x.shape[1]
    d = C // num_heads
    scale = 1.0 / math.sqrt(d)

    for _ in range(num_layers):
        # PointCN layer: conv1x1 + BN + ReLU
        x = jnp.maximum(bn(linear(x)), 0.0)

        # fused q/k/v projection: one [C, 3C] matmul instead of three launches
        qkv = linear(x)            # [N, 3C]

        # multi-head non-local attention modulated by spatial compatibility
        heads = []
        for h in range(num_heads):
            qh = qkv[:, h * d:(h + 1) * d]
            kh = qkv[:, C + h * d:C + (h + 1) * d]
            vh = qkv[:, 2 * C + h * d:2 * C + (h + 1) * d]
            s = lax.dot_general(qh, kh, (((1,), (1,)), ((), ())),
                                preferred_element_type=jnp.float32) * scale   # [N, N]
            logits = compat * s
            mx = jnp.max(logits, axis=-1, keepdims=True)
            e = jnp.exp(logits - mx)
            w = e / jnp.sum(e, axis=-1, keepdims=True)
            heads.append(jnp.dot(w, vh, preferred_element_type=jnp.float32))
        msg = jnp.concatenate(heads, axis=-1)          # [N, C]

        # message_mlp: conv+BN+ReLU, conv+BN+ReLU, conv ; residual connection
        m = jnp.maximum(bn(linear(msg)), 0.0)
        m = jnp.maximum(bn(linear(m)), 0.0)
        x = x + linear(m)

    feat_ref[...] = x

    # F.normalize(p=2) over channels
    nrm = jnp.sqrt(jnp.sum(x * x, axis=-1, keepdims=True))
    normed = x / jnp.maximum(nrm, 1e-12)
    normed_ref[...] = normed

    # Gram matrix of normalized feats (reused for feat_compatibility and knn sim)
    gram_ref[...] = lax.dot_general(normed, normed, (((1,), (1,)), ((), ())),
                                    preferred_element_type=jnp.float32)

    # corr_classifier: conv+ReLU, conv+ReLU, conv -> [N, 1]
    y = jnp.maximum(linear(x), 0.0)
    y = jnp.maximum(linear(y), 0.0)
    conf_ref[...] = linear(y)


def fused_forward(src, tgt, corr_pos_pad, flat_weights, cfg):
    N = src.shape[0]
    C = cfg['num_channels']
    inputs = [src, tgt, corr_pos_pad] + list(flat_weights)
    kern = functools.partial(
        _fused_forward_kernel,
        n_in=len(inputs),
        num_layers=cfg['num_layers'],
        num_heads=cfg['num_heads'],
        inv_sigma_d2=1.0 / (cfg['sigma_d'] ** 2),
    )
    out_shape = (
        jax.ShapeDtypeStruct((N, N), jnp.float32),     # src_dist
        jax.ShapeDtypeStruct((N, N), jnp.float32),     # tgt_dist
        jax.ShapeDtypeStruct((N, N), jnp.float32),     # spatial_compatibility
        jax.ShapeDtypeStruct((N, C), jnp.float32),     # corr_feat
        jax.ShapeDtypeStruct((N, C), jnp.float32),     # normed_corr_feat
        jax.ShapeDtypeStruct((N, N), jnp.float32),     # gram (normed @ normed.T)
        jax.ShapeDtypeStruct((N, 1), jnp.float32),     # confidence
    )
    vmem = pl.BlockSpec(memory_space=pltpu.MemorySpace.VMEM)
    return pl.pallas_call(
        kern,
        out_shape=out_shape,
        in_specs=[vmem] * len(inputs),
        out_specs=tuple([vmem] * len(out_shape)),
    )(*inputs)


# ----------------------------- parameter plumbing -----------------------------

def flatten_weights(params, in_pad):
    """Flatten params in the exact order the kernel consumes them."""
    def wb(p):
        return [p['w'], p['b'].reshape(1, -1)]

    flat = []
    w0 = params['init']['w']
    flat += [jnp.pad(w0, ((0, in_pad - w0.shape[0]), (0, 0))),
             params['init']['b'].reshape(1, -1)]
    for lp in params['layers']:
        flat += wb(lp['pcn']) + [lp['pcn_bn']]
        qkv_w = jnp.concatenate([lp['q']['w'], lp['k']['w'], lp['v']['w']], axis=1)
        qkv_b = jnp.concatenate([lp['q']['b'], lp['k']['b'], lp['v']['b']]).reshape(1, -1)
        flat += [qkv_w, qkv_b]
        flat += wb(lp['m0']) + [lp['m0_bn']]
        flat += wb(lp['m1']) + [lp['m1_bn']]
        flat += wb(lp['m2'])
    for k in ('cls0', 'cls1', 'cls2'):
        flat += wb(params[k])
    return flat


# ----------------------------- plain-JAX tail (consensus / Kabsch) -----------------------------

def rigid_transform_3d(A_pts, B_pts, weights):
    # TODO(synk): rigid_transform_3d is an external util in the original repo; a standard
    # weighted Kabsch (SVD) implementation is used here (plain JAX, no Pallas SVD).
    K = A_pts.shape[0]
    w = weights[:, :, None]
    wsum = jnp.maximum(jnp.sum(w, axis=1, keepdims=True), 1e-6)
    cA = jnp.sum(A_pts * w, axis=1, keepdims=True) / wsum
    cB = jnp.sum(B_pts * w, axis=1, keepdims=True) / wsum
    Am = A_pts - cA
    Bm = B_pts - cB
    H = jnp.einsum('kna,kn,knb->kab', Am, weights, Bm)
    U, _, Vt = jnp.linalg.svd(H)
    V = jnp.swapaxes(Vt, -1, -2)
    Ut = jnp.swapaxes(U, -1, -2)
    d = jnp.linalg.det(V @ Ut)
    ones = jnp.ones_like(d)
    D = jax.vmap(jnp.diag)(jnp.stack([ones, ones, d], axis=-1))
    R = V @ D @ Ut
    t = jnp.swapaxes(cB, 1, 2) - R @ jnp.swapaxes(cA, 1, 2)      # [K, 3, 1]
    top = jnp.concatenate([R, t], axis=-1)                       # [K, 3, 4]
    bottom = jnp.broadcast_to(jnp.array([[0., 0., 0., 1.]], jnp.float32), (K, 1, 4))
    return jnp.concatenate([top, bottom], axis=1)


def make_forward(cfg):
    N = cfg['num_points']
    n_seeds = int(N * cfg['ratio'])
    A = min(cfg['k'], N - 1)
    thr = cfg['inlier_threshold']
    in_pad = max(8, cfg['in_dim'])                    # pad contraction dim to sublane granule

    def forward(params, corr_pos, src_keypts, tgt_keypts):
        src = src_keypts[0]                            # [N, 3]
        tgt = tgt_keypts[0]
        cp = corr_pos[0]                               # [N, in_dim]
        cp = jnp.pad(cp, ((0, 0), (0, in_pad - cp.shape[1])))

        flat = flatten_weights(params, in_pad)
        (src_dist, tgt_dist, compat, corr_feat, normed, gram, conf2d) = fused_forward(
            src, tgt, cp, flat, cfg)
        conf = conf2d[:, 0]                            # [N]
        sigma2 = params['sigma'] ** 2                  # traced (nn.Parameter equivalent)

        # get_feat_compatibility (training branch) — reuses the kernel's Gram matrix
        eye = jnp.eye(N, dtype=bool)
        feat_comp = jnp.clip(1.0 - (1.0 - gram) / sigma2, 0.0, 1.0)
        feat_comp = jnp.where(eye, 0.0, feat_comp)

        # consensus_sampling (training: greedy seed picking + knn over normed feats).
        # top_k == argsort-descending[:n_seeds] but avoids the full sort.
        _, seeds = lax.top_k(conf, n_seeds)            # [K]
        sim = jnp.where(eye, -jnp.inf, gram)           # knn ignore_self, normalized
        _, knn_idx = lax.top_k(sim, A)                 # [N, A]
        consensus_idxs = knn_idx[seeds]                # [K, A]

        # consensus compatibility (feat x spatial, zero diagonal)
        cf = normed[consensus_idxs]                    # [K, A, D]
        fcc = jnp.einsum('kad,kbd->kab', cf, cf)
        fcc = jnp.maximum(1.0 - (1.0 - fcc) / sigma2, 0.0)
        sc = src[consensus_idxs]                       # [K, A, 3]
        tc = tgt[consensus_idxs]

        def batched_pdist(p):                          # Gram form, no [K,A,A,3] tensor
            sq = jnp.sum(p * p, axis=-1)
            g = jnp.einsum('kad,kbd->kab', p, p)
            d2 = jnp.maximum(sq[:, :, None] + sq[:, None, :] - 2.0 * g, 0.0)
            return jnp.sqrt(d2)

        dd = batched_pdist(sc) - batched_pdist(tc)
        scc = jnp.maximum(1.0 - dd ** 2 / cfg['sigma_d'] ** 2, 0.0)
        cc = scc * fcc * (1.0 - jnp.eye(A, dtype=jnp.float32))

        # cal_leading_eigenvector (fixed-iteration power method)
        # TODO(synk): data-dependent `allclose` early termination not replicated.
        v = jnp.ones((n_seeds, A, 1), jnp.float32)
        for _ in range(cfg['num_iterations']):
            v = cc @ v
            v = v / (jnp.linalg.norm(v, axis=1, keepdims=True) + 1e-6)
        w = v[:, :, 0]
        w = w / (jnp.sum(w, axis=-1, keepdims=True) + 1e-6)

        # cal_seed_trans: weighted Kabsch per seed + transform evaluation
        trans = rigid_transform_3d(sc, tc, w)          # [K, 4, 4]
        R = trans[:, :3, :3]
        t = trans[:, :3, 3]
        pred = jnp.einsum('kab,nb->kna', R, src) + t[:, None, :]
        L2 = jnp.linalg.norm(pred - tgt[None], axis=-1)                    # [K, N]
        fit = jnp.mean((L2 < thr).astype(jnp.float32) * (1.0 - L2 ** 2 / thr ** 2), axis=-1)
        best = jnp.argmax(fit)
        final_trans = trans[best]
        final_labels = conf                            # training branch overwrite
        # TODO(synk): testing-only paths (NMS seed picking, post_refinement) omitted.

        return {
            'src_dist': src_dist[None],
            'tgt_dist': tgt_dist[None],
            'spatial_compatibility': compat[None],
            'corr_feat': corr_feat.T[None],            # back to PyTorch [B, C, N]
            'normed_corr_feat': normed.T[None],
            'feat_compatibility': feat_comp[None],
            'confidence': conf[None],
            'seeds': seeds[None],
            'consensus_idxs': consensus_idxs[None],
            'consensus_weight': w[None],
            'seedwise_trans': trans[None],
            'seedwise_fitness': fit[None],
            'batch_best_guess': best[None],
            'final_trans': final_trans[None],
            'final_labels': final_labels[None],
        }

    return forward


# ----------------------------- parameter init -----------------------------

def init_params(key, cfg):
    C = cfg['num_channels']
    in_dim = cfg['in_dim']
    keys = iter(jax.random.split(key, 256))

    def conv(cin, cout):
        k1, k2 = next(keys), next(keys)
        std = math.sqrt(2.0 / (cin + cout))            # xavier_normal_, gain=1
        w = std * jax.random.normal(k1, (cin, cout), jnp.float32)
        bound = 1.0 / math.sqrt(cin)                   # PyTorch Conv1d default bias init
        b = jax.random.uniform(k2, (cout,), jnp.float32, -bound, bound)
        return {'w': w, 'b': b}

    def bn(c):                                         # BatchNorm affine: gamma=1, beta=0
        return jnp.stack([jnp.ones((c,), jnp.float32), jnp.zeros((c,), jnp.float32)])

    params = {
        'sigma': jnp.array(1.0, jnp.float32),          # nn.Parameter([1.0])
        'init': conv(in_dim, C),
        'layers': [],
        'cls0': conv(C, 32),
        'cls1': conv(32, 32),
        'cls2': conv(32, 1),
    }
    for _ in range(cfg['num_layers']):
        params['layers'].append({
            'pcn': conv(C, C), 'pcn_bn': bn(C),
            'q': conv(C, C), 'k': conv(C, C), 'v': conv(C, C),
            'm0': conv(C, C // 2), 'm0_bn': bn(C // 2),
            'm1': conv(C // 2, C // 2), 'm1_bn': bn(C // 2),
            'm2': conv(C // 2, C),
        })
    return params


# ----------------------------- main -----------------------------

if __name__ == "__main__":
    cfg = dict(in_dim=6, num_layers=2, num_iterations=10, ratio=0.25,
               num_channels=32, inlier_threshold=0.1, sigma_d=1.2, k=8,
               nms_radius=0.1, num_heads=4, lb_dim=16,
               num_points=32)

    key = jax.random.PRNGKey(0)
    kp, kd1, kd2 = jax.random.split(key, 3)
    params = init_params(kp, cfg)

    N = cfg['num_points']
    src_keypts = jax.random.normal(kd1, (1, N, 3), jnp.float32)
    tgt_keypts = src_keypts + 0.05 * jax.random.normal(kd2, (1, N, 3), jnp.float32)
    corr_pos = jnp.concatenate([src_keypts, tgt_keypts], axis=-1)   # [1, N, 6]

    fwd = jax.jit(make_forward(cfg))
    out = fwd(params, corr_pos, src_keypts, tgt_keypts)
    jax.block_until_ready(out)
    print("KERNEL_OK")
</pallas_src>

<mosaic_0001>
module attributes {stable_mosaic.version = 11 : i64} {
  func.func @_fused_forward_kernel(%arg0: memref<32x3xf32, #tpu.memory_space<vmem>>, %arg1: memref<32x3xf32, #tpu.memory_space<vmem>>, %arg2: memref<32x8xf32, #tpu.memory_space<vmem>>, %arg3: memref<8x32xf32, #tpu.memory_space<vmem>>, %arg4: memref<1x32xf32, #tpu.memory_space<vmem>>, %arg5: memref<32x32xf32, #tpu.memory_space<vmem>>, %arg6: memref<1x32xf32, #tpu.memory_space<vmem>>, %arg7: memref<2x32xf32, #tpu.memory_space<vmem>>, %arg8: memref<32x96xf32, #tpu.memory_space<vmem>>, %arg9: memref<1x96xf32, #tpu.memory_space<vmem>>, %arg10: memref<32x16xf32, #tpu.memory_space<vmem>>, %arg11: memref<1x16xf32, #tpu.memory_space<vmem>>, %arg12: memref<2x16xf32, #tpu.memory_space<vmem>>, %arg13: memref<16x16xf32, #tpu.memory_space<vmem>>, %arg14: memref<1x16xf32, #tpu.memory_space<vmem>>, %arg15: memref<2x16xf32, #tpu.memory_space<vmem>>, %arg16: memref<16x32xf32, #tpu.memory_space<vmem>>, %arg17: memref<1x32xf32, #tpu.memory_space<vmem>>, %arg18: memref<32x32xf32, #tpu.memory_space<vmem>>, %arg19: memref<1x32xf32, #tpu.memory_space<vmem>>, %arg20: memref<2x32xf32, #tpu.memory_space<vmem>>, %arg21: memref<32x96xf32, #tpu.memory_space<vmem>>, %arg22: memref<1x96xf32, #tpu.memory_space<vmem>>, %arg23: memref<32x16xf32, #tpu.memory_space<vmem>>, %arg24: memref<1x16xf32, #tpu.memory_space<vmem>>, %arg25: memref<2x16xf32, #tpu.memory_space<vmem>>, %arg26: memref<16x16xf32, #tpu.memory_space<vmem>>, %arg27: memref<1x16xf32, #tpu.memory_space<vmem>>, %arg28: memref<2x16xf32, #tpu.memory_space<vmem>>, %arg29: memref<16x32xf32, #tpu.memory_space<vmem>>, %arg30: memref<1x32xf32, #tpu.memory_space<vmem>>, %arg31: memref<32x32xf32, #tpu.memory_space<vmem>>, %arg32: memref<1x32xf32, #tpu.memory_space<vmem>>, %arg33: memref<32x32xf32, #tpu.memory_space<vmem>>, %arg34: memref<1x32xf32, #tpu.memory_space<vmem>>, %arg35: memref<32x1xf32, #tpu.memory_space<vmem>>, %arg36: memref<1x1xf32, #tpu.memory_space<vmem>>, %arg37: memref<32x32xf32, #tpu.memory_space<vmem>>, %arg38: memref<32x32xf32, #tpu.memory_space<vmem>>, %arg39: memref<32x32xf32, #tpu.memory_space<vmem>>, %arg40: memref<32x32xf32, #tpu.memory_space<vmem>>, %arg41: memref<32x32xf32, #tpu.memory_space<vmem>>, %arg42: memref<32x32xf32, #tpu.memory_space<vmem>>, %arg43: memref<32x1xf32, #tpu.memory_space<vmem>>) attributes {dimension_semantics = [], scalar_prefetch = 0 : i64, scratch_operands = 0 : i64, tpu.core_type = #tpu.core_type<tc>} {
    %c0 = arith.constant 0 : index
    %c0_0 = arith.constant 0 : index
    %0 = vector.load %arg0[%c0, %c0_0] : memref<32x3xf32, #tpu.memory_space<vmem>>, vector<32x3xf32>
    %c0_1 = arith.constant 0 : index
    %c0_2 = arith.constant 0 : index
    %1 = vector.load %arg1[%c0_1, %c0_2] : memref<32x3xf32, #tpu.memory_space<vmem>>, vector<32x3xf32>
    %c0_3 = arith.constant 0 : index
    %c0_4 = arith.constant 0 : index
    %2 = vector.load %arg2[%c0_3, %c0_4] : memref<32x8xf32, #tpu.memory_space<vmem>>, vector<32x8xf32>
    %3 = tpu.iota {dimensions = array<i32: 0>} : vector<32x32xi32>
    %4 = tpu.iota {dimensions = array<i32: 1>} : vector<32x32xi32>
    %5 = arith.cmpi ne, %3, %4 : vector<32x32xi32>
    %cst = arith.constant 1.000000e+00 : f32
    %6 = vector.broadcast %cst : f32 to vector<1x3xf32>
    %7 = arith.mulf %0, %0 : vector<32x3xf32>
    %cst_5 = arith.constant dense<0.000000e+00> : vector<32xf32>
    %8 = vector.multi_reduction <add>, %7, %cst_5 [1] : vector<32x3xf32> to vector<32xf32>
    %9 = vector.shape_cast %8 : vector<32xf32> to vector<32x1xf32>
    %cst_6 = arith.constant dense<0.000000e+00> : vector<1x32xf32>
    %10 = tpu.matmul %6, %7, %cst_6 {dimension_numbers = #tpu.dot_dimension_numbers<[1], [1], [0], [0], [0, 0, 1, 0], [], []>} : vector<1x3xf32>, vector<32x3xf32>, vector<1x32xf32> -> vector<1x32xf32>
    %cst_7 = arith.constant dense<0.000000e+00> : vector<32x32xf32>
    %11 = tpu.matmul %0, %0, %cst_7 {dimension_numbers = #tpu.dot_dimension_numbers<[1], [1], [0], [0], [0, 0, 1, 0], [], []>} : vector<32x3xf32>, vector<32x3xf32>, vector<32x32xf32> -> vector<32x32xf32>
    %12 = vector.broadcast %9 : vector<32x1xf32> to vector<32x32xf32>
    %13 = vector.broadcast %10 : vector<1x32xf32> to vector<32x32xf32>
    %14 = arith.addf %12, %13 : vector<32x32xf32>
    %cst_8 = arith.constant 2.000000e+00 : f32
    %15 = vector.broadcast %cst_8 : f32 to vector<32x32xf32>
    %16 = arith.mulf %15, %11 : vector<32x32xf32>
    %17 = arith.subf %14, %16 : vector<32x32xf32>
    %cst_9 = arith.constant 0.000000e+00 : f32
    %18 = vector.broadcast %cst_9 : f32 to vector<32x32xf32>
    %19 = arith.maximumf %17, %18 : vector<32x32xf32>
    %cst_10 = arith.constant 0.000000e+00 : f32
    %20 = vector.broadcast %cst_10 : f32 to vector<32x32xf32>
    %21 = arith.select %5, %19, %20 : vector<32x32xi1>, vector<32x32xf32>
    %22 = math.sqrt %21 : vector<32x32xf32>
    %23 = arith.mulf %1, %1 : vector<32x3xf32>
    %cst_11 = arith.constant dense<0.000000e+00> : vector<32xf32>
    %24 = vector.multi_reduction <add>, %23, %cst_11 [1] : vector<32x3xf32> to vector<32xf32>
    %25 = vector.shape_cast %24 : vector<32xf32> to vector<32x1xf32>
    %cst_12 = arith.constant dense<0.000000e+00> : vector<1x32xf32>
    %26 = tpu.matmul %6, %23, %cst_12 {dimension_numbers = #tpu.dot_dimension_numbers<[1], [1], [0], [0], [0, 0, 1, 0], [], []>} : vector<1x3xf32>, vector<32x3xf32>, vector<1x32xf32> -> vector<1x32xf32>
    %cst_13 = arith.constant dense<0.000000e+00> : vector<32x32xf32>
    %27 = tpu.matmul %1, %1, %cst_13 {dimension_numbers = #tpu.dot_dimension_numbers<[1], [1], [0], [0], [0, 0, 1, 0], [], []>} : vector<32x3xf32>, vector<32x3xf32>, vector<32x32xf32> -> vector<32x32xf32>
    %28 = vector.broadcast %25 : vector<32x1xf32> to vector<32x32xf32>
    %29 = vector.broadcast %26 : vector<1x32xf32> to vector<32x32xf32>
    %30 = arith.addf %28, %29 : vector<32x32xf32>
    %cst_14 = arith.constant 2.000000e+00 : f32
    %31 = vector.broadcast %cst_14 : f32 to vector<32x32xf32>
    %32 = arith.mulf %31, %27 : vector<32x32xf32>
    %33 = arith.subf %30, %32 : vector<32x32xf32>
    %cst_15 = arith.constant 0.000000e+00 : f32
    %34 = vector.broadcast %cst_15 : f32 to vector<32x32xf32>
    %35 = arith.maximumf %33, %34 : vector<32x32xf32>
    %cst_16 = arith.constant 0.000000e+00 : f32
    %36 = vector.broadcast %cst_16 : f32 to vector<32x32xf32>
    %37 = arith.select %5, %35, %36 : vector<32x32xi1>, vector<32x32xf32>
    %38 = math.sqrt %37 : vector<32x32xf32>
    %c0_17 = arith.constant 0 : index
    %c0_18 = arith.constant 0 : index
    %39 = vector.load %arg37[%c0_17, %c0_18] : memref<32x32xf32, #tpu.memory_space<vmem>>, vector<32x32xf32>
    tpu.vector_store %arg37[%c0_17, %c0_18], %22 {strides = array<i32>} : memref<32x32xf32, #tpu.memory_space<vmem>>, vector<32x32xf32>,
    %c0_19 = arith.constant 0 : index
    %c0_20 = arith.constant 0 : index
    %40 = vector.load %arg38[%c0_19, %c0_20] : memref<32x32xf32, #tpu.memory_space<vmem>>, vector<32x32xf32>
    tpu.vector_store %arg38[%c0_19, %c0_20], %38 {strides = array<i32>} : memref<32x32xf32, #tpu.memory_space<vmem>>, vector<32x32xf32>,
    %41 = arith.subf %22, %38 : vector<32x32xf32>
    %42 = arith.mulf %41, %41 : vector<32x32xf32>
    %cst_21 = arith.constant 0.694444418 : f32
    %43 = vector.broadcast %cst_21 : f32 to vector<32x32xf32>
    %44 = arith.mulf %42, %43 : vector<32x32xf32>
    %cst_22 = arith.constant 1.000000e+00 : f32
    %45 = vector.broadcast %cst_22 : f32 to vector<32x32xf32>
    %46 = arith.subf %45, %44 : vector<32x32xf32>
    %cst_23 = arith.constant 0.000000e+00 : f32
    %47 = vector.broadcast %cst_23 : f32 to vector<32x32xf32>
    %48 = arith.maximumf %46, %47 : vector<32x32xf32>
    %c0_24 = arith.constant 0 : index
    %c0_25 = arith.constant 0 : index
    %49 = vector.load %arg39[%c0_24, %c0_25] : memref<32x32xf32, #tpu.memory_space<vmem>>, vector<32x32xf32>
    tpu.vector_store %arg39[%c0_24, %c0_25], %48 {strides = array<i32>} : memref<32x32xf32, #tpu.memory_space<vmem>>, vector<32x32xf32>,
    %c0_26 = arith.constant 0 : index
    %c0_27 = arith.constant 0 : index
    %50 = vector.load %arg3[%c0_26, %c0_27] : memref<8x32xf32, #tpu.memory_space<vmem>>, vector<8x32xf32>
    %c0_28 = arith.constant 0 : index
    %c0_29 = arith.constant 0 : index
    %51 = vector.load %arg4[%c0_28, %c0_29] : memref<1x32xf32, #tpu.memory_space<vmem>>, vector<1x32xf32>
    %cst_30 = arith.constant dense<0.000000e+00> : vector<32x32xf32>
    %52 = tpu.matmul %2, %50, %cst_30 {dimension_numbers = #tpu.dot_dimension_numbers<[1], [0], [0], [1], [0, 0, 1, 1], [], []>} : vector<32x8xf32>, vector<8x32xf32>, vector<32x32xf32> -> vector<32x32xf32>
    %53 = vector.broadcast %51 : vector<1x32xf32> to vector<32x32xf32>
    %54 = arith.addf %52, %53 : vector<32x32xf32>
    %c0_31 = arith.constant 0 : index
    %c0_32 = arith.constant 0 : index
    %55 = vector.load %arg5[%c0_31, %c0_32] : memref<32x32xf32, #tpu.memory_space<vmem>>, vector<32x32xf32>
    %c0_33 = arith.constant 0 : index
    %c0_34 = arith.constant 0 : index
    %56 = vector.load %arg6[%c0_33, %c0_34] : memref<1x32xf32, #tpu.memory_space<vmem>>, vector<1x32xf32>
    %cst_35 = arith.constant dense<0.000000e+00> : vector<32x32xf32>
    %57 = tpu.matmul %54, %55, %cst_35 {dimension_numbers = #tpu.dot_dimension_numbers<[1], [0], [0], [1], [0, 0, 1, 1], [], []>} : vector<32x32xf32>, vector<32x32xf32>, vector<32x32xf32> -> vector<32x32xf32>
    %58 = vector.broadcast %56 : vector<1x32xf32> to vector<32x32xf32>
    %59 = arith.addf %57, %58 : vector<32x32xf32>
    %c0_36 = arith.constant 0 : index
    %c0_37 = arith.constant 0 : index
    %60 = vector.load %arg7[%c0_36, %c0_37] : memref<2x32xf32, #tpu.memory_space<vmem>>, vector<2x32xf32>
    %cst_38 = arith.constant dense<0.000000e+00> : vector<32xf32>
    %61 = vector.multi_reduction <add>, %59, %cst_38 [0] : vector<32x32xf32> to vector<32xf32>
    %62 = vector.shape_cast %61 : vector<32xf32> to vector<1x32xf32>
    %cst_39 = arith.constant 3.200000e+01 : f32
    %63 = vector.broadcast %cst_39 : f32 to vector<1x32xf32>
    %64 = arith.divf %62, %63 : vector<1x32xf32>
    %65 = vector.broadcast %64 : vector<1x32xf32> to vector<32x32xf32>
    %66 = arith.subf %59, %65 : vector<32x32xf32>
    %67 = arith.mulf %66, %66 : vector<32x32xf32>
    %cst_40 = arith.constant dense<0.000000e+00> : vector<32xf32>
    %68 = vector.multi_reduction <add>, %67, %cst_40 [0] : vector<32x32xf32> to vector<32xf32>
    %69 = vector.shape_cast %68 : vector<32xf32> to vector<1x32xf32>
    %cst_41 = arith.constant 3.200000e+01 : f32
    %70 = vector.broadcast %cst_41 : f32 to vector<1x32xf32>
    %71 = arith.divf %69, %70 : vector<1x32xf32>
    %72 = vector.broadcast %64 : vector<1x32xf32> to vector<32x32xf32>
    %73 = arith.subf %59, %72 : vector<32x32xf32>
    %cst_42 = arith.constant 9.99999974E-6 : f32
    %74 = vector.broadcast %cst_42 : f32 to vector<1x32xf32>
    %75 = arith.addf %71, %74 : vector<1x32xf32>
    %76 = math.rsqrt %75 : vector<1x32xf32>
    %77 = vector.broadcast %76 : vector<1x32xf32> to vector<32x32xf32>
    %78 = arith.mulf %73, %77 : vector<32x32xf32>
    %79 = vector.extract_strided_slice %60 {offsets = [0, 0], sizes = [1, 32], strides = [1, 1]} : vector<2x32xf32> to vector<1x32xf32>
    %80 = vector.broadcast %79 : vector<1x32xf32> to vector<32x32xf32>
    %81 = arith.mulf %78, %80 : vector<32x32xf32>
    %82 = vector.extract_strided_slice %60 {offsets = [1, 0], sizes = [1, 32], strides = [1, 1]} : vector<2x32xf32> to vector<1x32xf32>
    %83 = vector.broadcast %82 : vector<1x32xf32> to vector<32x32xf32>
    %84 = arith.addf %81, %83 : vector<32x32xf32>
    %cst_43 = arith.constant 0.000000e+00 : f32
    %85 = vector.broadcast %cst_43 : f32 to vector<32x32xf32>
    %86 = arith.maximumf %84, %85 : vector<32x32xf32>
    %c0_44 = arith.constant 0 : index
    %c0_45 = arith.constant 0 : index
    %87 = vector.load %arg8[%c0_44, %c0_45] : memref<32x96xf32, #tpu.memory_space<vmem>>, vector<32x96xf32>
    %c0_46 = arith.constant 0 : index
    %c0_47 = arith.constant 0 : index
    %88 = vector.load %arg9[%c0_46, %c0_47] : memref<1x96xf32, #tpu.memory_space<vmem>>, vector<1x96xf32>
    %cst_48 = arith.constant dense<0.000000e+00> : vector<32x96xf32>
    %89 = tpu.matmul %86, %87, %cst_48 {dimension_numbers = #tpu.dot_dimension_numbers<[1], [0], [0], [1], [0, 0, 1, 1], [], []>} : vector<32x32xf32>, vector<32x96xf32>, vector<32x96xf32> -> vector<32x96xf32>
    %90 = vector.broadcast %88 : vector<1x96xf32> to vector<32x96xf32>
    %91 = arith.addf %89, %90 : vector<32x96xf32>
    %92 = vector.extract_strided_slice %91 {offsets = [0, 0], sizes = [32, 8], strides = [1, 1]} : vector<32x96xf32> to vector<32x8xf32>
    %93 = vector.extract_strided_slice %91 {offsets = [0, 32], sizes = [32, 8], strides = [1, 1]} : vector<32x96xf32> to vector<32x8xf32>
    %94 = vector.extract_strided_slice %91 {offsets = [0, 64], sizes = [32, 8], strides = [1, 1]} : vector<32x96xf32> to vector<32x8xf32>
    %cst_49 = arith.constant dense<0.000000e+00> : vector<32x32xf32>
    %95 = tpu.matmul %92, %93, %cst_49 {dimension_numbers = #tpu.dot_dimension_numbers<[1], [1], [0], [0], [0, 0, 1, 0], [], []>} : vector<32x8xf32>, vector<32x8xf32>, vector<32x32xf32> -> vector<32x32xf32>
    %cst_50 = arith.constant 0.353553385 : f32
    %96 = vector.broadcast %cst_50 : f32 to vector<32x32xf32>
    %97 = arith.mulf %95, %96 : vector<32x32xf32>
    %98 = arith.mulf %48, %97 : vector<32x32xf32>
    %cst_51 = arith.constant dense<0xFF800000> : vector<32xf32>
    %99 = vector.multi_reduction <maximumf>, %98, %cst_51 [1] : vector<32x32xf32> to vector<32xf32>
    %100 = vector.shape_cast %99 : vector<32xf32> to vector<32x1xf32>
    %101 = vector.broadcast %100 : vector<32x1xf32> to vector<32x32xf32>
    %102 = arith.subf %98, %101 : vector<32x32xf32>
    %103 = math.exp %102 : vector<32x32xf32>
    %cst_52 = arith.constant dense<0.000000e+00> : vector<32xf32>
    %104 = vector.multi_reduction <add>, %103, %cst_52 [1] : vector<32x32xf32> to vector<32xf32>
    %105 = vector.shape_cast %104 : vector<32xf32> to vector<32x1xf32>
    %106 = vector.broadcast %105 : vector<32x1xf32> to vector<32x32xf32>
    %107 = arith.divf %103, %106 : vector<32x32xf32>
    %cst_53 = arith.constant dense<0.000000e+00> : vector<32x8xf32>
    %108 = tpu.matmul %107, %94, %cst_53 {dimension_numbers = #tpu.dot_dimension_numbers<[1], [0], [0], [1], [0, 0, 1, 1], [], []>} : vector<32x32xf32>, vector<32x8xf32>, vector<32x8xf32> -> vector<32x8xf32>
    %109 = vector.extract_strided_slice %91 {offsets = [0, 8], sizes = [32, 8], strides = [1, 1]} : vector<32x96xf32> to vector<32x8xf32>
    %110 = vector.extract_strided_slice %91 {offsets = [0, 40], sizes = [32, 8], strides = [1, 1]} : vector<32x96xf32> to vector<32x8xf32>
    %111 = vector.extract_strided_slice %91 {offsets = [0, 72], sizes = [32, 8], strides = [1, 1]} : vector<32x96xf32> to vector<32x8xf32>
    %cst_54 = arith.constant dense<0.000000e+00> : vector<32x32xf32>
    %112 = tpu.matmul %109, %110, %cst_54 {dimension_numbers = #tpu.dot_dimension_numbers<[1], [1], [0], [0], [0, 0, 1, 0], [], []>} : vector<32x8xf32>, vector<32x8xf32>, vector<32x32xf32> -> vector<32x32xf32>
    %cst_55 = arith.constant 0.353553385 : f32
    %113 = vector.broadcast %cst_55 : f32 to vector<32x32xf32>
    %114 = arith.mulf %112, %113 : vector<32x32xf32>
    %115 = arith.mulf %48, %114 : vector<32x32xf32>
    %cst_56 = arith.constant dense<0xFF800000> : vector<32xf32>
    %116 = vector.multi_reduction <maximumf>, %115, %cst_56 [1] : vector<32x32xf32> to vector<32xf32>
    %117 = vector.shape_cast %116 : vector<32xf32> to vector<32x1xf32>
    %118 = vector.broadcast %117 : vector<32x1xf32> to vector<32x32xf32>
    %119 = arith.subf %115, %118 : vector<32x32xf32>
    %120 = math.exp %119 : vector<32x32xf32>
    %cst_57 = arith.constant dense<0.000000e+00> : vector<32xf32>
    %121 = vector.multi_reduction <add>, %120, %cst_57 [1] : vector<32x32xf32> to vector<32xf32>
    %122 = vector.shape_cast %121 : vector<32xf32> to vector<32x1xf32>
    %123 = vector.broadcast %122 : vector<32x1xf32> to vector<32x32xf32>
    %124 = arith.divf %120, %123 : vector<32x32xf32>
    %cst_58 = arith.constant dense<0.000000e+00> : vector<32x8xf32>
    %125 = tpu.matmul %124, %111, %cst_58 {dimension_numbers = #tpu.dot_dimension_numbers<[1], [0], [0], [1], [0, 0, 1, 1], [], []>} : vector<32x32xf32>, vector<32x8xf32>, vector<32x8xf32> -> vector<32x8xf32>
    %126 = vector.extract_strided_slice %91 {offsets = [0, 16], sizes = [32, 8], strides = [1, 1]} : vector<32x96xf32> to vector<32x8xf32>
    %127 = vector.extract_strided_slice %91 {offsets = [0, 48], sizes = [32, 8], strides = [1, 1]} : vector<32x96xf32> to vector<32x8xf32>
    %128 = vector.extract_strided_slice %91 {offsets = [0, 80], sizes = [32, 8], strides = [1, 1]} : vector<32x96xf32> to vector<32x8xf32>
    %cst_59 = arith.constant dense<0.000000e+00> : vector<32x32xf32>
    %129 = tpu.matmul %126, %127, %cst_59 {dimension_numbers = #tpu.dot_dimension_numbers<[1], [1], [0], [0], [0, 0, 1, 0], [], []>} : vector<32x8xf32>, vector<32x8xf32>, vector<32x32xf32> -> vector<32x32xf32>
    %cst_60 = arith.constant 0.353553385 : f32
    %130 = vector.broadcast %cst_60 : f32 to vector<32x32xf32>
    %131 = arith.mulf %129, %130 : vector<32x32xf32>
    %132 = arith.mulf %48, %131 : vector<32x32xf32>
    %cst_61 = arith.constant dense<0xFF800000> : vector<32xf32>
    %133 = vector.multi_reduction <maximumf>, %132, %cst_61 [1] : vector<32x32xf32> to vector<32xf32>
    %134 = vector.shape_cast %133 : vector<32xf32> to vector<32x1xf32>
    %135 = vector.broadcast %134 : vector<32x1xf32> to vector<32x32xf32>
    %136 = arith.subf %132, %135 : vector<32x32xf32>
    %137 = math.exp %136 : vector<32x32xf32>
    %cst_62 = arith.constant dense<0.000000e+00> : vector<32xf32>
    %138 = vector.multi_reduction <add>, %137, %cst_62 [1] : vector<32x32xf32> to vector<32xf32>
    %139 = vector.shape_cast %138 : vector<32xf32> to vector<32x1xf32>
    %140 = vector.broadcast %139 : vector<32x1xf32> to vector<32x32xf32>
    %141 = arith.divf %137, %140 : vector<32x32xf32>
    %cst_63 = arith.constant dense<0.000000e+00> : vector<32x8xf32>
    %142 = tpu.matmul %141, %128, %cst_63 {dimension_numbers = #tpu.dot_dimension_numbers<[1], [0], [0], [1], [0, 0, 1, 1], [], []>} : vector<32x32xf32>, vector<32x8xf32>, vector<32x8xf32> -> vector<32x8xf32>
    %143 = vector.extract_strided_slice %91 {offsets = [0, 24], sizes = [32, 8], strides = [1, 1]} : vector<32x96xf32> to vector<32x8xf32>
    %144 = vector.extract_strided_slice %91 {offsets = [0, 56], sizes = [32, 8], strides = [1, 1]} : vector<32x96xf32> to vector<32x8xf32>
    %145 = vector.extract_strided_slice %91 {offsets = [0, 88], sizes = [32, 8], strides = [1, 1]} : vector<32x96xf32> to vector<32x8xf32>
    %cst_64 = arith.constant dense<0.000000e+00> : vector<32x32xf32>
    %146 = tpu.matmul %143, %144, %cst_64 {dimension_numbers = #tpu.dot_dimension_numbers<[1], [1], [0], [0], [0, 0, 1, 0], [], []>} : vector<32x8xf32>, vector<32x8xf32>, vector<32x32xf32> -> vector<32x32xf32>
    %cst_65 = arith.constant 0.353553385 : f32
    %147 = vector.broadcast %cst_65 : f32 to vector<32x32xf32>
    %148 = arith.mulf %146, %147 : vector<32x32xf32>
    %149 = arith.mulf %48, %148 : vector<32x32xf32>
    %cst_66 = arith.constant dense<0xFF800000> : vector<32xf32>
    %150 = vector.multi_reduction <maximumf>, %149, %cst_66 [1] : vector<32x32xf32> to vector<32xf32>
    %151 = vector.shape_cast %150 : vector<32xf32> to vector<32x1xf32>
    %152 = vector.broadcast %151 : vector<32x1xf32> to vector<32x32xf32>
    %153 = arith.subf %149, %152 : vector<32x32xf32>
    %154 = math.exp %153 : vector<32x32xf32>
    %cst_67 = arith.constant dense<0.000000e+00> : vector<32xf32>
    %155 = vector.multi_reduction <add>, %154, %cst_67 [1] : vector<32x32xf32> to vector<32xf32>
    %156 = vector.shape_cast %155 : vector<32xf32> to vector<32x1xf32>
    %157 = vector.broadcast %156 : vector<32x1xf32> to vector<32x32xf32>
    %158 = arith.divf %154, %157 : vector<32x32xf32>
    %cst_68 = arith.constant dense<0.000000e+00> : vector<32x8xf32>
    %159 = tpu.matmul %158, %145, %cst_68 {dimension_numbers = #tpu.dot_dimension_numbers<[1], [0], [0], [1], [0, 0, 1, 1], [], []>} : vector<32x32xf32>, vector<32x8xf32>, vector<32x8xf32> -> vector<32x8xf32>
    %160 = tpu.concatenate %108, %125, %142, %159 in 1 : vector<32x8xf32>, vector<32x8xf32>, vector<32x8xf32>, vector<32x8xf32> -> vector<32x32xf32>
    %c0_69 = arith.constant 0 : index
    %c0_70 = arith.constant 0 : index
    %161 = vector.load %arg10[%c0_69, %c0_70] : memref<32x16xf32, #tpu.memory_space<vmem>>, vector<32x16xf32>
    %c0_71 = arith.constant 0 : index
    %c0_72 = arith.constant 0 : index
    %162 = vector.load %arg11[%c0_71, %c0_72] : memref<1x16xf32, #tpu.memory_space<vmem>>, vector<1x16xf32>
    %cst_73 = arith.constant dense<0.000000e+00> : vector<32x16xf32>
    %163 = tpu.matmul %160, %161, %cst_73 {dimension_numbers = #tpu.dot_dimension_numbers<[1], [0], [0], [1], [0, 0, 1, 1], [], []>} : vector<32x32xf32>, vector<32x16xf32>, vector<32x16xf32> -> vector<32x16xf32>
    %164 = vector.broadcast %162 : vector<1x16xf32> to vector<32x16xf32>
    %165 = arith.addf %163, %164 : vector<32x16xf32>
    %c0_74 = arith.constant 0 : index
    %c0_75 = arith.constant 0 : index
    %166 = vector.load %arg12[%c0_74, %c0_75] : memref<2x16xf32, #tpu.memory_space<vmem>>, vector<2x16xf32>
    %cst_76 = arith.constant dense<0.000000e+00> : vector<16xf32>
    %167 = vector.multi_reduction <add>, %165, %cst_76 [0] : vector<32x16xf32> to vector<16xf32>
    %168 = vector.shape_cast %167 : vector<16xf32> to vector<1x16xf32>
    %cst_77 = arith.constant 3.200000e+01 : f32
    %169 = vector.broadcast %cst_77 : f32 to vector<1x16xf32>
    %170 = arith.divf %168, %169 : vector<1x16xf32>
    %171 = vector.broadcast %170 : vector<1x16xf32> to vector<32x16xf32>
    %172 = arith.subf %165, %171 : vector<32x16xf32>
    %173 = arith.mulf %172, %172 : vector<32x16xf32>
    %cst_78 = arith.constant dense<0.000000e+00> : vector<16xf32>
    %174 = vector.multi_reduction <add>, %173, %cst_78 [0] : vector<32x16xf32> to vector<16xf32>
    %175 = vector.shape_cast %174 : vector<16xf32> to vector<1x16xf32>
    %cst_79 = arith.constant 3.200000e+01 : f32
    %176 = vector.broadcast %cst_79 : f32 to vector<1x16xf32>
    %177 = arith.divf %175, %176 : vector<1x16xf32>
    %178 = vector.broadcast %170 : vector<1x16xf32> to vector<32x16xf32>
    %179 = arith.subf %165, %178 : vector<32x16xf32>
    %cst_80 = arith.constant 9.99999974E-6 : f32
    %180 = vector.broadcast %cst_80 : f32 to vector<1x16xf32>
    %181 = arith.addf %177, %180 : vector<1x16xf32>
    %182 = math.rsqrt %181 : vector<1x16xf32>
    %183 = vector.broadcast %182 : vector<1x16xf32> to vector<32x16xf32>
    %184 = arith.mulf %179, %183 : vector<32x16xf32>
    %185 = vector.extract_strided_slice %166 {offsets = [0, 0], sizes = [1, 16], strides = [1, 1]} : vector<2x16xf32> to vector<1x16xf32>
    %186 = vector.broadcast %185 : vector<1x16xf32> to vector<32x16xf32>
    %187 = arith.mulf %184, %186 : vector<32x16xf32>
    %188 = vector.extract_strided_slice %166 {offsets = [1, 0], sizes = [1, 16], strides = [1, 1]} : vector<2x16xf32> to vector<1x16xf32>
    %189 = vector.broadcast %188 : vector<1x16xf32> to vector<32x16xf32>
    %190 = arith.addf %187, %189 : vector<32x16xf32>
    %cst_81 = arith.constant 0.000000e+00 : f32
    %191 = vector.broadcast %cst_81 : f32 to vector<32x16xf32>
    %192 = arith.maximumf %190, %191 : vector<32x16xf32>
    %c0_82 = arith.constant 0 : index
    %c0_83 = arith.constant 0 : index
    %193 = vector.load %arg13[%c0_82, %c0_83] : memref<16x16xf32, #tpu.memory_space<vmem>>, vector<16x16xf32>
    %c0_84 = arith.constant 0 : index
    %c0_85 = arith.constant 0 : index
    %194 = vector.load %arg14[%c0_84, %c0_85] : memref<1x16xf32, #tpu.memory_space<vmem>>, vector<1x16xf32>
    %cst_86 = arith.constant dense<0.000000e+00> : vector<32x16xf32>
    %195 = tpu.matmul %192, %193, %cst_86 {dimension_numbers = #tpu.dot_dimension_numbers<[1], [0], [0], [1], [0, 0, 1, 1], [], []>} : vector<32x16xf32>, vector<16x16xf32>, vector<32x16xf32> -> vector<32x16xf32>
    %196 = vector.broadcast %194 : vector<1x16xf32> to vector<32x16xf32>
    %197 = arith.addf %195, %196 : vector<32x16xf32>
    %c0_87 = arith.constant 0 : index
    %c0_88 = arith.constant 0 : index
    %198 = vector.load %arg15[%c0_87, %c0_88] : memref<2x16xf32, #tpu.memory_space<vmem>>, vector<2x16xf32>
    %cst_89 = arith.constant dense<0.000000e+00> : vector<16xf32>
    %199 = vector.multi_reduction <add>, %197, %cst_89 [0] : vector<32x16xf32> to vector<16xf32>
    %200 = vector.shape_cast %199 : vector<16xf32> to vector<1x16xf32>
    %cst_90 = arith.constant 3.200000e+01 : f32
    %201 = vector.broadcast %cst_90 : f32 to vector<1x16xf32>
    %202 = arith.divf %200, %201 : vector<1x16xf32>
    %203 = vector.broadcast %202 : vector<1x16xf32> to vector<32x16xf32>
    %204 = arith.subf %197, %203 : vector<32x16xf32>
    %205 = arith.mulf %204, %204 : vector<32x16xf32>
    %cst_91 = arith.constant dense<0.000000e+00> : vector<16xf32>
    %206 = vector.multi_reduction <add>, %205, %cst_91 [0] : vector<32x16xf32> to vector<16xf32>
    %207 = vector.shape_cast %206 : vector<16xf32> to vector<1x16xf32>
    %cst_92 = arith.constant 3.200000e+01 : f32
    %208 = vector.broadcast %cst_92 : f32 to vector<1x16xf32>
    %209 = arith.divf %207, %208 : vector<1x16xf32>
    %210 = vector.broadcast %202 : vector<1x16xf32> to vector<32x16xf32>
    %211 = arith.subf %197, %210 : vector<32x16xf32>
    %cst_93 = arith.constant 9.99999974E-6 : f32
    %212 = vector.broadcast %cst_93 : f32 to vector<1x16xf32>
    %213 = arith.addf %209, %212 : vector<1x16xf32>
    %214 = math.rsqrt %213 : vector<1x16xf32>
    %215 = vector.broadcast %214 : vector<1x16xf32> to vector<32x16xf32>
    %216 = arith.mulf %211, %215 : vector<32x16xf32>
    %217 = vector.extract_strided_slice %198 {offsets = [0, 0], sizes = [1, 16], strides = [1, 1]} : vector<2x16xf32> to vector<1x16xf32>
    %218 = vector.broadcast %217 : vector<1x16xf32> to vector<32x16xf32>
    %219 = arith.mulf %216, %218 : vector<32x16xf32>
    %220 = vector.extract_strided_slice %198 {offsets = [1, 0], sizes = [1, 16], strides = [1, 1]} : vector<2x16xf32> to vector<1x16xf32>
    %221 = vector.broadcast %220 : vector<1x16xf32> to vector<32x16xf32>
    %222 = arith.addf %219, %221 : vector<32x16xf32>
    %cst_94 = arith.constant 0.000000e+00 : f32
    %223 = vector.broadcast %cst_94 : f32 to vector<32x16xf32>
    %224 = arith.maximumf %222, %223 : vector<32x16xf32>
    %c0_95 = arith.constant 0 : index
    %c0_96 = arith.constant 0 : index
    %225 = vector.load %arg16[%c0_95, %c0_96] : memref<16x32xf32, #tpu.memory_space<vmem>>, vector<16x32xf32>
    %c0_97 = arith.constant 0 : index
    %c0_98 = arith.constant 0 : index
    %226 = vector.load %arg17[%c0_97, %c0_98] : memref<1x32xf32, #tpu.memory_space<vmem>>, vector<1x32xf32>
    %cst_99 = arith.constant dense<0.000000e+00> : vector<32x32xf32>
    %227 = tpu.matmul %224, %225, %cst_99 {dimension_numbers = #tpu.dot_dimension_numbers<[1], [0], [0], [1], [0, 0, 1, 1], [], []>} : vector<32x16xf32>, vector<16x32xf32>, vector<32x32xf32> -> vector<32x32xf32>
    %228 = vector.broadcast %226 : vector<1x32xf32> to vector<32x32xf32>
    %229 = arith.addf %227, %228 : vector<32x32xf32>
    %230 = arith.addf %86, %229 : vector<32x32xf32>
    %c0_100 = arith.constant 0 : index
    %c0_101 = arith.constant 0 : index
    %231 = vector.load %arg18[%c0_100, %c0_101] : memref<32x32xf32, #tpu.memory_space<vmem>>, vector<32x32xf32>
    %c0_102 = arith.constant 0 : index
    %c0_103 = arith.constant 0 : index
    %232 = vector.load %arg19[%c0_102, %c0_103] : memref<1x32xf32, #tpu.memory_space<vmem>>, vector<1x32xf32>
    %cst_104 = arith.constant dense<0.000000e+00> : vector<32x32xf32>
    %233 = tpu.matmul %230, %231, %cst_104 {dimension_numbers = #tpu.dot_dimension_numbers<[1], [0], [0], [1], [0, 0, 1, 1], [], []>} : vector<32x32xf32>, vector<32x32xf32>, vector<32x32xf32> -> vector<32x32xf32>
    %234 = vector.broadcast %232 : vector<1x32xf32> to vector<32x32xf32>
    %235 = arith.addf %233, %234 : vector<32x32xf32>
    %c0_105 = arith.constant 0 : index
    %c0_106 = arith.constant 0 : index
    %236 = vector.load %arg20[%c0_105, %c0_106] : memref<2x32xf32, #tpu.memory_space<vmem>>, vector<2x32xf32>
    %cst_107 = arith.constant dense<0.000000e+00> : vector<32xf32>
    %237 = vector.multi_reduction <add>, %235, %cst_107 [0] : vector<32x32xf32> to vector<32xf32>
    %238 = vector.shape_cast %237 : vector<32xf32> to vector<1x32xf32>
    %cst_108 = arith.constant 3.200000e+01 : f32
    %239 = vector.broadcast %cst_108 : f32 to vector<1x32xf32>
    %240 = arith.divf %238, %239 : vector<1x32xf32>
    %241 = vector.broadcast %240 : vector<1x32xf32> to vector<32x32xf32>
    %242 = arith.subf %235, %241 : vector<32x32xf32>
    %243 = arith.mulf %242, %242 : vector<32x32xf32>
    %cst_109 = arith.constant dense<0.000000e+00> : vector<32xf32>
    %244 = vector.multi_reduction <add>, %243, %cst_109 [0] : vector<32x32xf32> to vector<32xf32>
    %245 = vector.shape_cast %244 : vector<32xf32> to vector<1x32xf32>
    %cst_110 = arith.constant 3.200000e+01 : f32
    %246 = vector.broadcast %cst_110 : f32 to vector<1x32xf32>
    %247 = arith.divf %245, %246 : vector<1x32xf32>
    %248 = vector.broadcast %240 : vector<1x32xf32> to vector<32x32xf32>
    %249 = arith.subf %235, %248 : vector<32x32xf32>
    %cst_111 = arith.constant 9.99999974E-6 : f32
    %250 = vector.broadcast %cst_111 : f32 to vector<1x32xf32>
    %251 = arith.addf %247, %250 : vector<1x32xf32>
    %252 = math.rsqrt %251 : vector<1x32xf32>
    %253 = vector.broadcast %252 : vector<1x32xf32> to vector<32x32xf32>
    %254 = arith.mulf %249, %253 : vector<32x32xf32>
    %255 = vector.extract_strided_slice %236 {offsets = [0, 0], sizes = [1, 32], strides = [1, 1]} : vector<2x32xf32> to vector<1x32xf32>
    %256 = vector.broadcast %255 : vector<1x32xf32> to vector<32x32xf32>
    %257 = arith.mulf %254, %256 : vector<32x32xf32>
    %258 = vector.extract_strided_slice %236 {offsets = [1, 0], sizes = [1, 32], strides = [1, 1]} : vector<2x32xf32> to vector<1x32xf32>
    %259 = vector.broadcast %258 : vector<1x32xf32> to vector<32x32xf32>
    %260 = arith.addf %257, %259 : vector<32x32xf32>
    %cst_112 = arith.constant 0.000000e+00 : f32
    %261 = vector.broadcast %cst_112 : f32 to vector<32x32xf32>
    %262 = arith.maximumf %260, %261 : vector<32x32xf32>
    %c0_113 = arith.constant 0 : index
    %c0_114 = arith.constant 0 : index
    %263 = vector.load %arg21[%c0_113, %c0_114] : memref<32x96xf32, #tpu.memory_space<vmem>>, vector<32x96xf32>
    %c0_115 = arith.constant 0 : index
    %c0_116 = arith.constant 0 : index
    %264 = vector.load %arg22[%c0_115, %c0_116] : memref<1x96xf32, #tpu.memory_space<vmem>>, vector<1x96xf32>
    %cst_117 = arith.constant dense<0.000000e+00> : vector<32x96xf32>
    %265 = tpu.matmul %262, %263, %cst_117 {dimension_numbers = #tpu.dot_dimension_numbers<[1], [0], [0], [1], [0, 0, 1, 1], [], []>} : vector<32x32xf32>, vector<32x96xf32>, vector<32x96xf32> -> vector<32x96xf32>
    %266 = vector.broadcast %264 : vector<1x96xf32> to vector<32x96xf32>
    %267 = arith.addf %265, %266 : vector<32x96xf32>
    %268 = vector.extract_strided_slice %267 {offsets = [0, 0], sizes = [32, 8], strides = [1, 1]} : vector<32x96xf32> to vector<32x8xf32>
    %269 = vector.extract_strided_slice %267 {offsets = [0, 32], sizes = [32, 8], strides = [1, 1]} : vector<32x96xf32> to vector<32x8xf32>
    %270 = vector.extract_strided_slice %267 {offsets = [0, 64], sizes = [32, 8], strides = [1, 1]} : vector<32x96xf32> to vector<32x8xf32>
    %cst_118 = arith.constant dense<0.000000e+00> : vector<32x32xf32>
    %271 = tpu.matmul %268, %269, %cst_118 {dimension_numbers = #tpu.dot_dimension_numbers<[1], [1], [0], [0], [0, 0, 1, 0], [], []>} : vector<32x8xf32>, vector<32x8xf32>, vector<32x32xf32> -> vector<32x32xf32>
    %cst_119 = arith.constant 0.353553385 : f32
    %272 = vector.broadcast %cst_119 : f32 to vector<32x32xf32>
    %273 = arith.mulf %271, %272 : vector<32x32xf32>
    %274 = arith.mulf %48, %273 : vector<32x32xf32>
    %cst_120 = arith.constant dense<0xFF800000> : vector<32xf32>
    %275 = vector.multi_reduction <maximumf>, %274, %cst_120 [1] : vector<32x32xf32> to vector<32xf32>
    %276 = vector.shape_cast %275 : vector<32xf32> to vector<32x1xf32>
    %277 = vector.broadcast %276 : vector<32x1xf32> to vector<32x32xf32>
    %278 = arith.subf %274, %277 : vector<32x32xf32>
    %279 = math.exp %278 : vector<32x32xf32>
    %cst_121 = arith.constant dense<0.000000e+00> : vector<32xf32>
    %280 = vector.multi_reduction <add>, %279, %cst_121 [1] : vector<32x32xf32> to vector<32xf32>
    %281 = vector.shape_cast %280 : vector<32xf32> to vector<32x1xf32>
    %282 = vector.broadcast %281 : vector<32x1xf32> to vector<32x32xf32>
    %283 = arith.divf %279, %282 : vector<32x32xf32>
    %cst_122 = arith.constant dense<0.000000e+00> : vector<32x8xf32>
    %284 = tpu.matmul %283, %270, %cst_122 {dimension_numbers = #tpu.dot_dimension_numbers<[1], [0], [0], [1], [0, 0, 1, 1], [], []>} : vector<32x32xf32>, vector<32x8xf32>, vector<32x8xf32> -> vector<32x8xf32>
    %285 = vector.extract_strided_slice %267 {offsets = [0, 8], sizes = [32, 8], strides = [1, 1]} : vector<32x96xf32> to vector<32x8xf32>
    %286 = vector.extract_strided_slice %267 {offsets = [0, 40], sizes = [32, 8], strides = [1, 1]} : vector<32x96xf32> to vector<32x8xf32>
    %287 = vector.extract_strided_slice %267 {offsets = [0, 72], sizes = [32, 8], strides = [1, 1]} : vector<32x96xf32> to vector<32x8xf32>
    %cst_123 = arith.constant dense<0.000000e+00> : vector<32x32xf32>
    %288 = tpu.matmul %285, %286, %cst_123 {dimension_numbers = #tpu.dot_dimension_numbers<[1], [1], [0], [0], [0, 0, 1, 0], [], []>} : vector<32x8xf32>, vector<32x8xf32>, vector<32x32xf32> -> vector<32x32xf32>
    %cst_124 = arith.constant 0.353553385 : f32
    %289 = vector.broadcast %cst_124 : f32 to vector<32x32xf32>
    %290 = arith.mulf %288, %289 : vector<32x32xf32>
    %291 = arith.mulf %48, %290 : vector<32x32xf32>
    %cst_125 = arith.constant dense<0xFF800000> : vector<32xf32>
    %292 = vector.multi_reduction <maximumf>, %291, %cst_125 [1] : vector<32x32xf32> to vector<32xf32>
    %293 = vector.shape_cast %292 : vector<32xf32> to vector<32x1xf32>
    %294 = vector.broadcast %293 : vector<32x1xf32> to vector<32x32xf32>
    %295 = arith.subf %291, %294 : vector<32x32xf32>
    %296 = math.exp %295 : vector<32x32xf32>
    %cst_126 = arith.constant dense<0.000000e+00> : vector<32xf32>
    %297 = vector.multi_reduction <add>, %296, %cst_126 [1] : vector<32x32xf32> to vector<32xf32>
    %298 = vector.shape_cast %297 : vector<32xf32> to vector<32x1xf32>
    %299 = vector.broadcast %298 : vector<32x1xf32> to vector<32x32xf32>
    %300 = arith.divf %296, %299 : vector<32x32xf32>
    %cst_127 = arith.constant dense<0.000000e+00> : vector<32x8xf32>
    %301 = tpu.matmul %300, %287, %cst_127 {dimension_numbers = #tpu.dot_dimension_numbers<[1], [0], [0], [1], [0, 0, 1, 1], [], []>} : vector<32x32xf32>, vector<32x8xf32>, vector<32x8xf32> -> vector<32x8xf32>
    %302 = vector.extract_strided_slice %267 {offsets = [0, 16], sizes = [32, 8], strides = [1, 1]} : vector<32x96xf32> to vector<32x8xf32>
    %303 = vector.extract_strided_slice %267 {offsets = [0, 48], sizes = [32, 8], strides = [1, 1]} : vector<32x96xf32> to vector<32x8xf32>
    %304 = vector.extract_strided_slice %267 {offsets = [0, 80], sizes = [32, 8], strides = [1, 1]} : vector<32x96xf32> to vector<32x8xf32>
    %cst_128 = arith.constant dense<0.000000e+00> : vector<32x32xf32>
    %305 = tpu.matmul %302, %303, %cst_128 {dimension_numbers = #tpu.dot_dimension_numbers<[1], [1], [0], [0], [0, 0, 1, 0], [], []>} : vector<32x8xf32>, vector<32x8xf32>, vector<32x32xf32> -> vector<32x32xf32>
    %cst_129 = arith.constant 0.353553385 : f32
    %306 = vector.broadcast %cst_129 : f32 to vector<32x32xf32>
    %307 = arith.mulf %305, %306 : vector<32x32xf32>
    %308 = arith.mulf %48, %307 : vector<32x32xf32>
    %cst_130 = arith.constant dense<0xFF800000> : vector<32xf32>
    %309 = vector.multi_reduction <maximumf>, %308, %cst_130 [1] : vector<32x32xf32> to vector<32xf32>
    %310 = vector.shape_cast %309 : vector<32xf32> to vector<32x1xf32>
    %311 = vector.broadcast %310 : vector<32x1xf32> to vector<32x32xf32>
    %312 = arith.subf %308, %311 : vector<32x32xf32>
    %313 = math.exp %312 : vector<32x32xf32>
    %cst_131 = arith.constant dense<0.000000e+00> : vector<32xf32>
    %314 = vector.multi_reduction <add>, %313, %cst_131 [1] : vector<32x32xf32> to vector<32xf32>
    %315 = vector.shape_cast %314 : vector<32xf32> to vector<32x1xf32>
    %316 = vector.broadcast %315 : vector<32x1xf32> to vector<32x32xf32>
    %317 = arith.divf %313, %316 : vector<32x32xf32>
    %cst_132 = arith.constant dense<0.000000e+00> : vector<32x8xf32>
    %318 = tpu.matmul %317, %304, %cst_132 {dimension_numbers = #tpu.dot_dimension_numbers<[1], [0], [0], [1], [0, 0, 1, 1], [], []>} : vector<32x32xf32>, vector<32x8xf32>, vector<32x8xf32> -> vector<32x8xf32>
    %319 = vector.extract_strided_slice %267 {offsets = [0, 24], sizes = [32, 8], strides = [1, 1]} : vector<32x96xf32> to vector<32x8xf32>
    %320 = vector.extract_strided_slice %267 {offsets = [0, 56], sizes = [32, 8], strides = [1, 1]} : vector<32x96xf32> to vector<32x8xf32>
    %321 = vector.extract_strided_slice %267 {offsets = [0, 88], sizes = [32, 8], strides = [1, 1]} : vector<32x96xf32> to vector<32x8xf32>
    %cst_133 = arith.constant dense<0.000000e+00> : vector<32x32xf32>
    %322 = tpu.matmul %319, %320, %cst_133 {dimension_numbers = #tpu.dot_dimension_numbers<[1], [1], [0], [0], [0, 0, 1, 0], [], []>} : vector<32x8xf32>, vector<32x8xf32>, vector<32x32xf32> -> vector<32x32xf32>
    %cst_134 = arith.constant 0.353553385 : f32
    %323 = vector.broadcast %cst_134 : f32 to vector<32x32xf32>
    %324 = arith.mulf %322, %323 : vector<32x32xf32>
    %325 = arith.mulf %48, %324 : vector<32x32xf32>
    %cst_135 = arith.constant dense<0xFF800000> : vector<32xf32>
    %326 = vector.multi_reduction <maximumf>, %325, %cst_135 [1] : vector<32x32xf32> to vector<32xf32>
    %327 = vector.shape_cast %326 : vector<32xf32> to vector<32x1xf32>
    %328 = vector.broadcast %327 : vector<32x1xf32> to vector<32x32xf32>
    %329 = arith.subf %325, %328 : vector<32x32xf32>
    %330 = math.exp %329 : vector<32x32xf32>
    %cst_136 = arith.constant dense<0.000000e+00> : vector<32xf32>
    %331 = vector.multi_reduction <add>, %330, %cst_136 [1] : vector<32x32xf32> to vector<32xf32>
    %332 = vector.shape_cast %331 : vector<32xf32> to vector<32x1xf32>
    %333 = vector.broadcast %332 : vector<32x1xf32> to vector<32x32xf32>
    %334 = arith.divf %330, %333 : vector<32x32xf32>
    %cst_137 = arith.constant dense<0.000000e+00> : vector<32x8xf32>
    %335 = tpu.matmul %334, %321, %cst_137 {dimension_numbers = #tpu.dot_dimension_numbers<[1], [0], [0], [1], [0, 0, 1, 1], [], []>} : vector<32x32xf32>, vector<32x8xf32>, vector<32x8xf32> -> vector<32x8xf32>
    %336 = tpu.concatenate %284, %301, %318, %335 in 1 : vector<32x8xf32>, vector<32x8xf32>, vector<32x8xf32>, vector<32x8xf32> -> vector<32x32xf32>
    %c0_138 = arith.constant 0 : index
    %c0_139 = arith.constant 0 : index
    %337 = vector.load %arg23[%c0_138, %c0_139] : memref<32x16xf32, #tpu.memory_space<vmem>>, vector<32x16xf32>
    %c0_140 = arith.constant 0 : index
    %c0_141 = arith.constant 0 : index
    %338 = vector.load %arg24[%c0_140, %c0_141] : memref<1x16xf32, #tpu.memory_space<vmem>>, vector<1x16xf32>
    %cst_142 = arith.constant dense<0.000000e+00> : vector<32x16xf32>
    %339 = tpu.matmul %336, %337, %cst_142 {dimension_numbers = #tpu.dot_dimension_numbers<[1], [0], [0], [1], [0, 0, 1, 1], [], []>} : vector<32x32xf32>, vector<32x16xf32>, vector<32x16xf32> -> vector<32x16xf32>
    %340 = vector.broadcast %338 : vector<1x16xf32> to vector<32x16xf32>
    %341 = arith.addf %339, %340 : vector<32x16xf32>
    %c0_143 = arith.constant 0 : index
    %c0_144 = arith.constant 0 : index
    %342 = vector.load %arg25[%c0_143, %c0_144] : memref<2x16xf32, #tpu.memory_space<vmem>>, vector<2x16xf32>
    %cst_145 = arith.constant dense<0.000000e+00> : vector<16xf32>
    %343 = vector.multi_reduction <add>, %341, %cst_145 [0] : vector<32x16xf32> to vector<16xf32>
    %344 = vector.shape_cast %343 : vector<16xf32> to vector<1x16xf32>
    %cst_146 = arith.constant 3.200000e+01 : f32
    %345 = vector.broadcast %cst_146 : f32 to vector<1x16xf32>
    %346 = arith.divf %344, %345 : vector<1x16xf32>
    %347 = vector.broadcast %346 : vector<1x16xf32> to vector<32x16xf32>
    %348 = arith.subf %341, %347 : vector<32x16xf32>
    %349 = arith.mulf %348, %348 : vector<32x16xf32>
    %cst_147 = arith.constant dense<0.000000e+00> : vector<16xf32>
    %350 = vector.multi_reduction <add>, %349, %cst_147 [0] : vector<32x16xf32> to vector<16xf32>
    %351 = vector.shape_cast %350 : vector<16xf32> to vector<1x16xf32>
    %cst_148 = arith.constant 3.200000e+01 : f32
    %352 = vector.broadcast %cst_148 : f32 to vector<1x16xf32>
    %353 = arith.divf %351, %352 : vector<1x16xf32>
    %354 = vector.broadcast %346 : vector<1x16xf32> to vector<32x16xf32>
    %355 = arith.subf %341, %354 : vector<32x16xf32>
    %cst_149 = arith.constant 9.99999974E-6 : f32
    %356 = vector.broadcast %cst_149 : f32 to vector<1x16xf32>
    %357 = arith.addf %353, %356 : vector<1x16xf32>
    %358 = math.rsqrt %357 : vector<1x16xf32>
    %359 = vector.broadcast %358 : vector<1x16xf32> to vector<32x16xf32>
    %360 = arith.mulf %355, %359 : vector<32x16xf32>
    %361 = vector.extract_strided_slice %342 {offsets = [0, 0], sizes = [1, 16], strides = [1, 1]} : vector<2x16xf32> to vector<1x16xf32>
    %362 = vector.broadcast %361 : vector<1x16xf32> to vector<32x16xf32>
    %363 = arith.mulf %360, %362 : vector<32x16xf32>
    %364 = vector.extract_strided_slice %342 {offsets = [1, 0], sizes = [1, 16], strides = [1, 1]} : vector<2x16xf32> to vector<1x16xf32>
    %365 = vector.broadcast %364 : vector<1x16xf32> to vector<32x16xf32>
    %366 = arith.addf %363, %365 : vector<32x16xf32>
    %cst_150 = arith.constant 0.000000e+00 : f32
    %367 = vector.broadcast %cst_150 : f32 to vector<32x16xf32>
    %368 = arith.maximumf %366, %367 : vector<32x16xf32>
    %c0_151 = arith.constant 0 : index
    %c0_152 = arith.constant 0 : index
    %369 = vector.load %arg26[%c0_151, %c0_152] : memref<16x16xf32, #tpu.memory_space<vmem>>, vector<16x16xf32>
    %c0_153 = arith.constant 0 : index
    %c0_154 = arith.constant 0 : index
    %370 = vector.load %arg27[%c0_153, %c0_154] : memref<1x16xf32, #tpu.memory_space<vmem>>, vector<1x16xf32>
    %cst_155 = arith.constant dense<0.000000e+00> : vector<32x16xf32>
    %371 = tpu.matmul %368, %369, %cst_155 {dimension_numbers = #tpu.dot_dimension_numbers<[1], [0], [0], [1], [0, 0, 1, 1], [], []>} : vector<32x16xf32>, vector<16x16xf32>, vector<32x16xf32> -> vector<32x16xf32>
    %372 = vector.broadcast %370 : vector<1x16xf32> to vector<32x16xf32>
    %373 = arith.addf %371, %372 : vector<32x16xf32>
    %c0_156 = arith.constant 0 : index
    %c0_157 = arith.constant 0 : index
    %374 = vector.load %arg28[%c0_156, %c0_157] : memref<2x16xf32, #tpu.memory_space<vmem>>, vector<2x16xf32>
    %cst_158 = arith.constant dense<0.000000e+00> : vector<16xf32>
    %375 = vector.multi_reduction <add>, %373, %cst_158 [0] : vector<32x16xf32> to vector<16xf32>
    %376 = vector.shape_cast %375 : vector<16xf32> to vector<1x16xf32>
    %cst_159 = arith.constant 3.200000e+01 : f32
    %377 = vector.broadcast %cst_159 : f32 to vector<1x16xf32>
    %378 = arith.divf %376, %377 : vector<1x16xf32>
    %379 = vector.broadcast %378 : vector<1x16xf32> to vector<32x16xf32>
    %380 = arith.subf %373, %379 : vector<32x16xf32>
    %381 = arith.mulf %380, %380 : vector<32x16xf32>
    %cst_160 = arith.constant dense<0.000000e+00> : vector<16xf32>
    %382 = vector.multi_reduction <add>, %381, %cst_160 [0] : vector<32x16xf32> to vector<16xf32>
    %383 = vector.shape_cast %382 : vector<16xf32> to vector<1x16xf32>
    %cst_161 = arith.constant 3.200000e+01 : f32
    %384 = vector.broadcast %cst_161 : f32 to vector<1x16xf32>
    %385 = arith.divf %383, %384 : vector<1x16xf32>
    %386 = vector.broadcast %378 : vector<1x16xf32> to vector<32x16xf32>
    %387 = arith.subf %373, %386 : vector<32x16xf32>
    %cst_162 = arith.constant 9.99999974E-6 : f32
    %388 = vector.broadcast %cst_162 : f32 to vector<1x16xf32>
    %389 = arith.addf %385, %388 : vector<1x16xf32>
    %390 = math.rsqrt %389 : vector<1x16xf32>
    %391 = vector.broadcast %390 : vector<1x16xf32> to vector<32x16xf32>
    %392 = arith.mulf %387, %391 : vector<32x16xf32>
    %393 = vector.extract_strided_slice %374 {offsets = [0, 0], sizes = [1, 16], strides = [1, 1]} : vector<2x16xf32> to vector<1x16xf32>
    %394 = vector.broadcast %393 : vector<1x16xf32> to vector<32x16xf32>
    %395 = arith.mulf %392, %394 : vector<32x16xf32>
    %396 = vector.extract_strided_slice %374 {offsets = [1, 0], sizes = [1, 16], strides = [1, 1]} : vector<2x16xf32> to vector<1x16xf32>
    %397 = vector.broadcast %396 : vector<1x16xf32> to vector<32x16xf32>
    %398 = arith.addf %395, %397 : vector<32x16xf32>
    %cst_163 = arith.constant 0.000000e+00 : f32
    %399 = vector.broadcast %cst_163 : f32 to vector<32x16xf32>
    %400 = arith.maximumf %398, %399 : vector<32x16xf32>
    %c0_164 = arith.constant 0 : index
    %c0_165 = arith.constant 0 : index
    %401 = vector.load %arg29[%c0_164, %c0_165] : memref<16x32xf32, #tpu.memory_space<vmem>>, vector<16x32xf32>
    %c0_166 = arith.constant 0 : index
    %c0_167 = arith.constant 0 : index
    %402 = vector.load %arg30[%c0_166, %c0_167] : memref<1x32xf32, #tpu.memory_space<vmem>>, vector<1x32xf32>
    %cst_168 = arith.constant dense<0.000000e+00> : vector<32x32xf32>
    %403 = tpu.matmul %400, %401, %cst_168 {dimension_numbers = #tpu.dot_dimension_numbers<[1], [0], [0], [1], [0, 0, 1, 1], [], []>} : vector<32x16xf32>, vector<16x32xf32>, vector<32x32xf32> -> vector<32x32xf32>
    %404 = vector.broadcast %402 : vector<1x32xf32> to vector<32x32xf32>
    %405 = arith.addf %403, %404 : vector<32x32xf32>
    %406 = arith.addf %262, %405 : vector<32x32xf32>
    %c0_169 = arith.constant 0 : index
    %c0_170 = arith.constant 0 : index
    %407 = vector.load %arg40[%c0_169, %c0_170] : memref<32x32xf32, #tpu.memory_space<vmem>>, vector<32x32xf32>
    tpu.vector_store %arg40[%c0_169, %c0_170], %406 {strides = array<i32>} : memref<32x32xf32, #tpu.memory_space<vmem>>, vector<32x32xf32>,
    %408 = arith.mulf %406, %406 : vector<32x32xf32>
    %cst_171 = arith.constant dense<0.000000e+00> : vector<32xf32>
    %409 = vector.multi_reduction <add>, %408, %cst_171 [1] : vector<32x32xf32> to vector<32xf32>
    %410 = vector.shape_cast %409 : vector<32xf32> to vector<32x1xf32>
    %411 = math.sqrt %410 : vector<32x1xf32>
    %cst_172 = arith.constant 9.99999996E-13 : f32
    %412 = vector.broadcast %cst_172 : f32 to vector<32x1xf32>
    %413 = arith.maximumf %411, %412 : vector<32x1xf32>
    %414 = vector.broadcast %413 : vector<32x1xf32> to vector<32x32xf32>
    %415 = arith.divf %406, %414 : vector<32x32xf32>
    %c0_173 = arith.constant 0 : index
    %c0_174 = arith.constant 0 : index
    %416 = vector.load %arg41[%c0_173, %c0_174] : memref<32x32xf32, #tpu.memory_space<vmem>>, vector<32x32xf32>
    tpu.vector_store %arg41[%c0_173, %c0_174], %415 {strides = array<i32>} : memref<32x32xf32, #tpu.memory_space<vmem>>, vector<32x32xf32>,
    %cst_175 = arith.constant dense<0.000000e+00> : vector<32x32xf32>
    %417 = tpu.matmul %415, %415, %cst_175 {dimension_numbers = #tpu.dot_dimension_numbers<[1], [1], [0], [0], [0, 0, 1, 0], [], []>} : vector<32x32xf32>, vector<32x32xf32>, vector<32x32xf32> -> vector<32x32xf32>
    %c0_176 = arith.constant 0 : index
    %c0_177 = arith.constant 0 : index
    %418 = vector.load %arg42[%c0_176, %c0_177] : memref<32x32xf32, #tpu.memory_space<vmem>>, vector<32x32xf32>
    tpu.vector_store %arg42[%c0_176, %c0_177], %417 {strides = array<i32>} : memref<32x32xf32, #tpu.memory_space<vmem>>, vector<32x32xf32>,
    %c0_178 = arith.constant 0 : index
    %c0_179 = arith.constant 0 : index
    %419 = vector.load %arg31[%c0_178, %c0_179] : memref<32x32xf32, #tpu.memory_space<vmem>>, vector<32x32xf32>
    %c0_180 = arith.constant 0 : index
    %c0_181 = arith.constant 0 : index
    %420 = vector.load %arg32[%c0_180, %c0_181] : memref<1x32xf32, #tpu.memory_space<vmem>>, vector<1x32xf32>
    %cst_182 = arith.constant dense<0.000000e+00> : vector<32x32xf32>
    %421 = tpu.matmul %406, %419, %cst_182 {dimension_numbers = #tpu.dot_dimension_numbers<[1], [0], [0], [1], [0, 0, 1, 1], [], []>} : vector<32x32xf32>, vector<32x32xf32>, vector<32x32xf32> -> vector<32x32xf32>
    %422 = vector.broadcast %420 : vector<1x32xf32> to vector<32x32xf32>
    %423 = arith.addf %421, %422 : vector<32x32xf32>
    %cst_183 = arith.constant 0.000000e+00 : f32
    %424 = vector.broadcast %cst_183 : f32 to vector<32x32xf32>
    %425 = arith.maximumf %423, %424 : vector<32x32xf32>
    %c0_184 = arith.constant 0 : index
    %c0_185 = arith.constant 0 : index
    %426 = vector.load %arg33[%c0_184, %c0_185] : memref<32x32xf32, #tpu.memory_space<vmem>>, vector<32x32xf32>
    %c0_186 = arith.constant 0 : index
    %c0_187 = arith.constant 0 : index
    %427 = vector.load %arg34[%c0_186, %c0_187] : memref<1x32xf32, #tpu.memory_space<vmem>>, vector<1x32xf32>
    %cst_188 = arith.constant dense<0.000000e+00> : vector<32x32xf32>
    %428 = tpu.matmul %425, %426, %cst_188 {dimension_numbers = #tpu.dot_dimension_numbers<[1], [0], [0], [1], [0, 0, 1, 1], [], []>} : vector<32x32xf32>, vector<32x32xf32>, vector<32x32xf32> -> vector<32x32xf32>
    %429 = vector.broadcast %427 : vector<1x32xf32> to vector<32x32xf32>
    %430 = arith.addf %428, %429 : vector<32x32xf32>
    %cst_189 = arith.constant 0.000000e+00 : f32
    %431 = vector.broadcast %cst_189 : f32 to vector<32x32xf32>
    %432 = arith.maximumf %430, %431 : vector<32x32xf32>
    %c0_190 = arith.constant 0 : index
    %c0_191 = arith.constant 0 : index
    %433 = vector.load %arg35[%c0_190, %c0_191] : memref<32x1xf32, #tpu.memory_space<vmem>>, vector<32x1xf32>
    %c0_192 = arith.constant 0 : index
    %c0_193 = arith.constant 0 : index
    %434 = vector.load %arg36[%c0_192, %c0_193] : memref<1x1xf32, #tpu.memory_space<vmem>>, vector<1x1xf32>
    %cst_194 = arith.constant dense<0.000000e+00> : vector<32x1xf32>
    %435 = tpu.matmul %432, %433, %cst_194 {dimension_numbers = #tpu.dot_dimension_numbers<[1], [0], [0], [1], [0, 0, 1, 1], [], []>} : vector<32x32xf32>, vector<32x1xf32>, vector<32x1xf32> -> vector<32x1xf32>
    %436 = vector.broadcast %434 : vector<1x1xf32> to vector<32x1xf32>
    %437 = arith.addf %435, %436 : vector<32x1xf32>
    %c0_195 = arith.constant 0 : index
    %c0_196 = arith.constant 0 : index
    %438 = vector.load %arg43[%c0_195, %c0_196] : memref<32x1xf32, #tpu.memory_space<vmem>>, vector<32x1xf32>
    tpu.vector_store %arg43[%c0_195, %c0_196], %437 {strides = array<i32>} : memref<32x1xf32, #tpu.memory_space<vmem>>, vector<32x1xf32>,
    return
  }
}

</mosaic_0001>

<llo_original>
// kernel: custom-call.65
$region0: #{custom-call.65}
  %s0 = inlined_call_operand.vmem [shape: f32[8,6,3], index: 0, kind: input, shape index: {}]
  %s1 = inlined_call_operand.vmem [shape: f32[8,6,3], index: 1, kind: output, shape index: {0}]
  %s2 = inlined_call_operand.vmem [shape: f32[8,3], index: 2, kind: output, shape index: {1}]
  %3 = xla_tuple %s1, %s2
  $region1: #{custom-call.65} parent=0
    #allocation0 [shape = 'u8[8192]{0}', space=vmem, size = 0x2000, scoped, tag = 'operand span for operand 0']
    #allocation1 [shape = 'u8[8192]{0}', space=vmem, size = 0x2000, scoped, tag = 'operand span for operand 1']
    #allocation2 [shape = 'u8[8192]{0}', space=vmem, size = 0x2000, scoped, tag = 'operand span for operand 2']
    loop: start=0, step=1, limit=10
    $region2: #{custom-call.65} parent=1 // loop_pre_header
      _
    $region3: #{custom-call.65} parent=1 // loop_header
      %s5 = sphi 0, %s9
      %p6 = scmp.ge.s32.totalorder %s5, 10
      %s12 = sphi 0, %s31
      %s13 = sphi 0, %s27
      %s14 = sphi 0, %s23
      %s15 = sphi 0, %s12
      %s16 = sphi 0, %s13
      %s17 = sphi 0, %s14
      %s18 = sphi 0, %s15
      %s19 = sphi 0, %s16
      %s20 = sphi 0, %s17
      %s46 = sphi 0, %s48
      %s49 = sphi 0, %s46
      %s50 = sphi 0, %s49
      %s66 = sphi 0, %s50
    $region4: #{custom-call.65} parent=1 // loop_header_branch
      %8 = sbr.rel (%p6) target = $region8
    $region5: #{custom-call.65} parent=1 // loop_body
      %s10 = ssub.s32 %s5, 1
      %s11 = ssub.s32 %s5, 2
      %s21 = sadd.s32 1, %s14
      %p22 = scmp.ge.s32.totalorder %s21, 1
      %s23 = scalar_select %p22, 0, %s21
      %s24 = sadd.s32 1, %s13
      %s25 = scalar_select %p22, %s24, %s13
      %p26 = scmp.ge.s32.totalorder %s25, 1
      %s27 = scalar_select %p26, 0, %s25
      %s28 = sadd.s32 1, %s12
      %s29 = scalar_select %p26, %s28, %s12
      %p30 = scmp.ge.s32.totalorder %s29, 8
      %s31 = scalar_select %p30, 0, %s29
      %p32 = scmp.lt.s32.totalorder %s12, 0
      %s33 = ssub.s32 0, %s12
      %s34 = scalar_select %p32, %s33, %s12
      %s35 = sshrl.u32 %s34, 3
      %s36 = ssub.s32 0, %s35
      %s37 = scalar_select %p32, %s36, %s35
      %p38 = scmp.lt.s32.totalorder %s31, 0
      %s39 = ssub.s32 0, %s31
      %s40 = scalar_select %p38, %s39, %s31
      %s41 = sshrl.u32 %s40, 3
      %s42 = ssub.s32 0, %s41
      %s43 = scalar_select %p38, %s42, %s41
      %s44 = ssub.s32 %s37, %s43
      %p45 = scmp.eq.s32.totalorder %s44, 0
      %s47 = sadd.s32 %s46, 1
      %s48 = scalar_select %p45, %s46, %s47
      %p51 = pneg %p45
      %p52 = scmp.eq.s32.totalorder %s5, 7
      %p53 = por %p51, %p52
      %p54 = scmp.ne.s32.totalorder %s46, %s49
      %p55 = scmp.eq.s32.totalorder %s5, 0
      %p56 = por %p54, %p55
      %p57 = scmp.ne.s32.totalorder %s46, %s49
      %p58 = scmp.eq.s32.totalorder %s10, 7
      %p59 = por %p57, %p58
      %p60 = scmp.ne.s32.totalorder %s49, %s50
      %p61 = scmp.eq.s32.totalorder %s10, 0
      %p62 = por %p60, %p61
      %p63 = scmp.ne.s32.totalorder %s49, %s50
      %p64 = scmp.eq.s32.totalorder %s11, 7
      %p65 = por %p63, %p64
      %p67 = scmp.ne.s32.totalorder %s50, %s66
      %p68 = scmp.eq.s32.totalorder %s11, 0
      %p69 = por %p67, %p68
      %p70 = scmp.le.s32.totalorder 1, %s5
      %p71 = scmp.lt.s32.totalorder %s5, 9
      %p72 = pnand %p70, %p71
      %p73 = pneg %p72
      // Predicated region
      $region9: #{custom-call.65} parent=5 // pred_check
        _
      $region10: #{custom-call.65} parent=5 // pred_check_branch
        %75 = sbr.rel (%p72) target = $region12
      $region11: #{custom-call.65} parent=5 // pred_region
        %s76 = ssub.s32 %s5, 1
      $region12: #{custom-call.65} parent=5 // pred_fallthru
        _
      %p77 = scmp.lt.s32.totalorder %s5, 8
      // Predicated region
      $region13: #{custom-call.65} parent=5 // pred_check
        %p78 = pneg %p77
      $region14: #{custom-call.65} parent=5 // pred_check_branch
        %80 = sbr.rel (%p78) target = $region16
      $region15: #{custom-call.65} parent=5 // pred_region
        %s81 = sand.u32 %s5, 1
        %s82 = sand.u32 %s5, 1
        %s83 = smul.addr %s82, 8
        %s84 = scalar_lea.vmem [#allocation0], %s83
        %s85 = sadd.s32 %s14, %s13
        %s86 = sadd.s32 %s85, %s12
        %s87 = smul.addr %s86, 8
        %s88 = scalar_lea.vmem %s0, %s87
        // Predicated region
        $region17: #{custom-call.65} parent=15 // pred_check
          _
        $region18: #{custom-call.65} parent=15 // pred_check_branch
          %90 = sbr.rel (0) target = $region20
        $region19: #{custom-call.65} parent=15 // pred_region
          // Predicated region
          $region21: #{custom-call.65} parent=19 // pred_check
            _
          $region22: #{custom-call.65} parent=19 // pred_check_branch
            %92 = sbr.rel (0) target = $region24
          $region23: #{custom-call.65} parent=19 // pred_region
            // Predicated region
            $region36: #{custom-call.65} parent=23 // pred_check
              _
            $region37: #{custom-call.65} parent=23 // pred_check_branch
              %108 = sbr.rel (0) target = $region39
            $region38: #{custom-call.65} parent=23 // pred_region
              loop: start=0, step=1, limit=1
              $region40: #{custom-call.65} parent=38 // loop_pre_header
                _
              $region41: #{custom-call.65} parent=38 // loop_header
                %s110 = sphi 0, %s114
                %p111 = scmp.ge.s32.totalorder %s110, 1
                %s115 = sphi %s88, %s88
                %s116 = sphi %s84, %s84
              $region42: #{custom-call.65} parent=38 // loop_header_branch
                %113 = sbr.rel (%p111) target = $region46
              $region43: #{custom-call.65} parent=38 // loop_body
                %v117 = vld [vmem:[%s115] sm:$0xff]
                %118 = vst [vmem:[%s116] sm:$0xff] %v117
              $region44: #{custom-call.65} parent=38 // loop_footer
                %s114 = sadd.s32 1, %s110
              $region45: #{custom-call.65} parent=38 // loop_footer_branch
                %109 = sbr.rel target = $region41
              $region46: #{custom-call.65} parent=38 // loop_exit
                _
            $region39: #{custom-call.65} parent=23 // pred_fallthru
              _
            // Predicated region
            $region47: #{custom-call.65} parent=23 // pred_check
              _
            $region48: #{custom-call.65} parent=23 // pred_check_branch
              %120 = sbr.rel target = $region50
            $region49: #{custom-call.65} parent=23 // pred_region
              _
            $region50: #{custom-call.65} parent=23 // pred_fallthru
              _
          $region24: #{custom-call.65} parent=19 // pred_fallthru
            _
          // Predicated region
          $region25: #{custom-call.65} parent=19 // pred_check
            _
          $region26: #{custom-call.65} parent=19 // pred_check_branch
            %94 = sbr.rel target = $region28
          $region27: #{custom-call.65} parent=19 // pred_region
            %s96 = ssub.s32 256, 1
            loop: start=0, step=1, limit=1
            $region29: #{custom-call.65} parent=27 // loop_pre_header
              _
            $region30: #{custom-call.65} parent=27 // loop_header
              %s98 = sphi 0, %s102
              %p99 = scmp.ge.s32.totalorder %s98, 1
              %s103 = sphi %s88, %s88
              %s104 = sphi %s84, %s84
            $region31: #{custom-call.65} parent=27 // loop_header_branch
              %101 = sbr.rel (%p99) target = $region35
            $region32: #{custom-call.65} parent=27 // loop_body
              %v105 = vld [vmem:[%s103] sm:%s96]
              %106 = vst [vmem:[%s104] sm:%s96] %v105
            $region33: #{custom-call.65} parent=27 // loop_footer
              %s102 = sadd.s32 1, %s98
            $region34: #{custom-call.65} parent=27 // loop_footer_branch
              %97 = sbr.rel target = $region30
            $region35: #{custom-call.65} parent=27 // loop_exit
              _
          $region28: #{custom-call.65} parent=19 // pred_fallthru
            _
        $region20: #{custom-call.65} parent=15 // pred_fallthru
          _
        %121 = vnop
      $region16: #{custom-call.65} parent=5 // pred_fallthru
        _
      %p122 = scmp.le.s32.totalorder 1, %s5
      %p123 = scmp.lt.s32.totalorder %s5, 9
      %p124 = pnand %p122, %p123
      %p125 = pneg %p124
      // Predicated region
      $region51: #{custom-call.65} parent=5 // pred_check
        _
      $region52: #{custom-call.65} parent=5 // pred_check_branch
        %127 = sbr.rel (%p124) target = $region54
      $region53: #{custom-call.65} parent=5 // pred_region
        #allocation3 [shape = 'f32[6,128]{1,0}', space=vmem, size = 0x1000, scoped, tag = 'scratch for Householder reflectors']
        %s128 = ssub.s32 %s5, 1
        %s129 = sand.u32 %s10, 1
        %s130 = sand.u32 %s10, 1
        %s131 = smul.addr %s130, 8
        %s132 = scalar_lea.vmem [#allocation0], %s131
        %s133 = sand.u32 %s10, 1
        %s134 = sand.u32 %s10, 1
        %s135 = smul.addr %s134, 8
        %s136 = scalar_lea.vmem [#allocation0], %s135
        %s137 = sand.u32 %s10, 1
        %s138 = sand.u32 %s10, 1
        %s139 = smul.addr %s138, 8
        %s140 = scalar_lea.vmem [#allocation1], %s139
        %p141 = pneg %p62
        %p142 = pneg %p59
        %s143 = sand.u32 %s49, 1
        %s144 = sand.u32 %s49, 1
        %s145 = smul.addr %s144, 8
        %s146 = scalar_lea.vmem [#allocation2], %s145
        %p147 = scmp.lt.s32.totalorder %s15, 0
        %s148 = ssub.s32 0, %s15
        %s149 = scalar_select %p147, %s148, %s15
        %s150 = sshrl.u32 %s149, 3
        %s151 = ssub.s32 0, %s150
        %s152 = scalar_select %p147, %s151, %s150
        %s153 = sand.u32 %s15, 7
        %s154 = scalar_lea.vmem %s146, %s153 [#allocation2]
        %v155 = vld [vmem:[%s132] sm:$0xff]
        %156 = vst [vmem:[%s140] sm:$0xff] %v155
        %157 = vst [vmem:[%s154] sm:$0x1] 0.0
        loop: start=0, step=1, limit=3
        $region55: #{custom-call.65} parent=53 // loop_pre_header
          _
        $region56: #{custom-call.65} parent=53 // loop_header
          %s159 = sphi 0, %s163
          %p160 = scmp.ge.s32.totalorder %s159, 3
        $region57: #{custom-call.65} parent=53 // loop_header_branch
          %162 = sbr.rel (%p160) target = $region61
        $region58: #{custom-call.65} parent=53 // loop_body
          %v164 = vld [vmem:[%s140] sm:$0xff]
          %v165 = vlaneseq
          %v166 = vshrl.u32 %v165, 7
          %v168 = vstv %s159
          %vm169 = vcmp.gt.s32.totalorder %v166, %v168
          %vm170 = vcmp.lt.s32.totalorder %v166, 6
          %vm171 = vmand %vm169, %vm170
          %v172 = vsel %vm171, %v164, 0.0
          %v173 = vmul.f32 %v172, %v172
          %v174 = vrot.slane %v173, 4
          %v175 = vadd.f32 %v173, %v174
          %v176 = vrot.slane %v175, 2
          %v177 = vadd.f32 %v175, %v176
          %v178 = vrot.slane %v177, 1
          %v179 = vadd.f32 %v177, %v178
          %v180 = vrsqrt.pop %v179
          %v181 = vmul.f32 %v180, %v179
          %v182 = vmul.f32 %v181, %v180
          %v183 = vmul.f32 0.5, %v182
          %v184 = vsub.f32 1.5, %v183
          %v185 = vmul.f32 %v180, %v184
          %v186 = vmul.f32 %v179, %v185
          %vm187 = vcmp.eq.f32.partialorder %v179, inf
          %v188 = vsel %vm187, %v179, %v186
          %vm189 = vcmp.eq.f32.partialorder %v179, 0.0
          %v190 = vand.u32 %v179, 2147483648
          %v191 = vsel %vm189, %v190, %v188
          %vm192 = vcmp.eq.f32.partialorder %v179, 0.0
          %s193 = sshrl.u32 %s159, 3
          %s194 = sand.u32 %s159, 7
          %s195 = smul.addr %s193, 8
          %s196 = sadd.s32 %s194, %s195
          %s197 = scalar_lea.vmem %s140, %s196 [#allocation1]
          %v198 = vld [vmem:[%s197] ss:$0 sm:$0xff]
          %v199 = vand.u32 2147483647, %v198
          %v200 = vmax.f32 %v199, 0.0
          %v201 = vand.u32 2147483647, %v191
          %v202 = vmax.f32 %v200, %v201
          %v203 = vrcp.pop %v202
          %v204 = vmul.f32 %v202, %v203
          %v205 = vsub.f32 1.0, %v204
          %v206 = vmul.f32 %v203, %v205
          %v207 = vadd.f32 %v203, %v206
          %vm208 = vweird.f32 %v202
          %vm209 = vweird.f32 %v203
          %vm210 = vmor %vm208, %vm209
          %v211 = vsel %vm210, %v203, %v207
          %v212 = vand.u32 2147483647, %v202
          %vm213 = vcmp.eq.f32.partialorder %v212, 8.507059e+37
          %v214 = vand.u32 %v202, 2147483648
          %v215 = vor.u32 1.1754944e-38, %v214
          %v216 = vsel %vm213, %v215, %v211
          %v217 = vmul.f32 %v199, %v216
          %v218 = vmul.f32 %v217, %v217
          %v219 = vrcp.pop %v202
          %v220 = vmul.f32 %v202, %v219
          %v221 = vsub.f32 1.0, %v220
          %v222 = vmul.f32 %v219, %v221
          %v223 = vadd.f32 %v219, %v222
          %vm224 = vweird.f32 %v202
          %vm225 = vweird.f32 %v219
          %vm226 = vmor %vm224, %vm225
          %v227 = vsel %vm226, %v219, %v223
          %v228 = vand.u32 2147483647, %v202
          %vm229 = vcmp.eq.f32.partialorder %v228, 8.507059e+37
          %v230 = vand.u32 %v202, 2147483648
          %v231 = vor.u32 1.1754944e-38, %v230
          %v232 = vsel %vm229, %v231, %v227
          %v233 = vmul.f32 0.0, %v232
          %v234 = vmul.f32 %v233, %v233
          %v235 = vadd.f32 %v218, %v234
          %v236 = vrcp.pop %v202
          %v237 = vmul.f32 %v202, %v236
          %v238 = vsub.f32 1.0, %v237
          %v239 = vmul.f32 %v236, %v238
          %v240 = vadd.f32 %v236, %v239
          %vm241 = vweird.f32 %v202
          %vm242 = vweird.f32 %v236
          %vm243 = vmor %vm241, %vm242
          %v244 = vsel %vm243, %v236, %v240
          %v245 = vand.u32 2147483647, %v202
          %vm246 = vcmp.eq.f32.partialorder %v245, 8.507059e+37
          %v247 = vand.u32 %v202, 2147483648
          %v248 = vor.u32 1.1754944e-38, %v247
          %v249 = vsel %vm246, %v248, %v244
          %v250 = vmul.f32 %v201, %v249
          %v251 = vmul.f32 %v250, %v250
          %v252 = vadd.f32 %v235, %v251
          %vm253 = vcmp.eq.f32.partialorder %v202, 0.0
          %v254 = vrsqrt.pop %v252
          %v255 = vmul.f32 %v254, %v252
          %v256 = vmul.f32 %v255, %v254
          %v257 = vmul.f32 0.5, %v256
          %v258 = vsub.f32 1.5, %v257
          %v259 = vmul.f32 %v254, %v258
          %v260 = vmul.f32 %v252, %v259
          %vm261 = vcmp.eq.f32.partialorder %v252, inf
          %v262 = vsel %vm261, %v252, %v260
          %vm263 = vcmp.eq.f32.partialorder %v252, 0.0
          %v264 = vand.u32 %v252, 2147483648
          %v265 = vsel %vm263, %v264, %v262
          %v266 = vmul.f32 %v202, %v265
          %v267 = vsel %vm253, 0.0, %v266
          %vm268 = vcmp.lt.f32.partialorder %v198, 0.0
          %v269 = vxor.u32 %v267, 2147483648
          %v270 = vsel %vm268, %v267, %v269
          %v271 = vsub.f32 %v270, %v198
          %v272 = vrcp.pop %v270
          %v273 = vmul.f32 %v270, %v272
          %v274 = vsub.f32 1.0, %v273
          %v275 = vmul.f32 %v272, %v274
          %v276 = vadd.f32 %v272, %v275
          %vm277 = vweird.f32 %v270
          %vm278 = vweird.f32 %v272
          %vm279 = vmor %vm277, %vm278
          %v280 = vsel %vm279, %v272, %v276
          %v281 = vand.u32 2147483647, %v270
          %vm282 = vcmp.eq.f32.partialorder %v281, 8.507059e+37
          %v283 = vand.u32 %v270, 2147483648
          %v284 = vor.u32 1.1754944e-38, %v283
          %v285 = vsel %vm282, %v284, %v280
          %v286 = vmul.f32 %v271, %v285
          %v287 = vsel %vm192, %v198, %v270
          %v288 = vsel %vm192, 0.0, %v286
          %v289 = vsub.f32 %v198, %v287
          %s290 = smov %s140
          %v291 = vlaneseq
          %v292 = vshrl.u32 %v291, 7
          %v293 = vmov %v292
          %v294 = vld [vmem:[%s290] sm:$0xff]
          %v296 = vstv %s159
          %vm297 = vcmp.gt.s32.totalorder %v293, %v296
          %vm298 = vcmp.lt.s32.totalorder %v293, 6
          %vm299 = vmand %vm297, %vm298
          %v300 = vsel %vm299, %v294, 0.0
          %v301 = vrcp.pop %v289
          %v302 = vmul.f32 %v289, %v301
          %v303 = vsub.f32 1.0, %v302
          %v304 = vmul.f32 %v301, %v303
          %v305 = vadd.f32 %v301, %v304
          %vm306 = vweird.f32 %v289
          %vm307 = vweird.f32 %v301
          %vm308 = vmor %vm306, %vm307
          %v309 = vsel %vm308, %v301, %v305
          %v310 = vand.u32 2147483647, %v289
          %vm311 = vcmp.eq.f32.partialorder %v310, 8.507059e+37
          %v312 = vand.u32 %v289, 2147483648
          %v313 = vor.u32 1.1754944e-38, %v312
          %v314 = vsel %vm311, %v313, %v309
          %v315 = vmul.f32 %v300, %v314
          %v316 = vsel %vm192, 0.0, %v315
          %v317 = vstv %s159
          %v318 = vlaneseq
          %v319 = vand.u32 %v318, 127
          %vm320 = vcmp.eq.s32.totalorder %v319, %v317
          %v321 = vsel %vm320, %v316, 0.0
          %322 = vadd.xlane.f32.xlu0 %v321
          %v323 = vpop.xlane.xlu0 %322
          %324 = vst [vmem:[#allocation3] sm:$0xff] %v323
          %s325 = scalar_lea.vmem [#allocation3], %s159
          %326 = vst [vmem:[%s325] sm:$0x1] 1.0
          %v327 = vstv %s159
          %v328 = vlaneseq
          %v329 = vand.u32 %v328, 127
          %vm330 = vcmp.eq.s32.totalorder %v329, %v327
          %v331 = vsel %vm330, %v288, 0.0
          %332 = vadd.xlane.f32.xlu0 %v331
          %v333 = vpop.xlane.xlu0 %332
          %v334 = vstv %s159
          %v335 = vlaneseq
          %v336 = vand.u32 %v335, 127
          %vm337 = vcmp.eq.s32.totalorder %v336, %v334
          %v338 = vld [vmem:[%s154] ss:$0 sm:$0xff]
          %v339 = vsel %vm337, %v333, %v338
          %340 = vst [vmem:[%s154] sm:$0x1] %v339
          %s341 = smov %s140
          %s342 = smov [#allocation3]
          %v343 = vlaneseq
          %v344 = vshrl.u32 %v343, 7
          %v345 = vmov %v344
          %v347 = vld [vmem:[%s342] sm:$0xff]
          %v348 = vld [vmem:[%s341] sm:$0xff]
          %v349 = vmul.f32 %v347, %v348
          %vm350 = vcmp.lt.s32.totalorder %v345, 6
          %v351 = vsel %vm350, %v349, 0.0
          %v352 = vrot.slane %v351, 4
          %v353 = vadd.f32 %v351, %v352
          %v354 = vrot.slane %v353, 2
          %v355 = vadd.f32 %v353, %v354
          %v356 = vrot.slane %v355, 1
          %v357 = vadd.f32 %v355, %v356
          %s358 = smov %s341
          %s359 = smov %s342
          %v360 = vlaneseq
          %v361 = vshrl.u32 %v360, 7
          %v362 = vmov %v361
          %v363 = vmul.f32 %v357, %v333
          %v365 = vlaneseq
          %v366 = vand.u32 %v365, 127
          %v367 = vld [vmem:[%s359] sm:$0xff]
          %v368 = vmul.f32 %v367, %v363
          %v369 = vld [vmem:[%s358] sm:$0xff]
          %v370 = vstv %s159
          %vm371 = vcmp.gt.s32.totalorder %v366, %v370
          %v372 = vsub.f32 %v369, %v368
          %v373 = vsel %vm371, %v372, %v369
          %v374 = vstv %s159
          %v375 = vlaneseq
          %v376 = vand.u32 %v375, 127
          %vm377 = vcmp.eq.s32.totalorder %v376, %v374
          %v378 = vstv %s159
          %vm379 = vcmp.ge.s32.totalorder %v362, %v378
          %vm380 = vmand %vm377, %vm379
          %v381 = vsel %vm380, %v367, %v373
          %382 = vst [vmem:[%s358] sm:$0xff] %v381
          %s383 = scalar_lea.vmem %s358, %s159
          %v384 = vld [vmem:[%s383] ss:$0 sm:$0xff]
          %v385 = vstv %s159
          %v386 = vlaneseq
          %v387 = vand.u32 %v386, 127
          %vm388 = vcmp.eq.s32.totalorder %v387, %v385
          %v389 = vsel %vm388, %v287, %v384
          %390 = vst [vmem:[%s383] sm:$0x1] %v389
        $region59: #{custom-call.65} parent=53 // loop_footer
          %s163 = sadd.s32 1, %s159
        $region60: #{custom-call.65} parent=53 // loop_footer_branch
          %158 = sbr.rel target = $region56
        $region61: #{custom-call.65} parent=53 // loop_exit
          _
        %s391 = sand.u32 %s10, 1
        %s392 = sand.u32 %s10, 1
        %s393 = smul.addr %s392, 8
        %s394 = scalar_lea.vmem [#allocation1], %s393
        %s395 = sand.u32 %s49, 1
        %s396 = sand.u32 %s49, 1
        %s397 = smul.addr %s396, 8
        %s398 = scalar_lea.vmem [#allocation2], %s397
        %s399 = sadd.s32 %s17, %s16
        %s400 = sadd.s32 %s399, %s15
        %s401 = smul.addr %s400, 8
        %s402 = scalar_lea.vmem %s1, %s401
        // Predicated region
        $region62: #{custom-call.65} parent=53 // pred_check
          _
        $region63: #{custom-call.65} parent=53 // pred_check_branch
          %404 = sbr.rel (0) target = $region65
        $region64: #{custom-call.65} parent=53 // pred_region
          // Predicated region
          $region66: #{custom-call.65} parent=64 // pred_check
            _
          $region67: #{custom-call.65} parent=64 // pred_check_branch
            %406 = sbr.rel (0) target = $region69
          $region68: #{custom-call.65} parent=64 // pred_region
            // Predicated region
            $region81: #{custom-call.65} parent=68 // pred_check
              _
            $region82: #{custom-call.65} parent=68 // pred_check_branch
              %422 = sbr.rel (0) target = $region84
            $region83: #{custom-call.65} parent=68 // pred_region
              loop: start=0, step=1, limit=1
              $region85: #{custom-call.65} parent=83 // loop_pre_header
                _
              $region86: #{custom-call.65} parent=83 // loop_header
                %s424 = sphi 0, %s428
                %p425 = scmp.ge.s32.totalorder %s424, 1
                %s429 = sphi %s394, %s394
                %s430 = sphi %s402, %s402
              $region87: #{custom-call.65} parent=83 // loop_header_branch
                %427 = sbr.rel (%p425) target = $region91
              $region88: #{custom-call.65} parent=83 // loop_body
                %v431 = vld [vmem:[%s429] sm:$0xff]
                %432 = vst [vmem:[%s430] sm:$0xff] %v431
              $region89: #{custom-call.65} parent=83 // loop_footer
                %s428 = sadd.s32 1, %s424
              $region90: #{custom-call.65} parent=83 // loop_footer_branch
                %423 = sbr.rel target = $region86
              $region91: #{custom-call.65} parent=83 // loop_exit
                _
            $region84: #{custom-call.65} parent=68 // pred_fallthru
              _
            // Predicated region
            $region92: #{custom-call.65} parent=68 // pred_check
              _
            $region93: #{custom-call.65} parent=68 // pred_check_branch
              %434 = sbr.rel target = $region95
            $region94: #{custom-call.65} parent=68 // pred_region
              _
            $region95: #{custom-call.65} parent=68 // pred_fallthru
              _
          $region69: #{custom-call.65} parent=64 // pred_fallthru
            _
          // Predicated region
          $region70: #{custom-call.65} parent=64 // pred_check
            _
          $region71: #{custom-call.65} parent=64 // pred_check_branch
            %408 = sbr.rel target = $region73
          $region72: #{custom-call.65} parent=64 // pred_region
            %s410 = ssub.s32 256, 1
            loop: start=0, step=1, limit=1
            $region74: #{custom-call.65} parent=72 // loop_pre_header
              _
            $region75: #{custom-call.65} parent=72 // loop_header
              %s412 = sphi 0, %s416
              %p413 = scmp.ge.s32.totalorder %s412, 1
              %s417 = sphi %s394, %s394
              %s418 = sphi %s402, %s402
            $region76: #{custom-call.65} parent=72 // loop_header_branch
              %415 = sbr.rel (%p413) target = $region80
            $region77: #{custom-call.65} parent=72 // loop_body
              %v419 = vld [vmem:[%s417] sm:%s410]
              %420 = vst [vmem:[%s418] sm:%s410] %v419
            $region78: #{custom-call.65} parent=72 // loop_footer
              %s416 = sadd.s32 1, %s412
            $region79: #{custom-call.65} parent=72 // loop_footer_branch
              %411 = sbr.rel target = $region75
            $region80: #{custom-call.65} parent=72 // loop_exit
              _
          $region73: #{custom-call.65} parent=64 // pred_fallthru
            _
        $region65: #{custom-call.65} parent=53 // pred_fallthru
          _
        %435 = vnop
        // Predicated region
        $region96: #{custom-call.65} parent=53 // pred_check
          %p436 = pneg %p59
        $region97: #{custom-call.65} parent=53 // pred_check_branch
          %438 = sbr.rel (%p436) target = $region99
        $region98: #{custom-call.65} parent=53 // pred_region
          %p439 = scmp.lt.s32.totalorder %s15, 0
          %s440 = ssub.s32 0, %s15
          %s441 = scalar_select %p439, %s440, %s15
          %s442 = sshrl.u32 %s441, 3
          %s443 = ssub.s32 0, %s442
          %s444 = scalar_select %p439, %s443, %s442
          %s445 = smul.addr %s444, 8
          %s446 = scalar_lea.vmem %s2, %s445
          // Predicated region
          $region100: #{custom-call.65} parent=98 // pred_check
            _
          $region101: #{custom-call.65} parent=98 // pred_check_branch
            %448 = sbr.rel (0) target = $region103
          $region102: #{custom-call.65} parent=98 // pred_region
            // Predicated region
            $region104: #{custom-call.65} parent=102 // pred_check
              _
            $region105: #{custom-call.65} parent=102 // pred_check_branch
              %450 = sbr.rel (0) target = $region107
            $region106: #{custom-call.65} parent=102 // pred_region
              // Predicated region
              $region119: #{custom-call.65} parent=106 // pred_check
                _
              $region120: #{custom-call.65} parent=106 // pred_check_branch
                %466 = sbr.rel (0) target = $region122
              $region121: #{custom-call.65} parent=106 // pred_region
                loop: start=0, step=1, limit=1
                $region123: #{custom-call.65} parent=121 // loop_pre_header
                  _
                $region124: #{custom-call.65} parent=121 // loop_header
                  %s468 = sphi 0, %s472
                  %p469 = scmp.ge.s32.totalorder %s468, 1
                  %s473 = sphi %s398, %s398
                  %s474 = sphi %s446, %s446
                $region125: #{custom-call.65} parent=121 // loop_header_branch
                  %471 = sbr.rel (%p469) target = $region129
                $region126: #{custom-call.65} parent=121 // loop_body
                  %v475 = vld [vmem:[%s473] sm:$0xff]
                  %476 = vst [vmem:[%s474] sm:$0xff] %v475
                $region127: #{custom-call.65} parent=121 // loop_footer
                  %s472 = sadd.s32 1, %s468
                $region128: #{custom-call.65} parent=121 // loop_footer_branch
                  %467 = sbr.rel target = $region124
                $region129: #{custom-call.65} parent=121 // loop_exit
                  _
              $region122: #{custom-call.65} parent=106 // pred_fallthru
                _
              // Predicated region
              $region130: #{custom-call.65} parent=106 // pred_check
                _
              $region131: #{custom-call.65} parent=106 // pred_check_branch
                %478 = sbr.rel target = $region133
              $region132: #{custom-call.65} parent=106 // pred_region
                _
              $region133: #{custom-call.65} parent=106 // pred_fallthru
                _
            $region107: #{custom-call.65} parent=102 // pred_fallthru
              _
            // Predicated region
            $region108: #{custom-call.65} parent=102 // pred_check
              _
            $region109: #{custom-call.65} parent=102 // pred_check_branch
              %452 = sbr.rel target = $region111
            $region110: #{custom-call.65} parent=102 // pred_region
              %s454 = ssub.s32 256, 1
              loop: start=0, step=1, limit=1
              $region112: #{custom-call.65} parent=110 // loop_pre_header
                _
              $region113: #{custom-call.65} parent=110 // loop_header
                %s456 = sphi 0, %s460
                %p457 = scmp.ge.s32.totalorder %s456, 1
                %s461 = sphi %s398, %s398
                %s462 = sphi %s446, %s446
              $region114: #{custom-call.65} parent=110 // loop_header_branch
                %459 = sbr.rel (%p457) target = $region118
              $region115: #{custom-call.65} parent=110 // loop_body
                %v463 = vld [vmem:[%s461] sm:%s454]
                %464 = vst [vmem:[%s462] sm:%s454] %v463
              $region116: #{custom-call.65} parent=110 // loop_footer
                %s460 = sadd.s32 1, %s456
              $region117: #{custom-call.65} parent=110 // loop_footer_branch
                %455 = sbr.rel target = $region113
              $region118: #{custom-call.65} parent=110 // loop_exit
                _
            $region111: #{custom-call.65} parent=102 // pred_fallthru
              _
          $region103: #{custom-call.65} parent=98 // pred_fallthru
            _
          %479 = vnop
        $region99: #{custom-call.65} parent=53 // pred_fallthru
          _
      $region54: #{custom-call.65} parent=5 // pred_fallthru
        _
      %p480 = scmp.le.s32.totalorder 2, %s5
      // Predicated region
      $region134: #{custom-call.65} parent=5 // pred_check
        %p481 = pneg %p480
      $region135: #{custom-call.65} parent=5 // pred_check_branch
        %483 = sbr.rel (%p481) target = $region137
      $region136: #{custom-call.65} parent=5 // pred_region
        %s484 = ssub.s32 %s5, 2
        %s485 = sand.u32 %s11, 1
        %s486 = sand.u32 %s11, 1
        %s487 = smul.addr %s486, 8
        %s488 = scalar_lea.vmem [#allocation1], %s487
        // Predicated region
        $region138: #{custom-call.65} parent=136 // pred_check
          %p489 = pneg %p65
        $region139: #{custom-call.65} parent=136 // pred_check_branch
          %491 = sbr.rel (%p489) target = $region141
        $region140: #{custom-call.65} parent=136 // pred_region
          %s492 = sand.u32 %s50, 1
          %s493 = sand.u32 %s50, 1
          %s494 = smul.addr %s493, 8
          %s495 = scalar_lea.vmem [#allocation2], %s494
        $region141: #{custom-call.65} parent=136 // pred_fallthru
          _
      $region137: #{custom-call.65} parent=5 // pred_fallthru
        _
    $region6: #{custom-call.65} parent=1 // loop_footer
      %s9 = sadd.s32 1, %s5
    $region7: #{custom-call.65} parent=1 // loop_footer_branch
      %4 = sbr.rel target = $region3
    $region8: #{custom-call.65} parent=1 // loop_exit
      _

// kernel: custom-call.66
$region0: #{custom-call.66}
  %s0 = inlined_call_operand.vmem [shape: f32[8,3,3], index: 0, kind: input, shape index: {}]
  %s1 = inlined_call_operand.vmem [shape: f32[8,3,3], index: 1, kind: output, shape index: {}]
  $region1: #{custom-call.66} parent=0
    #allocation0 [shape = 'u8[4096]{0}', space=vmem, size = 0x1000, scoped, tag = 'operand span for operand 0']
    #allocation1 [shape = 'u8[4096]{0}', space=vmem, size = 0x1000, scoped, tag = 'packed  for operand 0']
    #allocation2 [shape = 'u8[4096]{0}', space=vmem, size = 0x1000, scoped, tag = 'operand span for operand 1']
    #allocation3 [shape = 'u8[4096]{0}', space=vmem, size = 0x1000, scoped, tag = 'packed  for operand 1']
    loop: start=0, step=1, limit=10
    $region2: #{custom-call.66} parent=1 // loop_pre_header
      _
    $region3: #{custom-call.66} parent=1 // loop_header
      %s3 = sphi 0, %s7
      %p4 = scmp.ge.s32.totalorder %s3, 10
    $region4: #{custom-call.66} parent=1 // loop_header_branch
      %6 = sbr.rel (%p4) target = $region8
    $region5: #{custom-call.66} parent=1 // loop_body
      %s8 = ssub.s32 %s3, 1
      %s9 = ssub.s32 %s3, 2
      %s10 = sadd.s32 %s3, 1
      %p11 = scmp.le.s32.totalorder 1, %s3
      %p12 = scmp.lt.s32.totalorder %s3, 9
      %p13 = pnand %p11, %p12
      %p14 = pneg %p13
      // Predicated region
      $region9: #{custom-call.66} parent=5 // pred_check
        _
      $region10: #{custom-call.66} parent=5 // pred_check_branch
        %16 = sbr.rel (%p13) target = $region12
      $region11: #{custom-call.66} parent=5 // pred_region
        %s17 = ssub.s32 %s3, 1
      $region12: #{custom-call.66} parent=5 // pred_fallthru
        _
      %p18 = scmp.lt.s32.totalorder %s3, 8
      // Predicated region
      $region13: #{custom-call.66} parent=5 // pred_check
        %p19 = pneg %p18
      $region14: #{custom-call.66} parent=5 // pred_check_branch
        %21 = sbr.rel (%p19) target = $region16
      $region15: #{custom-call.66} parent=5 // pred_region
        %s22 = sand.u32 %s3, 1
        %s23 = sand.u32 %s3, 1
        %s24 = smul.addr %s23, 4
        %s25 = scalar_lea.vmem [#allocation1], %s24
        %s26 = smul.addr %s3, 4
        %s27 = scalar_lea.vmem %s0, %s26
        // Predicated region
        $region17: #{custom-call.66} parent=15 // pred_check
          _
        $region18: #{custom-call.66} parent=15 // pred_check_branch
          %29 = sbr.rel (0) target = $region20
        $region19: #{custom-call.66} parent=15 // pred_region
          // Predicated region
          $region21: #{custom-call.66} parent=19 // pred_check
            _
          $region22: #{custom-call.66} parent=19 // pred_check_branch
            %31 = sbr.rel target = $region24
          $region23: #{custom-call.66} parent=19 // pred_region
            // Predicated region
            $region36: #{custom-call.66} parent=23 // pred_check
              _
            $region37: #{custom-call.66} parent=23 // pred_check_branch
              %47 = sbr.rel (0) target = $region39
            $region38: #{custom-call.66} parent=23 // pred_region
              %s49 = ssub.s32 16, 1
              loop: start=0, step=1, limit=1
              $region40: #{custom-call.66} parent=38 // loop_pre_header
                _
              $region41: #{custom-call.66} parent=38 // loop_header
                %s51 = sphi 0, %s55
                %p52 = scmp.ge.s32.totalorder %s51, 1
                %s56 = sphi %s27, %s27
                %s57 = sphi %s25, %s25
              $region42: #{custom-call.66} parent=38 // loop_header_branch
                %54 = sbr.rel (%p52) target = $region46
              $region43: #{custom-call.66} parent=38 // loop_body
                %v58 = vld [vmem:[%s56] sm:%s49]
                %59 = vst [vmem:[%s57] sm:%s49] %v58
              $region44: #{custom-call.66} parent=38 // loop_footer
                %s55 = sadd.s32 1, %s51
              $region45: #{custom-call.66} parent=38 // loop_footer_branch
                %50 = sbr.rel target = $region41
              $region46: #{custom-call.66} parent=38 // loop_exit
                _
            $region39: #{custom-call.66} parent=23 // pred_fallthru
              _
          $region24: #{custom-call.66} parent=19 // pred_fallthru
            _
          // Predicated region
          $region25: #{custom-call.66} parent=19 // pred_check
            _
          $region26: #{custom-call.66} parent=19 // pred_check_branch
            %33 = sbr.rel (0) target = $region28
          $region27: #{custom-call.66} parent=19 // pred_region
            %s35 = ssub.s32 16, 1
            loop: start=0, step=1, limit=1
            $region29: #{custom-call.66} parent=27 // loop_pre_header
              _
            $region30: #{custom-call.66} parent=27 // loop_header
              %s37 = sphi 0, %s41
              %p38 = scmp.ge.s32.totalorder %s37, 1
              %s42 = sphi %s27, %s27
              %s43 = sphi %s25, %s25
            $region31: #{custom-call.66} parent=27 // loop_header_branch
              %40 = sbr.rel (%p38) target = $region35
            $region32: #{custom-call.66} parent=27 // loop_body
              %v44 = vld [vmem:[%s42] sm:%s35]
              %45 = vst [vmem:[%s43] sm:%s35] %v44
            $region33: #{custom-call.66} parent=27 // loop_footer
              %s41 = sadd.s32 1, %s37
            $region34: #{custom-call.66} parent=27 // loop_footer_branch
              %36 = sbr.rel target = $region30
            $region35: #{custom-call.66} parent=27 // loop_exit
              _
          $region28: #{custom-call.66} parent=19 // pred_fallthru
            _
        $region20: #{custom-call.66} parent=15 // pred_fallthru
          _
        %60 = vnop
      $region16: #{custom-call.66} parent=5 // pred_fallthru
        _
      %p61 = scmp.le.s32.totalorder 1, %s3
      %p62 = scmp.lt.s32.totalorder %s3, 9
      %p63 = pnand %p61, %p62
      %p64 = pneg %p63
      // Predicated region
      $region47: #{custom-call.66} parent=5 // pred_check
        _
      $region48: #{custom-call.66} parent=5 // pred_check_branch
        %66 = sbr.rel (%p63) target = $region50
      $region49: #{custom-call.66} parent=5 // pred_region
        %s67 = ssub.s32 %s3, 1
        %s68 = sand.u32 %s8, 1
        %s69 = sand.u32 %s8, 1
        %s70 = smul.addr %s69, 4
        %s71 = scalar_lea.vmem [#allocation1], %s70
        %s72 = sand.u32 %s8, 1
        %s73 = sand.u32 %s8, 1
        %s74 = smul.addr %s73, 4
        %s75 = scalar_lea.vmem [#allocation1], %s74
        %s76 = sand.u32 %s8, 1
        %s77 = sand.u32 %s8, 1
        %s78 = smul.addr %s77, 4
        %s79 = scalar_lea.vmem [#allocation3], %s78
        %s81 = ssub.s32 16, 1
        %v82 = vld [vmem:[%s75] sm:%s81]
        %83 = vst [vmem:[#allocation0] sm:%s81] %v82
        %v84 = vlaneseq
        %v85 = vand.u32 %v84, 127
        %v86 = vlaneseq
        %v87 = vshrl.u32 %v86, 7
        %vm89 = vcmp.eq.s32.totalorder %v85, %v87
        %v90 = vld [vmem:[#allocation0] sm:$0xff]
        %v91 = vlaneseq
        %v92 = vand.u32 %v91, 127
        %vm93 = vcmp.eq.s32.totalorder %v92, 0
        %v94 = vsel %vm93, %v90, 1.0
        %v95 = vsel %vm89, %v94, 0.0
        %s96 = scalar_lea.vmem [#allocation0], 1
        %v97 = vld [vmem:[%s96] ss:$0 sm:$0xff]
        %vm98 = vcmask 23552
        %v99 = vsel %vm98, %v97, 0.0
        %v100 = vlaneseq
        %v101 = vand.u32 %v100, 127
        %vm102 = vcmp.eq.s32.totalorder %v101, 1
        %v103 = vmul.f32 %v99, %v95
        %104 = vadd.xlane.f32.xlu0 %v103
        %v105 = vpop.xlane.xlu0 %104
        %v106 = vsel %vm102, %v105, %v95
        %s107 = scalar_lea.vmem [#allocation0], 2
        %v108 = vld [vmem:[%s107] ss:$0 sm:$0xff]
        %vm109 = vcmask 23552
        %v110 = vsel %vm109, %v108, 0.0
        %v111 = vlaneseq
        %v112 = vand.u32 %v111, 127
        %vm113 = vcmp.eq.s32.totalorder %v112, 2
        %v114 = vmul.f32 %v110, %v106
        %115 = vadd.xlane.f32.xlu0 %v114
        %v116 = vpop.xlane.xlu0 %115
        %v117 = vsel %vm113, %v116, %v106
        %118 = vst [vmem:[#allocation2] sm:$0xff] %v117
        %s120 = ssub.s32 16, 1
        %v121 = vld [vmem:[#allocation2] sm:%s120]
        %s123 = ssub.s32 16, 1
        %124 = vst [vmem:[%s79] sm:%s123] %v121
        %s125 = sand.u32 %s8, 1
        %s126 = sand.u32 %s8, 1
        %s127 = smul.addr %s126, 4
        %s128 = scalar_lea.vmem [#allocation3], %s127
        %s129 = smul.addr %s8, 4
        %s130 = scalar_lea.vmem %s1, %s129
        // Predicated region
        $region51: #{custom-call.66} parent=49 // pred_check
          _
        $region52: #{custom-call.66} parent=49 // pred_check_branch
          %132 = sbr.rel (0) target = $region54
        $region53: #{custom-call.66} parent=49 // pred_region
          // Predicated region
          $region55: #{custom-call.66} parent=53 // pred_check
            _
          $region56: #{custom-call.66} parent=53 // pred_check_branch
            %134 = sbr.rel target = $region58
          $region57: #{custom-call.66} parent=53 // pred_region
            // Predicated region
            $region70: #{custom-call.66} parent=57 // pred_check
              _
            $region71: #{custom-call.66} parent=57 // pred_check_branch
              %150 = sbr.rel (0) target = $region73
            $region72: #{custom-call.66} parent=57 // pred_region
              %s152 = ssub.s32 16, 1
              loop: start=0, step=1, limit=1
              $region74: #{custom-call.66} parent=72 // loop_pre_header
                _
              $region75: #{custom-call.66} parent=72 // loop_header
                %s154 = sphi 0, %s158
                %p155 = scmp.ge.s32.totalorder %s154, 1
                %s159 = sphi %s128, %s128
                %s160 = sphi %s130, %s130
              $region76: #{custom-call.66} parent=72 // loop_header_branch
                %157 = sbr.rel (%p155) target = $region80
              $region77: #{custom-call.66} parent=72 // loop_body
                %v161 = vld [vmem:[%s159] sm:%s152]
                %162 = vst [vmem:[%s160] sm:%s152] %v161
              $region78: #{custom-call.66} parent=72 // loop_footer
                %s158 = sadd.s32 1, %s154
              $region79: #{custom-call.66} parent=72 // loop_footer_branch
                %153 = sbr.rel target = $region75
              $region80: #{custom-call.66} parent=72 // loop_exit
                _
            $region73: #{custom-call.66} parent=57 // pred_fallthru
              _
          $region58: #{custom-call.66} parent=53 // pred_fallthru
            _
          // Predicated region
          $region59: #{custom-call.66} parent=53 // pred_check
            _
          $region60: #{custom-call.66} parent=53 // pred_check_branch
            %136 = sbr.rel (0) target = $region62
          $region61: #{custom-call.66} parent=53 // pred_region
            %s138 = ssub.s32 16, 1
            loop: start=0, step=1, limit=1
            $region63: #{custom-call.66} parent=61 // loop_pre_header
              _
            $region64: #{custom-call.66} parent=61 // loop_header
              %s140 = sphi 0, %s144
              %p141 = scmp.ge.s32.totalorder %s140, 1
              %s145 = sphi %s128, %s128
              %s146 = sphi %s130, %s130
            $region65: #{custom-call.66} parent=61 // loop_header_branch
              %143 = sbr.rel (%p141) target = $region69
            $region66: #{custom-call.66} parent=61 // loop_body
              %v147 = vld [vmem:[%s145] sm:%s138]
              %148 = vst [vmem:[%s146] sm:%s138] %v147
            $region67: #{custom-call.66} parent=61 // loop_footer
              %s144 = sadd.s32 1, %s140
            $region68: #{custom-call.66} parent=61 // loop_footer_branch
              %139 = sbr.rel target = $region64
            $region69: #{custom-call.66} parent=61 // loop_exit
              _
          $region62: #{custom-call.66} parent=53 // pred_fallthru
            _
        $region54: #{custom-call.66} parent=49 // pred_fallthru
          _
        %163 = vnop
      $region50: #{custom-call.66} parent=5 // pred_fallthru
        _
      %p164 = scmp.le.s32.totalorder 2, %s3
      // Predicated region
      $region81: #{custom-call.66} parent=5 // pred_check
        %p165 = pneg %p164
      $region82: #{custom-call.66} parent=5 // pred_check_branch
        %167 = sbr.rel (%p165) target = $region84
      $region83: #{custom-call.66} parent=5 // pred_region
        %s168 = ssub.s32 %s3, 2
        %s169 = sand.u32 %s9, 1
        %s170 = sand.u32 %s9, 1
        %s171 = smul.addr %s170, 4
        %s172 = scalar_lea.vmem [#allocation3], %s171
      $region84: #{custom-call.66} parent=5 // pred_fallthru
        _
    $region6: #{custom-call.66} parent=1 // loop_footer
      %s7 = sadd.s32 1, %s3
    $region7: #{custom-call.66} parent=1 // loop_footer_branch
      %2 = sbr.rel target = $region3
    $region8: #{custom-call.66} parent=1 // loop_exit
      _

// kernel: custom-call.58
$region0: #{custom-call.58}
  %s0 = inlined_call_operand.hbm [shape: pred[8], index: 0, kind: output, shape index: {}]

// kernel: custom-call.63
$region0: #{custom-call.63}
  %s0 = inlined_call_operand.vmem [shape: f32[8,3,3], index: 0, kind: input, shape index: {}]
  %s1 = inlined_call_operand.vmem [shape: f32[8,3,3], index: 1, kind: output, shape index: {}]
  $region1: #{custom-call.63} parent=0
    #allocation0 [shape = 'u8[4096]{0}', space=vmem, size = 0x1000, scoped, tag = 'operand span for operand 0']
    #allocation1 [shape = 'u8[4096]{0}', space=vmem, size = 0x1000, scoped, tag = 'packed  for operand 0']
    #allocation2 [shape = 'u8[4096]{0}', space=vmem, size = 0x1000, scoped, tag = 'operand span for operand 1']
    #allocation3 [shape = 'u8[4096]{0}', space=vmem, size = 0x1000, scoped, tag = 'packed  for operand 1']
    loop: start=0, step=1, limit=10
    $region2: #{custom-call.63} parent=1 // loop_pre_header
      _
    $region3: #{custom-call.63} parent=1 // loop_header
      %s3 = sphi 0, %s7
      %p4 = scmp.ge.s32.totalorder %s3, 10
      %s10 = sphi 0, %s29
      %s11 = sphi 0, %s25
      %s12 = sphi 0, %s21
      %s13 = sphi 0, %s10
      %s14 = sphi 0, %s11
      %s15 = sphi 0, %s12
      %s16 = sphi 0, %s13
      %s17 = sphi 0, %s14
      %s18 = sphi 0, %s15
    $region4: #{custom-call.63} parent=1 // loop_header_branch
      %6 = sbr.rel (%p4) target = $region8
    $region5: #{custom-call.63} parent=1 // loop_body
      %s8 = ssub.s32 %s3, 1
      %s9 = ssub.s32 %s3, 2
      %s19 = sadd.s32 1, %s12
      %p20 = scmp.ge.s32.totalorder %s19, 1
      %s21 = scalar_select %p20, 0, %s19
      %s22 = sadd.s32 1, %s11
      %s23 = scalar_select %p20, %s22, %s11
      %p24 = scmp.ge.s32.totalorder %s23, 1
      %s25 = scalar_select %p24, 0, %s23
      %s26 = sadd.s32 1, %s10
      %s27 = scalar_select %p24, %s26, %s10
      %p28 = scmp.ge.s32.totalorder %s27, 8
      %s29 = scalar_select %p28, 0, %s27
      %p30 = scmp.le.s32.totalorder 1, %s3
      %p31 = scmp.lt.s32.totalorder %s3, 9
      %p32 = pnand %p30, %p31
      %p33 = pneg %p32
      // Predicated region
      $region9: #{custom-call.63} parent=5 // pred_check
        _
      $region10: #{custom-call.63} parent=5 // pred_check_branch
        %35 = sbr.rel (%p32) target = $region12
      $region11: #{custom-call.63} parent=5 // pred_region
        %s36 = ssub.s32 %s3, 1
      $region12: #{custom-call.63} parent=5 // pred_fallthru
        _
      %p37 = scmp.lt.s32.totalorder %s3, 8
      // Predicated region
      $region13: #{custom-call.63} parent=5 // pred_check
        %p38 = pneg %p37
      $region14: #{custom-call.63} parent=5 // pred_check_branch
        %40 = sbr.rel (%p38) target = $region16
      $region15: #{custom-call.63} parent=5 // pred_region
        %s41 = sand.u32 %s3, 1
        %s42 = sand.u32 %s3, 1
        %s43 = smul.addr %s42, 4
        %s44 = scalar_lea.vmem [#allocation1], %s43
        %s45 = sadd.s32 %s12, %s11
        %s46 = sadd.s32 %s45, %s10
        %s47 = smul.addr %s46, 4
        %s48 = scalar_lea.vmem %s0, %s47
        // Predicated region
        $region17: #{custom-call.63} parent=15 // pred_check
          _
        $region18: #{custom-call.63} parent=15 // pred_check_branch
          %50 = sbr.rel (0) target = $region20
        $region19: #{custom-call.63} parent=15 // pred_region
          // Predicated region
          $region21: #{custom-call.63} parent=19 // pred_check
            _
          $region22: #{custom-call.63} parent=19 // pred_check_branch
            %52 = sbr.rel target = $region24
          $region23: #{custom-call.63} parent=19 // pred_region
            // Predicated region
            $region36: #{custom-call.63} parent=23 // pred_check
              _
            $region37: #{custom-call.63} parent=23 // pred_check_branch
              %68 = sbr.rel (0) target = $region39
            $region38: #{custom-call.63} parent=23 // pred_region
              %s70 = ssub.s32 16, 1
              loop: start=0, step=1, limit=1
              $region40: #{custom-call.63} parent=38 // loop_pre_header
                _
              $region41: #{custom-call.63} parent=38 // loop_header
                %s72 = sphi 0, %s76
                %p73 = scmp.ge.s32.totalorder %s72, 1
                %s77 = sphi %s48, %s48
                %s78 = sphi %s44, %s44
              $region42: #{custom-call.63} parent=38 // loop_header_branch
                %75 = sbr.rel (%p73) target = $region46
              $region43: #{custom-call.63} parent=38 // loop_body
                %v79 = vld [vmem:[%s77] sm:%s70]
                %80 = vst [vmem:[%s78] sm:%s70] %v79
              $region44: #{custom-call.63} parent=38 // loop_footer
                %s76 = sadd.s32 1, %s72
              $region45: #{custom-call.63} parent=38 // loop_footer_branch
                %71 = sbr.rel target = $region41
              $region46: #{custom-call.63} parent=38 // loop_exit
                _
            $region39: #{custom-call.63} parent=23 // pred_fallthru
              _
          $region24: #{custom-call.63} parent=19 // pred_fallthru
            _
          // Predicated region
          $region25: #{custom-call.63} parent=19 // pred_check
            _
          $region26: #{custom-call.63} parent=19 // pred_check_branch
            %54 = sbr.rel (0) target = $region28
          $region27: #{custom-call.63} parent=19 // pred_region
            %s56 = ssub.s32 16, 1
            loop: start=0, step=1, limit=1
            $region29: #{custom-call.63} parent=27 // loop_pre_header
              _
            $region30: #{custom-call.63} parent=27 // loop_header
              %s58 = sphi 0, %s62
              %p59 = scmp.ge.s32.totalorder %s58, 1
              %s63 = sphi %s48, %s48
              %s64 = sphi %s44, %s44
            $region31: #{custom-call.63} parent=27 // loop_header_branch
              %61 = sbr.rel (%p59) target = $region35
            $region32: #{custom-call.63} parent=27 // loop_body
              %v65 = vld [vmem:[%s63] sm:%s56]
              %66 = vst [vmem:[%s64] sm:%s56] %v65
            $region33: #{custom-call.63} parent=27 // loop_footer
              %s62 = sadd.s32 1, %s58
            $region34: #{custom-call.63} parent=27 // loop_footer_branch
              %57 = sbr.rel target = $region30
            $region35: #{custom-call.63} parent=27 // loop_exit
              _
          $region28: #{custom-call.63} parent=19 // pred_fallthru
            _
        $region20: #{custom-call.63} parent=15 // pred_fallthru
          _
        %81 = vnop
      $region16: #{custom-call.63} parent=5 // pred_fallthru
        _
      %p82 = scmp.le.s32.totalorder 1, %s3
      %p83 = scmp.lt.s32.totalorder %s3, 9
      %p84 = pnand %p82, %p83
      %p85 = pneg %p84
      // Predicated region
      $region47: #{custom-call.63} parent=5 // pred_check
        _
      $region48: #{custom-call.63} parent=5 // pred_check_branch
        %87 = sbr.rel (%p84) target = $region50
      $region49: #{custom-call.63} parent=5 // pred_region
        %s88 = ssub.s32 %s3, 1
        %s89 = sand.u32 %s8, 1
        %s90 = sand.u32 %s8, 1
        %s91 = smul.addr %s90, 4
        %s92 = scalar_lea.vmem [#allocation1], %s91
        %s93 = sand.u32 %s8, 1
        %s94 = sand.u32 %s8, 1
        %s95 = smul.addr %s94, 4
        %s96 = scalar_lea.vmem [#allocation1], %s95
        %s97 = sand.u32 %s8, 1
        %s98 = sand.u32 %s8, 1
        %s99 = smul.addr %s98, 4
        %s100 = scalar_lea.vmem [#allocation3], %s99
        %s102 = ssub.s32 16, 1
        %v103 = vld [vmem:[%s96] sm:%s102]
        %104 = vst [vmem:[#allocation0] sm:%s102] %v103
        %105 = vst [vmem:[#allocation2] sm:$0xff] 0.0
        %vm106 = vcmask 7168
        %v107 = vld [vmem:[#allocation2] ss:$0 sm:$0xff]
        %v108 = vld [vmem:[#allocation0] ss:$0 sm:$0xff]
        %v109 = vmul.f32 %v107, %v107
        %110 = vadd.xlane.f32.xlu0 %v109
        %v111 = vpop.xlane.xlu0 %110
        %v112 = vsub.f32 %v108, %v111
        %v113 = vrsqrt.pop %v112
        %v114 = vmul.f32 %v113, %v112
        %v115 = vmul.f32 %v114, %v113
        %v116 = vmul.f32 0.5, %v115
        %v117 = vsub.f32 1.5, %v116
        %v118 = vmul.f32 %v113, %v117
        %vm119 = vweird.f32 %v112
        %vm120 = vweird.f32 %v113
        %vm121 = vmor %vm119, %vm120
        %v122 = vsel %vm121, %v113, %v118
        %v123 = vld [vmem:[#allocation0] sm:$0xff]
        %v124 = vld [vmem:[#allocation2] sm:$0xff]
        %v125 = vmul.f32 %v124, %v107
        %126 = vadd.xlane.f32.xlu0 %v125
        %v127 = vpop.xlane.xlu0 %126
        %v128 = vsub.f32 %v123, %v127
        %v129 = vmul.f32 %v128, %v122
        %v130 = vsel %vm106, %v129, 0.0
        %v131 = vadd.f32 %v124, %v130
        %132 = vst [vmem:[#allocation2] sm:$0xff] %v131
        %vm133 = vcmask 15368
        %s134 = scalar_lea.vmem [#allocation2], 1
        %v135 = vld [vmem:[%s134] ss:$0 sm:$0xff]
        %s136 = scalar_lea.vmem [#allocation0], 1
        %v137 = vld [vmem:[%s136] ss:$0 sm:$0xff]
        %v138 = vmul.f32 %v135, %v135
        %139 = vadd.xlane.f32.xlu0 %v138
        %v140 = vpop.xlane.xlu0 %139
        %v141 = vsub.f32 %v137, %v140
        %v142 = vrsqrt.pop %v141
        %v143 = vmul.f32 %v142, %v141
        %v144 = vmul.f32 %v143, %v142
        %v145 = vmul.f32 0.5, %v144
        %v146 = vsub.f32 1.5, %v145
        %v147 = vmul.f32 %v142, %v146
        %vm148 = vweird.f32 %v141
        %vm149 = vweird.f32 %v142
        %vm150 = vmor %vm148, %vm149
        %v151 = vsel %vm150, %v142, %v147
        %v152 = vld [vmem:[#allocation0] sm:$0xff]
        %v153 = vld [vmem:[#allocation2] sm:$0xff]
        %v154 = vmul.f32 %v153, %v135
        %155 = vadd.xlane.f32.xlu0 %v154
        %v156 = vpop.xlane.xlu0 %155
        %v157 = vsub.f32 %v152, %v156
        %v158 = vmul.f32 %v157, %v151
        %vm159 = vcmask 1047553
        %vm160 = vmand %vm133, %vm159
        %v161 = vsel %vm160, %v158, 0.0
        %v162 = vadd.f32 %v153, %v161
        %163 = vst [vmem:[#allocation2] sm:$0xff] %v162
        %vm164 = vcmask 23568
        %s165 = scalar_lea.vmem [#allocation2], 2
        %v166 = vld [vmem:[%s165] ss:$0 sm:$0xff]
        %s167 = scalar_lea.vmem [#allocation0], 2
        %v168 = vld [vmem:[%s167] ss:$0 sm:$0xff]
        %v169 = vmul.f32 %v166, %v166
        %170 = vadd.xlane.f32.xlu0 %v169
        %v171 = vpop.xlane.xlu0 %170
        %v172 = vsub.f32 %v168, %v171
        %v173 = vrsqrt.pop %v172
        %v174 = vmul.f32 %v173, %v172
        %v175 = vmul.f32 %v174, %v173
        %v176 = vmul.f32 0.5, %v175
        %v177 = vsub.f32 1.5, %v176
        %v178 = vmul.f32 %v173, %v177
        %vm179 = vweird.f32 %v172
        %vm180 = vweird.f32 %v173
        %vm181 = vmor %vm179, %vm180
        %v182 = vsel %vm181, %v173, %v178
        %v183 = vld [vmem:[#allocation0] sm:$0xff]
        %v184 = vld [vmem:[#allocation2] sm:$0xff]
        %v185 = vmul.f32 %v184, %v166
        %186 = vadd.xlane.f32.xlu0 %v185
        %v187 = vpop.xlane.xlu0 %186
        %v188 = vsub.f32 %v183, %v187
        %v189 = vmul.f32 %v188, %v182
        %vm190 = vcmask 1047554
        %vm191 = vmand %vm164, %vm190
        %v192 = vsel %vm191, %v189, 0.0
        %v193 = vadd.f32 %v184, %v192
        %194 = vst [vmem:[#allocation2] sm:$0xff] %v193
        %s196 = ssub.s32 16, 1
        %v197 = vld [vmem:[#allocation2] sm:%s196]
        %s199 = ssub.s32 16, 1
        %200 = vst [vmem:[%s100] sm:%s199] %v197
        %s201 = sand.u32 %s8, 1
        %s202 = sand.u32 %s8, 1
        %s203 = smul.addr %s202, 4
        %s204 = scalar_lea.vmem [#allocation3], %s203
        %s205 = sadd.s32 %s15, %s14
        %s206 = sadd.s32 %s205, %s13
        %s207 = smul.addr %s206, 4
        %s208 = scalar_lea.vmem %s1, %s207
        // Predicated region
        $region51: #{custom-call.63} parent=49 // pred_check
          _
        $region52: #{custom-call.63} parent=49 // pred_check_branch
          %210 = sbr.rel (0) target = $region54
        $region53: #{custom-call.63} parent=49 // pred_region
          // Predicated region
          $region55: #{custom-call.63} parent=53 // pred_check
            _
          $region56: #{custom-call.63} parent=53 // pred_check_branch
            %212 = sbr.rel target = $region58
          $region57: #{custom-call.63} parent=53 // pred_region
            // Predicated region
            $region70: #{custom-call.63} parent=57 // pred_check
              _
            $region71: #{custom-call.63} parent=57 // pred_check_branch
              %228 = sbr.rel (0) target = $region73
            $region72: #{custom-call.63} parent=57 // pred_region
              %s230 = ssub.s32 16, 1
              loop: start=0, step=1, limit=1
              $region74: #{custom-call.63} parent=72 // loop_pre_header
                _
              $region75: #{custom-call.63} parent=72 // loop_header
                %s232 = sphi 0, %s236
                %p233 = scmp.ge.s32.totalorder %s232, 1
                %s237 = sphi %s204, %s204
                %s238 = sphi %s208, %s208
              $region76: #{custom-call.63} parent=72 // loop_header_branch
                %235 = sbr.rel (%p233) target = $region80
              $region77: #{custom-call.63} parent=72 // loop_body
                %v239 = vld [vmem:[%s237] sm:%s230]
                %240 = vst [vmem:[%s238] sm:%s230] %v239
              $region78: #{custom-call.63} parent=72 // loop_footer
                %s236 = sadd.s32 1, %s232
              $region79: #{custom-call.63} parent=72 // loop_footer_branch
                %231 = sbr.rel target = $region75
              $region80: #{custom-call.63} parent=72 // loop_exit
                _
            $region73: #{custom-call.63} parent=57 // pred_fallthru
              _
          $region58: #{custom-call.63} parent=53 // pred_fallthru
            _
          // Predicated region
          $region59: #{custom-call.63} parent=53 // pred_check
            _
          $region60: #{custom-call.63} parent=53 // pred_check_branch
            %214 = sbr.rel (0) target = $region62
          $region61: #{custom-call.63} parent=53 // pred_region
            %s216 = ssub.s32 16, 1
            loop: start=0, step=1, limit=1
            $region63: #{custom-call.63} parent=61 // loop_pre_header
              _
            $region64: #{custom-call.63} parent=61 // loop_header
              %s218 = sphi 0, %s222
              %p219 = scmp.ge.s32.totalorder %s218, 1
              %s223 = sphi %s204, %s204
              %s224 = sphi %s208, %s208
            $region65: #{custom-call.63} parent=61 // loop_header_branch
              %221 = sbr.rel (%p219) target = $region69
            $region66: #{custom-call.63} parent=61 // loop_body
              %v225 = vld [vmem:[%s223] sm:%s216]
              %226 = vst [vmem:[%s224] sm:%s216] %v225
            $region67: #{custom-call.63} parent=61 // loop_footer
              %s222 = sadd.s32 1, %s218
            $region68: #{custom-call.63} parent=61 // loop_footer_branch
              %217 = sbr.rel target = $region64
            $region69: #{custom-call.63} parent=61 // loop_exit
              _
          $region62: #{custom-call.63} parent=53 // pred_fallthru
            _
        $region54: #{custom-call.63} parent=49 // pred_fallthru
          _
        %241 = vnop
      $region50: #{custom-call.63} parent=5 // pred_fallthru
        _
      %p242 = scmp.le.s32.totalorder 2, %s3
      // Predicated region
      $region81: #{custom-call.63} parent=5 // pred_check
        %p243 = pneg %p242
      $region82: #{custom-call.63} parent=5 // pred_check_branch
        %245 = sbr.rel (%p243) target = $region84
      $region83: #{custom-call.63} parent=5 // pred_region
        %s246 = ssub.s32 %s3, 2
        %s247 = sand.u32 %s9, 1
        %s248 = sand.u32 %s9, 1
        %s249 = smul.addr %s248, 4
        %s250 = scalar_lea.vmem [#allocation3], %s249
      $region84: #{custom-call.63} parent=5 // pred_fallthru
        _
    $region6: #{custom-call.63} parent=1 // loop_footer
      %s7 = sadd.s32 1, %s3
    $region7: #{custom-call.63} parent=1 // loop_footer_branch
      %2 = sbr.rel target = $region3
    $region8: #{custom-call.63} parent=1 // loop_exit
      _

// kernel: forward.1
$region0: #{forward.1}
  #allocation0 [shape = 'u32[]', space=smem, size = 0x4, offset = 0x4, fixed_abs, tag = 'smem constant byte address 0x4 - core index']
  #allocation1 [shape = 'u32[72,128]{1,0:T(1,128)}', space=vmem, size = 0x9000, scoped, tag = 'internal scratch']
  #allocation2 [shape = 'f32[1,1]{1,0:T(1,128)S(1)}', space=vmem, size = 0x200, scoped, tag = 'scoped memory for forward.1']
  %s0 = inlined_call_operand.smem [shape: u32[44], index: -1, kind: input, shape index: {}]
  %s1 = sld [smem:[%s0]]
  %s2 = scalar_lea.smem %s0, 1
  %s3 = sld [smem:[%s2]]
  %s4 = scalar_lea.smem %s0, 2
  %s5 = sld [smem:[%s4]]
  %s6 = scalar_lea.smem %s0, 3
  %s7 = sld [smem:[%s6]]
  %s8 = scalar_lea.smem %s0, 4
  %s9 = sld [smem:[%s8]]
  %s10 = scalar_lea.smem %s0, 5
  %s11 = sld [smem:[%s10]]
  %s12 = scalar_lea.smem %s0, 6
  %s13 = sld [smem:[%s12]]
  %s14 = scalar_lea.smem %s0, 7
  %s15 = sld [smem:[%s14]]
  %s16 = scalar_lea.smem %s0, 8
  %s17 = sld [smem:[%s16]]
  %s18 = scalar_lea.smem %s0, 9
  %s19 = sld [smem:[%s18]]
  %s20 = scalar_lea.smem %s0, 10
  %s21 = sld [smem:[%s20]]
  %s22 = scalar_lea.smem %s0, 11
  %s23 = sld [smem:[%s22]]
  %s24 = scalar_lea.smem %s0, 12
  %s25 = sld [smem:[%s24]]
  %s26 = scalar_lea.smem %s0, 13
  %s27 = sld [smem:[%s26]]
  %s28 = scalar_lea.smem %s0, 14
  %s29 = sld [smem:[%s28]]
  %s30 = scalar_lea.smem %s0, 15
  %s31 = sld [smem:[%s30]]
  %s32 = scalar_lea.smem %s0, 16
  %s33 = sld [smem:[%s32]]
  %s34 = scalar_lea.smem %s0, 17
  %s35 = sld [smem:[%s34]]
  %s36 = scalar_lea.smem %s0, 18
  %s37 = sld [smem:[%s36]]
  %s38 = scalar_lea.smem %s0, 19
  %s39 = sld [smem:[%s38]]
  %s40 = scalar_lea.smem %s0, 20
  %s41 = sld [smem:[%s40]]
  %s42 = scalar_lea.smem %s0, 21
  %s43 = sld [smem:[%s42]]
  %s44 = scalar_lea.smem %s0, 22
  %s45 = sld [smem:[%s44]]
  %s46 = scalar_lea.smem %s0, 23
  %s47 = sld [smem:[%s46]]
  %s48 = scalar_lea.smem %s0, 24
  %s49 = sld [smem:[%s48]]
  %s50 = scalar_lea.smem %s0, 25
  %s51 = sld [smem:[%s50]]
  %s52 = scalar_lea.smem %s0, 26
  %s53 = sld [smem:[%s52]]
  %s54 = scalar_lea.smem %s0, 27
  %s55 = sld [smem:[%s54]]
  %s56 = scalar_lea.smem %s0, 28
  %s57 = sld [smem:[%s56]]
  %s58 = scalar_lea.smem %s0, 29
  %s59 = sld [smem:[%s58]]
  %s60 = scalar_lea.smem %s0, 30
  %s61 = sld [smem:[%s60]]
  %s62 = scalar_lea.smem %s0, 31
  %s63 = sld [smem:[%s62]]
  %s64 = scalar_lea.smem %s0, 32
  %s65 = sld [smem:[%s64]]
  %s66 = scalar_lea.smem %s0, 33
  %s67 = sld [smem:[%s66]]
  %s68 = scalar_lea.smem %s0, 34
  %s69 = sld [smem:[%s68]]
  %s70 = scalar_lea.smem %s0, 35
  %s71 = sld [smem:[%s70]]
  %s72 = scalar_lea.smem %s0, 36
  %s73 = sld [smem:[%s72]]
  %s74 = scalar_lea.smem %s0, 37
  %s75 = sld [smem:[%s74]]
  %s76 = scalar_lea.smem %s0, 38
  %s77 = sld [smem:[%s76]]
  %s78 = scalar_lea.smem %s0, 39
  %s79 = sld [smem:[%s78]]
  %s80 = scalar_lea.smem %s0, 40
  %s81 = sld [smem:[%s80]]
  %s82 = scalar_lea.smem %s0, 41
  %s83 = sld [smem:[%s82]]
  %s84 = scalar_lea.smem %s0, 42
  %s85 = sld [smem:[%s84]]
  %s86 = scalar_lea.smem %s0, 43
  %s87 = sld [smem:[%s86]]
  %88 = xla_tuple %s75, %s77, %s79, %s81, %s83, %s85, %s87
  %s89 = sld [smem:[#allocation0]]
  $region206: #{forward.1} parent=0
    _
  %s91 = ssub.s32 1, %s89
  %s92 = scalar_select 0, %s91, %s89
  %v93 = vstv %s73
  %94 = vst [vmem:[#allocation2] sm:$0x1] %v93
  $region1: #{forward.1} parent=0
    #allocation3 [shape = 'u8[16384]{0}', space=vmem, size = 0x4000, scoped, tag = 'output window, operand 0, single buffered']
    #allocation4 [shape = 's32[1]{0}', space=sflag, size = 0x4, scoped, tag = 'scoped memory for forward.1']
    #allocation5 [shape = 'u8[16384]{0}', space=vmem, size = 0x4000, scoped, tag = 'output window, operand 1, single buffered']
    #allocation6 [shape = 's32[1]{0}', space=sflag, size = 0x4, scoped, tag = 'scoped memory for forward.1']
    #allocation7 [shape = 'u8[16384]{0}', space=vmem, size = 0x4000, scoped, tag = 'output window, operand 2, single buffered']
    %95 = vsyncpa [#allocation4], 0
    %96 = vsyncpa [#allocation6], 0
    // Predicated region
    $region2: #{forward.1} parent=1 // pred_check
      _
    $region3: #{forward.1} parent=1 // pred_check_branch
      %98 = sbr.rel (0) target = $region5
    $region4: #{forward.1} parent=1 // pred_region
      _
    $region5: #{forward.1} parent=1 // pred_fallthru
      _
    // Predicated region
    $region6: #{forward.1} parent=1 // pred_check
      _
    $region7: #{forward.1} parent=1 // pred_check_branch
      %100 = sbr.rel (0) target = $region9
    $region8: #{forward.1} parent=1 // pred_region
      _
    $region9: #{forward.1} parent=1 // pred_fallthru
      _
    // Predicated region
    $region10: #{forward.1} parent=1 // pred_check
      _
    $region11: #{forward.1} parent=1 // pred_check_branch
      %102 = sbr.rel (0) target = $region13
    $region12: #{forward.1} parent=1 // pred_region
      _
    $region13: #{forward.1} parent=1 // pred_fallthru
      _
    // Predicated region
    $region14: #{forward.1} parent=1 // pred_check
      _
    $region15: #{forward.1} parent=1 // pred_check_branch
      %104 = sbr.rel (0) target = $region17
    $region16: #{forward.1} parent=1 // pred_region
      _
    $region17: #{forward.1} parent=1 // pred_fallthru
      _
    // Predicated region
    $region18: #{forward.1} parent=1 // pred_check
      _
    $region19: #{forward.1} parent=1 // pred_check_branch
      %106 = sbr.rel (0) target = $region21
    $region20: #{forward.1} parent=1 // pred_region
      _
    $region21: #{forward.1} parent=1 // pred_fallthru
      _
    // Predicated region
    $region22: #{forward.1} parent=1 // pred_check
      _
    $region23: #{forward.1} parent=1 // pred_check_branch
      %108 = sbr.rel (0) target = $region25
    $region24: #{forward.1} parent=1 // pred_region
      _
    $region25: #{forward.1} parent=1 // pred_fallthru
      _
    // Predicated region
    $region26: #{forward.1} parent=1 // pred_check
      _
    $region27: #{forward.1} parent=1 // pred_check_branch
      %110 = sbr.rel (0) target = $region29
    $region28: #{forward.1} parent=1 // pred_region
      _
    $region29: #{forward.1} parent=1 // pred_fallthru
      _
    // Predicated region
    $region30: #{forward.1} parent=1 // pred_check
      _
    $region31: #{forward.1} parent=1 // pred_check_branch
      %112 = sbr.rel (0) target = $region33
    $region32: #{forward.1} parent=1 // pred_region
      _
    $region33: #{forward.1} parent=1 // pred_fallthru
      _
    // Predicated region
    $region34: #{forward.1} parent=1 // pred_check
      _
    $region35: #{forward.1} parent=1 // pred_check_branch
      %114 = sbr.rel (0) target = $region37
    $region36: #{forward.1} parent=1 // pred_region
      _
    $region37: #{forward.1} parent=1 // pred_fallthru
      _
    // Predicated region
    $region38: #{forward.1} parent=1 // pred_check
      _
    $region39: #{forward.1} parent=1 // pred_check_branch
      %116 = sbr.rel (0) target = $region41
    $region40: #{forward.1} parent=1 // pred_region
      _
    $region41: #{forward.1} parent=1 // pred_fallthru
      _
    // Predicated region
    $region42: #{forward.1} parent=1 // pred_check
      _
    $region43: #{forward.1} parent=1 // pred_check_branch
      %118 = sbr.rel (0) target = $region45
    $region44: #{forward.1} parent=1 // pred_region
      _
    $region45: #{forward.1} parent=1 // pred_fallthru
      _
    // Predicated region
    $region46: #{forward.1} parent=1 // pred_check
      _
    $region47: #{forward.1} parent=1 // pred_check_branch
      %120 = sbr.rel (0) target = $region49
    $region48: #{forward.1} parent=1 // pred_region
      _
    $region49: #{forward.1} parent=1 // pred_fallthru
      _
    // Predicated region
    $region50: #{forward.1} parent=1 // pred_check
      _
    $region51: #{forward.1} parent=1 // pred_check_branch
      %122 = sbr.rel (0) target = $region53
    $region52: #{forward.1} parent=1 // pred_region
      _
    $region53: #{forward.1} parent=1 // pred_fallthru
      _
    // Predicated region
    $region54: #{forward.1} parent=1 // pred_check
      _
    $region55: #{forward.1} parent=1 // pred_check_branch
      %124 = sbr.rel (0) target = $region57
    $region56: #{forward.1} parent=1 // pred_region
      _
    $region57: #{forward.1} parent=1 // pred_fallthru
      _
    // Predicated region
    $region58: #{forward.1} parent=1 // pred_check
      _
    $region59: #{forward.1} parent=1 // pred_check_branch
      %126 = sbr.rel (0) target = $region61
    $region60: #{forward.1} parent=1 // pred_region
      _
    $region61: #{forward.1} parent=1 // pred_fallthru
      _
    // Predicated region
    $region62: #{forward.1} parent=1 // pred_check
      _
    $region63: #{forward.1} parent=1 // pred_check_branch
      %128 = sbr.rel (0) target = $region65
    $region64: #{forward.1} parent=1 // pred_region
      _
    $region65: #{forward.1} parent=1 // pred_fallthru
      _
    // Predicated region
    $region66: #{forward.1} parent=1 // pred_check
      _
    $region67: #{forward.1} parent=1 // pred_check_branch
      %130 = sbr.rel (0) target = $region69
    $region68: #{forward.1} parent=1 // pred_region
      _
    $region69: #{forward.1} parent=1 // pred_fallthru
      _
    // Predicated region
    $region70: #{forward.1} parent=1 // pred_check
      _
    $region71: #{forward.1} parent=1 // pred_check_branch
      %132 = sbr.rel (0) target = $region73
    $region72: #{forward.1} parent=1 // pred_region
      _
    $region73: #{forward.1} parent=1 // pred_fallthru
      _
    // Predicated region
    $region74: #{forward.1} parent=1 // pred_check
      _
    $region75: #{forward.1} parent=1 // pred_check_branch
      %134 = sbr.rel (0) target = $region77
    $region76: #{forward.1} parent=1 // pred_region
      _
    $region77: #{forward.1} parent=1 // pred_fallthru
      _
    // Predicated region
    $region78: #{forward.1} parent=1 // pred_check
      _
    $region79: #{forward.1} parent=1 // pred_check_branch
      %136 = sbr.rel (0) target = $region81
    $region80: #{forward.1} parent=1 // pred_region
      _
    $region81: #{forward.1} parent=1 // pred_fallthru
      _
    // Predicated region
    $region82: #{forward.1} parent=1 // pred_check
      _
    $region83: #{forward.1} parent=1 // pred_check_branch
      %138 = sbr.rel (0) target = $region85
    $region84: #{forward.1} parent=1 // pred_region
      _
    $region85: #{forward.1} parent=1 // pred_fallthru
      _
    // Predicated region
    $region86: #{forward.1} parent=1 // pred_check
      _
    $region87: #{forward.1} parent=1 // pred_check_branch
      %140 = sbr.rel (0) target = $region89
    $region88: #{forward.1} parent=1 // pred_region
      _
    $region89: #{forward.1} parent=1 // pred_fallthru
      _
    // Predicated region
    $region90: #{forward.1} parent=1 // pred_check
      _
    $region91: #{forward.1} parent=1 // pred_check_branch
      %142 = sbr.rel (0) target = $region93
    $region92: #{forward.1} parent=1 // pred_region
      _
    $region93: #{forward.1} parent=1 // pred_fallthru
      _
    // Predicated region
    $region94: #{forward.1} parent=1 // pred_check
      _
    $region95: #{forward.1} parent=1 // pred_check_branch
      %144 = sbr.rel (0) target = $region97
    $region96: #{forward.1} parent=1 // pred_region
      _
    $region97: #{forward.1} parent=1 // pred_fallthru
      _
    // Predicated region
    $region98: #{forward.1} parent=1 // pred_check
      _
    $region99: #{forward.1} parent=1 // pred_check_branch
      %146 = sbr.rel (0) target = $region101
    $region100: #{forward.1} parent=1 // pred_region
      _
    $region101: #{forward.1} parent=1 // pred_fallthru
      _
    // Predicated region
    $region102: #{forward.1} parent=1 // pred_check
      _
    $region103: #{forward.1} parent=1 // pred_check_branch
      %148 = sbr.rel (0) target = $region105
    $region104: #{forward.1} parent=1 // pred_region
      _
    $region105: #{forward.1} parent=1 // pred_fallthru
      _
    // Predicated region
    $region106: #{forward.1} parent=1 // pred_check
      _
    $region107: #{forward.1} parent=1 // pred_check_branch
      %150 = sbr.rel (0) target = $region109
    $region108: #{forward.1} parent=1 // pred_region
      _
    $region109: #{forward.1} parent=1 // pred_fallthru
      _
    // Predicated region
    $region110: #{forward.1} parent=1 // pred_check
      _
    $region111: #{forward.1} parent=1 // pred_check_branch
      %152 = sbr.rel (0) target = $region113
    $region112: #{forward.1} parent=1 // pred_region
      _
    $region113: #{forward.1} parent=1 // pred_fallthru
      _
    // Predicated region
    $region114: #{forward.1} parent=1 // pred_check
      _
    $region115: #{forward.1} parent=1 // pred_check_branch
      %154 = sbr.rel (0) target = $region117
    $region116: #{forward.1} parent=1 // pred_region
      _
    $region117: #{forward.1} parent=1 // pred_fallthru
      _
    // Predicated region
    $region118: #{forward.1} parent=1 // pred_check
      _
    $region119: #{forward.1} parent=1 // pred_check_branch
      %156 = sbr.rel (0) target = $region121
    $region120: #{forward.1} parent=1 // pred_region
      _
    $region121: #{forward.1} parent=1 // pred_fallthru
      _
    // Predicated region
    $region122: #{forward.1} parent=1 // pred_check
      _
    $region123: #{forward.1} parent=1 // pred_check_branch
      %158 = sbr.rel (0) target = $region125
    $region124: #{forward.1} parent=1 // pred_region
      _
    $region125: #{forward.1} parent=1 // pred_fallthru
      _
    // Predicated region
    $region126: #{forward.1} parent=1 // pred_check
      _
    $region127: #{forward.1} parent=1 // pred_check_branch
      %160 = sbr.rel (0) target = $region129
    $region128: #{forward.1} parent=1 // pred_region
      _
    $region129: #{forward.1} parent=1 // pred_fallthru
      _
    // Predicated region
    $region130: #{forward.1} parent=1 // pred_check
      _
    $region131: #{forward.1} parent=1 // pred_check_branch
      %162 = sbr.rel (0) target = $region133
    $region132: #{forward.1} parent=1 // pred_region
      _
    $region133: #{forward.1} parent=1 // pred_fallthru
      _
    // Predicated region
    $region134: #{forward.1} parent=1 // pred_check
      _
    $region135: #{forward.1} parent=1 // pred_check_branch
      %164 = sbr.rel (0) target = $region137
    $region136: #{forward.1} parent=1 // pred_region
      _
    $region137: #{forward.1} parent=1 // pred_fallthru
      _
    // Predicated region
    $region138: #{forward.1} parent=1 // pred_check
      _
    $region139: #{forward.1} parent=1 // pred_check_branch
      %166 = sbr.rel (0) target = $region141
    $region140: #{forward.1} parent=1 // pred_region
      _
    $region141: #{forward.1} parent=1 // pred_fallthru
      _
    // Predicated region
    $region142: #{forward.1} parent=1 // pred_check
      _
    $region143: #{forward.1} parent=1 // pred_check_branch
      %168 = sbr.rel (0) target = $region145
    $region144: #{forward.1} parent=1 // pred_region
      _
    $region145: #{forward.1} parent=1 // pred_fallthru
      _
    // Predicated region
    $region146: #{forward.1} parent=1 // pred_check
      _
    $region147: #{forward.1} parent=1 // pred_check_branch
      %170 = sbr.rel (0) target = $region149
    $region148: #{forward.1} parent=1 // pred_region
      _
    $region149: #{forward.1} parent=1 // pred_fallthru
      _
    %v171 = vld [vmem:[%s1] sm:$0xff]
    %v172 = vld [vmem:[%s1 + $0x8] sm:$0xff]
    %v173 = vld [vmem:[%s1 + $0x10] sm:$0xff]
    %v174 = vld [vmem:[%s1 + $0x18] sm:$0xff]
    %v175 = vld [vmem:[%s3] sm:$0xff]
    %v176 = vld [vmem:[%s3 + $0x8] sm:$0xff]
    %v177 = vld [vmem:[%s3 + $0x10] sm:$0xff]
    %v178 = vld [vmem:[%s3 + $0x18] sm:$0xff]
    %v179 = vld [vmem:[%s5] sm:$0xff]
    %v180 = vld [vmem:[%s5 + $0x8] sm:$0xff]
    %v181 = vld [vmem:[%s5 + $0x10] sm:$0xff]
    %v182 = vld [vmem:[%s5 + $0x18] sm:$0xff]
    %v183 = vlaneseq
    %v184 = vshrl.u32 %v183, 7
    %v185 = vadd.s32 %v184, 8
    %v186 = vadd.s32 %v184, 16
    %v187 = vadd.s32 %v184, 24
    %v188 = vlaneseq
    %v189 = vand.u32 %v188, 127
    %vm190 = vcmp.ne.s32.totalorder %v184, %v189
    %vm191 = vcmp.ne.s32.totalorder %v185, %v189
    %vm192 = vcmp.ne.s32.totalorder %v186, %v189
    %vm193 = vcmp.ne.s32.totalorder %v187, %v189
    %v194 = vmul.f32 %v171, %v171
    %v195 = vmul.f32 %v172, %v172
    %v196 = vmul.f32 %v173, %v173
    %v197 = vmul.f32 %v174, %v174
    %vm198 = vcmask 23552
    %v199 = vsel %vm198, %v194, 0.0
    %200 = vadd.xlane.f32.xlu0 %v199
    %v201 = vpop.xlane.xlu0 %200
    %v202 = vsel %vm198, %v195, 0.0
    %203 = vadd.xlane.f32.xlu0 %v202
    %v204 = vpop.xlane.xlu0 %203
    %v205 = vsel %vm198, %v196, 0.0
    %206 = vadd.xlane.f32.xlu0 %v205
    %v207 = vpop.xlane.xlu0 %206
    %v208 = vsel %vm198, %v197, 0.0
    %209 = vadd.xlane.f32.xlu0 %v208
    %v210 = vpop.xlane.xlu0 %209
    %v212 = vsel %vm198, 1.0, 0
    %v215 = vsel %vm198, %v194, 0
    %v218 = vsel %vm198, %v195, 0
    %v221 = vsel %vm198, %v196, 0
    %v224 = vsel %vm198, %v197, 0
    %226 = vmatpush.xpose.msra.mxu0 0.0
    %227 = vmatpush.xpose.msra.mxu0 0.0
    %228 = vmatpush.xpose.msra.mxu0 0.0
    %229 = vmatpush.xpose.msra.mxu0 0.0
    %230 = vmatpush.xpose.msra.mxu0 0.0
    %231 = vmatpush.xpose.msra.mxu0 0.0
    %232 = vmatpush.xpose.msra.mxu0 0.0
    %233 = vmatpush.xpose.msra.mxu0 0.0
    %234 = vmatpush.xpose.msra.mxu0 0.0
    %235 = vmatpush.xpose.msra.mxu0 0.0
    %236 = vmatpush.xpose.msra.mxu0 0.0
    %237 = vmatpush.xpose.msra.mxu0 0.0
    %238 = vmatpush.xpose.msra.mxu0 %v224
    %239 = vmatpush.xpose.msra.mxu0 %v221
    %240 = vmatpush.xpose.msra.mxu0 %v218
    %241 = vmatpush.xpose.msra.mxu0 %v215
    %242 = vmatmul.f32.gmra.mxu0 %v212
    %v243 = vpop.f32.mrf.mxu0
    %v244 = vadd.f32 0.0, %v243
    %245 = vdwg.mxu0
    %v247 = vsel %vm198, %v171, 0
    %v250 = vsel %vm198, %v172, 0
    %v253 = vsel %vm198, %v173, 0
    %v256 = vsel %vm198, %v174, 0
    %258 = vmatpush.xpose.msra.mxu0 0.0
    %259 = vmatpush.xpose.msra.mxu0 0.0
    %260 = vmatpush.xpose.msra.mxu0 0.0
    %261 = vmatpush.xpose.msra.mxu0 0.0
    %262 = vmatpush.xpose.msra.mxu0 0.0
    %263 = vmatpush.xpose.msra.mxu0 0.0
    %264 = vmatpush.xpose.msra.mxu0 0.0
    %265 = vmatpush.xpose.msra.mxu0 0.0
    %266 = vmatpush.xpose.msra.mxu0 0.0
    %267 = vmatpush.xpose.msra.mxu0 0.0
    %268 = vmatpush.xpose.msra.mxu0 0.0
    %269 = vmatpush.xpose.msra.mxu0 0.0
    %270 = vmatpush.xpose.msra.mxu0 %v256
    %271 = vmatpush.xpose.msra.mxu0 %v253
    %272 = vmatpush.xpose.msra.mxu0 %v250
    %273 = vmatpush.xpose.msra.mxu0 %v247
    %274 = vmatmul.f32.gmra.mxu0 %v247
    %v275 = vpop.f32.mrf.mxu0
    %v276 = vadd.f32 0.0, %v275
    %277 = vmatmul.f32.gmra.mxu0 %v250
    %v278 = vpop.f32.mrf.mxu0
    %v279 = vadd.f32 0.0, %v278
    %280 = vmatmul.f32.gmra.mxu0 %v253
    %v281 = vpop.f32.mrf.mxu0
    %v282 = vadd.f32 0.0, %v281
    %283 = vmatmul.f32.gmra.mxu0 %v256
    %v284 = vpop.f32.mrf.mxu0
    %v285 = vadd.f32 0.0, %v284
    %286 = vdwg.mxu0
    %v287 = vperm.slane %v244, 0
    %v288 = vadd.f32 %v201, %v287
    %v289 = vadd.f32 %v204, %v287
    %v290 = vadd.f32 %v207, %v287
    %v291 = vadd.f32 %v210, %v287
    %v292 = vmul.f32 %v276, 2.0
    %v293 = vmul.f32 %v279, 2.0
    %v294 = vmul.f32 %v282, 2.0
    %v295 = vmul.f32 %v285, 2.0
    %v296 = vsub.f32 %v288, %v292
    %v297 = vsub.f32 %v289, %v293
    %v298 = vsub.f32 %v290, %v294
    %v299 = vsub.f32 %v291, %v295
    %v300 = vmax.f32 %v296, 0.0
    %v301 = vmax.f32 %v297, 0.0
    %v302 = vmax.f32 %v298, 0.0
    %v303 = vmax.f32 %v299, 0.0
    %v304 = vsel %vm190, %v300, 0.0
    %v305 = vsel %vm191, %v301, 0.0
    %v306 = vsel %vm192, %v302, 0.0
    %v307 = vsel %vm193, %v303, 0.0
    %v308 = vrsqrt.pop %v304
    %v309 = vmul.f32 %v308, %v304
    %v310 = vmul.f32 %v309, %v308
    %v311 = vmul.f32 0.5, %v310
    %v312 = vsub.f32 1.5, %v311
    %v313 = vmul.f32 %v308, %v312
    %v314 = vmul.f32 %v304, %v313
    %vm315 = vcmp.eq.f32.partialorder %v304, inf
    %v316 = vsel %vm315, %v304, %v314
    %vm317 = vcmp.eq.f32.partialorder %v304, 0.0
    %v318 = vand.u32 %v304, 2147483648
    %v319 = vsel %vm317, %v318, %v316
    %v320 = vrsqrt.pop %v305
    %v321 = vmul.f32 %v320, %v305
    %v322 = vmul.f32 %v321, %v320
    %v323 = vmul.f32 0.5, %v322
    %v324 = vsub.f32 1.5, %v323
    %v325 = vmul.f32 %v320, %v324
    %v326 = vmul.f32 %v305, %v325
    %vm327 = vcmp.eq.f32.partialorder %v305, inf
    %v328 = vsel %vm327, %v305, %v326
    %vm329 = vcmp.eq.f32.partialorder %v305, 0.0
    %v330 = vand.u32 %v305, 2147483648
    %v331 = vsel %vm329, %v330, %v328
    %v332 = vrsqrt.pop %v306
    %v333 = vmul.f32 %v332, %v306
    %v334 = vmul.f32 %v333, %v332
    %v335 = vmul.f32 0.5, %v334
    %v336 = vsub.f32 1.5, %v335
    %v337 = vmul.f32 %v332, %v336
    %v338 = vmul.f32 %v306, %v337
    %vm339 = vcmp.eq.f32.partialorder %v306, inf
    %v340 = vsel %vm339, %v306, %v338
    %vm341 = vcmp.eq.f32.partialorder %v306, 0.0
    %v342 = vand.u32 %v306, 2147483648
    %v343 = vsel %vm341, %v342, %v340
    %v344 = vrsqrt.pop %v307
    %v345 = vmul.f32 %v344, %v307
    %v346 = vmul.f32 %v345, %v344
    %v347 = vmul.f32 0.5, %v346
    %v348 = vsub.f32 1.5, %v347
    %v349 = vmul.f32 %v344, %v348
    %v350 = vmul.f32 %v307, %v349
    %vm351 = vcmp.eq.f32.partialorder %v307, inf
    %v352 = vsel %vm351, %v307, %v350
    %vm353 = vcmp.eq.f32.partialorder %v307, 0.0
    %v354 = vand.u32 %v307, 2147483648
    %v355 = vsel %vm353, %v354, %v352
    %v356 = vmul.f32 %v175, %v175
    %v357 = vmul.f32 %v176, %v176
    %v358 = vmul.f32 %v177, %v177
    %v359 = vmul.f32 %v178, %v178
    %v360 = vsel %vm198, %v356, 0.0
    %361 = vadd.xlane.f32.xlu0 %v360
    %v362 = vpop.xlane.xlu0 %361
    %v363 = vsel %vm198, %v357, 0.0
    %364 = vadd.xlane.f32.xlu0 %v363
    %v365 = vpop.xlane.xlu0 %364
    %v366 = vsel %vm198, %v358, 0.0
    %367 = vadd.xlane.f32.xlu0 %v366
    %v368 = vpop.xlane.xlu0 %367
    %v369 = vsel %vm198, %v359, 0.0
    %370 = vadd.xlane.f32.xlu0 %v369
    %v371 = vpop.xlane.xlu0 %370
    %v373 = vsel %vm198, %v356, 0
    %v376 = vsel %vm198, %v357, 0
    %v379 = vsel %vm198, %v358, 0
    %v382 = vsel %vm198, %v359, 0
    %384 = vmatpush.xpose.msra.mxu0 0.0
    %385 = vmatpush.xpose.msra.mxu0 0.0
    %386 = vmatpush.xpose.msra.mxu0 0.0
    %387 = vmatpush.xpose.msra.mxu0 0.0
    %388 = vmatpush.xpose.msra.mxu0 0.0
    %389 = vmatpush.xpose.msra.mxu0 0.0
    %390 = vmatpush.xpose.msra.mxu0 0.0
    %391 = vmatpush.xpose.msra.mxu0 0.0
    %392 = vmatpush.xpose.msra.mxu0 0.0
    %393 = vmatpush.xpose.msra.mxu0 0.0
    %394 = vmatpush.xpose.msra.mxu0 0.0
    %395 = vmatpush.xpose.msra.mxu0 0.0
    %396 = vmatpush.xpose.msra.mxu0 %v382
    %397 = vmatpush.xpose.msra.mxu0 %v379
    %398 = vmatpush.xpose.msra.mxu0 %v376
    %399 = vmatpush.xpose.msra.mxu0 %v373
    %400 = vmatmul.f32.gmra.mxu0 %v212
    %v401 = vpop.f32.mrf.mxu0
    %v402 = vadd.f32 0.0, %v401
    %403 = vdwg.mxu0
    %v405 = vsel %vm198, %v175, 0
    %v408 = vsel %vm198, %v176, 0
    %v411 = vsel %vm198, %v177, 0
    %v414 = vsel %vm198, %v178, 0
    %416 = vmatpush.xpose.msra.mxu0 0.0
    %417 = vmatpush.xpose.msra.mxu0 0.0
    %418 = vmatpush.xpose.msra.mxu0 0.0
    %419 = vmatpush.xpose.msra.mxu0 0.0
    %420 = vmatpush.xpose.msra.mxu0 0.0
    %421 = vmatpush.xpose.msra.mxu0 0.0
    %422 = vmatpush.xpose.msra.mxu0 0.0
    %423 = vmatpush.xpose.msra.mxu0 0.0
    %424 = vmatpush.xpose.msra.mxu0 0.0
    %425 = vmatpush.xpose.msra.mxu0 0.0
    %426 = vmatpush.xpose.msra.mxu0 0.0
    %427 = vmatpush.xpose.msra.mxu0 0.0
    %428 = vmatpush.xpose.msra.mxu0 %v414
    %429 = vmatpush.xpose.msra.mxu0 %v411
    %430 = vmatpush.xpose.msra.mxu0 %v408
    %431 = vmatpush.xpose.msra.mxu0 %v405
    %432 = vmatmul.f32.gmra.mxu0 %v405
    %v433 = vpop.f32.mrf.mxu0
    %v434 = vadd.f32 0.0, %v433
    %435 = vmatmul.f32.gmra.mxu0 %v408
    %v436 = vpop.f32.mrf.mxu0
    %v437 = vadd.f32 0.0, %v436
    %438 = vmatmul.f32.gmra.mxu0 %v411
    %v439 = vpop.f32.mrf.mxu0
    %v440 = vadd.f32 0.0, %v439
    %441 = vmatmul.f32.gmra.mxu0 %v414
    %v442 = vpop.f32.mrf.mxu0
    %v443 = vadd.f32 0.0, %v442
    %444 = vdwg.mxu0
    %v445 = vperm.slane %v402, 0
    %v446 = vadd.f32 %v362, %v445
    %v447 = vadd.f32 %v365, %v445
    %v448 = vadd.f32 %v368, %v445
    %v449 = vadd.f32 %v371, %v445
    %v450 = vmul.f32 %v434, 2.0
    %v451 = vmul.f32 %v437, 2.0
    %v452 = vmul.f32 %v440, 2.0
    %v453 = vmul.f32 %v443, 2.0
    %v454 = vsub.f32 %v446, %v450
    %v455 = vsub.f32 %v447, %v451
    %v456 = vsub.f32 %v448, %v452
    %v457 = vsub.f32 %v449, %v453
    %v458 = vmax.f32 %v454, 0.0
    %v459 = vmax.f32 %v455, 0.0
    %v460 = vmax.f32 %v456, 0.0
    %v461 = vmax.f32 %v457, 0.0
    %v462 = vsel %vm190, %v458, 0.0
    %v463 = vsel %vm191, %v459, 0.0
    %v464 = vsel %vm192, %v460, 0.0
    %v465 = vsel %vm193, %v461, 0.0
    %v466 = vrsqrt.pop %v462
    %v467 = vmul.f32 %v466, %v462
    %v468 = vmul.f32 %v467, %v466
    %v469 = vmul.f32 0.5, %v468
    %v470 = vsub.f32 1.5, %v469
    %v471 = vmul.f32 %v466, %v470
    %v472 = vmul.f32 %v462, %v471
    %vm473 = vcmp.eq.f32.partialorder %v462, inf
    %v474 = vsel %vm473, %v462, %v472
    %vm475 = vcmp.eq.f32.partialorder %v462, 0.0
    %v476 = vand.u32 %v462, 2147483648
    %v477 = vsel %vm475, %v476, %v474
    %v478 = vrsqrt.pop %v463
    %v479 = vmul.f32 %v478, %v463
    %v480 = vmul.f32 %v479, %v478
    %v481 = vmul.f32 0.5, %v480
    %v482 = vsub.f32 1.5, %v481
    %v483 = vmul.f32 %v478, %v482
    %v484 = vmul.f32 %v463, %v483
    %vm485 = vcmp.eq.f32.partialorder %v463, inf
    %v486 = vsel %vm485, %v463, %v484
    %vm487 = vcmp.eq.f32.partialorder %v463, 0.0
    %v488 = vand.u32 %v463, 2147483648
    %v489 = vsel %vm487, %v488, %v486
    %v490 = vrsqrt.pop %v464
    %v491 = vmul.f32 %v490, %v464
    %v492 = vmul.f32 %v491, %v490
    %v493 = vmul.f32 0.5, %v492
    %v494 = vsub.f32 1.5, %v493
    %v495 = vmul.f32 %v490, %v494
    %v496 = vmul.f32 %v464, %v495
    %vm497 = vcmp.eq.f32.partialorder %v464, inf
    %v498 = vsel %vm497, %v464, %v496
    %vm499 = vcmp.eq.f32.partialorder %v464, 0.0
    %v500 = vand.u32 %v464, 2147483648
    %v501 = vsel %vm499, %v500, %v498
    %v502 = vrsqrt.pop %v465
    %v503 = vmul.f32 %v502, %v465
    %v504 = vmul.f32 %v503, %v502
    %v505 = vmul.f32 0.5, %v504
    %v506 = vsub.f32 1.5, %v505
    %v507 = vmul.f32 %v502, %v506
    %v508 = vmul.f32 %v465, %v507
    %vm509 = vcmp.eq.f32.partialorder %v465, inf
    %v510 = vsel %vm509, %v465, %v508
    %vm511 = vcmp.eq.f32.partialorder %v465, 0.0
    %v512 = vand.u32 %v465, 2147483648
    %v513 = vsel %vm511, %v512, %v510
    %vm514 = vcmask 261120
    %515 = vst.msk [vmem:[#allocation3] sm:$0xff] %vm514, %v319
    %516 = vst.msk [vmem:[#allocation3 + $0x8] sm:$0xff] %vm514, %v331
    %517 = vst.msk [vmem:[#allocation3 + $0x10] sm:$0xff] %vm514, %v343
    %518 = vst.msk [vmem:[#allocation3 + $0x18] sm:$0xff] %vm514, %v355
    %519 = vst.msk [vmem:[#allocation5] sm:$0xff] %vm514, %v477
    %520 = vst.msk [vmem:[#allocation5 + $0x8] sm:$0xff] %vm514, %v489
    %521 = vst.msk [vmem:[#allocation5 + $0x10] sm:$0xff] %vm514, %v501
    %522 = vst.msk [vmem:[#allocation5 + $0x18] sm:$0xff] %vm514, %v513
    %v523 = vsub.f32 %v319, %v477
    %v524 = vsub.f32 %v331, %v489
    %v525 = vsub.f32 %v343, %v501
    %v526 = vsub.f32 %v355, %v513
    %v527 = vmul.f32 %v523, %v523
    %v528 = vmul.f32 %v524, %v524
    %v529 = vmul.f32 %v525, %v525
    %v530 = vmul.f32 %v526, %v526
    %v531 = vmul.f32 %v527, 0.6944444
    %v532 = vmul.f32 %v528, 0.6944444
    %v533 = vmul.f32 %v529, 0.6944444
    %v534 = vmul.f32 %v530, 0.6944444
    %v535 = vsub.f32 1.0, %v531
    %v536 = vsub.f32 1.0, %v532
    %v537 = vsub.f32 1.0, %v533
    %v538 = vsub.f32 1.0, %v534
    %v539 = vmax.f32 %v535, 0.0
    %v540 = vmax.f32 %v536, 0.0
    %v541 = vmax.f32 %v537, 0.0
    %v542 = vmax.f32 %v538, 0.0
    %543 = vst.msk [vmem:[#allocation7] sm:$0xff] %vm514, %v539
    %544 = vst.msk [vmem:[#allocation7 + $0x8] sm:$0xff] %vm514, %v540
    %545 = vst.msk [vmem:[#allocation7 + $0x10] sm:$0xff] %vm514, %v541
    %546 = vst.msk [vmem:[#allocation7 + $0x18] sm:$0xff] %vm514, %v542
    %v547 = vld [vmem:[%s7] sm:$0xff]
    %v548 = vld [vmem:[%s9] sm:$0x1]
    %v550 = vperm.slane %v548, 0
    %vm552 = vcmask 64512
    %v554 = vsel %vm552, %v179, 0
    %v557 = vsel %vm552, %v180, 0
    %v560 = vsel %vm552, %v181, 0
    %v563 = vsel %vm552, %v182, 0
    %565 = vmatpush.msra.mxu0 0.0
    %566 = vmatpush.msra.mxu0 0.0
    %567 = vmatpush.msra.mxu0 0.0
    %568 = vmatpush.msra.mxu0 0.0
    %569 = vmatpush.msra.mxu0 0.0
    %570 = vmatpush.msra.mxu0 0.0
    %571 = vmatpush.msra.mxu0 0.0
    %572 = vmatpush.msra.mxu0 0.0
    %573 = vmatpush.msra.mxu0 0.0
    %574 = vmatpush.msra.mxu0 0.0
    %575 = vmatpush.msra.mxu0 0.0
    %576 = vmatpush.msra.mxu0 0.0
    %577 = vmatpush.msra.mxu0 0.0
    %578 = vmatpush.msra.mxu0 0.0
    %579 = vmatpush.msra.mxu0 0.0
    %580 = vmatpush.msra.mxu0 %v547
    %581 = vmatmul.f32.gmra.mxu0 %v554
    %v582 = vpop.f32.mrf.mxu0
    %v583 = vadd.f32 %v550, %v582
    %584 = vmatmul.f32.gmra.mxu0 %v557
    %v585 = vpop.f32.mrf.mxu0
    %v586 = vadd.f32 %v550, %v585
    %587 = vmatmul.f32.gmra.mxu0 %v560
    %v588 = vpop.f32.mrf.mxu0
    %v589 = vadd.f32 %v550, %v588
    %590 = vmatmul.f32.gmra.mxu0 %v563
    %v591 = vpop.f32.mrf.mxu0
    %v592 = vadd.f32 %v550, %v591
    %593 = vdwg.mxu0
    %v594 = vld [vmem:[%s11] sm:$0xff]
    %v595 = vld [vmem:[%s11 + $0x8] sm:$0xff]
    %v596 = vld [vmem:[%s11 + $0x10] sm:$0xff]
    %v597 = vld [vmem:[%s11 + $0x18] sm:$0xff]
    %v598 = vld [vmem:[%s13] sm:$0x1]
    %v600 = vperm.slane %v598, 0
    %v603 = vsel %vm514, %v583, 0
    %v606 = vsel %vm514, %v586, 0
    %v609 = vsel %vm514, %v589, 0
    %v612 = vsel %vm514, %v592, 0
    %614 = vmatpush.msra.mxu0 0.0
    %615 = vmatpush.msra.mxu0 0.0
    %616 = vmatpush.msra.mxu0 0.0
    %617 = vmatpush.msra.mxu0 0.0
    %618 = vmatpush.msra.mxu0 0.0
    %619 = vmatpush.msra.mxu0 0.0
    %620 = vmatpush.msra.mxu0 0.0
    %621 = vmatpush.msra.mxu0 0.0
    %622 = vmatpush.msra.mxu0 0.0
    %623 = vmatpush.msra.mxu0 0.0
    %624 = vmatpush.msra.mxu0 0.0
    %625 = vmatpush.msra.mxu0 0.0
    %626 = vmatpush.msra.mxu0 %v597
    %627 = vmatpush.msra.mxu0 %v596
    %628 = vmatpush.msra.mxu0 %v595
    %629 = vmatpush.msra.mxu0 %v594
    %630 = vmatmul.f32.gmra.mxu0 %v603
    %v631 = vpop.f32.mrf.mxu0
    %v632 = vadd.f32 %v600, %v631
    %633 = vmatmul.f32.gmra.mxu0 %v606
    %v634 = vpop.f32.mrf.mxu0
    %v635 = vadd.f32 %v600, %v634
    %636 = vmatmul.f32.gmra.mxu0 %v609
    %v637 = vpop.f32.mrf.mxu0
    %v638 = vadd.f32 %v600, %v637
    %639 = vmatmul.f32.gmra.mxu0 %v612
    %v640 = vpop.f32.mrf.mxu0
    %v641 = vadd.f32 %v600, %v640
    %642 = vdwg.mxu0
    %v643 = vld [vmem:[%s15] sm:$0x3]
    %v644 = vsel %vm514, %v632, 0.0
    %v645 = vsel %vm514, %v635, 0.0
    %v646 = vadd.f32 %v644, %v645
    %v647 = vsel %vm514, %v638, 0.0
    %v648 = vadd.f32 %v646, %v647
    %v649 = vsel %vm514, %v641, 0.0
    %v650 = vadd.f32 %v648, %v649
    %v651 = vrot.slane %v650, 4
    %v652 = vadd.f32 %v650, %v651
    %v653 = vrot.slane %v652, 2
    %v654 = vadd.f32 %v652, %v653
    %v655 = vrot.slane %v654, 1
    %v656 = vadd.f32 %v654, %v655
    %v657 = vrcp.pop 32.0
    %v658 = vmul.f32 32.0, %v657
    %v659 = vsub.f32 1.0, %v658
    %v660 = vmul.f32 %v657, %v659
    %v661 = vadd.f32 %v657, %v660
    %vm662 = vweird.f32 %v657
    %v663 = vsel %vm662, %v657, %v661
    %v664 = vmul.f32 %v656, %v663
    %v665 = vsub.f32 %v632, %v664
    %v666 = vsub.f32 %v635, %v664
    %v667 = vsub.f32 %v638, %v664
    %v668 = vsub.f32 %v641, %v664
    %v669 = vmul.f32 %v665, %v665
    %v670 = vmul.f32 %v666, %v666
    %v671 = vmul.f32 %v667, %v667
    %v672 = vmul.f32 %v668, %v668
    %v673 = vsel %vm514, %v669, 0.0
    %v674 = vsel %vm514, %v670, 0.0
    %v675 = vadd.f32 %v673, %v674
    %v676 = vsel %vm514, %v671, 0.0
    %v677 = vadd.f32 %v675, %v676
    %v678 = vsel %vm514, %v672, 0.0
    %v679 = vadd.f32 %v677, %v678
    %v680 = vrot.slane %v679, 4
    %v681 = vadd.f32 %v679, %v680
    %v682 = vrot.slane %v681, 2
    %v683 = vadd.f32 %v681, %v682
    %v684 = vrot.slane %v683, 1
    %v685 = vadd.f32 %v683, %v684
    %v686 = vmul.f32 %v685, %v663
    %v687 = vadd.f32 %v686, 1e-05
    %v688 = vrsqrt.pop %v687
    %v689 = vmul.f32 %v688, %v687
    %v690 = vmul.f32 %v689, %v688
    %v691 = vmul.f32 0.5, %v690
    %v692 = vsub.f32 1.5, %v691
    %v693 = vmul.f32 %v688, %v692
    %vm694 = vweird.f32 %v687
    %vm695 = vweird.f32 %v688
    %vm696 = vmor %vm694, %vm695
    %v697 = vsel %vm696, %v688, %v693
    %v698 = vmul.f32 %v665, %v697
    %v699 = vmul.f32 %v666, %v697
    %v700 = vmul.f32 %v667, %v697
    %v701 = vmul.f32 %v668, %v697
    %v702 = vperm.slane %v643, 0
    %v703 = vmul.f32 %v698, %v702
    %v704 = vmul.f32 %v699, %v702
    %v705 = vmul.f32 %v700, %v702
    %v706 = vmul.f32 %v701, %v702
    %v707 = vperm.slane %v643, 1
    %v708 = vadd.f32 %v703, %v707
    %v709 = vadd.f32 %v704, %v707
    %v710 = vadd.f32 %v705, %v707
    %v711 = vadd.f32 %v706, %v707
    %v712 = vmax.f32 %v708, 0.0
    %v713 = vmax.f32 %v709, 0.0
    %v714 = vmax.f32 %v710, 0.0
    %v715 = vmax.f32 %v711, 0.0
    %v716 = vld [vmem:[%s17] sm:$0xff]
    %v717 = vld [vmem:[%s17 + $0x8] sm:$0xff]
    %v718 = vld [vmem:[%s17 + $0x10] sm:$0xff]
    %v719 = vld [vmem:[%s17 + $0x18] sm:$0xff]
    %v720 = vld [vmem:[%s19] sm:$0x1]
    %v722 = vperm.slane %v720, 0
    %v725 = vsel %vm514, %v712, 0
    %v728 = vsel %vm514, %v713, 0
    %v731 = vsel %vm514, %v714, 0
    %v734 = vsel %vm514, %v715, 0
    %736 = vmatpush.msra.mxu0 0.0
    %737 = vmatpush.msra.mxu0 0.0
    %738 = vmatpush.msra.mxu0 0.0
    %739 = vmatpush.msra.mxu0 0.0
    %740 = vmatpush.msra.mxu0 0.0
    %741 = vmatpush.msra.mxu0 0.0
    %742 = vmatpush.msra.mxu0 0.0
    %743 = vmatpush.msra.mxu0 0.0
    %744 = vmatpush.msra.mxu0 0.0
    %745 = vmatpush.msra.mxu0 0.0
    %746 = vmatpush.msra.mxu0 0.0
    %747 = vmatpush.msra.mxu0 0.0
    %748 = vmatpush.msra.mxu0 %v719
    %749 = vmatpush.msra.mxu0 %v718
    %750 = vmatpush.msra.mxu0 %v717
    %751 = vmatpush.msra.mxu0 %v716
    %752 = vmatmul.f32.gmra.mxu0 %v725
    %v753 = vpop.f32.mrf.mxu0
    %v754 = vadd.f32 %v722, %v753
    %755 = vmatmul.f32.gmra.mxu0 %v728
    %v756 = vpop.f32.mrf.mxu0
    %v757 = vadd.f32 %v722, %v756
    %758 = vmatmul.f32.gmra.mxu0 %v731
    %v759 = vpop.f32.mrf.mxu0
    %v760 = vadd.f32 %v722, %v759
    %761 = vmatmul.f32.gmra.mxu0 %v734
    %v762 = vpop.f32.mrf.mxu0
    %v763 = vadd.f32 %v722, %v762
    %764 = vdwg.mxu0
    %769 = vrot.lane.b32.xlu0 %v754, 96
    %v770 = vpop.permute.xlu0 %769
    %771 = vrot.lane.b32.xlu0 %v757, 96
    %v772 = vpop.permute.xlu0 %771
    %773 = vrot.lane.b32.xlu0 %v760, 96
    %v774 = vpop.permute.xlu0 %773
    %775 = vrot.lane.b32.xlu0 %v763, 96
    %v776 = vpop.permute.xlu0 %775
    %v777 = vsel %vm552, %v754, 0
    %v779 = vsel %vm552, %v757, 0
    %v781 = vsel %vm552, %v760, 0
    %v783 = vsel %vm552, %v763, 0
    %v785 = vsel %vm552, %v770, 0
    %v787 = vsel %vm552, %v772, 0
    %v789 = vsel %vm552, %v774, 0
    %v791 = vsel %vm552, %v776, 0
    %793 = vmatpush.xpose.msra.mxu0 0.0
    %794 = vmatpush.xpose.msra.mxu0 0.0
    %795 = vmatpush.xpose.msra.mxu0 0.0
    %796 = vmatpush.xpose.msra.mxu0 0.0
    %797 = vmatpush.xpose.msra.mxu0 0.0
    %798 = vmatpush.xpose.msra.mxu0 0.0
    %799 = vmatpush.xpose.msra.mxu0 0.0
    %800 = vmatpush.xpose.msra.mxu0 0.0
    %801 = vmatpush.xpose.msra.mxu0 0.0
    %802 = vmatpush.xpose.msra.mxu0 0.0
    %803 = vmatpush.xpose.msra.mxu0 0.0
    %804 = vmatpush.xpose.msra.mxu0 0.0
    %805 = vmatpush.xpose.msra.mxu0 %v791
    %806 = vmatpush.xpose.msra.mxu0 %v789
    %807 = vmatpush.xpose.msra.mxu0 %v787
    %808 = vmatpush.xpose.msra.mxu0 %v785
    %809 = vmatmul.f32.gmra.mxu0 %v777
    %v810 = vpop.f32.mrf.mxu0
    %v811 = vadd.f32 0.0, %v810
    %812 = vmatmul.f32.gmra.mxu0 %v779
    %v813 = vpop.f32.mrf.mxu0
    %v814 = vadd.f32 0.0, %v813
    %815 = vmatmul.f32.gmra.mxu0 %v781
    %v816 = vpop.f32.mrf.mxu0
    %v817 = vadd.f32 0.0, %v816
    %818 = vmatmul.f32.gmra.mxu0 %v783
    %v819 = vpop.f32.mrf.mxu0
    %v820 = vadd.f32 0.0, %v819
    %821 = vdwg.mxu0
    %v822 = vmul.f32 %v811, 0.35355338
    %v823 = vmul.f32 %v814, 0.35355338
    %v824 = vmul.f32 %v817, 0.35355338
    %v825 = vmul.f32 %v820, 0.35355338
    %v826 = vmul.f32 %v539, %v822
    %v827 = vmul.f32 %v540, %v823
    %v828 = vmul.f32 %v541, %v824
    %v829 = vmul.f32 %v542, %v825
    %v830 = vsel %vm514, %v826, -inf
    %831 = vmax.xlane.f32.xlu0 %v830
    %v832 = vpop.xlane.xlu0 %831
    %v833 = vsel %vm514, %v827, -inf
    %834 = vmax.xlane.f32.xlu0 %v833
    %v835 = vpop.xlane.xlu0 %834
    %v836 = vsel %vm514, %v828, -inf
    %837 = vmax.xlane.f32.xlu0 %v836
    %v838 = vpop.xlane.xlu0 %837
    %v839 = vsel %vm514, %v829, -inf
    %840 = vmax.xlane.f32.xlu0 %v839
    %v841 = vpop.xlane.xlu0 %840
    %v842 = vsub.f32 %v826, %v832
    %v843 = vsub.f32 %v827, %v835
    %v844 = vsub.f32 %v828, %v838
    %v845 = vsub.f32 %v829, %v841
    %v846 = vmul.f32 %v842, 1.442695
    %v847 = vpow.pop %v846
    %v848 = vmul.f32 %v843, 1.442695
    %v849 = vpow.pop %v848
    %v850 = vmul.f32 %v844, 1.442695
    %v851 = vpow.pop %v850
    %v852 = vmul.f32 %v845, 1.442695
    %v853 = vpow.pop %v852
    %v854 = vsel %vm514, %v847, 0.0
    %855 = vadd.xlane.f32.xlu0 %v854
    %v856 = vpop.xlane.xlu0 %855
    %v857 = vsel %vm514, %v849, 0.0
    %858 = vadd.xlane.f32.xlu0 %v857
    %v859 = vpop.xlane.xlu0 %858
    %v860 = vsel %vm514, %v851, 0.0
    %861 = vadd.xlane.f32.xlu0 %v860
    %v862 = vpop.xlane.xlu0 %861
    %v863 = vsel %vm514, %v853, 0.0
    %864 = vadd.xlane.f32.xlu0 %v863
    %v865 = vpop.xlane.xlu0 %864
    %v866 = vrcp.pop %v856
    %v867 = vmul.f32 %v856, %v866
    %v868 = vsub.f32 1.0, %v867
    %v869 = vmul.f32 %v866, %v868
    %v870 = vadd.f32 %v866, %v869
    %vm871 = vweird.f32 %v856
    %vm872 = vweird.f32 %v866
    %vm873 = vmor %vm871, %vm872
    %v874 = vsel %vm873, %v866, %v870
    %v875 = vand.u32 2147483647, %v856
    %vm876 = vcmp.eq.f32.partialorder %v875, 8.507059e+37
    %v877 = vand.u32 %v856, 2147483648
    %v878 = vor.u32 1.1754944e-38, %v877
    %v879 = vsel %vm876, %v878, %v874
    %v880 = vmul.f32 %v847, %v879
    %v881 = vrcp.pop %v859
    %v882 = vmul.f32 %v859, %v881
    %v883 = vsub.f32 1.0, %v882
    %v884 = vmul.f32 %v881, %v883
    %v885 = vadd.f32 %v881, %v884
    %vm886 = vweird.f32 %v859
    %vm887 = vweird.f32 %v881
    %vm888 = vmor %vm886, %vm887
    %v889 = vsel %vm888, %v881, %v885
    %v890 = vand.u32 2147483647, %v859
    %vm891 = vcmp.eq.f32.partialorder %v890, 8.507059e+37
    %v892 = vand.u32 %v859, 2147483648
    %v893 = vor.u32 1.1754944e-38, %v892
    %v894 = vsel %vm891, %v893, %v889
    %v895 = vmul.f32 %v849, %v894
    %v896 = vrcp.pop %v862
    %v897 = vmul.f32 %v862, %v896
    %v898 = vsub.f32 1.0, %v897
    %v899 = vmul.f32 %v896, %v898
    %v900 = vadd.f32 %v896, %v899
    %vm901 = vweird.f32 %v862
    %vm902 = vweird.f32 %v896
    %vm903 = vmor %vm901, %vm902
    %v904 = vsel %vm903, %v896, %v900
    %v905 = vand.u32 2147483647, %v862
    %vm906 = vcmp.eq.f32.partialorder %v905, 8.507059e+37
    %v907 = vand.u32 %v862, 2147483648
    %v908 = vor.u32 1.1754944e-38, %v907
    %v909 = vsel %vm906, %v908, %v904
    %v910 = vmul.f32 %v851, %v909
    %v911 = vrcp.pop %v865
    %v912 = vmul.f32 %v865, %v911
    %v913 = vsub.f32 1.0, %v912
    %v914 = vmul.f32 %v911, %v913
    %v915 = vadd.f32 %v911, %v914
    %vm916 = vweird.f32 %v865
    %vm917 = vweird.f32 %v911
    %vm918 = vmor %vm916, %vm917
    %v919 = vsel %vm918, %v911, %v915
    %v920 = vand.u32 2147483647, %v865
    %vm921 = vcmp.eq.f32.partialorder %v920, 8.507059e+37
    %v922 = vand.u32 %v865, 2147483648
    %v923 = vor.u32 1.1754944e-38, %v922
    %v924 = vsel %vm921, %v923, %v919
    %v925 = vmul.f32 %v853, %v924
    %926 = vrot.lane.b32.xlu0 %v754, 64
    %v927 = vpop.permute.xlu0 %926
    %928 = vrot.lane.b32.xlu0 %v757, 64
    %v929 = vpop.permute.xlu0 %928
    %930 = vrot.lane.b32.xlu0 %v760, 64
    %v931 = vpop.permute.xlu0 %930
    %932 = vrot.lane.b32.xlu0 %v763, 64
    %v933 = vpop.permute.xlu0 %932
    %v939 = vsel %vm514, %v880, 0
    %v942 = vsel %vm514, %v895, 0
    %v945 = vsel %vm514, %v910, 0
    %v948 = vsel %vm514, %v925, 0
    %950 = vmatpush.msra.mxu0 0.0
    %951 = vmatpush.msra.mxu0 0.0
    %952 = vmatpush.msra.mxu0 0.0
    %953 = vmatpush.msra.mxu0 0.0
    %954 = vmatpush.msra.mxu0 0.0
    %955 = vmatpush.msra.mxu0 0.0
    %956 = vmatpush.msra.mxu0 0.0
    %957 = vmatpush.msra.mxu0 0.0
    %958 = vmatpush.msra.mxu0 0.0
    %959 = vmatpush.msra.mxu0 0.0
    %960 = vmatpush.msra.mxu0 0.0
    %961 = vmatpush.msra.mxu0 0.0
    %962 = vmatpush.msra.mxu0 %v933
    %963 = vmatpush.msra.mxu0 %v931
    %964 = vmatpush.msra.mxu0 %v929
    %965 = vmatpush.msra.mxu0 %v927
    %966 = vmatmul.f32.gmra.mxu0 %v939
    %v967 = vpop.f32.mrf.mxu0
    %v968 = vadd.f32 0.0, %v967
    %969 = vmatmul.f32.gmra.mxu0 %v942
    %v970 = vpop.f32.mrf.mxu0
    %v971 = vadd.f32 0.0, %v970
    %972 = vmatmul.f32.gmra.mxu0 %v945
    %v973 = vpop.f32.mrf.mxu0
    %v974 = vadd.f32 0.0, %v973
    %975 = vmatmul.f32.gmra.mxu0 %v948
    %v976 = vpop.f32.mrf.mxu0
    %v977 = vadd.f32 0.0, %v976
    %978 = vdwg.mxu0
    %979 = vrot.lane.b32.xlu0 %v754, 120
    %v980 = vpop.permute.xlu0 %979
    %981 = vrot.lane.b32.xlu0 %v757, 120
    %v982 = vpop.permute.xlu0 %981
    %983 = vrot.lane.b32.xlu0 %v760, 120
    %v984 = vpop.permute.xlu0 %983
    %985 = vrot.lane.b32.xlu0 %v763, 120
    %v986 = vpop.permute.xlu0 %985
    %987 = vrot.lane.b32.xlu0 %v754, 88
    %v988 = vpop.permute.xlu0 %987
    %989 = vrot.lane.b32.xlu0 %v757, 88
    %v990 = vpop.permute.xlu0 %989
    %991 = vrot.lane.b32.xlu0 %v760, 88
    %v992 = vpop.permute.xlu0 %991
    %993 = vrot.lane.b32.xlu0 %v763, 88
    %v994 = vpop.permute.xlu0 %993
    %v995 = vsel %vm552, %v980, 0
    %v997 = vsel %vm552, %v982, 0
    %v999 = vsel %vm552, %v984, 0
    %v1001 = vsel %vm552, %v986, 0
    %v1003 = vsel %vm552, %v988, 0
    %v1005 = vsel %vm552, %v990, 0
    %v1007 = vsel %vm552, %v992, 0
    %v1009 = vsel %vm552, %v994, 0
    %1011 = vmatpush.xpose.msra.mxu0 0.0
    %1012 = vmatpush.xpose.msra.mxu0 0.0
    %1013 = vmatpush.xpose.msra.mxu0 0.0
    %1014 = vmatpush.xpose.msra.mxu0 0.0
    %1015 = vmatpush.xpose.msra.mxu0 0.0
    %1016 = vmatpush.xpose.msra.mxu0 0.0
    %1017 = vmatpush.xpose.msra.mxu0 0.0
    %1018 = vmatpush.xpose.msra.mxu0 0.0
    %1019 = vmatpush.xpose.msra.mxu0 0.0
    %1020 = vmatpush.xpose.msra.mxu0 0.0
    %1021 = vmatpush.xpose.msra.mxu0 0.0
    %1022 = vmatpush.xpose.msra.mxu0 0.0
    %1023 = vmatpush.xpose.msra.mxu0 %v1009
    %1024 = vmatpush.xpose.msra.mxu0 %v1007
    %1025 = vmatpush.xpose.msra.mxu0 %v1005
    %1026 = vmatpush.xpose.msra.mxu0 %v1003
    %1027 = vmatmul.f32.gmra.mxu0 %v995
    %v1028 = vpop.f32.mrf.mxu0
    %v1029 = vadd.f32 0.0, %v1028
    %1030 = vmatmul.f32.gmra.mxu0 %v997
    %v1031 = vpop.f32.mrf.mxu0
    %v1032 = vadd.f32 0.0, %v1031
    %1033 = vmatmul.f32.gmra.mxu0 %v999
    %v1034 = vpop.f32.mrf.mxu0
    %v1035 = vadd.f32 0.0, %v1034
    %1036 = vmatmul.f32.gmra.mxu0 %v1001
    %v1037 = vpop.f32.mrf.mxu0
    %v1038 = vadd.f32 0.0, %v1037
    %1039 = vdwg.mxu0
    %v1040 = vmul.f32 %v1029, 0.35355338
    %v1041 = vmul.f32 %v1032, 0.35355338
    %v1042 = vmul.f32 %v1035, 0.35355338
    %v1043 = vmul.f32 %v1038, 0.35355338
    %v1044 = vmul.f32 %v539, %v1040
    %v1045 = vmul.f32 %v540, %v1041
    %v1046 = vmul.f32 %v541, %v1042
    %v1047 = vmul.f32 %v542, %v1043
    %v1048 = vsel %vm514, %v1044, -inf
    %1049 = vmax.xlane.f32.xlu0 %v1048
    %v1050 = vpop.xlane.xlu0 %1049
    %v1051 = vsel %vm514, %v1045, -inf
    %1052 = vmax.xlane.f32.xlu0 %v1051
    %v1053 = vpop.xlane.xlu0 %1052
    %v1054 = vsel %vm514, %v1046, -inf
    %1055 = vmax.xlane.f32.xlu0 %v1054
    %v1056 = vpop.xlane.xlu0 %1055
    %v1057 = vsel %vm514, %v1047, -inf
    %1058 = vmax.xlane.f32.xlu0 %v1057
    %v1059 = vpop.xlane.xlu0 %1058
    %v1060 = vsub.f32 %v1044, %v1050
    %v1061 = vsub.f32 %v1045, %v1053
    %v1062 = vsub.f32 %v1046, %v1056
    %v1063 = vsub.f32 %v1047, %v1059
    %v1064 = vmul.f32 %v1060, 1.442695
    %v1065 = vpow.pop %v1064
    %v1066 = vmul.f32 %v1061, 1.442695
    %v1067 = vpow.pop %v1066
    %v1068 = vmul.f32 %v1062, 1.442695
    %v1069 = vpow.pop %v1068
    %v1070 = vmul.f32 %v1063, 1.442695
    %v1071 = vpow.pop %v1070
    %v1072 = vsel %vm514, %v1065, 0.0
    %1073 = vadd.xlane.f32.xlu0 %v1072
    %v1074 = vpop.xlane.xlu0 %1073
    %v1075 = vsel %vm514, %v1067, 0.0
    %1076 = vadd.xlane.f32.xlu0 %v1075
    %v1077 = vpop.xlane.xlu0 %1076
    %v1078 = vsel %vm514, %v1069, 0.0
    %1079 = vadd.xlane.f32.xlu0 %v1078
    %v1080 = vpop.xlane.xlu0 %1079
    %v1081 = vsel %vm514, %v1071, 0.0
    %1082 = vadd.xlane.f32.xlu0 %v1081
    %v1083 = vpop.xlane.xlu0 %1082
    %v1084 = vrcp.pop %v1074
    %v1085 = vmul.f32 %v1074, %v1084
    %v1086 = vsub.f32 1.0, %v1085
    %v1087 = vmul.f32 %v1084, %v1086
    %v1088 = vadd.f32 %v1084, %v1087
    %vm1089 = vweird.f32 %v1074
    %vm1090 = vweird.f32 %v1084
    %vm1091 = vmor %vm1089, %vm1090
    %v1092 = vsel %vm1091, %v1084, %v1088
    %v1093 = vand.u32 2147483647, %v1074
    %vm1094 = vcmp.eq.f32.partialorder %v1093, 8.507059e+37
    %v1095 = vand.u32 %v1074, 2147483648
    %v1096 = vor.u32 1.1754944e-38, %v1095
    %v1097 = vsel %vm1094, %v1096, %v1092
    %v1098 = vmul.f32 %v1065, %v1097
    %v1099 = vrcp.pop %v1077
    %v1100 = vmul.f32 %v1077, %v1099
    %v1101 = vsub.f32 1.0, %v1100
    %v1102 = vmul.f32 %v1099, %v1101
    %v1103 = vadd.f32 %v1099, %v1102
    %vm1104 = vweird.f32 %v1077
    %vm1105 = vweird.f32 %v1099
    %vm1106 = vmor %vm1104, %vm1105
    %v1107 = vsel %vm1106, %v1099, %v1103
    %v1108 = vand.u32 2147483647, %v1077
    %vm1109 = vcmp.eq.f32.partialorder %v1108, 8.507059e+37
    %v1110 = vand.u32 %v1077, 2147483648
    %v1111 = vor.u32 1.1754944e-38, %v1110
    %v1112 = vsel %vm1109, %v1111, %v1107
    %v1113 = vmul.f32 %v1067, %v1112
    %v1114 = vrcp.pop %v1080
    %v1115 = vmul.f32 %v1080, %v1114
    %v1116 = vsub.f32 1.0, %v1115
    %v1117 = vmul.f32 %v1114, %v1116
    %v1118 = vadd.f32 %v1114, %v1117
    %vm1119 = vweird.f32 %v1080
    %vm1120 = vweird.f32 %v1114
    %vm1121 = vmor %vm1119, %vm1120
    %v1122 = vsel %vm1121, %v1114, %v1118
    %v1123 = vand.u32 2147483647, %v1080
    %vm1124 = vcmp.eq.f32.partialorder %v1123, 8.507059e+37
    %v1125 = vand.u32 %v1080, 2147483648
    %v1126 = vor.u32 1.1754944e-38, %v1125
    %v1127 = vsel %vm1124, %v1126, %v1122
    %v1128 = vmul.f32 %v1069, %v1127
    %v1129 = vrcp.pop %v1083
    %v1130 = vmul.f32 %v1083, %v1129
    %v1131 = vsub.f32 1.0, %v1130
    %v1132 = vmul.f32 %v1129, %v1131
    %v1133 = vadd.f32 %v1129, %v1132
    %vm1134 = vweird.f32 %v1083
    %vm1135 = vweird.f32 %v1129
    %vm1136 = vmor %vm1134, %vm1135
    %v1137 = vsel %vm1136, %v1129, %v1133
    %v1138 = vand.u32 2147483647, %v1083
    %vm1139 = vcmp.eq.f32.partialorder %v1138, 8.507059e+37
    %v1140 = vand.u32 %v1083, 2147483648
    %v1141 = vor.u32 1.1754944e-38, %v1140
    %v1142 = vsel %vm1139, %v1141, %v1137
    %v1143 = vmul.f32 %v1071, %v1142
    %1144 = vrot.lane.b32.xlu0 %v754, 56
    %v1145 = vpop.permute.xlu0 %1144
    %1146 = vrot.lane.b32.xlu0 %v757, 56
    %v1147 = vpop.permute.xlu0 %1146
    %1148 = vrot.lane.b32.xlu0 %v760, 56
    %v1149 = vpop.permute.xlu0 %1148
    %1150 = vrot.lane.b32.xlu0 %v763, 56
    %v1151 = vpop.permute.xlu0 %1150
    %v1157 = vsel %vm514, %v1098, 0
    %v1160 = vsel %vm514, %v1113, 0
    %v1163 = vsel %vm514, %v1128, 0
    %v1166 = vsel %vm514, %v1143, 0
    %1168 = vmatpush.msra.mxu0 0.0
    %1169 = vmatpush.msra.mxu0 0.0
    %1170 = vmatpush.msra.mxu0 0.0
    %1171 = vmatpush.msra.mxu0 0.0
    %1172 = vmatpush.msra.mxu0 0.0
    %1173 = vmatpush.msra.mxu0 0.0
    %1174 = vmatpush.msra.mxu0 0.0
    %1175 = vmatpush.msra.mxu0 0.0
    %1176 = vmatpush.msra.mxu0 0.0
    %1177 = vmatpush.msra.mxu0 0.0
    %1178 = vmatpush.msra.mxu0 0.0
    %1179 = vmatpush.msra.mxu0 0.0
    %1180 = vmatpush.msra.mxu0 %v1151
    %1181 = vmatpush.msra.mxu0 %v1149
    %1182 = vmatpush.msra.mxu0 %v1147
    %1183 = vmatpush.msra.mxu0 %v1145
    %1184 = vmatmul.f32.gmra.mxu0 %v1157
    %v1185 = vpop.f32.mrf.mxu0
    %v1186 = vadd.f32 0.0, %v1185
    %1187 = vmatmul.f32.gmra.mxu0 %v1160
    %v1188 = vpop.f32.mrf.mxu0
    %v1189 = vadd.f32 0.0, %v1188
    %1190 = vmatmul.f32.gmra.mxu0 %v1163
    %v1191 = vpop.f32.mrf.mxu0
    %v1192 = vadd.f32 0.0, %v1191
    %1193 = vmatmul.f32.gmra.mxu0 %v1166
    %v1194 = vpop.f32.mrf.mxu0
    %v1195 = vadd.f32 0.0, %v1194
    %1196 = vdwg.mxu0
    %1197 = vrot.lane.b32.xlu0 %v754, 112
    %v1198 = vpop.permute.xlu0 %1197
    %1199 = vrot.lane.b32.xlu0 %v757, 112
    %v1200 = vpop.permute.xlu0 %1199
    %1201 = vrot.lane.b32.xlu0 %v760, 112
    %v1202 = vpop.permute.xlu0 %1201
    %1203 = vrot.lane.b32.xlu0 %v763, 112
    %v1204 = vpop.permute.xlu0 %1203
    %1205 = vrot.lane.b32.xlu0 %v754, 80
    %v1206 = vpop.permute.xlu0 %1205
    %1207 = vrot.lane.b32.xlu0 %v757, 80
    %v1208 = vpop.permute.xlu0 %1207
    %1209 = vrot.lane.b32.xlu0 %v760, 80
    %v1210 = vpop.permute.xlu0 %1209
    %1211 = vrot.lane.b32.xlu0 %v763, 80
    %v1212 = vpop.permute.xlu0 %1211
    %v1213 = vsel %vm552, %v1198, 0
    %v1215 = vsel %vm552, %v1200, 0
    %v1217 = vsel %vm552, %v1202, 0
    %v1219 = vsel %vm552, %v1204, 0
    %v1221 = vsel %vm552, %v1206, 0
    %v1223 = vsel %vm552, %v1208, 0
    %v1225 = vsel %vm552, %v1210, 0
    %v1227 = vsel %vm552, %v1212, 0
    %1229 = vmatpush.xpose.msra.mxu0 0.0
    %1230 = vmatpush.xpose.msra.mxu0 0.0
    %1231 = vmatpush.xpose.msra.mxu0 0.0
    %1232 = vmatpush.xpose.msra.mxu0 0.0
    %1233 = vmatpush.xpose.msra.mxu0 0.0
    %1234 = vmatpush.xpose.msra.mxu0 0.0
    %1235 = vmatpush.xpose.msra.mxu0 0.0
    %1236 = vmatpush.xpose.msra.mxu0 0.0
    %1237 = vmatpush.xpose.msra.mxu0 0.0
    %1238 = vmatpush.xpose.msra.mxu0 0.0
    %1239 = vmatpush.xpose.msra.mxu0 0.0
    %1240 = vmatpush.xpose.msra.mxu0 0.0
    %1241 = vmatpush.xpose.msra.mxu0 %v1227
    %1242 = vmatpush.xpose.msra.mxu0 %v1225
    %1243 = vmatpush.xpose.msra.mxu0 %v1223
    %1244 = vmatpush.xpose.msra.mxu0 %v1221
    %1245 = vmatmul.f32.gmra.mxu0 %v1213
    %v1246 = vpop.f32.mrf.mxu0
    %v1247 = vadd.f32 0.0, %v1246
    %1248 = vmatmul.f32.gmra.mxu0 %v1215
    %v1249 = vpop.f32.mrf.mxu0
    %v1250 = vadd.f32 0.0, %v1249
    %1251 = vmatmul.f32.gmra.mxu0 %v1217
    %v1252 = vpop.f32.mrf.mxu0
    %v1253 = vadd.f32 0.0, %v1252
    %1254 = vmatmul.f32.gmra.mxu0 %v1219
    %v1255 = vpop.f32.mrf.mxu0
    %v1256 = vadd.f32 0.0, %v1255
    %1257 = vdwg.mxu0
    %v1258 = vmul.f32 %v1247, 0.35355338
    %v1259 = vmul.f32 %v1250, 0.35355338
    %v1260 = vmul.f32 %v1253, 0.35355338
    %v1261 = vmul.f32 %v1256, 0.35355338
    %v1262 = vmul.f32 %v539, %v1258
    %v1263 = vmul.f32 %v540, %v1259
    %v1264 = vmul.f32 %v541, %v1260
    %v1265 = vmul.f32 %v542, %v1261
    %v1266 = vsel %vm514, %v1262, -inf
    %1267 = vmax.xlane.f32.xlu0 %v1266
    %v1268 = vpop.xlane.xlu0 %1267
    %v1269 = vsel %vm514, %v1263, -inf
    %1270 = vmax.xlane.f32.xlu0 %v1269
    %v1271 = vpop.xlane.xlu0 %1270
    %v1272 = vsel %vm514, %v1264, -inf
    %1273 = vmax.xlane.f32.xlu0 %v1272
    %v1274 = vpop.xlane.xlu0 %1273
    %v1275 = vsel %vm514, %v1265, -inf
    %1276 = vmax.xlane.f32.xlu0 %v1275
    %v1277 = vpop.xlane.xlu0 %1276
    %v1278 = vsub.f32 %v1262, %v1268
    %v1279 = vsub.f32 %v1263, %v1271
    %v1280 = vsub.f32 %v1264, %v1274
    %v1281 = vsub.f32 %v1265, %v1277
    %v1282 = vmul.f32 %v1278, 1.442695
    %v1283 = vpow.pop %v1282
    %v1284 = vmul.f32 %v1279, 1.442695
    %v1285 = vpow.pop %v1284
    %v1286 = vmul.f32 %v1280, 1.442695
    %v1287 = vpow.pop %v1286
    %v1288 = vmul.f32 %v1281, 1.442695
    %v1289 = vpow.pop %v1288
    %v1290 = vsel %vm514, %v1283, 0.0
    %1291 = vadd.xlane.f32.xlu0 %v1290
    %v1292 = vpop.xlane.xlu0 %1291
    %v1293 = vsel %vm514, %v1285, 0.0
    %1294 = vadd.xlane.f32.xlu0 %v1293
    %v1295 = vpop.xlane.xlu0 %1294
    %v1296 = vsel %vm514, %v1287, 0.0
    %1297 = vadd.xlane.f32.xlu0 %v1296
    %v1298 = vpop.xlane.xlu0 %1297
    %v1299 = vsel %vm514, %v1289, 0.0
    %1300 = vadd.xlane.f32.xlu0 %v1299
    %v1301 = vpop.xlane.xlu0 %1300
    %v1302 = vrcp.pop %v1292
    %v1303 = vmul.f32 %v1292, %v1302
    %v1304 = vsub.f32 1.0, %v1303
    %v1305 = vmul.f32 %v1302, %v1304
    %v1306 = vadd.f32 %v1302, %v1305
    %vm1307 = vweird.f32 %v1292
    %vm1308 = vweird.f32 %v1302
    %vm1309 = vmor %vm1307, %vm1308
    %v1310 = vsel %vm1309, %v1302, %v1306
    %v1311 = vand.u32 2147483647, %v1292
    %vm1312 = vcmp.eq.f32.partialorder %v1311, 8.507059e+37
    %v1313 = vand.u32 %v1292, 2147483648
    %v1314 = vor.u32 1.1754944e-38, %v1313
    %v1315 = vsel %vm1312, %v1314, %v1310
    %v1316 = vmul.f32 %v1283, %v1315
    %v1317 = vrcp.pop %v1295
    %v1318 = vmul.f32 %v1295, %v1317
    %v1319 = vsub.f32 1.0, %v1318
    %v1320 = vmul.f32 %v1317, %v1319
    %v1321 = vadd.f32 %v1317, %v1320
    %vm1322 = vweird.f32 %v1295
    %vm1323 = vweird.f32 %v1317
    %vm1324 = vmor %vm1322, %vm1323
    %v1325 = vsel %vm1324, %v1317, %v1321
    %v1326 = vand.u32 2147483647, %v1295
    %vm1327 = vcmp.eq.f32.partialorder %v1326, 8.507059e+37
    %v1328 = vand.u32 %v1295, 2147483648
    %v1329 = vor.u32 1.1754944e-38, %v1328
    %v1330 = vsel %vm1327, %v1329, %v1325
    %v1331 = vmul.f32 %v1285, %v1330
    %v1332 = vrcp.pop %v1298
    %v1333 = vmul.f32 %v1298, %v1332
    %v1334 = vsub.f32 1.0, %v1333
    %v1335 = vmul.f32 %v1332, %v1334
    %v1336 = vadd.f32 %v1332, %v1335
    %vm1337 = vweird.f32 %v1298
    %vm1338 = vweird.f32 %v1332
    %vm1339 = vmor %vm1337, %vm1338
    %v1340 = vsel %vm1339, %v1332, %v1336
    %v1341 = vand.u32 2147483647, %v1298
    %vm1342 = vcmp.eq.f32.partialorder %v1341, 8.507059e+37
    %v1343 = vand.u32 %v1298, 2147483648
    %v1344 = vor.u32 1.1754944e-38, %v1343
    %v1345 = vsel %vm1342, %v1344, %v1340
    %v1346 = vmul.f32 %v1287, %v1345
    %v1347 = vrcp.pop %v1301
    %v1348 = vmul.f32 %v1301, %v1347
    %v1349 = vsub.f32 1.0, %v1348
    %v1350 = vmul.f32 %v1347, %v1349
    %v1351 = vadd.f32 %v1347, %v1350
    %vm1352 = vweird.f32 %v1301
    %vm1353 = vweird.f32 %v1347
    %vm1354 = vmor %vm1352, %vm1353
    %v1355 = vsel %vm1354, %v1347, %v1351
    %v1356 = vand.u32 2147483647, %v1301
    %vm1357 = vcmp.eq.f32.partialorder %v1356, 8.507059e+37
    %v1358 = vand.u32 %v1301, 2147483648
    %v1359 = vor.u32 1.1754944e-38, %v1358
    %v1360 = vsel %vm1357, %v1359, %v1355
    %v1361 = vmul.f32 %v1289, %v1360
    %1362 = vrot.lane.b32.xlu0 %v754, 48
    %v1363 = vpop.permute.xlu0 %1362
    %1364 = vrot.lane.b32.xlu0 %v757, 48
    %v1365 = vpop.permute.xlu0 %1364
    %1366 = vrot.lane.b32.xlu0 %v760, 48
    %v1367 = vpop.permute.xlu0 %1366
    %1368 = vrot.lane.b32.xlu0 %v763, 48
    %v1369 = vpop.permute.xlu0 %1368
    %v1375 = vsel %vm514, %v1316, 0
    %v1378 = vsel %vm514, %v1331, 0
    %v1381 = vsel %vm514, %v1346, 0
    %v1384 = vsel %vm514, %v1361, 0
    %1386 = vmatpush.msra.mxu0 0.0
    %1387 = vmatpush.msra.mxu0 0.0
    %1388 = vmatpush.msra.mxu0 0.0
    %1389 = vmatpush.msra.mxu0 0.0
    %1390 = vmatpush.msra.mxu0 0.0
    %1391 = vmatpush.msra.mxu0 0.0
    %1392 = vmatpush.msra.mxu0 0.0
    %1393 = vmatpush.msra.mxu0 0.0
    %1394 = vmatpush.msra.mxu0 0.0
    %1395 = vmatpush.msra.mxu0 0.0
    %1396 = vmatpush.msra.mxu0 0.0
    %1397 = vmatpush.msra.mxu0 0.0
    %1398 = vmatpush.msra.mxu0 %v1369
    %1399 = vmatpush.msra.mxu0 %v1367
    %1400 = vmatpush.msra.mxu0 %v1365
    %1401 = vmatpush.msra.mxu0 %v1363
    %1402 = vmatmul.f32.gmra.mxu0 %v1375
    %v1403 = vpop.f32.mrf.mxu0
    %v1404 = vadd.f32 0.0, %v1403
    %1405 = vmatmul.f32.gmra.mxu0 %v1378
    %v1406 = vpop.f32.mrf.mxu0
    %v1407 = vadd.f32 0.0, %v1406
    %1408 = vmatmul.f32.gmra.mxu0 %v1381
    %v1409 = vpop.f32.mrf.mxu0
    %v1410 = vadd.f32 0.0, %v1409
    %1411 = vmatmul.f32.gmra.mxu0 %v1384
    %v1412 = vpop.f32.mrf.mxu0
    %v1413 = vadd.f32 0.0, %v1412
    %1414 = vdwg.mxu0
    %1415 = vrot.lane.b32.xlu0 %v754, 104
    %v1416 = vpop.permute.xlu0 %1415
    %1417 = vrot.lane.b32.xlu0 %v757, 104
    %v1418 = vpop.permute.xlu0 %1417
    %1419 = vrot.lane.b32.xlu0 %v760, 104
    %v1420 = vpop.permute.xlu0 %1419
    %1421 = vrot.lane.b32.xlu0 %v763, 104
    %v1422 = vpop.permute.xlu0 %1421
    %1423 = vrot.lane.b32.xlu0 %v754, 72
    %v1424 = vpop.permute.xlu0 %1423
    %1425 = vrot.lane.b32.xlu0 %v757, 72
    %v1426 = vpop.permute.xlu0 %1425
    %1427 = vrot.lane.b32.xlu0 %v760, 72
    %v1428 = vpop.permute.xlu0 %1427
    %1429 = vrot.lane.b32.xlu0 %v763, 72
    %v1430 = vpop.permute.xlu0 %1429
    %v1431 = vsel %vm552, %v1416, 0
    %v1433 = vsel %vm552, %v1418, 0
    %v1435 = vsel %vm552, %v1420, 0
    %v1437 = vsel %vm552, %v1422, 0
    %v1439 = vsel %vm552, %v1424, 0
    %v1441 = vsel %vm552, %v1426, 0
    %v1443 = vsel %vm552, %v1428, 0
    %v1445 = vsel %vm552, %v1430, 0
    %1447 = vmatpush.xpose.msra.mxu0 0.0
    %1448 = vmatpush.xpose.msra.mxu0 0.0
    %1449 = vmatpush.xpose.msra.mxu0 0.0
    %1450 = vmatpush.xpose.msra.mxu0 0.0
    %1451 = vmatpush.xpose.msra.mxu0 0.0
    %1452 = vmatpush.xpose.msra.mxu0 0.0
    %1453 = vmatpush.xpose.msra.mxu0 0.0
    %1454 = vmatpush.xpose.msra.mxu0 0.0
    %1455 = vmatpush.xpose.msra.mxu0 0.0
    %1456 = vmatpush.xpose.msra.mxu0 0.0
    %1457 = vmatpush.xpose.msra.mxu0 0.0
    %1458 = vmatpush.xpose.msra.mxu0 0.0
    %1459 = vmatpush.xpose.msra.mxu0 %v1445
    %1460 = vmatpush.xpose.msra.mxu0 %v1443
    %1461 = vmatpush.xpose.msra.mxu0 %v1441
    %1462 = vmatpush.xpose.msra.mxu0 %v1439
    %1463 = vmatmul.f32.gmra.mxu0 %v1431
    %v1464 = vpop.f32.mrf.mxu0
    %v1465 = vadd.f32 0.0, %v1464
    %1466 = vmatmul.f32.gmra.mxu0 %v1433
    %v1467 = vpop.f32.mrf.mxu0
    %v1468 = vadd.f32 0.0, %v1467
    %1469 = vmatmul.f32.gmra.mxu0 %v1435
    %v1470 = vpop.f32.mrf.mxu0
    %v1471 = vadd.f32 0.0, %v1470
    %1472 = vmatmul.f32.gmra.mxu0 %v1437
    %v1473 = vpop.f32.mrf.mxu0
    %v1474 = vadd.f32 0.0, %v1473
    %1475 = vdwg.mxu0
    %v1476 = vmul.f32 %v1465, 0.35355338
    %v1477 = vmul.f32 %v1468, 0.35355338
    %v1478 = vmul.f32 %v1471, 0.35355338
    %v1479 = vmul.f32 %v1474, 0.35355338
    %v1480 = vmul.f32 %v539, %v1476
    %v1481 = vmul.f32 %v540, %v1477
    %v1482 = vmul.f32 %v541, %v1478
    %v1483 = vmul.f32 %v542, %v1479
    %v1484 = vsel %vm514, %v1480, -inf
    %1485 = vmax.xlane.f32.xlu0 %v1484
    %v1486 = vpop.xlane.xlu0 %1485
    %v1487 = vsel %vm514, %v1481, -inf
    %1488 = vmax.xlane.f32.xlu0 %v1487
    %v1489 = vpop.xlane.xlu0 %1488
    %v1490 = vsel %vm514, %v1482, -inf
    %1491 = vmax.xlane.f32.xlu0 %v1490
    %v1492 = vpop.xlane.xlu0 %1491
    %v1493 = vsel %vm514, %v1483, -inf
    %1494 = vmax.xlane.f32.xlu0 %v1493
    %v1495 = vpop.xlane.xlu0 %1494
    %v1496 = vsub.f32 %v1480, %v1486
    %v1497 = vsub.f32 %v1481, %v1489
    %v1498 = vsub.f32 %v1482, %v1492
    %v1499 = vsub.f32 %v1483, %v1495
    %v1500 = vmul.f32 %v1496, 1.442695
    %v1501 = vpow.pop %v1500
    %v1502 = vmul.f32 %v1497, 1.442695
    %v1503 = vpow.pop %v1502
    %v1504 = vmul.f32 %v1498, 1.442695
    %v1505 = vpow.pop %v1504
    %v1506 = vmul.f32 %v1499, 1.442695
    %v1507 = vpow.pop %v1506
    %v1508 = vsel %vm514, %v1501, 0.0
    %1509 = vadd.xlane.f32.xlu0 %v1508
    %v1510 = vpop.xlane.xlu0 %1509
    %v1511 = vsel %vm514, %v1503, 0.0
    %1512 = vadd.xlane.f32.xlu0 %v1511
    %v1513 = vpop.xlane.xlu0 %1512
    %v1514 = vsel %vm514, %v1505, 0.0
    %1515 = vadd.xlane.f32.xlu0 %v1514
    %v1516 = vpop.xlane.xlu0 %1515
    %v1517 = vsel %vm514, %v1507, 0.0
    %1518 = vadd.xlane.f32.xlu0 %v1517
    %v1519 = vpop.xlane.xlu0 %1518
    %v1520 = vrcp.pop %v1510
    %v1521 = vmul.f32 %v1510, %v1520
    %v1522 = vsub.f32 1.0, %v1521
    %v1523 = vmul.f32 %v1520, %v1522
    %v1524 = vadd.f32 %v1520, %v1523
    %vm1525 = vweird.f32 %v1510
    %vm1526 = vweird.f32 %v1520
    %vm1527 = vmor %vm1525, %vm1526
    %v1528 = vsel %vm1527, %v1520, %v1524
    %v1529 = vand.u32 2147483647, %v1510
    %vm1530 = vcmp.eq.f32.partialorder %v1529, 8.507059e+37
    %v1531 = vand.u32 %v1510, 2147483648
    %v1532 = vor.u32 1.1754944e-38, %v1531
    %v1533 = vsel %vm1530, %v1532, %v1528
    %v1534 = vmul.f32 %v1501, %v1533
    %v1535 = vrcp.pop %v1513
    %v1536 = vmul.f32 %v1513, %v1535
    %v1537 = vsub.f32 1.0, %v1536
    %v1538 = vmul.f32 %v1535, %v1537
    %v1539 = vadd.f32 %v1535, %v1538
    %vm1540 = vweird.f32 %v1513
    %vm1541 = vweird.f32 %v1535
    %vm1542 = vmor %vm1540, %vm1541
    %v1543 = vsel %vm1542, %v1535, %v1539
    %v1544 = vand.u32 2147483647, %v1513
    %vm1545 = vcmp.eq.f32.partialorder %v1544, 8.507059e+37
    %v1546 = vand.u32 %v1513, 2147483648
    %v1547 = vor.u32 1.1754944e-38, %v1546
    %v1548 = vsel %vm1545, %v1547, %v1543
    %v1549 = vmul.f32 %v1503, %v1548
    %v1550 = vrcp.pop %v1516
    %v1551 = vmul.f32 %v1516, %v1550
    %v1552 = vsub.f32 1.0, %v1551
    %v1553 = vmul.f32 %v1550, %v1552
    %v1554 = vadd.f32 %v1550, %v1553
    %vm1555 = vweird.f32 %v1516
    %vm1556 = vweird.f32 %v1550
    %vm1557 = vmor %vm1555, %vm1556
    %v1558 = vsel %vm1557, %v1550, %v1554
    %v1559 = vand.u32 2147483647, %v1516
    %vm1560 = vcmp.eq.f32.partialorder %v1559, 8.507059e+37
    %v1561 = vand.u32 %v1516, 2147483648
    %v1562 = vor.u32 1.1754944e-38, %v1561
    %v1563 = vsel %vm1560, %v1562, %v1558
    %v1564 = vmul.f32 %v1505, %v1563
    %v1565 = vrcp.pop %v1519
    %v1566 = vmul.f32 %v1519, %v1565
    %v1567 = vsub.f32 1.0, %v1566
    %v1568 = vmul.f32 %v1565, %v1567
    %v1569 = vadd.f32 %v1565, %v1568
    %vm1570 = vweird.f32 %v1519
    %vm1571 = vweird.f32 %v1565
    %vm1572 = vmor %vm1570, %vm1571
    %v1573 = vsel %vm1572, %v1565, %v1569
    %v1574 = vand.u32 2147483647, %v1519
    %vm1575 = vcmp.eq.f32.partialorder %v1574, 8.507059e+37
    %v1576 = vand.u32 %v1519, 2147483648
    %v1577 = vor.u32 1.1754944e-38, %v1576
    %v1578 = vsel %vm1575, %v1577, %v1573
    %v1579 = vmul.f32 %v1507, %v1578
    %1580 = vrot.lane.b32.xlu0 %v754, 40
    %v1581 = vpop.permute.xlu0 %1580
    %1582 = vrot.lane.b32.xlu0 %v757, 40
    %v1583 = vpop.permute.xlu0 %1582
    %1584 = vrot.lane.b32.xlu0 %v760, 40
    %v1585 = vpop.permute.xlu0 %1584
    %1586 = vrot.lane.b32.xlu0 %v763, 40
    %v1587 = vpop.permute.xlu0 %1586
    %v1593 = vsel %vm514, %v1534, 0
    %v1596 = vsel %vm514, %v1549, 0
    %v1599 = vsel %vm514, %v1564, 0
    %v1602 = vsel %vm514, %v1579, 0
    %1604 = vmatpush.msra.mxu0 0.0
    %1605 = vmatpush.msra.mxu0 0.0
    %1606 = vmatpush.msra.mxu0 0.0
    %1607 = vmatpush.msra.mxu0 0.0
    %1608 = vmatpush.msra.mxu0 0.0
    %1609 = vmatpush.msra.mxu0 0.0
    %1610 = vmatpush.msra.mxu0 0.0
    %1611 = vmatpush.msra.mxu0 0.0
    %1612 = vmatpush.msra.mxu0 0.0
    %1613 = vmatpush.msra.mxu0 0.0
    %1614 = vmatpush.msra.mxu0 0.0
    %1615 = vmatpush.msra.mxu0 0.0
    %1616 = vmatpush.msra.mxu0 %v1587
    %1617 = vmatpush.msra.mxu0 %v1585
    %1618 = vmatpush.msra.mxu0 %v1583
    %1619 = vmatpush.msra.mxu0 %v1581
    %1620 = vmatmul.f32.gmra.mxu0 %v1593
    %v1621 = vpop.f32.mrf.mxu0
    %v1622 = vadd.f32 0.0, %v1621
    %1623 = vmatmul.f32.gmra.mxu0 %v1596
    %v1624 = vpop.f32.mrf.mxu0
    %v1625 = vadd.f32 0.0, %v1624
    %1626 = vmatmul.f32.gmra.mxu0 %v1599
    %v1627 = vpop.f32.mrf.mxu0
    %v1628 = vadd.f32 0.0, %v1627
    %1629 = vmatmul.f32.gmra.mxu0 %v1602
    %v1630 = vpop.f32.mrf.mxu0
    %v1631 = vadd.f32 0.0, %v1630
    %1632 = vdwg.mxu0
    %1637 = vrot.lane.b32.xlu0 %v1186, 8
    %v1638 = vpop.permute.xlu0 %1637
    %1639 = vrot.lane.b32.xlu0 %v1189, 8
    %v1640 = vpop.permute.xlu0 %1639
    %1641 = vrot.lane.b32.xlu0 %v1192, 8
    %v1642 = vpop.permute.xlu0 %1641
    %1643 = vrot.lane.b32.xlu0 %v1195, 8
    %v1644 = vpop.permute.xlu0 %1643
    %1653 = vrot.lane.b32.xlu0 %v1404, 16
    %v1654 = vpop.permute.xlu0 %1653
    %1655 = vrot.lane.b32.xlu0 %v1407, 16
    %v1656 = vpop.permute.xlu0 %1655
    %1657 = vrot.lane.b32.xlu0 %v1410, 16
    %v1658 = vpop.permute.xlu0 %1657
    %1659 = vrot.lane.b32.xlu0 %v1413, 16
    %v1660 = vpop.permute.xlu0 %1659
    %1669 = vrot.lane.b32.xlu0 %v1622, 24
    %v1670 = vpop.permute.xlu0 %1669
    %1671 = vrot.lane.b32.xlu0 %v1625, 24
    %v1672 = vpop.permute.xlu0 %1671
    %1673 = vrot.lane.b32.xlu0 %v1628, 24
    %v1674 = vpop.permute.xlu0 %1673
    %1675 = vrot.lane.b32.xlu0 %v1631, 24
    %v1676 = vpop.permute.xlu0 %1675
    %v1681 = vsel %vm552, %v968, %v1638
    %v1682 = vsel %vm552, %v971, %v1640
    %v1683 = vsel %vm552, %v974, %v1642
    %v1684 = vsel %vm552, %v977, %v1644
    %vm1685 = vcmask 130048
    %v1686 = vsel %vm1685, %v1681, %v1654
    %v1687 = vsel %vm1685, %v1682, %v1656
    %v1688 = vsel %vm1685, %v1683, %v1658
    %v1689 = vsel %vm1685, %v1684, %v1660
    %vm1690 = vcmask 195584
    %v1691 = vsel %vm1690, %v1686, %v1670
    %v1692 = vsel %vm1690, %v1687, %v1672
    %v1693 = vsel %vm1690, %v1688, %v1674
    %v1694 = vsel %vm1690, %v1689, %v1676
    %v1695 = vld [vmem:[%s21] sm:$0xff]
    %v1696 = vld [vmem:[%s21 + $0x8] sm:$0xff]
    %v1697 = vld [vmem:[%s21 + $0x10] sm:$0xff]
    %v1698 = vld [vmem:[%s21 + $0x18] sm:$0xff]
    %v1699 = vld [vmem:[%s23] sm:$0x1]
    %v1701 = vperm.slane %v1699, 0
    %v1704 = vsel %vm514, %v1691, 0
    %v1707 = vsel %vm514, %v1692, 0
    %v1710 = vsel %vm514, %v1693, 0
    %v1713 = vsel %vm514, %v1694, 0
    %1715 = vmatpush.msra.mxu0 0.0
    %1716 = vmatpush.msra.mxu0 0.0
    %1717 = vmatpush.msra.mxu0 0.0
    %1718 = vmatpush.msra.mxu0 0.0
    %1719 = vmatpush.msra.mxu0 0.0
    %1720 = vmatpush.msra.mxu0 0.0
    %1721 = vmatpush.msra.mxu0 0.0
    %1722 = vmatpush.msra.mxu0 0.0
    %1723 = vmatpush.msra.mxu0 0.0
    %1724 = vmatpush.msra.mxu0 0.0
    %1725 = vmatpush.msra.mxu0 0.0
    %1726 = vmatpush.msra.mxu0 0.0
    %1727 = vmatpush.msra.mxu0 %v1698
    %1728 = vmatpush.msra.mxu0 %v1697
    %1729 = vmatpush.msra.mxu0 %v1696
    %1730 = vmatpush.msra.mxu0 %v1695
    %1731 = vmatmul.f32.gmra.mxu0 %v1704
    %v1732 = vpop.f32.mrf.mxu0
    %v1733 = vadd.f32 %v1701, %v1732
    %1734 = vmatmul.f32.gmra.mxu0 %v1707
    %v1735 = vpop.f32.mrf.mxu0
    %v1736 = vadd.f32 %v1701, %v1735
    %1737 = vmatmul.f32.gmra.mxu0 %v1710
    %v1738 = vpop.f32.mrf.mxu0
    %v1739 = vadd.f32 %v1701, %v1738
    %1740 = vmatmul.f32.gmra.mxu0 %v1713
    %v1741 = vpop.f32.mrf.mxu0
    %v1742 = vadd.f32 %v1701, %v1741
    %1743 = vdwg.mxu0
    %v1744 = vld [vmem:[%s25] sm:$0x3]
    %v1745 = vsel %vm1685, %v1733, 0.0
    %v1746 = vsel %vm1685, %v1736, 0.0
    %v1747 = vadd.f32 %v1745, %v1746
    %v1748 = vsel %vm1685, %v1739, 0.0
    %v1749 = vadd.f32 %v1747, %v1748
    %v1750 = vsel %vm1685, %v1742, 0.0
    %v1751 = vadd.f32 %v1749, %v1750
    %v1752 = vrot.slane %v1751, 4
    %v1753 = vadd.f32 %v1751, %v1752
    %v1754 = vrot.slane %v1753, 2
    %v1755 = vadd.f32 %v1753, %v1754
    %v1756 = vrot.slane %v1755, 1
    %v1757 = vadd.f32 %v1755, %v1756
    %v1758 = vmul.f32 %v1757, %v663
    %v1759 = vsub.f32 %v1733, %v1758
    %v1760 = vsub.f32 %v1736, %v1758
    %v1761 = vsub.f32 %v1739, %v1758
    %v1762 = vsub.f32 %v1742, %v1758
    %v1763 = vmul.f32 %v1759, %v1759
    %v1764 = vmul.f32 %v1760, %v1760
    %v1765 = vmul.f32 %v1761, %v1761
    %v1766 = vmul.f32 %v1762, %v1762
    %v1767 = vsel %vm1685, %v1763, 0.0
    %v1768 = vsel %vm1685, %v1764, 0.0
    %v1769 = vadd.f32 %v1767, %v1768
    %v1770 = vsel %vm1685, %v1765, 0.0
    %v1771 = vadd.f32 %v1769, %v1770
    %v1772 = vsel %vm1685, %v1766, 0.0
    %v1773 = vadd.f32 %v1771, %v1772
    %v1774 = vrot.slane %v1773, 4
    %v1775 = vadd.f32 %v1773, %v1774
    %v1776 = vrot.slane %v1775, 2
    %v1777 = vadd.f32 %v1775, %v1776
    %v1778 = vrot.slane %v1777, 1
    %v1779 = vadd.f32 %v1777, %v1778
    %v1780 = vmul.f32 %v1779, %v663
    %v1781 = vadd.f32 %v1780, 1e-05
    %v1782 = vrsqrt.pop %v1781
    %v1783 = vmul.f32 %v1782, %v1781
    %v1784 = vmul.f32 %v1783, %v1782
    %v1785 = vmul.f32 0.5, %v1784
    %v1786 = vsub.f32 1.5, %v1785
    %v1787 = vmul.f32 %v1782, %v1786
    %vm1788 = vweird.f32 %v1781
    %vm1789 = vweird.f32 %v1782
    %vm1790 = vmor %vm1788, %vm1789
    %v1791 = vsel %vm1790, %v1782, %v1787
    %v1792 = vmul.f32 %v1759, %v1791
    %v1793 = vmul.f32 %v1760, %v1791
    %v1794 = vmul.f32 %v1761, %v1791
    %v1795 = vmul.f32 %v1762, %v1791
    %v1796 = vperm.slane %v1744, 0
    %v1797 = vmul.f32 %v1792, %v1796
    %v1798 = vmul.f32 %v1793, %v1796
    %v1799 = vmul.f32 %v1794, %v1796
    %v1800 = vmul.f32 %v1795, %v1796
    %v1801 = vperm.slane %v1744, 1
    %v1802 = vadd.f32 %v1797, %v1801
    %v1803 = vadd.f32 %v1798, %v1801
    %v1804 = vadd.f32 %v1799, %v1801
    %v1805 = vadd.f32 %v1800, %v1801
    %v1806 = vmax.f32 %v1802, 0.0
    %v1807 = vmax.f32 %v1803, 0.0
    %v1808 = vmax.f32 %v1804, 0.0
    %v1809 = vmax.f32 %v1805, 0.0
    %v1810 = vld [vmem:[%s27] sm:$0xff]
    %v1811 = vld [vmem:[%s27 + $0x8] sm:$0xff]
    %v1812 = vld [vmem:[%s29] sm:$0x1]
    %v1814 = vperm.slane %v1812, 0
    %v1817 = vsel %vm1685, %v1806, 0
    %v1820 = vsel %vm1685, %v1807, 0
    %v1823 = vsel %vm1685, %v1808, 0
    %v1826 = vsel %vm1685, %v1809, 0
    %1828 = vmatpush.msra.mxu0 0.0
    %1829 = vmatpush.msra.mxu0 0.0
    %1830 = vmatpush.msra.mxu0 0.0
    %1831 = vmatpush.msra.mxu0 0.0
    %1832 = vmatpush.msra.mxu0 0.0
    %1833 = vmatpush.msra.mxu0 0.0
    %1834 = vmatpush.msra.mxu0 0.0
    %1835 = vmatpush.msra.mxu0 0.0
    %1836 = vmatpush.msra.mxu0 0.0
    %1837 = vmatpush.msra.mxu0 0.0
    %1838 = vmatpush.msra.mxu0 0.0
    %1839 = vmatpush.msra.mxu0 0.0
    %1840 = vmatpush.msra.mxu0 0.0
    %1841 = vmatpush.msra.mxu0 0.0
    %1842 = vmatpush.msra.mxu0 %v1811
    %1843 = vmatpush.msra.mxu0 %v1810
    %1844 = vmatmul.f32.gmra.mxu0 %v1817
    %v1845 = vpop.f32.mrf.mxu0
    %v1846 = vadd.f32 %v1814, %v1845
    %1847 = vmatmul.f32.gmra.mxu0 %v1820
    %v1848 = vpop.f32.mrf.mxu0
    %v1849 = vadd.f32 %v1814, %v1848
    %1850 = vmatmul.f32.gmra.mxu0 %v1823
    %v1851 = vpop.f32.mrf.mxu0
    %v1852 = vadd.f32 %v1814, %v1851
    %1853 = vmatmul.f32.gmra.mxu0 %v1826
    %v1854 = vpop.f32.mrf.mxu0
    %v1855 = vadd.f32 %v1814, %v1854
    %1856 = vdwg.mxu0
    %v1857 = vld [vmem:[%s31] sm:$0x3]
    %v1858 = vsel %vm1685, %v1846, 0.0
    %v1859 = vsel %vm1685, %v1849, 0.0
    %v1860 = vadd.f32 %v1858, %v1859
    %v1861 = vsel %vm1685, %v1852, 0.0
    %v1862 = vadd.f32 %v1860, %v1861
    %v1863 = vsel %vm1685, %v1855, 0.0
    %v1864 = vadd.f32 %v1862, %v1863
    %v1865 = vrot.slane %v1864, 4
    %v1866 = vadd.f32 %v1864, %v1865
    %v1867 = vrot.slane %v1866, 2
    %v1868 = vadd.f32 %v1866, %v1867
    %v1869 = vrot.slane %v1868, 1
    %v1870 = vadd.f32 %v1868, %v1869
    %v1871 = vmul.f32 %v1870, %v663
    %v1872 = vsub.f32 %v1846, %v1871
    %v1873 = vsub.f32 %v1849, %v1871
    %v1874 = vsub.f32 %v1852, %v1871
    %v1875 = vsub.f32 %v1855, %v1871
    %v1876 = vmul.f32 %v1872, %v1872
    %v1877 = vmul.f32 %v1873, %v1873
    %v1878 = vmul.f32 %v1874, %v1874
    %v1879 = vmul.f32 %v1875, %v1875
    %v1880 = vsel %vm1685, %v1876, 0.0
    %v1881 = vsel %vm1685, %v1877, 0.0
    %v1882 = vadd.f32 %v1880, %v1881
    %v1883 = vsel %vm1685, %v1878, 0.0
    %v1884 = vadd.f32 %v1882, %v1883
    %v1885 = vsel %vm1685, %v1879, 0.0
    %v1886 = vadd.f32 %v1884, %v1885
    %v1887 = vrot.slane %v1886, 4
    %v1888 = vadd.f32 %v1886, %v1887
    %v1889 = vrot.slane %v1888, 2
    %v1890 = vadd.f32 %v1888, %v1889
    %v1891 = vrot.slane %v1890, 1
    %v1892 = vadd.f32 %v1890, %v1891
    %v1893 = vmul.f32 %v1892, %v663
    %v1894 = vadd.f32 %v1893, 1e-05
    %v1895 = vrsqrt.pop %v1894
    %v1896 = vmul.f32 %v1895, %v1894
    %v1897 = vmul.f32 %v1896, %v1895
    %v1898 = vmul.f32 0.5, %v1897
    %v1899 = vsub.f32 1.5, %v1898
    %v1900 = vmul.f32 %v1895, %v1899
    %vm1901 = vweird.f32 %v1894
    %vm1902 = vweird.f32 %v1895
    %vm1903 = vmor %vm1901, %vm1902
    %v1904 = vsel %vm1903, %v1895, %v1900
    %v1905 = vmul.f32 %v1872, %v1904
    %v1906 = vmul.f32 %v1873, %v1904
    %v1907 = vmul.f32 %v1874, %v1904
    %v1908 = vmul.f32 %v1875, %v1904
    %v1909 = vperm.slane %v1857, 0
    %v1910 = vmul.f32 %v1905, %v1909
    %v1911 = vmul.f32 %v1906, %v1909
    %v1912 = vmul.f32 %v1907, %v1909
    %v1913 = vmul.f32 %v1908, %v1909
    %v1914 = vperm.slane %v1857, 1
    %v1915 = vadd.f32 %v1910, %v1914
    %v1916 = vadd.f32 %v1911, %v1914
    %v1917 = vadd.f32 %v1912, %v1914
    %v1918 = vadd.f32 %v1913, %v1914
    %v1919 = vmax.f32 %v1915, 0.0
    %v1920 = vmax.f32 %v1916, 0.0
    %v1921 = vmax.f32 %v1917, 0.0
    %v1922 = vmax.f32 %v1918, 0.0
    %v1923 = vld [vmem:[%s33] sm:$0xff]
    %v1924 = vld [vmem:[%s33 + $0x8] sm:$0xff]
    %v1925 = vld [vmem:[%s35] sm:$0x1]
    %v1927 = vperm.slane %v1925, 0
    %v1930 = vsel %vm1685, %v1919, 0
    %v1933 = vsel %vm1685, %v1920, 0
    %v1936 = vsel %vm1685, %v1921, 0
    %v1939 = vsel %vm1685, %v1922, 0
    %1941 = vmatpush.msra.mxu0 0.0
    %1942 = vmatpush.msra.mxu0 0.0
    %1943 = vmatpush.msra.mxu0 0.0
    %1944 = vmatpush.msra.mxu0 0.0
    %1945 = vmatpush.msra.mxu0 0.0
    %1946 = vmatpush.msra.mxu0 0.0
    %1947 = vmatpush.msra.mxu0 0.0
    %1948 = vmatpush.msra.mxu0 0.0
    %1949 = vmatpush.msra.mxu0 0.0
    %1950 = vmatpush.msra.mxu0 0.0
    %1951 = vmatpush.msra.mxu0 0.0
    %1952 = vmatpush.msra.mxu0 0.0
    %1953 = vmatpush.msra.mxu0 0.0
    %1954 = vmatpush.msra.mxu0 0.0
    %1955 = vmatpush.msra.mxu0 %v1924
    %1956 = vmatpush.msra.mxu0 %v1923
    %1957 = vmatmul.f32.gmra.mxu0 %v1930
    %v1958 = vpop.f32.mrf.mxu0
    %v1959 = vadd.f32 %v1927, %v1958
    %1960 = vmatmul.f32.gmra.mxu0 %v1933
    %v1961 = vpop.f32.mrf.mxu0
    %v1962 = vadd.f32 %v1927, %v1961
    %1963 = vmatmul.f32.gmra.mxu0 %v1936
    %v1964 = vpop.f32.mrf.mxu0
    %v1965 = vadd.f32 %v1927, %v1964
    %1966 = vmatmul.f32.gmra.mxu0 %v1939
    %v1967 = vpop.f32.mrf.mxu0
    %v1968 = vadd.f32 %v1927, %v1967
    %1969 = vdwg.mxu0
    %v1970 = vadd.f32 %v712, %v1959
    %v1971 = vadd.f32 %v713, %v1962
    %v1972 = vadd.f32 %v714, %v1965
    %v1973 = vadd.f32 %v715, %v1968
    %v1974 = vld [vmem:[%s37] sm:$0xff]
    %v1975 = vld [vmem:[%s37 + $0x8] sm:$0xff]
    %v1976 = vld [vmem:[%s37 + $0x10] sm:$0xff]
    %v1977 = vld [vmem:[%s37 + $0x18] sm:$0xff]
    %v1978 = vld [vmem:[%s39] sm:$0x1]
    %v1980 = vperm.slane %v1978, 0
    %v1983 = vsel %vm514, %v1970, 0
    %v1986 = vsel %vm514, %v1971, 0
    %v1989 = vsel %vm514, %v1972, 0
    %v1992 = vsel %vm514, %v1973, 0
    %1994 = vmatpush.msra.mxu0 0.0
    %1995 = vmatpush.msra.mxu0 0.0
    %1996 = vmatpush.msra.mxu0 0.0
    %1997 = vmatpush.msra.mxu0 0.0
    %1998 = vmatpush.msra.mxu0 0.0
    %1999 = vmatpush.msra.mxu0 0.0
    %2000 = vmatpush.msra.mxu0 0.0
    %2001 = vmatpush.msra.mxu0 0.0
    %2002 = vmatpush.msra.mxu0 0.0
    %2003 = vmatpush.msra.mxu0 0.0
    %2004 = vmatpush.msra.mxu0 0.0
    %2005 = vmatpush.msra.mxu0 0.0
    %2006 = vmatpush.msra.mxu0 %v1977
    %2007 = vmatpush.msra.mxu0 %v1976
    %2008 = vmatpush.msra.mxu0 %v1975
    %2009 = vmatpush.msra.mxu0 %v1974
    %2010 = vmatmul.f32.gmra.mxu0 %v1983
    %v2011 = vpop.f32.mrf.mxu0
    %v2012 = vadd.f32 %v1980, %v2011
    %2013 = vmatmul.f32.gmra.mxu0 %v1986
    %v2014 = vpop.f32.mrf.mxu0
    %v2015 = vadd.f32 %v1980, %v2014
    %2016 = vmatmul.f32.gmra.mxu0 %v1989
    %v2017 = vpop.f32.mrf.mxu0
    %v2018 = vadd.f32 %v1980, %v2017
    %2019 = vmatmul.f32.gmra.mxu0 %v1992
    %v2020 = vpop.f32.mrf.mxu0
    %v2021 = vadd.f32 %v1980, %v2020
    %2022 = vdwg.mxu0
    %v2023 = vld [vmem:[%s41] sm:$0x3]
    %v2024 = vsel %vm514, %v2012, 0.0
    %v2025 = vsel %vm514, %v2015, 0.0
    %v2026 = vadd.f32 %v2024, %v2025
    %v2027 = vsel %vm514, %v2018, 0.0
    %v2028 = vadd.f32 %v2026, %v2027
    %v2029 = vsel %vm514, %v2021, 0.0
    %v2030 = vadd.f32 %v2028, %v2029
    %v2031 = vrot.slane %v2030, 4
    %v2032 = vadd.f32 %v2030, %v2031
    %v2033 = vrot.slane %v2032, 2
    %v2034 = vadd.f32 %v2032, %v2033
    %v2035 = vrot.slane %v2034, 1
    %v2036 = vadd.f32 %v2034, %v2035
    %v2037 = vmul.f32 %v2036, %v663
    %v2038 = vsub.f32 %v2012, %v2037
    %v2039 = vsub.f32 %v2015, %v2037
    %v2040 = vsub.f32 %v2018, %v2037
    %v2041 = vsub.f32 %v2021, %v2037
    %v2042 = vmul.f32 %v2038, %v2038
    %v2043 = vmul.f32 %v2039, %v2039
    %v2044 = vmul.f32 %v2040, %v2040
    %v2045 = vmul.f32 %v2041, %v2041
    %v2046 = vsel %vm514, %v2042, 0.0
    %v2047 = vsel %vm514, %v2043, 0.0
    %v2048 = vadd.f32 %v2046, %v2047
    %v2049 = vsel %vm514, %v2044, 0.0
    %v2050 = vadd.f32 %v2048, %v2049
    %v2051 = vsel %vm514, %v2045, 0.0
    %v2052 = vadd.f32 %v2050, %v2051
    %v2053 = vrot.slane %v2052, 4
    %v2054 = vadd.f32 %v2052, %v2053
    %v2055 = vrot.slane %v2054, 2
    %v2056 = vadd.f32 %v2054, %v2055
    %v2057 = vrot.slane %v2056, 1
    %v2058 = vadd.f32 %v2056, %v2057
    %v2059 = vmul.f32 %v2058, %v663
    %v2060 = vadd.f32 %v2059, 1e-05
    %v2061 = vrsqrt.pop %v2060
    %v2062 = vmul.f32 %v2061, %v2060
    %v2063 = vmul.f32 %v2062, %v2061
    %v2064 = vmul.f32 0.5, %v2063
    %v2065 = vsub.f32 1.5, %v2064
    %v2066 = vmul.f32 %v2061, %v2065
    %vm2067 = vweird.f32 %v2060
    %vm2068 = vweird.f32 %v2061
    %vm2069 = vmor %vm2067, %vm2068
    %v2070 = vsel %vm2069, %v2061, %v2066
    %v2071 = vmul.f32 %v2038, %v2070
    %v2072 = vmul.f32 %v2039, %v2070
    %v2073 = vmul.f32 %v2040, %v2070
    %v2074 = vmul.f32 %v2041, %v2070
    %v2075 = vperm.slane %v2023, 0
    %v2076 = vmul.f32 %v2071, %v2075
    %v2077 = vmul.f32 %v2072, %v2075
    %v2078 = vmul.f32 %v2073, %v2075
    %v2079 = vmul.f32 %v2074, %v2075
    %v2080 = vperm.slane %v2023, 1
    %v2081 = vadd.f32 %v2076, %v2080
    %v2082 = vadd.f32 %v2077, %v2080
    %v2083 = vadd.f32 %v2078, %v2080
    %v2084 = vadd.f32 %v2079, %v2080
    %v2085 = vmax.f32 %v2081, 0.0
    %v2086 = vmax.f32 %v2082, 0.0
    %v2087 = vmax.f32 %v2083, 0.0
    %v2088 = vmax.f32 %v2084, 0.0
    %v2089 = vld [vmem:[%s43] sm:$0xff]
    %v2090 = vld [vmem:[%s43 + $0x8] sm:$0xff]
    %v2091 = vld [vmem:[%s43 + $0x10] sm:$0xff]
    %v2092 = vld [vmem:[%s43 + $0x18] sm:$0xff]
    %v2093 = vld [vmem:[%s45] sm:$0x1]
    %v2095 = vperm.slane %v2093, 0
    %v2098 = vsel %vm514, %v2085, 0
    %v2101 = vsel %vm514, %v2086, 0
    %v2104 = vsel %vm514, %v2087, 0
    %v2107 = vsel %vm514, %v2088, 0
    %2109 = vmatpush.msra.mxu0 0.0
    %2110 = vmatpush.msra.mxu0 0.0
    %2111 = vmatpush.msra.mxu0 0.0
    %2112 = vmatpush.msra.mxu0 0.0
    %2113 = vmatpush.msra.mxu0 0.0
    %2114 = vmatpush.msra.mxu0 0.0
    %2115 = vmatpush.msra.mxu0 0.0
    %2116 = vmatpush.msra.mxu0 0.0
    %2117 = vmatpush.msra.mxu0 0.0
    %2118 = vmatpush.msra.mxu0 0.0
    %2119 = vmatpush.msra.mxu0 0.0
    %2120 = vmatpush.msra.mxu0 0.0
    %2121 = vmatpush.msra.mxu0 %v2092
    %2122 = vmatpush.msra.mxu0 %v2091
    %2123 = vmatpush.msra.mxu0 %v2090
    %2124 = vmatpush.msra.mxu0 %v2089
    %2125 = vmatmul.f32.gmra.mxu0 %v2098
    %v2126 = vpop.f32.mrf.mxu0
    %v2127 = vadd.f32 %v2095, %v2126
    %2128 = vmatmul.f32.gmra.mxu0 %v2101
    %v2129 = vpop.f32.mrf.mxu0
    %v2130 = vadd.f32 %v2095, %v2129
    %2131 = vmatmul.f32.gmra.mxu0 %v2104
    %v2132 = vpop.f32.mrf.mxu0
    %v2133 = vadd.f32 %v2095, %v2132
    %2134 = vmatmul.f32.gmra.mxu0 %v2107
    %v2135 = vpop.f32.mrf.mxu0
    %v2136 = vadd.f32 %v2095, %v2135
    %2137 = vdwg.mxu0
    %2142 = vrot.lane.b32.xlu0 %v2127, 96
    %v2143 = vpop.permute.xlu0 %2142
    %2144 = vrot.lane.b32.xlu0 %v2130, 96
    %v2145 = vpop.permute.xlu0 %2144
    %2146 = vrot.lane.b32.xlu0 %v2133, 96
    %v2147 = vpop.permute.xlu0 %2146
    %2148 = vrot.lane.b32.xlu0 %v2136, 96
    %v2149 = vpop.permute.xlu0 %2148
    %v2150 = vsel %vm552, %v2127, 0
    %v2152 = vsel %vm552, %v2130, 0
    %v2154 = vsel %vm552, %v2133, 0
    %v2156 = vsel %vm552, %v2136, 0
    %v2158 = vsel %vm552, %v2143, 0
    %v2160 = vsel %vm552, %v2145, 0
    %v2162 = vsel %vm552, %v2147, 0
    %v2164 = vsel %vm552, %v2149, 0
    %2166 = vmatpush.xpose.msra.mxu0 0.0
    %2167 = vmatpush.xpose.msra.mxu0 0.0
    %2168 = vmatpush.xpose.msra.mxu0 0.0
    %2169 = vmatpush.xpose.msra.mxu0 0.0
    %2170 = vmatpush.xpose.msra.mxu0 0.0
    %2171 = vmatpush.xpose.msra.mxu0 0.0
    %2172 = vmatpush.xpose.msra.mxu0 0.0
    %2173 = vmatpush.xpose.msra.mxu0 0.0
    %2174 = vmatpush.xpose.msra.mxu0 0.0
    %2175 = vmatpush.xpose.msra.mxu0 0.0
    %2176 = vmatpush.xpose.msra.mxu0 0.0
    %2177 = vmatpush.xpose.msra.mxu0 0.0
    %2178 = vmatpush.xpose.msra.mxu0 %v2164
    %2179 = vmatpush.xpose.msra.mxu0 %v2162
    %2180 = vmatpush.xpose.msra.mxu0 %v2160
    %2181 = vmatpush.xpose.msra.mxu0 %v2158
    %2182 = vmatmul.f32.gmra.mxu0 %v2150
    %v2183 = vpop.f32.mrf.mxu0
    %v2184 = vadd.f32 0.0, %v2183
    %2185 = vmatmul.f32.gmra.mxu0 %v2152
    %v2186 = vpop.f32.mrf.mxu0
    %v2187 = vadd.f32 0.0, %v2186
    %2188 = vmatmul.f32.gmra.mxu0 %v2154
    %v2189 = vpop.f32.mrf.mxu0
    %v2190 = vadd.f32 0.0, %v2189
    %2191 = vmatmul.f32.gmra.mxu0 %v2156
    %v2192 = vpop.f32.mrf.mxu0
    %v2193 = vadd.f32 0.0, %v2192
    %2194 = vdwg.mxu0
    %v2195 = vmul.f32 %v2184, 0.35355338
    %v2196 = vmul.f32 %v2187, 0.35355338
    %v2197 = vmul.f32 %v2190, 0.35355338
    %v2198 = vmul.f32 %v2193, 0.35355338
    %v2199 = vmul.f32 %v539, %v2195
    %v2200 = vmul.f32 %v540, %v2196
    %v2201 = vmul.f32 %v541, %v2197
    %v2202 = vmul.f32 %v542, %v2198
    %v2203 = vsel %vm514, %v2199, -inf
    %2204 = vmax.xlane.f32.xlu0 %v2203
    %v2205 = vpop.xlane.xlu0 %2204
    %v2206 = vsel %vm514, %v2200, -inf
    %2207 = vmax.xlane.f32.xlu0 %v2206
    %v2208 = vpop.xlane.xlu0 %2207
    %v2209 = vsel %vm514, %v2201, -inf
    %2210 = vmax.xlane.f32.xlu0 %v2209
    %v2211 = vpop.xlane.xlu0 %2210
    %v2212 = vsel %vm514, %v2202, -inf
    %2213 = vmax.xlane.f32.xlu0 %v2212
    %v2214 = vpop.xlane.xlu0 %2213
    %v2215 = vsub.f32 %v2199, %v2205
    %v2216 = vsub.f32 %v2200, %v2208
    %v2217 = vsub.f32 %v2201, %v2211
    %v2218 = vsub.f32 %v2202, %v2214
    %v2219 = vmul.f32 %v2215, 1.442695
    %v2220 = vpow.pop %v2219
    %v2221 = vmul.f32 %v2216, 1.442695
    %v2222 = vpow.pop %v2221
    %v2223 = vmul.f32 %v2217, 1.442695
    %v2224 = vpow.pop %v2223
    %v2225 = vmul.f32 %v2218, 1.442695
    %v2226 = vpow.pop %v2225
    %v2227 = vsel %vm514, %v2220, 0.0
    %2228 = vadd.xlane.f32.xlu0 %v2227
    %v2229 = vpop.xlane.xlu0 %2228
    %v2230 = vsel %vm514, %v2222, 0.0
    %2231 = vadd.xlane.f32.xlu0 %v2230
    %v2232 = vpop.xlane.xlu0 %2231
    %v2233 = vsel %vm514, %v2224, 0.0
    %2234 = vadd.xlane.f32.xlu0 %v2233
    %v2235 = vpop.xlane.xlu0 %2234
    %v2236 = vsel %vm514, %v2226, 0.0
    %2237 = vadd.xlane.f32.xlu0 %v2236
    %v2238 = vpop.xlane.xlu0 %2237
    %v2239 = vrcp.pop %v2229
    %v2240 = vmul.f32 %v2229, %v2239
    %v2241 = vsub.f32 1.0, %v2240
    %v2242 = vmul.f32 %v2239, %v2241
    %v2243 = vadd.f32 %v2239, %v2242
    %vm2244 = vweird.f32 %v2229
    %vm2245 = vweird.f32 %v2239
    %vm2246 = vmor %vm2244, %vm2245
    %v2247 = vsel %vm2246, %v2239, %v2243
    %v2248 = vand.u32 2147483647, %v2229
    %vm2249 = vcmp.eq.f32.partialorder %v2248, 8.507059e+37
    %v2250 = vand.u32 %v2229, 2147483648
    %v2251 = vor.u32 1.1754944e-38, %v2250
    %v2252 = vsel %vm2249, %v2251, %v2247
    %v2253 = vmul.f32 %v2220, %v2252
    %v2254 = vrcp.pop %v2232
    %v2255 = vmul.f32 %v2232, %v2254
    %v2256 = vsub.f32 1.0, %v2255
    %v2257 = vmul.f32 %v2254, %v2256
    %v2258 = vadd.f32 %v2254, %v2257
    %vm2259 = vweird.f32 %v2232
    %vm2260 = vweird.f32 %v2254
    %vm2261 = vmor %vm2259, %vm2260
    %v2262 = vsel %vm2261, %v2254, %v2258
    %v2263 = vand.u32 2147483647, %v2232
    %vm2264 = vcmp.eq.f32.partialorder %v2263, 8.507059e+37
    %v2265 = vand.u32 %v2232, 2147483648
    %v2266 = vor.u32 1.1754944e-38, %v2265
    %v2267 = vsel %vm2264, %v2266, %v2262
    %v2268 = vmul.f32 %v2222, %v2267
    %v2269 = vrcp.pop %v2235
    %v2270 = vmul.f32 %v2235, %v2269
    %v2271 = vsub.f32 1.0, %v2270
    %v2272 = vmul.f32 %v2269, %v2271
    %v2273 = vadd.f32 %v2269, %v2272
    %vm2274 = vweird.f32 %v2235
    %vm2275 = vweird.f32 %v2269
    %vm2276 = vmor %vm2274, %vm2275
    %v2277 = vsel %vm2276, %v2269, %v2273
    %v2278 = vand.u32 2147483647, %v2235
    %vm2279 = vcmp.eq.f32.partialorder %v2278, 8.507059e+37
    %v2280 = vand.u32 %v2235, 2147483648
    %v2281 = vor.u32 1.1754944e-38, %v2280
    %v2282 = vsel %vm2279, %v2281, %v2277
    %v2283 = vmul.f32 %v2224, %v2282
    %v2284 = vrcp.pop %v2238
    %v2285 = vmul.f32 %v2238, %v2284
    %v2286 = vsub.f32 1.0, %v2285
    %v2287 = vmul.f32 %v2284, %v2286
    %v2288 = vadd.f32 %v2284, %v2287
    %vm2289 = vweird.f32 %v2238
    %vm2290 = vweird.f32 %v2284
    %vm2291 = vmor %vm2289, %vm2290
    %v2292 = vsel %vm2291, %v2284, %v2288
    %v2293 = vand.u32 2147483647, %v2238
    %vm2294 = vcmp.eq.f32.partialorder %v2293, 8.507059e+37
    %v2295 = vand.u32 %v2238, 2147483648
    %v2296 = vor.u32 1.1754944e-38, %v2295
    %v2297 = vsel %vm2294, %v2296, %v2292
    %v2298 = vmul.f32 %v2226, %v2297
    %2299 = vrot.lane.b32.xlu0 %v2127, 64
    %v2300 = vpop.permute.xlu0 %2299
    %2301 = vrot.lane.b32.xlu0 %v2130, 64
    %v2302 = vpop.permute.xlu0 %2301
    %2303 = vrot.lane.b32.xlu0 %v2133, 64
    %v2304 = vpop.permute.xlu0 %2303
    %2305 = vrot.lane.b32.xlu0 %v2136, 64
    %v2306 = vpop.permute.xlu0 %2305
    %v2312 = vsel %vm514, %v2253, 0
    %v2315 = vsel %vm514, %v2268, 0
    %v2318 = vsel %vm514, %v2283, 0
    %v2321 = vsel %vm514, %v2298, 0
    %2323 = vmatpush.msra.mxu0 0.0
    %2324 = vmatpush.msra.mxu0 0.0
    %2325 = vmatpush.msra.mxu0 0.0
    %2326 = vmatpush.msra.mxu0 0.0
    %2327 = vmatpush.msra.mxu0 0.0
    %2328 = vmatpush.msra.mxu0 0.0
    %2329 = vmatpush.msra.mxu0 0.0
    %2330 = vmatpush.msra.mxu0 0.0
    %2331 = vmatpush.msra.mxu0 0.0
    %2332 = vmatpush.msra.mxu0 0.0
    %2333 = vmatpush.msra.mxu0 0.0
    %2334 = vmatpush.msra.mxu0 0.0
    %2335 = vmatpush.msra.mxu0 %v2306
    %2336 = vmatpush.msra.mxu0 %v2304
    %2337 = vmatpush.msra.mxu0 %v2302
    %2338 = vmatpush.msra.mxu0 %v2300
    %2339 = vmatmul.f32.gmra.mxu0 %v2312
    %v2340 = vpop.f32.mrf.mxu0
    %v2341 = vadd.f32 0.0, %v2340
    %2342 = vmatmul.f32.gmra.mxu0 %v2315
    %v2343 = vpop.f32.mrf.mxu0
    %v2344 = vadd.f32 0.0, %v2343
    %2345 = vmatmul.f32.gmra.mxu0 %v2318
    %v2346 = vpop.f32.mrf.mxu0
    %v2347 = vadd.f32 0.0, %v2346
    %2348 = vmatmul.f32.gmra.mxu0 %v2321
    %v2349 = vpop.f32.mrf.mxu0
    %v2350 = vadd.f32 0.0, %v2349
    %2351 = vdwg.mxu0
    %2352 = vrot.lane.b32.xlu0 %v2127, 120
    %v2353 = vpop.permute.xlu0 %2352
    %2354 = vrot.lane.b32.xlu0 %v2130, 120
    %v2355 = vpop.permute.xlu0 %2354
    %2356 = vrot.lane.b32.xlu0 %v2133, 120
    %v2357 = vpop.permute.xlu0 %2356
    %2358 = vrot.lane.b32.xlu0 %v2136, 120
    %v2359 = vpop.permute.xlu0 %2358
    %2360 = vrot.lane.b32.xlu0 %v2127, 88
    %v2361 = vpop.permute.xlu0 %2360
    %2362 = vrot.lane.b32.xlu0 %v2130, 88
    %v2363 = vpop.permute.xlu0 %2362
    %2364 = vrot.lane.b32.xlu0 %v2133, 88
    %v2365 = vpop.permute.xlu0 %2364
    %2366 = vrot.lane.b32.xlu0 %v2136, 88
    %v2367 = vpop.permute.xlu0 %2366
    %v2368 = vsel %vm552, %v2353, 0
    %v2370 = vsel %vm552, %v2355, 0
    %v2372 = vsel %vm552, %v2357, 0
    %v2374 = vsel %vm552, %v2359, 0
    %v2376 = vsel %vm552, %v2361, 0
    %v2378 = vsel %vm552, %v2363, 0
    %v2380 = vsel %vm552, %v2365, 0
    %v2382 = vsel %vm552, %v2367, 0
    %2384 = vmatpush.xpose.msra.mxu0 0.0
    %2385 = vmatpush.xpose.msra.mxu0 0.0
    %2386 = vmatpush.xpose.msra.mxu0 0.0
    %2387 = vmatpush.xpose.msra.mxu0 0.0
    %2388 = vmatpush.xpose.msra.mxu0 0.0
    %2389 = vmatpush.xpose.msra.mxu0 0.0
    %2390 = vmatpush.xpose.msra.mxu0 0.0
    %2391 = vmatpush.xpose.msra.mxu0 0.0
    %2392 = vmatpush.xpose.msra.mxu0 0.0
    %2393 = vmatpush.xpose.msra.mxu0 0.0
    %2394 = vmatpush.xpose.msra.mxu0 0.0
    %2395 = vmatpush.xpose.msra.mxu0 0.0
    %2396 = vmatpush.xpose.msra.mxu0 %v2382
    %2397 = vmatpush.xpose.msra.mxu0 %v2380
    %2398 = vmatpush.xpose.msra.mxu0 %v2378
    %2399 = vmatpush.xpose.msra.mxu0 %v2376
    %2400 = vmatmul.f32.gmra.mxu0 %v2368
    %v2401 = vpop.f32.mrf.mxu0
    %v2402 = vadd.f32 0.0, %v2401
    %2403 = vmatmul.f32.gmra.mxu0 %v2370
    %v2404 = vpop.f32.mrf.mxu0
    %v2405 = vadd.f32 0.0, %v2404
    %2406 = vmatmul.f32.gmra.mxu0 %v2372
    %v2407 = vpop.f32.mrf.mxu0
    %v2408 = vadd.f32 0.0, %v2407
    %2409 = vmatmul.f32.gmra.mxu0 %v2374
    %v2410 = vpop.f32.mrf.mxu0
    %v2411 = vadd.f32 0.0, %v2410
    %2412 = vdwg.mxu0
    %v2413 = vmul.f32 %v2402, 0.35355338
    %v2414 = vmul.f32 %v2405, 0.35355338
    %v2415 = vmul.f32 %v2408, 0.35355338
    %v2416 = vmul.f32 %v2411, 0.35355338
    %v2417 = vmul.f32 %v539, %v2413
    %v2418 = vmul.f32 %v540, %v2414
    %v2419 = vmul.f32 %v541, %v2415
    %v2420 = vmul.f32 %v542, %v2416
    %v2421 = vsel %vm514, %v2417, -inf
    %2422 = vmax.xlane.f32.xlu0 %v2421
    %v2423 = vpop.xlane.xlu0 %2422
    %v2424 = vsel %vm514, %v2418, -inf
    %2425 = vmax.xlane.f32.xlu0 %v2424
    %v2426 = vpop.xlane.xlu0 %2425
    %v2427 = vsel %vm514, %v2419, -inf
    %2428 = vmax.xlane.f32.xlu0 %v2427
    %v2429 = vpop.xlane.xlu0 %2428
    %v2430 = vsel %vm514, %v2420, -inf
    %2431 = vmax.xlane.f32.xlu0 %v2430
    %v2432 = vpop.xlane.xlu0 %2431
    %v2433 = vsub.f32 %v2417, %v2423
    %v2434 = vsub.f32 %v2418, %v2426
    %v2435 = vsub.f32 %v2419, %v2429
    %v2436 = vsub.f32 %v2420, %v2432
    %v2437 = vmul.f32 %v2433, 1.442695
    %v2438 = vpow.pop %v2437
    %v2439 = vmul.f32 %v2434, 1.442695
    %v2440 = vpow.pop %v2439
    %v2441 = vmul.f32 %v2435, 1.442695
    %v2442 = vpow.pop %v2441
    %v2443 = vmul.f32 %v2436, 1.442695
    %v2444 = vpow.pop %v2443
    %v2445 = vsel %vm514, %v2438, 0.0
    %2446 = vadd.xlane.f32.xlu0 %v2445
    %v2447 = vpop.xlane.xlu0 %2446
    %v2448 = vsel %vm514, %v2440, 0.0
    %2449 = vadd.xlane.f32.xlu0 %v2448
    %v2450 = vpop.xlane.xlu0 %2449
    %v2451 = vsel %vm514, %v2442, 0.0
    %2452 = vadd.xlane.f32.xlu0 %v2451
    %v2453 = vpop.xlane.xlu0 %2452
    %v2454 = vsel %vm514, %v2444, 0.0
    %2455 = vadd.xlane.f32.xlu0 %v2454
    %v2456 = vpop.xlane.xlu0 %2455
    %v2457 = vrcp.pop %v2447
    %v2458 = vmul.f32 %v2447, %v2457
    %v2459 = vsub.f32 1.0, %v2458
    %v2460 = vmul.f32 %v2457, %v2459
    %v2461 = vadd.f32 %v2457, %v2460
    %vm2462 = vweird.f32 %v2447
    %vm2463 = vweird.f32 %v2457
    %vm2464 = vmor %vm2462, %vm2463
    %v2465 = vsel %vm2464, %v2457, %v2461
    %v2466 = vand.u32 2147483647, %v2447
    %vm2467 = vcmp.eq.f32.partialorder %v2466, 8.507059e+37
    %v2468 = vand.u32 %v2447, 2147483648
    %v2469 = vor.u32 1.1754944e-38, %v2468
    %v2470 = vsel %vm2467, %v2469, %v2465
    %v2471 = vmul.f32 %v2438, %v2470
    %v2472 = vrcp.pop %v2450
    %v2473 = vmul.f32 %v2450, %v2472
    %v2474 = vsub.f32 1.0, %v2473
    %v2475 = vmul.f32 %v2472, %v2474
    %v2476 = vadd.f32 %v2472, %v2475
    %vm2477 = vweird.f32 %v2450
    %vm2478 = vweird.f32 %v2472
    %vm2479 = vmor %vm2477, %vm2478
    %v2480 = vsel %vm2479, %v2472, %v2476
    %v2481 = vand.u32 2147483647, %v2450
    %vm2482 = vcmp.eq.f32.partialorder %v2481, 8.507059e+37
    %v2483 = vand.u32 %v2450, 2147483648
    %v2484 = vor.u32 1.1754944e-38, %v2483
    %v2485 = vsel %vm2482, %v2484, %v2480
    %v2486 = vmul.f32 %v2440, %v2485
    %v2487 = vrcp.pop %v2453
    %v2488 = vmul.f32 %v2453, %v2487
    %v2489 = vsub.f32 1.0, %v2488
    %v2490 = vmul.f32 %v2487, %v2489
    %v2491 = vadd.f32 %v2487, %v2490
    %vm2492 = vweird.f32 %v2453
    %vm2493 = vweird.f32 %v2487
    %vm2494 = vmor %vm2492, %vm2493
    %v2495 = vsel %vm2494, %v2487, %v2491
    %v2496 = vand.u32 2147483647, %v2453
    %vm2497 = vcmp.eq.f32.partialorder %v2496, 8.507059e+37
    %v2498 = vand.u32 %v2453, 2147483648
    %v2499 = vor.u32 1.1754944e-38, %v2498
    %v2500 = vsel %vm2497, %v2499, %v2495
    %v2501 = vmul.f32 %v2442, %v2500
    %v2502 = vrcp.pop %v2456
    %v2503 = vmul.f32 %v2456, %v2502
    %v2504 = vsub.f32 1.0, %v2503
    %v2505 = vmul.f32 %v2502, %v2504
    %v2506 = vadd.f32 %v2502, %v2505
    %vm2507 = vweird.f32 %v2456
    %vm2508 = vweird.f32 %v2502
    %vm2509 = vmor %vm2507, %vm2508
    %v2510 = vsel %vm2509, %v2502, %v2506
    %v2511 = vand.u32 2147483647, %v2456
    %vm2512 = vcmp.eq.f32.partialorder %v2511, 8.507059e+37
    %v2513 = vand.u32 %v2456, 2147483648
    %v2514 = vor.u32 1.1754944e-38, %v2513
    %v2515 = vsel %vm2512, %v2514, %v2510
    %v2516 = vmul.f32 %v2444, %v2515
    %2517 = vrot.lane.b32.xlu0 %v2127, 56
    %v2518 = vpop.permute.xlu0 %2517
    %2519 = vrot.lane.b32.xlu0 %v2130, 56
    %v2520 = vpop.permute.xlu0 %2519
    %2521 = vrot.lane.b32.xlu0 %v2133, 56
    %v2522 = vpop.permute.xlu0 %2521
    %2523 = vrot.lane.b32.xlu0 %v2136, 56
    %v2524 = vpop.permute.xlu0 %2523
    %v2530 = vsel %vm514, %v2471, 0
    %v2533 = vsel %vm514, %v2486, 0
    %v2536 = vsel %vm514, %v2501, 0
    %v2539 = vsel %vm514, %v2516, 0
    %2541 = vmatpush.msra.mxu0 0.0
    %2542 = vmatpush.msra.mxu0 0.0
    %2543 = vmatpush.msra.mxu0 0.0
    %2544 = vmatpush.msra.mxu0 0.0
    %2545 = vmatpush.msra.mxu0 0.0
    %2546 = vmatpush.msra.mxu0 0.0
    %2547 = vmatpush.msra.mxu0 0.0
    %2548 = vmatpush.msra.mxu0 0.0
    %2549 = vmatpush.msra.mxu0 0.0
    %2550 = vmatpush.msra.mxu0 0.0
    %2551 = vmatpush.msra.mxu0 0.0
    %2552 = vmatpush.msra.mxu0 0.0
    %2553 = vmatpush.msra.mxu0 %v2524
    %2554 = vmatpush.msra.mxu0 %v2522
    %2555 = vmatpush.msra.mxu0 %v2520
    %2556 = vmatpush.msra.mxu0 %v2518
    %2557 = vmatmul.f32.gmra.mxu0 %v2530
    %v2558 = vpop.f32.mrf.mxu0
    %v2559 = vadd.f32 0.0, %v2558
    %2560 = vmatmul.f32.gmra.mxu0 %v2533
    %v2561 = vpop.f32.mrf.mxu0
    %v2562 = vadd.f32 0.0, %v2561
    %2563 = vmatmul.f32.gmra.mxu0 %v2536
    %v2564 = vpop.f32.mrf.mxu0
    %v2565 = vadd.f32 0.0, %v2564
    %2566 = vmatmul.f32.gmra.mxu0 %v2539
    %v2567 = vpop.f32.mrf.mxu0
    %v2568 = vadd.f32 0.0, %v2567
    %2569 = vdwg.mxu0
    %2570 = vrot.lane.b32.xlu0 %v2127, 112
    %v2571 = vpop.permute.xlu0 %2570
    %2572 = vrot.lane.b32.xlu0 %v2130, 112
    %v2573 = vpop.permute.xlu0 %2572
    %2574 = vrot.lane.b32.xlu0 %v2133, 112
    %v2575 = vpop.permute.xlu0 %2574
    %2576 = vrot.lane.b32.xlu0 %v2136, 112
    %v2577 = vpop.permute.xlu0 %2576
    %2578 = vrot.lane.b32.xlu0 %v2127, 80
    %v2579 = vpop.permute.xlu0 %2578
    %2580 = vrot.lane.b32.xlu0 %v2130, 80
    %v2581 = vpop.permute.xlu0 %2580
    %2582 = vrot.lane.b32.xlu0 %v2133, 80
    %v2583 = vpop.permute.xlu0 %2582
    %2584 = vrot.lane.b32.xlu0 %v2136, 80
    %v2585 = vpop.permute.xlu0 %2584
    %v2586 = vsel %vm552, %v2571, 0
    %v2588 = vsel %vm552, %v2573, 0
    %v2590 = vsel %vm552, %v2575, 0
    %v2592 = vsel %vm552, %v2577, 0
    %v2594 = vsel %vm552, %v2579, 0
    %v2596 = vsel %vm552, %v2581, 0
    %v2598 = vsel %vm552, %v2583, 0
    %v2600 = vsel %vm552, %v2585, 0
    %2602 = vmatpush.xpose.msra.mxu0 0.0
    %2603 = vmatpush.xpose.msra.mxu0 0.0
    %2604 = vmatpush.xpose.msra.mxu0 0.0
    %2605 = vmatpush.xpose.msra.mxu0 0.0
    %2606 = vmatpush.xpose.msra.mxu0 0.0
    %2607 = vmatpush.xpose.msra.mxu0 0.0
    %2608 = vmatpush.xpose.msra.mxu0 0.0
    %2609 = vmatpush.xpose.msra.mxu0 0.0
    %2610 = vmatpush.xpose.msra.mxu0 0.0
    %2611 = vmatpush.xpose.msra.mxu0 0.0
    %2612 = vmatpush.xpose.msra.mxu0 0.0
    %2613 = vmatpush.xpose.msra.mxu0 0.0
    %2614 = vmatpush.xpose.msra.mxu0 %v2600
    %2615 = vmatpush.xpose.msra.mxu0 %v2598
    %2616 = vmatpush.xpose.msra.mxu0 %v2596
    %2617 = vmatpush.xpose.msra.mxu0 %v2594
    %2618 = vmatmul.f32.gmra.mxu0 %v2586
    %v2619 = vpop.f32.mrf.mxu0
    %v2620 = vadd.f32 0.0, %v2619
    %2621 = vmatmul.f32.gmra.mxu0 %v2588
    %v2622 = vpop.f32.mrf.mxu0
    %v2623 = vadd.f32 0.0, %v2622
    %2624 = vmatmul.f32.gmra.mxu0 %v2590
    %v2625 = vpop.f32.mrf.mxu0
    %v2626 = vadd.f32 0.0, %v2625
    %2627 = vmatmul.f32.gmra.mxu0 %v2592
    %v2628 = vpop.f32.mrf.mxu0
    %v2629 = vadd.f32 0.0, %v2628
    %2630 = vdwg.mxu0
    %v2631 = vmul.f32 %v2620, 0.35355338
    %v2632 = vmul.f32 %v2623, 0.35355338
    %v2633 = vmul.f32 %v2626, 0.35355338
    %v2634 = vmul.f32 %v2629, 0.35355338
    %v2635 = vmul.f32 %v539, %v2631
    %v2636 = vmul.f32 %v540, %v2632
    %v2637 = vmul.f32 %v541, %v2633
    %v2638 = vmul.f32 %v542, %v2634
    %v2639 = vsel %vm514, %v2635, -inf
    %2640 = vmax.xlane.f32.xlu0 %v2639
    %v2641 = vpop.xlane.xlu0 %2640
    %v2642 = vsel %vm514, %v2636, -inf
    %2643 = vmax.xlane.f32.xlu0 %v2642
    %v2644 = vpop.xlane.xlu0 %2643
    %v2645 = vsel %vm514, %v2637, -inf
    %2646 = vmax.xlane.f32.xlu0 %v2645
    %v2647 = vpop.xlane.xlu0 %2646
    %v2648 = vsel %vm514, %v2638, -inf
    %2649 = vmax.xlane.f32.xlu0 %v2648
    %v2650 = vpop.xlane.xlu0 %2649
    %v2651 = vsub.f32 %v2635, %v2641
    %v2652 = vsub.f32 %v2636, %v2644
    %v2653 = vsub.f32 %v2637, %v2647
    %v2654 = vsub.f32 %v2638, %v2650
    %v2655 = vmul.f32 %v2651, 1.442695
    %v2656 = vpow.pop %v2655
    %v2657 = vmul.f32 %v2652, 1.442695
    %v2658 = vpow.pop %v2657
    %v2659 = vmul.f32 %v2653, 1.442695
    %v2660 = vpow.pop %v2659
    %v2661 = vmul.f32 %v2654, 1.442695
    %v2662 = vpow.pop %v2661
    %v2663 = vsel %vm514, %v2656, 0.0
    %2664 = vadd.xlane.f32.xlu0 %v2663
    %v2665 = vpop.xlane.xlu0 %2664
    %v2666 = vsel %vm514, %v2658, 0.0
    %2667 = vadd.xlane.f32.xlu0 %v2666
    %v2668 = vpop.xlane.xlu0 %2667
    %v2669 = vsel %vm514, %v2660, 0.0
    %2670 = vadd.xlane.f32.xlu0 %v2669
    %v2671 = vpop.xlane.xlu0 %2670
    %v2672 = vsel %vm514, %v2662, 0.0
    %2673 = vadd.xlane.f32.xlu0 %v2672
    %v2674 = vpop.xlane.xlu0 %2673
    %v2675 = vrcp.pop %v2665
    %v2676 = vmul.f32 %v2665, %v2675
    %v2677 = vsub.f32 1.0, %v2676
    %v2678 = vmul.f32 %v2675, %v2677
    %v2679 = vadd.f32 %v2675, %v2678
    %vm2680 = vweird.f32 %v2665
    %vm2681 = vweird.f32 %v2675
    %vm2682 = vmor %vm2680, %vm2681
    %v2683 = vsel %vm2682, %v2675, %v2679
    %v2684 = vand.u32 2147483647, %v2665
    %vm2685 = vcmp.eq.f32.partialorder %v2684, 8.507059e+37
    %v2686 = vand.u32 %v2665, 2147483648
    %v2687 = vor.u32 1.1754944e-38, %v2686
    %v2688 = vsel %vm2685, %v2687, %v2683
    %v2689 = vmul.f32 %v2656, %v2688
    %v2690 = vrcp.pop %v2668
    %v2691 = vmul.f32 %v2668, %v2690
    %v2692 = vsub.f32 1.0, %v2691
    %v2693 = vmul.f32 %v2690, %v2692
    %v2694 = vadd.f32 %v2690, %v2693
    %vm2695 = vweird.f32 %v2668
    %vm2696 = vweird.f32 %v2690
    %vm2697 = vmor %vm2695, %vm2696
    %v2698 = vsel %vm2697, %v2690, %v2694
    %v2699 = vand.u32 2147483647, %v2668
    %vm2700 = vcmp.eq.f32.partialorder %v2699, 8.507059e+37
    %v2701 = vand.u32 %v2668, 2147483648
    %v2702 = vor.u32 1.1754944e-38, %v2701
    %v2703 = vsel %vm2700, %v2702, %v2698
    %v2704 = vmul.f32 %v2658, %v2703
    %v2705 = vrcp.pop %v2671
    %v2706 = vmul.f32 %v2671, %v2705
    %v2707 = vsub.f32 1.0, %v2706
    %v2708 = vmul.f32 %v2705, %v2707
    %v2709 = vadd.f32 %v2705, %v2708
    %vm2710 = vweird.f32 %v2671
    %vm2711 = vweird.f32 %v2705
    %vm2712 = vmor %vm2710, %vm2711
    %v2713 = vsel %vm2712, %v2705, %v2709
    %v2714 = vand.u32 2147483647, %v2671
    %vm2715 = vcmp.eq.f32.partialorder %v2714, 8.507059e+37
    %v2716 = vand.u32 %v2671, 2147483648
    %v2717 = vor.u32 1.1754944e-38, %v2716
    %v2718 = vsel %vm2715, %v2717, %v2713
    %v2719 = vmul.f32 %v2660, %v2718
    %v2720 = vrcp.pop %v2674
    %v2721 = vmul.f32 %v2674, %v2720
    %v2722 = vsub.f32 1.0, %v2721
    %v2723 = vmul.f32 %v2720, %v2722
    %v2724 = vadd.f32 %v2720, %v2723
    %vm2725 = vweird.f32 %v2674
    %vm2726 = vweird.f32 %v2720
    %vm2727 = vmor %vm2725, %vm2726
    %v2728 = vsel %vm2727, %v2720, %v2724
    %v2729 = vand.u32 2147483647, %v2674
    %vm2730 = vcmp.eq.f32.partialorder %v2729, 8.507059e+37
    %v2731 = vand.u32 %v2674, 2147483648
    %v2732 = vor.u32 1.1754944e-38, %v2731
    %v2733 = vsel %vm2730, %v2732, %v2728
    %v2734 = vmul.f32 %v2662, %v2733
    %2735 = vrot.lane.b32.xlu0 %v2127, 48
    %v2736 = vpop.permute.xlu0 %2735
    %2737 = vrot.lane.b32.xlu0 %v2130, 48
    %v2738 = vpop.permute.xlu0 %2737
    %2739 = vrot.lane.b32.xlu0 %v2133, 48
    %v2740 = vpop.permute.xlu0 %2739
    %2741 = vrot.lane.b32.xlu0 %v2136, 48
    %v2742 = vpop.permute.xlu0 %2741
    %v2748 = vsel %vm514, %v2689, 0
    %v2751 = vsel %vm514, %v2704, 0
    %v2754 = vsel %vm514, %v2719, 0
    %v2757 = vsel %vm514, %v2734, 0
    %2759 = vmatpush.msra.mxu0 0.0
    %2760 = vmatpush.msra.mxu0 0.0
    %2761 = vmatpush.msra.mxu0 0.0
    %2762 = vmatpush.msra.mxu0 0.0
    %2763 = vmatpush.msra.mxu0 0.0
    %2764 = vmatpush.msra.mxu0 0.0
    %2765 = vmatpush.msra.mxu0 0.0
    %2766 = vmatpush.msra.mxu0 0.0
    %2767 = vmatpush.msra.mxu0 0.0
    %2768 = vmatpush.msra.mxu0 0.0
    %2769 = vmatpush.msra.mxu0 0.0
    %2770 = vmatpush.msra.mxu0 0.0
    %2771 = vmatpush.msra.mxu0 %v2742
    %2772 = vmatpush.msra.mxu0 %v2740
    %2773 = vmatpush.msra.mxu0 %v2738
    %2774 = vmatpush.msra.mxu0 %v2736
    %2775 = vmatmul.f32.gmra.mxu0 %v2748
    %v2776 = vpop.f32.mrf.mxu0
    %v2777 = vadd.f32 0.0, %v2776
    %2778 = vmatmul.f32.gmra.mxu0 %v2751
    %v2779 = vpop.f32.mrf.mxu0
    %v2780 = vadd.f32 0.0, %v2779
    %2781 = vmatmul.f32.gmra.mxu0 %v2754
    %v2782 = vpop.f32.mrf.mxu0
    %v2783 = vadd.f32 0.0, %v2782
    %2784 = vmatmul.f32.gmra.mxu0 %v2757
    %v2785 = vpop.f32.mrf.mxu0
    %v2786 = vadd.f32 0.0, %v2785
    %2787 = vdwg.mxu0
    %2788 = vrot.lane.b32.xlu0 %v2127, 104
    %v2789 = vpop.permute.xlu0 %2788
    %2790 = vrot.lane.b32.xlu0 %v2130, 104
    %v2791 = vpop.permute.xlu0 %2790
    %2792 = vrot.lane.b32.xlu0 %v2133, 104
    %v2793 = vpop.permute.xlu0 %2792
    %2794 = vrot.lane.b32.xlu0 %v2136, 104
    %v2795 = vpop.permute.xlu0 %2794
    %2796 = vrot.lane.b32.xlu0 %v2127, 72
    %v2797 = vpop.permute.xlu0 %2796
    %2798 = vrot.lane.b32.xlu0 %v2130, 72
    %v2799 = vpop.permute.xlu0 %2798
    %2800 = vrot.lane.b32.xlu0 %v2133, 72
    %v2801 = vpop.permute.xlu0 %2800
    %2802 = vrot.lane.b32.xlu0 %v2136, 72
    %v2803 = vpop.permute.xlu0 %2802
    %v2804 = vsel %vm552, %v2789, 0
    %v2806 = vsel %vm552, %v2791, 0
    %v2808 = vsel %vm552, %v2793, 0
    %v2810 = vsel %vm552, %v2795, 0
    %v2812 = vsel %vm552, %v2797, 0
    %v2814 = vsel %vm552, %v2799, 0
    %v2816 = vsel %vm552, %v2801, 0
    %v2818 = vsel %vm552, %v2803, 0
    %2820 = vmatpush.xpose.msra.mxu0 0.0
    %2821 = vmatpush.xpose.msra.mxu0 0.0
    %2822 = vmatpush.xpose.msra.mxu0 0.0
    %2823 = vmatpush.xpose.msra.mxu0 0.0
    %2824 = vmatpush.xpose.msra.mxu0 0.0
    %2825 = vmatpush.xpose.msra.mxu0 0.0
    %2826 = vmatpush.xpose.msra.mxu0 0.0
    %2827 = vmatpush.xpose.msra.mxu0 0.0
    %2828 = vmatpush.xpose.msra.mxu0 0.0
    %2829 = vmatpush.xpose.msra.mxu0 0.0
    %2830 = vmatpush.xpose.msra.mxu0 0.0
    %2831 = vmatpush.xpose.msra.mxu0 0.0
    %2832 = vmatpush.xpose.msra.mxu0 %v2818
    %2833 = vmatpush.xpose.msra.mxu0 %v2816
    %2834 = vmatpush.xpose.msra.mxu0 %v2814
    %2835 = vmatpush.xpose.msra.mxu0 %v2812
    %2836 = vmatmul.f32.gmra.mxu0 %v2804
    %v2837 = vpop.f32.mrf.mxu0
    %v2838 = vadd.f32 0.0, %v2837
    %2839 = vmatmul.f32.gmra.mxu0 %v2806
    %v2840 = vpop.f32.mrf.mxu0
    %v2841 = vadd.f32 0.0, %v2840
    %2842 = vmatmul.f32.gmra.mxu0 %v2808
    %v2843 = vpop.f32.mrf.mxu0
    %v2844 = vadd.f32 0.0, %v2843
    %2845 = vmatmul.f32.gmra.mxu0 %v2810
    %v2846 = vpop.f32.mrf.mxu0
    %v2847 = vadd.f32 0.0, %v2846
    %2848 = vdwg.mxu0
    %v2849 = vmul.f32 %v2838, 0.35355338
    %v2850 = vmul.f32 %v2841, 0.35355338
    %v2851 = vmul.f32 %v2844, 0.35355338
    %v2852 = vmul.f32 %v2847, 0.35355338
    %v2853 = vmul.f32 %v539, %v2849
    %v2854 = vmul.f32 %v540, %v2850
    %v2855 = vmul.f32 %v541, %v2851
    %v2856 = vmul.f32 %v542, %v2852
    %v2857 = vsel %vm514, %v2853, -inf
    %2858 = vmax.xlane.f32.xlu0 %v2857
    %v2859 = vpop.xlane.xlu0 %2858
    %v2860 = vsel %vm514, %v2854, -inf
    %2861 = vmax.xlane.f32.xlu0 %v2860
    %v2862 = vpop.xlane.xlu0 %2861
    %v2863 = vsel %vm514, %v2855, -inf
    %2864 = vmax.xlane.f32.xlu0 %v2863
    %v2865 = vpop.xlane.xlu0 %2864
    %v2866 = vsel %vm514, %v2856, -inf
    %2867 = vmax.xlane.f32.xlu0 %v2866
    %v2868 = vpop.xlane.xlu0 %2867
    %v2869 = vsub.f32 %v2853, %v2859
    %v2870 = vsub.f32 %v2854, %v2862
    %v2871 = vsub.f32 %v2855, %v2865
    %v2872 = vsub.f32 %v2856, %v2868
    %v2873 = vmul.f32 %v2869, 1.442695
    %v2874 = vpow.pop %v2873
    %v2875 = vmul.f32 %v2870, 1.442695
    %v2876 = vpow.pop %v2875
    %v2877 = vmul.f32 %v2871, 1.442695
    %v2878 = vpow.pop %v2877
    %v2879 = vmul.f32 %v2872, 1.442695
    %v2880 = vpow.pop %v2879
    %v2881 = vsel %vm514, %v2874, 0.0
    %2882 = vadd.xlane.f32.xlu0 %v2881
    %v2883 = vpop.xlane.xlu0 %2882
    %v2884 = vsel %vm514, %v2876, 0.0
    %2885 = vadd.xlane.f32.xlu0 %v2884
    %v2886 = vpop.xlane.xlu0 %2885
    %v2887 = vsel %vm514, %v2878, 0.0
    %2888 = vadd.xlane.f32.xlu0 %v2887
    %v2889 = vpop.xlane.xlu0 %2888
    %v2890 = vsel %vm514, %v2880, 0.0
    %2891 = vadd.xlane.f32.xlu0 %v2890
    %v2892 = vpop.xlane.xlu0 %2891
    %v2893 = vrcp.pop %v2883
    %v2894 = vmul.f32 %v2883, %v2893
    %v2895 = vsub.f32 1.0, %v2894
    %v2896 = vmul.f32 %v2893, %v2895
    %v2897 = vadd.f32 %v2893, %v2896
    %vm2898 = vweird.f32 %v2883
    %vm2899 = vweird.f32 %v2893
    %vm2900 = vmor %vm2898, %vm2899
    %v2901 = vsel %vm2900, %v2893, %v2897
    %v2902 = vand.u32 2147483647, %v2883
    %vm2903 = vcmp.eq.f32.partialorder %v2902, 8.507059e+37
    %v2904 = vand.u32 %v2883, 2147483648
    %v2905 = vor.u32 1.1754944e-38, %v2904
    %v2906 = vsel %vm2903, %v2905, %v2901
    %v2907 = vmul.f32 %v2874, %v2906
    %v2908 = vrcp.pop %v2886
    %v2909 = vmul.f32 %v2886, %v2908
    %v2910 = vsub.f32 1.0, %v2909
    %v2911 = vmul.f32 %v2908, %v2910
    %v2912 = vadd.f32 %v2908, %v2911
    %vm2913 = vweird.f32 %v2886
    %vm2914 = vweird.f32 %v2908
    %vm2915 = vmor %vm2913, %vm2914
    %v2916 = vsel %vm2915, %v2908, %v2912
    %v2917 = vand.u32 2147483647, %v2886
    %vm2918 = vcmp.eq.f32.partialorder %v2917, 8.507059e+37
    %v2919 = vand.u32 %v2886, 2147483648
    %v2920 = vor.u32 1.1754944e-38, %v2919
    %v2921 = vsel %vm2918, %v2920, %v2916
    %v2922 = vmul.f32 %v2876, %v2921
    %v2923 = vrcp.pop %v2889
    %v2924 = vmul.f32 %v2889, %v2923
    %v2925 = vsub.f32 1.0, %v2924
    %v2926 = vmul.f32 %v2923, %v2925
    %v2927 = vadd.f32 %v2923, %v2926
    %vm2928 = vweird.f32 %v2889
    %vm2929 = vweird.f32 %v2923
    %vm2930 = vmor %vm2928, %vm2929
    %v2931 = vsel %vm2930, %v2923, %v2927
    %v2932 = vand.u32 2147483647, %v2889
    %vm2933 = vcmp.eq.f32.partialorder %v2932, 8.507059e+37
    %v2934 = vand.u32 %v2889, 2147483648
    %v2935 = vor.u32 1.1754944e-38, %v2934
    %v2936 = vsel %vm2933, %v2935, %v2931
    %v2937 = vmul.f32 %v2878, %v2936
    %v2938 = vrcp.pop %v2892
    %v2939 = vmul.f32 %v2892, %v2938
    %v2940 = vsub.f32 1.0, %v2939
    %v2941 = vmul.f32 %v2938, %v2940
    %v2942 = vadd.f32 %v2938, %v2941
    %vm2943 = vweird.f32 %v2892
    %vm2944 = vweird.f32 %v2938
    %vm2945 = vmor %vm2943, %vm2944
    %v2946 = vsel %vm2945, %v2938, %v2942
    %v2947 = vand.u32 2147483647, %v2892
    %vm2948 = vcmp.eq.f32.partialorder %v2947, 8.507059e+37
    %v2949 = vand.u32 %v2892, 2147483648
    %v2950 = vor.u32 1.1754944e-38, %v2949
    %v2951 = vsel %vm2948, %v2950, %v2946
    %v2952 = vmul.f32 %v2880, %v2951
    %2953 = vrot.lane.b32.xlu0 %v2127, 40
    %v2954 = vpop.permute.xlu0 %2953
    %2955 = vrot.lane.b32.xlu0 %v2130, 40
    %v2956 = vpop.permute.xlu0 %2955
    %2957 = vrot.lane.b32.xlu0 %v2133, 40
    %v2958 = vpop.permute.xlu0 %2957
    %2959 = vrot.lane.b32.xlu0 %v2136, 40
    %v2960 = vpop.permute.xlu0 %2959
    %v2966 = vsel %vm514, %v2907, 0
    %v2969 = vsel %vm514, %v2922, 0
    %v2972 = vsel %vm514, %v2937, 0
    %v2975 = vsel %vm514, %v2952, 0
    %2977 = vmatpush.msra.mxu0 0.0
    %2978 = vmatpush.msra.mxu0 0.0
    %2979 = vmatpush.msra.mxu0 0.0
    %2980 = vmatpush.msra.mxu0 0.0
    %2981 = vmatpush.msra.mxu0 0.0
    %2982 = vmatpush.msra.mxu0 0.0
    %2983 = vmatpush.msra.mxu0 0.0
    %2984 = vmatpush.msra.mxu0 0.0
    %2985 = vmatpush.msra.mxu0 0.0
    %2986 = vmatpush.msra.mxu0 0.0
    %2987 = vmatpush.msra.mxu0 0.0
    %2988 = vmatpush.msra.mxu0 0.0
    %2989 = vmatpush.msra.mxu0 %v2960
    %2990 = vmatpush.msra.mxu0 %v2958
    %2991 = vmatpush.msra.mxu0 %v2956
    %2992 = vmatpush.msra.mxu0 %v2954
    %2993 = vmatmul.f32.gmra.mxu0 %v2966
    %v2994 = vpop.f32.mrf.mxu0
    %v2995 = vadd.f32 0.0, %v2994
    %2996 = vmatmul.f32.gmra.mxu0 %v2969
    %v2997 = vpop.f32.mrf.mxu0
    %v2998 = vadd.f32 0.0, %v2997
    %2999 = vmatmul.f32.gmra.mxu0 %v2972
    %v3000 = vpop.f32.mrf.mxu0
    %v3001 = vadd.f32 0.0, %v3000
    %3002 = vmatmul.f32.gmra.mxu0 %v2975
    %v3003 = vpop.f32.mrf.mxu0
    %v3004 = vadd.f32 0.0, %v3003
    %3005 = vdwg.mxu0
    %3010 = vrot.lane.b32.xlu0 %v2559, 8
    %v3011 = vpop.permute.xlu0 %3010
    %3012 = vrot.lane.b32.xlu0 %v2562, 8
    %v3013 = vpop.permute.xlu0 %3012
    %3014 = vrot.lane.b32.xlu0 %v2565, 8
    %v3015 = vpop.permute.xlu0 %3014
    %3016 = vrot.lane.b32.xlu0 %v2568, 8
    %v3017 = vpop.permute.xlu0 %3016
    %3026 = vrot.lane.b32.xlu0 %v2777, 16
    %v3027 = vpop.permute.xlu0 %3026
    %3028 = vrot.lane.b32.xlu0 %v2780, 16
    %v3029 = vpop.permute.xlu0 %3028
    %3030 = vrot.lane.b32.xlu0 %v2783, 16
    %v3031 = vpop.permute.xlu0 %3030
    %3032 = vrot.lane.b32.xlu0 %v2786, 16
    %v3033 = vpop.permute.xlu0 %3032
    %3042 = vrot.lane.b32.xlu0 %v2995, 24
    %v3043 = vpop.permute.xlu0 %3042
    %3044 = vrot.lane.b32.xlu0 %v2998, 24
    %v3045 = vpop.permute.xlu0 %3044
    %3046 = vrot.lane.b32.xlu0 %v3001, 24
    %v3047 = vpop.permute.xlu0 %3046
    %3048 = vrot.lane.b32.xlu0 %v3004, 24
    %v3049 = vpop.permute.xlu0 %3048
    %v3054 = vsel %vm552, %v2341, %v3011
    %v3055 = vsel %vm552, %v2344, %v3013
    %v3056 = vsel %vm552, %v2347, %v3015
    %v3057 = vsel %vm552, %v2350, %v3017
    %v3058 = vsel %vm1685, %v3054, %v3027
    %v3059 = vsel %vm1685, %v3055, %v3029
    %v3060 = vsel %vm1685, %v3056, %v3031
    %v3061 = vsel %vm1685, %v3057, %v3033
    %v3062 = vsel %vm1690, %v3058, %v3043
    %v3063 = vsel %vm1690, %v3059, %v3045
    %v3064 = vsel %vm1690, %v3060, %v3047
    %v3065 = vsel %vm1690, %v3061, %v3049
    %v3066 = vld [vmem:[%s47] sm:$0xff]
    %v3067 = vld [vmem:[%s47 + $0x8] sm:$0xff]
    %v3068 = vld [vmem:[%s47 + $0x10] sm:$0xff]
    %v3069 = vld [vmem:[%s47 + $0x18] sm:$0xff]
    %v3070 = vld [vmem:[%s49] sm:$0x1]
    %v3072 = vperm.slane %v3070, 0
    %v3075 = vsel %vm514, %v3062, 0
    %v3078 = vsel %vm514, %v3063, 0
    %v3081 = vsel %vm514, %v3064, 0
    %v3084 = vsel %vm514, %v3065, 0
    %3086 = vmatpush.msra.mxu0 0.0
    %3087 = vmatpush.msra.mxu0 0.0
    %3088 = vmatpush.msra.mxu0 0.0
    %3089 = vmatpush.msra.mxu0 0.0
    %3090 = vmatpush.msra.mxu0 0.0
    %3091 = vmatpush.msra.mxu0 0.0
    %3092 = vmatpush.msra.mxu0 0.0
    %3093 = vmatpush.msra.mxu0 0.0
    %3094 = vmatpush.msra.mxu0 0.0
    %3095 = vmatpush.msra.mxu0 0.0
    %3096 = vmatpush.msra.mxu0 0.0
    %3097 = vmatpush.msra.mxu0 0.0
    %3098 = vmatpush.msra.mxu0 %v3069
    %3099 = vmatpush.msra.mxu0 %v3068
    %3100 = vmatpush.msra.mxu0 %v3067
    %3101 = vmatpush.msra.mxu0 %v3066
    %3102 = vmatmul.f32.gmra.mxu0 %v3075
    %v3103 = vpop.f32.mrf.mxu0
    %v3104 = vadd.f32 %v3072, %v3103
    %3105 = vmatmul.f32.gmra.mxu0 %v3078
    %v3106 = vpop.f32.mrf.mxu0
    %v3107 = vadd.f32 %v3072, %v3106
    %3108 = vmatmul.f32.gmra.mxu0 %v3081
    %v3109 = vpop.f32.mrf.mxu0
    %v3110 = vadd.f32 %v3072, %v3109
    %3111 = vmatmul.f32.gmra.mxu0 %v3084
    %v3112 = vpop.f32.mrf.mxu0
    %v3113 = vadd.f32 %v3072, %v3112
    %3114 = vdwg.mxu0
    %v3115 = vld [vmem:[%s51] sm:$0x3]
    %v3116 = vsel %vm1685, %v3104, 0.0
    %v3117 = vsel %vm1685, %v3107, 0.0
    %v3118 = vadd.f32 %v3116, %v3117
    %v3119 = vsel %vm1685, %v3110, 0.0
    %v3120 = vadd.f32 %v3118, %v3119
    %v3121 = vsel %vm1685, %v3113, 0.0
    %v3122 = vadd.f32 %v3120, %v3121
    %v3123 = vrot.slane %v3122, 4
    %v3124 = vadd.f32 %v3122, %v3123
    %v3125 = vrot.slane %v3124, 2
    %v3126 = vadd.f32 %v3124, %v3125
    %v3127 = vrot.slane %v3126, 1
    %v3128 = vadd.f32 %v3126, %v3127
    %v3129 = vmul.f32 %v3128, %v663
    %v3130 = vsub.f32 %v3104, %v3129
    %v3131 = vsub.f32 %v3107, %v3129
    %v3132 = vsub.f32 %v3110, %v3129
    %v3133 = vsub.f32 %v3113, %v3129
    %v3134 = vmul.f32 %v3130, %v3130
    %v3135 = vmul.f32 %v3131, %v3131
    %v3136 = vmul.f32 %v3132, %v3132
    %v3137 = vmul.f32 %v3133, %v3133
    %v3138 = vsel %vm1685, %v3134, 0.0
    %v3139 = vsel %vm1685, %v3135, 0.0
    %v3140 = vadd.f32 %v3138, %v3139
    %v3141 = vsel %vm1685, %v3136, 0.0
    %v3142 = vadd.f32 %v3140, %v3141
    %v3143 = vsel %vm1685, %v3137, 0.0
    %v3144 = vadd.f32 %v3142, %v3143
    %v3145 = vrot.slane %v3144, 4
    %v3146 = vadd.f32 %v3144, %v3145
    %v3147 = vrot.slane %v3146, 2
    %v3148 = vadd.f32 %v3146, %v3147
    %v3149 = vrot.slane %v3148, 1
    %v3150 = vadd.f32 %v3148, %v3149
    %v3151 = vmul.f32 %v3150, %v663
    %v3152 = vadd.f32 %v3151, 1e-05
    %v3153 = vrsqrt.pop %v3152
    %v3154 = vmul.f32 %v3153, %v3152
    %v3155 = vmul.f32 %v3154, %v3153
    %v3156 = vmul.f32 0.5, %v3155
    %v3157 = vsub.f32 1.5, %v3156
    %v3158 = vmul.f32 %v3153, %v3157
    %vm3159 = vweird.f32 %v3152
    %vm3160 = vweird.f32 %v3153
    %vm3161 = vmor %vm3159, %vm3160
    %v3162 = vsel %vm3161, %v3153, %v3158
    %v3163 = vmul.f32 %v3130, %v3162
    %v3164 = vmul.f32 %v3131, %v3162
    %v3165 = vmul.f32 %v3132, %v3162
    %v3166 = vmul.f32 %v3133, %v3162
    %v3167 = vperm.slane %v3115, 0
    %v3168 = vmul.f32 %v3163, %v3167
    %v3169 = vmul.f32 %v3164, %v3167
    %v3170 = vmul.f32 %v3165, %v3167
    %v3171 = vmul.f32 %v3166, %v3167
    %v3172 = vperm.slane %v3115, 1
    %v3173 = vadd.f32 %v3168, %v3172
    %v3174 = vadd.f32 %v3169, %v3172
    %v3175 = vadd.f32 %v3170, %v3172
    %v3176 = vadd.f32 %v3171, %v3172
    %v3177 = vmax.f32 %v3173, 0.0
    %v3178 = vmax.f32 %v3174, 0.0
    %v3179 = vmax.f32 %v3175, 0.0
    %v3180 = vmax.f32 %v3176, 0.0
    %v3181 = vld [vmem:[%s53] sm:$0xff]
    %v3182 = vld [vmem:[%s53 + $0x8] sm:$0xff]
    %v3183 = vld [vmem:[%s55] sm:$0x1]
    %v3185 = vperm.slane %v3183, 0
    %v3188 = vsel %vm1685, %v3177, 0
    %v3191 = vsel %vm1685, %v3178, 0
    %v3194 = vsel %vm1685, %v3179, 0
    %v3197 = vsel %vm1685, %v3180, 0
    %3199 = vmatpush.msra.mxu0 0.0
    %3200 = vmatpush.msra.mxu0 0.0
    %3201 = vmatpush.msra.mxu0 0.0
    %3202 = vmatpush.msra.mxu0 0.0
    %3203 = vmatpush.msra.mxu0 0.0
    %3204 = vmatpush.msra.mxu0 0.0
    %3205 = vmatpush.msra.mxu0 0.0
    %3206 = vmatpush.msra.mxu0 0.0
    %3207 = vmatpush.msra.mxu0 0.0
    %3208 = vmatpush.msra.mxu0 0.0
    %3209 = vmatpush.msra.mxu0 0.0
    %3210 = vmatpush.msra.mxu0 0.0
    %3211 = vmatpush.msra.mxu0 0.0
    %3212 = vmatpush.msra.mxu0 0.0
    %3213 = vmatpush.msra.mxu0 %v3182
    %3214 = vmatpush.msra.mxu0 %v3181
    %3215 = vmatmul.f32.gmra.mxu0 %v3188
    %v3216 = vpop.f32.mrf.mxu0
    %v3217 = vadd.f32 %v3185, %v3216
    %3218 = vmatmul.f32.gmra.mxu0 %v3191
    %v3219 = vpop.f32.mrf.mxu0
    %v3220 = vadd.f32 %v3185, %v3219
    %3221 = vmatmul.f32.gmra.mxu0 %v3194
    %v3222 = vpop.f32.mrf.mxu0
    %v3223 = vadd.f32 %v3185, %v3222
    %3224 = vmatmul.f32.gmra.mxu0 %v3197
    %v3225 = vpop.f32.mrf.mxu0
    %v3226 = vadd.f32 %v3185, %v3225
    %3227 = vdwg.mxu0
    %v3228 = vld [vmem:[%s57] sm:$0x3]
    %v3229 = vsel %vm1685, %v3217, 0.0
    %v3230 = vsel %vm1685, %v3220, 0.0
    %v3231 = vadd.f32 %v3229, %v3230
    %v3232 = vsel %vm1685, %v3223, 0.0
    %v3233 = vadd.f32 %v3231, %v3232
    %v3234 = vsel %vm1685, %v3226, 0.0
    %v3235 = vadd.f32 %v3233, %v3234
    %v3236 = vrot.slane %v3235, 4
    %v3237 = vadd.f32 %v3235, %v3236
    %v3238 = vrot.slane %v3237, 2
    %v3239 = vadd.f32 %v3237, %v3238
    %v3240 = vrot.slane %v3239, 1
    %v3241 = vadd.f32 %v3239, %v3240
    %v3242 = vmul.f32 %v3241, %v663
    %v3243 = vsub.f32 %v3217, %v3242
    %v3244 = vsub.f32 %v3220, %v3242
    %v3245 = vsub.f32 %v3223, %v3242
    %v3246 = vsub.f32 %v3226, %v3242
    %v3247 = vmul.f32 %v3243, %v3243
    %v3248 = vmul.f32 %v3244, %v3244
    %v3249 = vmul.f32 %v3245, %v3245
    %v3250 = vmul.f32 %v3246, %v3246
    %v3251 = vsel %vm1685, %v3247, 0.0
    %v3252 = vsel %vm1685, %v3248, 0.0
    %v3253 = vadd.f32 %v3251, %v3252
    %v3254 = vsel %vm1685, %v3249, 0.0
    %v3255 = vadd.f32 %v3253, %v3254
    %v3256 = vsel %vm1685, %v3250, 0.0
    %v3257 = vadd.f32 %v3255, %v3256
    %v3258 = vrot.slane %v3257, 4
    %v3259 = vadd.f32 %v3257, %v3258
    %v3260 = vrot.slane %v3259, 2
    %v3261 = vadd.f32 %v3259, %v3260
    %v3262 = vrot.slane %v3261, 1
    %v3263 = vadd.f32 %v3261, %v3262
    %v3264 = vmul.f32 %v3263, %v663
    %v3265 = vadd.f32 %v3264, 1e-05
    %v3266 = vrsqrt.pop %v3265
    %v3267 = vmul.f32 %v3266, %v3265
    %v3268 = vmul.f32 %v3267, %v3266
    %v3269 = vmul.f32 0.5, %v3268
    %v3270 = vsub.f32 1.5, %v3269
    %v3271 = vmul.f32 %v3266, %v3270
    %vm3272 = vweird.f32 %v3265
    %vm3273 = vweird.f32 %v3266
    %vm3274 = vmor %vm3272, %vm3273
    %v3275 = vsel %vm3274, %v3266, %v3271
    %v3276 = vmul.f32 %v3243, %v3275
    %v3277 = vmul.f32 %v3244, %v3275
    %v3278 = vmul.f32 %v3245, %v3275
    %v3279 = vmul.f32 %v3246, %v3275
    %v3280 = vperm.slane %v3228, 0
    %v3281 = vmul.f32 %v3276, %v3280
    %v3282 = vmul.f32 %v3277, %v3280
    %v3283 = vmul.f32 %v3278, %v3280
    %v3284 = vmul.f32 %v3279, %v3280
    %v3285 = vperm.slane %v3228, 1
    %v3286 = vadd.f32 %v3281, %v3285
    %v3287 = vadd.f32 %v3282, %v3285
    %v3288 = vadd.f32 %v3283, %v3285
    %v3289 = vadd.f32 %v3284, %v3285
    %v3290 = vmax.f32 %v3286, 0.0
    %v3291 = vmax.f32 %v3287, 0.0
    %v3292 = vmax.f32 %v3288, 0.0
    %v3293 = vmax.f32 %v3289, 0.0
    %v3294 = vld [vmem:[%s59] sm:$0xff]
    %v3295 = vld [vmem:[%s59 + $0x8] sm:$0xff]
    %v3296 = vld [vmem:[%s61] sm:$0x1]
    %v3298 = vperm.slane %v3296, 0
    %v3301 = vsel %vm1685, %v3290, 0
    %v3304 = vsel %vm1685, %v3291, 0
    %v3307 = vsel %vm1685, %v3292, 0
    %v3310 = vsel %vm1685, %v3293, 0
    %3312 = vmatpush.msra.mxu0 0.0
    %3313 = vmatpush.msra.mxu0 0.0
    %3314 = vmatpush.msra.mxu0 0.0
    %3315 = vmatpush.msra.mxu0 0.0
    %3316 = vmatpush.msra.mxu0 0.0
    %3317 = vmatpush.msra.mxu0 0.0
    %3318 = vmatpush.msra.mxu0 0.0
    %3319 = vmatpush.msra.mxu0 0.0
    %3320 = vmatpush.msra.mxu0 0.0
    %3321 = vmatpush.msra.mxu0 0.0
    %3322 = vmatpush.msra.mxu0 0.0
    %3323 = vmatpush.msra.mxu0 0.0
    %3324 = vmatpush.msra.mxu0 0.0
    %3325 = vmatpush.msra.mxu0 0.0
    %3326 = vmatpush.msra.mxu0 %v3295
    %3327 = vmatpush.msra.mxu0 %v3294
    %3328 = vmatmul.f32.gmra.mxu0 %v3301
    %v3329 = vpop.f32.mrf.mxu0
    %v3330 = vadd.f32 %v3298, %v3329
    %3331 = vmatmul.f32.gmra.mxu0 %v3304
    %v3332 = vpop.f32.mrf.mxu0
    %v3333 = vadd.f32 %v3298, %v3332
    %3334 = vmatmul.f32.gmra.mxu0 %v3307
    %v3335 = vpop.f32.mrf.mxu0
    %v3336 = vadd.f32 %v3298, %v3335
    %3337 = vmatmul.f32.gmra.mxu0 %v3310
    %v3338 = vpop.f32.mrf.mxu0
    %v3339 = vadd.f32 %v3298, %v3338
    %3340 = vdwg.mxu0
    %v3341 = vadd.f32 %v2085, %v3330
    %v3342 = vadd.f32 %v2086, %v3333
    %v3343 = vadd.f32 %v2087, %v3336
    %v3344 = vadd.f32 %v2088, %v3339
    %3345 = vst.msk [vmem:[%s81] sm:$0xff] %vm514, %v3341
    %3346 = vst.msk [vmem:[%s81 + $0x8] sm:$0xff] %vm514, %v3342
    %3347 = vst.msk [vmem:[%s81 + $0x10] sm:$0xff] %vm514, %v3343
    %3348 = vst.msk [vmem:[%s81 + $0x18] sm:$0xff] %vm514, %v3344
    %v3349 = vmul.f32 %v3341, %v3341
    %v3350 = vmul.f32 %v3342, %v3342
    %v3351 = vmul.f32 %v3343, %v3343
    %v3352 = vmul.f32 %v3344, %v3344
    %v3353 = vsel %vm514, %v3349, 0.0
    %3354 = vadd.xlane.f32.xlu0 %v3353
    %v3355 = vpop.xlane.xlu0 %3354
    %v3356 = vsel %vm514, %v3350, 0.0
    %3357 = vadd.xlane.f32.xlu0 %v3356
    %v3358 = vpop.xlane.xlu0 %3357
    %v3359 = vsel %vm514, %v3351, 0.0
    %3360 = vadd.xlane.f32.xlu0 %v3359
    %v3361 = vpop.xlane.xlu0 %3360
    %v3362 = vsel %vm514, %v3352, 0.0
    %3363 = vadd.xlane.f32.xlu0 %v3362
    %v3364 = vpop.xlane.xlu0 %3363
    %v3365 = vrsqrt.pop %v3355
    %v3366 = vmul.f32 %v3365, %v3355
    %v3367 = vmul.f32 %v3366, %v3365
    %v3368 = vmul.f32 0.5, %v3367
    %v3369 = vsub.f32 1.5, %v3368
    %v3370 = vmul.f32 %v3365, %v3369
    %v3371 = vmul.f32 %v3355, %v3370
    %vm3372 = vcmp.eq.f32.partialorder %v3355, inf
    %v3373 = vsel %vm3372, %v3355, %v3371
    %vm3374 = vcmp.eq.f32.partialorder %v3355, 0.0
    %v3375 = vand.u32 %v3355, 2147483648
    %v3376 = vsel %vm3374, %v3375, %v3373
    %v3377 = vrsqrt.pop %v3358
    %v3378 = vmul.f32 %v3377, %v3358
    %v3379 = vmul.f32 %v3378, %v3377
    %v3380 = vmul.f32 0.5, %v3379
    %v3381 = vsub.f32 1.5, %v3380
    %v3382 = vmul.f32 %v3377, %v3381
    %v3383 = vmul.f32 %v3358, %v3382
    %vm3384 = vcmp.eq.f32.partialorder %v3358, inf
    %v3385 = vsel %vm3384, %v3358, %v3383
    %vm3386 = vcmp.eq.f32.partialorder %v3358, 0.0
    %v3387 = vand.u32 %v3358, 2147483648
    %v3388 = vsel %vm3386, %v3387, %v3385
    %v3389 = vrsqrt.pop %v3361
    %v3390 = vmul.f32 %v3389, %v3361
    %v3391 = vmul.f32 %v3390, %v3389
    %v3392 = vmul.f32 0.5, %v3391
    %v3393 = vsub.f32 1.5, %v3392
    %v3394 = vmul.f32 %v3389, %v3393
    %v3395 = vmul.f32 %v3361, %v3394
    %vm3396 = vcmp.eq.f32.partialorder %v3361, inf
    %v3397 = vsel %vm3396, %v3361, %v3395
    %vm3398 = vcmp.eq.f32.partialorder %v3361, 0.0
    %v3399 = vand.u32 %v3361, 2147483648
    %v3400 = vsel %vm3398, %v3399, %v3397
    %v3401 = vrsqrt.pop %v3364
    %v3402 = vmul.f32 %v3401, %v3364
    %v3403 = vmul.f32 %v3402, %v3401
    %v3404 = vmul.f32 0.5, %v3403
    %v3405 = vsub.f32 1.5, %v3404
    %v3406 = vmul.f32 %v3401, %v3405
    %v3407 = vmul.f32 %v3364, %v3406
    %vm3408 = vcmp.eq.f32.partialorder %v3364, inf
    %v3409 = vsel %vm3408, %v3364, %v3407
    %vm3410 = vcmp.eq.f32.partialorder %v3364, 0.0
    %v3411 = vand.u32 %v3364, 2147483648
    %v3412 = vsel %vm3410, %v3411, %v3409
    %v3413 = vmax.f32 %v3376, 1e-12
    %v3414 = vmax.f32 %v3388, 1e-12
    %v3415 = vmax.f32 %v3400, 1e-12
    %v3416 = vmax.f32 %v3412, 1e-12
    %v3417 = vrcp.pop %v3413
    %v3418 = vmul.f32 %v3413, %v3417
    %v3419 = vsub.f32 1.0, %v3418
    %v3420 = vmul.f32 %v3417, %v3419
    %v3421 = vadd.f32 %v3417, %v3420
    %vm3422 = vweird.f32 %v3413
    %vm3423 = vweird.f32 %v3417
    %vm3424 = vmor %vm3422, %vm3423
    %v3425 = vsel %vm3424, %v3417, %v3421
    %v3426 = vand.u32 2147483647, %v3413
    %vm3427 = vcmp.eq.f32.partialorder %v3426, 8.507059e+37
    %v3428 = vand.u32 %v3413, 2147483648
    %v3429 = vor.u32 1.1754944e-38, %v3428
    %v3430 = vsel %vm3427, %v3429, %v3425
    %v3431 = vmul.f32 %v3341, %v3430
    %v3432 = vrcp.pop %v3414
    %v3433 = vmul.f32 %v3414, %v3432
    %v3434 = vsub.f32 1.0, %v3433
    %v3435 = vmul.f32 %v3432, %v3434
    %v3436 = vadd.f32 %v3432, %v3435
    %vm3437 = vweird.f32 %v3414
    %vm3438 = vweird.f32 %v3432
    %vm3439 = vmor %vm3437, %vm3438
    %v3440 = vsel %vm3439, %v3432, %v3436
    %v3441 = vand.u32 2147483647, %v3414
    %vm3442 = vcmp.eq.f32.partialorder %v3441, 8.507059e+37
    %v3443 = vand.u32 %v3414, 2147483648
    %v3444 = vor.u32 1.1754944e-38, %v3443
    %v3445 = vsel %vm3442, %v3444, %v3440
    %v3446 = vmul.f32 %v3342, %v3445
    %v3447 = vrcp.pop %v3415
    %v3448 = vmul.f32 %v3415, %v3447
    %v3449 = vsub.f32 1.0, %v3448
    %v3450 = vmul.f32 %v3447, %v3449
    %v3451 = vadd.f32 %v3447, %v3450
    %vm3452 = vweird.f32 %v3415
    %vm3453 = vweird.f32 %v3447
    %vm3454 = vmor %vm3452, %vm3453
    %v3455 = vsel %vm3454, %v3447, %v3451
    %v3456 = vand.u32 2147483647, %v3415
    %vm3457 = vcmp.eq.f32.partialorder %v3456, 8.507059e+37
    %v3458 = vand.u32 %v3415, 2147483648
    %v3459 = vor.u32 1.1754944e-38, %v3458
    %v3460 = vsel %vm3457, %v3459, %v3455
    %v3461 = vmul.f32 %v3343, %v3460
    %v3462 = vrcp.pop %v3416
    %v3463 = vmul.f32 %v3416, %v3462
    %v3464 = vsub.f32 1.0, %v3463
    %v3465 = vmul.f32 %v3462, %v3464
    %v3466 = vadd.f32 %v3462, %v3465
    %vm3467 = vweird.f32 %v3416
    %vm3468 = vweird.f32 %v3462
    %vm3469 = vmor %vm3467, %vm3468
    %v3470 = vsel %vm3469, %v3462, %v3466
    %v3471 = vand.u32 2147483647, %v3416
    %vm3472 = vcmp.eq.f32.partialorder %v3471, 8.507059e+37
    %v3473 = vand.u32 %v3416, 2147483648
    %v3474 = vor.u32 1.1754944e-38, %v3473
    %v3475 = vsel %vm3472, %v3474, %v3470
    %v3476 = vmul.f32 %v3344, %v3475
    %3477 = vst.msk [vmem:[%s83] sm:$0xff] %vm514, %v3431
    %3478 = vst.msk [vmem:[%s83 + $0x8] sm:$0xff] %vm514, %v3446
    %3479 = vst.msk [vmem:[%s83 + $0x10] sm:$0xff] %vm514, %v3461
    %3480 = vst.msk [vmem:[%s83 + $0x18] sm:$0xff] %vm514, %v3476
    %v3482 = vsel %vm514, %v3431, 0
    %v3485 = vsel %vm514, %v3446, 0
    %v3488 = vsel %vm514, %v3461, 0
    %v3491 = vsel %vm514, %v3476, 0
    %3493 = vmatpush.xpose.msra.mxu0 0.0
    %3494 = vmatpush.xpose.msra.mxu0 0.0
    %3495 = vmatpush.xpose.msra.mxu0 0.0
    %3496 = vmatpush.xpose.msra.mxu0 0.0
    %3497 = vmatpush.xpose.msra.mxu0 0.0
    %3498 = vmatpush.xpose.msra.mxu0 0.0
    %3499 = vmatpush.xpose.msra.mxu0 0.0
    %3500 = vmatpush.xpose.msra.mxu0 0.0
    %3501 = vmatpush.xpose.msra.mxu0 0.0
    %3502 = vmatpush.xpose.msra.mxu0 0.0
    %3503 = vmatpush.xpose.msra.mxu0 0.0
    %3504 = vmatpush.xpose.msra.mxu0 0.0
    %3505 = vmatpush.xpose.msra.mxu0 %v3491
    %3506 = vmatpush.xpose.msra.mxu0 %v3488
    %3507 = vmatpush.xpose.msra.mxu0 %v3485
    %3508 = vmatpush.xpose.msra.mxu0 %v3482
    %3509 = vmatmul.f32.gmra.mxu0 %v3482
    %v3510 = vpop.f32.mrf.mxu0
    %v3511 = vadd.f32 0.0, %v3510
    %3512 = vmatmul.f32.gmra.mxu0 %v3485
    %v3513 = vpop.f32.mrf.mxu0
    %v3514 = vadd.f32 0.0, %v3513
    %3515 = vmatmul.f32.gmra.mxu0 %v3488
    %v3516 = vpop.f32.mrf.mxu0
    %v3517 = vadd.f32 0.0, %v3516
    %3518 = vmatmul.f32.gmra.mxu0 %v3491
    %v3519 = vpop.f32.mrf.mxu0
    %v3520 = vadd.f32 0.0, %v3519
    %3521 = vdwg.mxu0
    %3522 = vst.msk [vmem:[%s85] sm:$0xff] %vm514, %v3511
    %3523 = vst.msk [vmem:[%s85 + $0x8] sm:$0xff] %vm514, %v3514
    %3524 = vst.msk [vmem:[%s85 + $0x10] sm:$0xff] %vm514, %v3517
    %3525 = vst.msk [vmem:[%s85 + $0x18] sm:$0xff] %vm514, %v3520
    %v3526 = vld [vmem:[%s63] sm:$0xff]
    %v3527 = vld [vmem:[%s63 + $0x8] sm:$0xff]
    %v3528 = vld [vmem:[%s63 + $0x10] sm:$0xff]
    %v3529 = vld [vmem:[%s63 + $0x18] sm:$0xff]
    %v3530 = vld [vmem:[%s65] sm:$0x1]
    %v3532 = vperm.slane %v3530, 0
    %v3535 = vsel %vm514, %v3341, 0
    %v3538 = vsel %vm514, %v3342, 0
    %v3541 = vsel %vm514, %v3343, 0
    %v3544 = vsel %vm514, %v3344, 0
    %3546 = vmatpush.msra.mxu0 0.0
    %3547 = vmatpush.msra.mxu0 0.0
    %3548 = vmatpush.msra.mxu0 0.0
    %3549 = vmatpush.msra.mxu0 0.0
    %3550 = vmatpush.msra.mxu0 0.0
    %3551 = vmatpush.msra.mxu0 0.0
    %3552 = vmatpush.msra.mxu0 0.0
    %3553 = vmatpush.msra.mxu0 0.0
    %3554 = vmatpush.msra.mxu0 0.0
    %3555 = vmatpush.msra.mxu0 0.0
    %3556 = vmatpush.msra.mxu0 0.0
    %3557 = vmatpush.msra.mxu0 0.0
    %3558 = vmatpush.msra.mxu0 %v3529
    %3559 = vmatpush.msra.mxu0 %v3528
    %3560 = vmatpush.msra.mxu0 %v3527
    %3561 = vmatpush.msra.mxu0 %v3526
    %3562 = vmatmul.f32.gmra.mxu0 %v3535
    %v3563 = vpop.f32.mrf.mxu0
    %v3564 = vadd.f32 %v3532, %v3563
    %3565 = vmatmul.f32.gmra.mxu0 %v3538
    %v3566 = vpop.f32.mrf.mxu0
    %v3567 = vadd.f32 %v3532, %v3566
    %3568 = vmatmul.f32.gmra.mxu0 %v3541
    %v3569 = vpop.f32.mrf.mxu0
    %v3570 = vadd.f32 %v3532, %v3569
    %3571 = vmatmul.f32.gmra.mxu0 %v3544
    %v3572 = vpop.f32.mrf.mxu0
    %v3573 = vadd.f32 %v3532, %v3572
    %3574 = vdwg.mxu0
    %v3575 = vmax.f32 %v3564, 0.0
    %v3576 = vmax.f32 %v3567, 0.0
    %v3577 = vmax.f32 %v3570, 0.0
    %v3578 = vmax.f32 %v3573, 0.0
    %v3579 = vld [vmem:[%s67] sm:$0xff]
    %v3580 = vld [vmem:[%s67 + $0x8] sm:$0xff]
    %v3581 = vld [vmem:[%s67 + $0x10] sm:$0xff]
    %v3582 = vld [vmem:[%s67 + $0x18] sm:$0xff]
    %v3583 = vld [vmem:[%s69] sm:$0x1]
    %v3585 = vperm.slane %v3583, 0
    %v3588 = vsel %vm514, %v3575, 0
    %v3591 = vsel %vm514, %v3576, 0
    %v3594 = vsel %vm514, %v3577, 0
    %v3597 = vsel %vm514, %v3578, 0
    %3599 = vmatpush.msra.mxu0 0.0
    %3600 = vmatpush.msra.mxu0 0.0
    %3601 = vmatpush.msra.mxu0 0.0
    %3602 = vmatpush.msra.mxu0 0.0
    %3603 = vmatpush.msra.mxu0 0.0
    %3604 = vmatpush.msra.mxu0 0.0
    %3605 = vmatpush.msra.mxu0 0.0
    %3606 = vmatpush.msra.mxu0 0.0
    %3607 = vmatpush.msra.mxu0 0.0
    %3608 = vmatpush.msra.mxu0 0.0
    %3609 = vmatpush.msra.mxu0 0.0
    %3610 = vmatpush.msra.mxu0 0.0
    %3611 = vmatpush.msra.mxu0 %v3582
    %3612 = vmatpush.msra.mxu0 %v3581
    %3613 = vmatpush.msra.mxu0 %v3580
    %3614 = vmatpush.msra.mxu0 %v3579
    %3615 = vmatmul.f32.gmra.mxu0 %v3588
    %v3616 = vpop.f32.mrf.mxu0
    %v3617 = vadd.f32 %v3585, %v3616
    %3618 = vmatmul.f32.gmra.mxu0 %v3591
    %v3619 = vpop.f32.mrf.mxu0
    %v3620 = vadd.f32 %v3585, %v3619
    %3621 = vmatmul.f32.gmra.mxu0 %v3594
    %v3622 = vpop.f32.mrf.mxu0
    %v3623 = vadd.f32 %v3585, %v3622
    %3624 = vmatmul.f32.gmra.mxu0 %v3597
    %v3625 = vpop.f32.mrf.mxu0
    %v3626 = vadd.f32 %v3585, %v3625
    %3627 = vdwg.mxu0
    %v3628 = vmax.f32 %v3617, 0.0
    %v3629 = vmax.f32 %v3620, 0.0
    %v3630 = vmax.f32 %v3623, 0.0
    %v3631 = vmax.f32 %v3626, 0.0
    %v3632 = vld [vmem:[%s71] sm:$0xff]
    %v3633 = vld [vmem:[%s71 + $0x8] sm:$0xff]
    %v3634 = vld [vmem:[%s71 + $0x10] sm:$0xff]
    %v3635 = vld [vmem:[%s71 + $0x18] sm:$0xff]
    %v3636 = vld [vmem:[#allocation2] sm:$0x1]
    %v3638 = vperm.slane %v3636, 0
    %v3641 = vsel %vm514, %v3628, 0
    %v3644 = vsel %vm514, %v3629, 0
    %v3647 = vsel %vm514, %v3630, 0
    %v3650 = vsel %vm514, %v3631, 0
    %3652 = vmatpush.msra.mxu0 0.0
    %3653 = vmatpush.msra.mxu0 0.0
    %3654 = vmatpush.msra.mxu0 0.0
    %3655 = vmatpush.msra.mxu0 0.0
    %3656 = vmatpush.msra.mxu0 0.0
    %3657 = vmatpush.msra.mxu0 0.0
    %3658 = vmatpush.msra.mxu0 0.0
    %3659 = vmatpush.msra.mxu0 0.0
    %3660 = vmatpush.msra.mxu0 0.0
    %3661 = vmatpush.msra.mxu0 0.0
    %3662 = vmatpush.msra.mxu0 0.0
    %3663 = vmatpush.msra.mxu0 0.0
    %3664 = vmatpush.msra.mxu0 %v3635
    %3665 = vmatpush.msra.mxu0 %v3634
    %3666 = vmatpush.msra.mxu0 %v3633
    %3667 = vmatpush.msra.mxu0 %v3632
    %3668 = vmatmul.f32.gmra.mxu0 %v3641
    %v3669 = vpop.f32.mrf.mxu0
    %v3670 = vadd.f32 %v3638, %v3669
    %3671 = vmatmul.f32.gmra.mxu0 %v3644
    %v3672 = vpop.f32.mrf.mxu0
    %v3673 = vadd.f32 %v3638, %v3672
    %3674 = vmatmul.f32.gmra.mxu0 %v3647
    %v3675 = vpop.f32.mrf.mxu0
    %v3676 = vadd.f32 %v3638, %v3675
    %3677 = vmatmul.f32.gmra.mxu0 %v3650
    %v3678 = vpop.f32.mrf.mxu0
    %v3679 = vadd.f32 %v3638, %v3678
    %3680 = vdwg.mxu0
    %vm3681 = vcmask 7168
    %3682 = vst.msk [vmem:[%s87] sm:$0xff] %vm3681, %v3670
    %3683 = vst.msk [vmem:[%s87 + $0x8] sm:$0xff] %vm3681, %v3673
    %3684 = vst.msk [vmem:[%s87 + $0x10] sm:$0xff] %vm3681, %v3676
    %3685 = vst.msk [vmem:[%s87 + $0x18] sm:$0xff] %vm3681, %v3679
    // Predicated region
    $region150: #{forward.1} parent=1 // pred_check
      _
    $region151: #{forward.1} parent=1 // pred_check_branch
      %3687 = sbr.rel (0) target = $region153
    $region152: #{forward.1} parent=1 // pred_region
      %3689 = vsyncadd [#allocation4], 0
      %s3690 = sshll.u32 [#allocation3], 4
      %s3691 = int_to_ptr.vmem [resolvable:$true] %s3690
      %s3692 = sshll.u32 %s75, 4
      %s3693 = int_to_ptr.hbm [resolvable:$true] %s3692
      %3698 = dma.vmem_to_hbm [thread:$0]  %s3691, 512, %s3693, [#allocation4], 128, 128, 8
    $region153: #{forward.1} parent=1 // pred_fallthru
      _
    // Predicated region
    $region154: #{forward.1} parent=1 // pred_check
      _
    $region155: #{forward.1} parent=1 // pred_check_branch
      %3700 = sbr.rel (0) target = $region157
    $region156: #{forward.1} parent=1 // pred_region
      %3702 = vsyncadd [#allocation6], 0
      %s3703 = sshll.u32 [#allocation5], 4
      %s3704 = int_to_ptr.vmem [resolvable:$true] %s3703
      %s3705 = sshll.u32 %s77, 4
      %s3706 = int_to_ptr.hbm [resolvable:$true] %s3705
      %3711 = dma.vmem_to_hbm [thread:$0]  %s3704, 512, %s3706, [#allocation6], 128, 128, 8
    $region157: #{forward.1} parent=1 // pred_fallthru
      _
    // Predicated region
    $region158: #{forward.1} parent=1 // pred_check
      _
    $region159: #{forward.1} parent=1 // pred_check_branch
      %3713 = sbr.rel (0) target = $region161
    $region160: #{forward.1} parent=1 // pred_region
      %3715 = vsyncadd [#allocation6], 0
      %s3716 = sshll.u32 [#allocation7], 4
      %s3717 = int_to_ptr.vmem [resolvable:$true] %s3716
      %s3718 = sshll.u32 %s79, 4
      %s3719 = int_to_ptr.hbm [resolvable:$true] %s3718
      %3724 = dma.vmem_to_hbm [thread:$0]  %s3717, 512, %s3719, [#allocation6], 128, 128, 8
    $region161: #{forward.1} parent=1 // pred_fallthru
      _
    // Predicated region
    $region162: #{forward.1} parent=1 // pred_check
      _
    $region163: #{forward.1} parent=1 // pred_check_branch
      %3726 = sbr.rel (0) target = $region165
    $region164: #{forward.1} parent=1 // pred_region
      _
    $region165: #{forward.1} parent=1 // pred_fallthru
      _
    // Predicated region
    $region166: #{forward.1} parent=1 // pred_check
      _
    $region167: #{forward.1} parent=1 // pred_check_branch
      %3728 = sbr.rel (0) target = $region169
    $region168: #{forward.1} parent=1 // pred_region
      _
    $region169: #{forward.1} parent=1 // pred_fallthru
      _
    // Predicated region
    $region170: #{forward.1} parent=1 // pred_check
      _
    $region171: #{forward.1} parent=1 // pred_check_branch
      %3730 = sbr.rel (0) target = $region173
    $region172: #{forward.1} parent=1 // pred_region
      _
    $region173: #{forward.1} parent=1 // pred_fallthru
      _
    // Predicated region
    $region174: #{forward.1} parent=1 // pred_check
      _
    $region175: #{forward.1} parent=1 // pred_check_branch
      %3732 = sbr.rel (0) target = $region177
    $region176: #{forward.1} parent=1 // pred_region
      _
    $region177: #{forward.1} parent=1 // pred_fallthru
      _
    // Predicated region
    $region178: #{forward.1} parent=1 // pred_check
      _
    $region179: #{forward.1} parent=1 // pred_check_branch
      %3734 = sbr.rel (0) target = $region181
    $region180: #{forward.1} parent=1 // pred_region
      %3736 = dma.done [#allocation4], 512
    $region181: #{forward.1} parent=1 // pred_fallthru
      _
    // Predicated region
    $region182: #{forward.1} parent=1 // pred_check
      _
    $region183: #{forward.1} parent=1 // pred_check_branch
      %3738 = sbr.rel (0) target = $region185
    $region184: #{forward.1} parent=1 // pred_region
      %3740 = dma.done [#allocation6], 512
    $region185: #{forward.1} parent=1 // pred_fallthru
      _
    // Predicated region
    $region186: #{forward.1} parent=1 // pred_check
      _
    $region187: #{forward.1} parent=1 // pred_check_branch
      %3742 = sbr.rel (0) target = $region189
    $region188: #{forward.1} parent=1 // pred_region
      %3744 = dma.done [#allocation6], 512
    $region189: #{forward.1} parent=1 // pred_fallthru
      _
    // Predicated region
    $region190: #{forward.1} parent=1 // pred_check
      _
    $region191: #{forward.1} parent=1 // pred_check_branch
      %3746 = sbr.rel (0) target = $region193
    $region192: #{forward.1} parent=1 // pred_region
      _
    $region193: #{forward.1} parent=1 // pred_fallthru
      _
    // Predicated region
    $region194: #{forward.1} parent=1 // pred_check
      _
    $region195: #{forward.1} parent=1 // pred_check_branch
      %3748 = sbr.rel (0) target = $region197
    $region196: #{forward.1} parent=1 // pred_region
      _
    $region197: #{forward.1} parent=1 // pred_fallthru
      _
    // Predicated region
    $region198: #{forward.1} parent=1 // pred_check
      _
    $region199: #{forward.1} parent=1 // pred_check_branch
      %3750 = sbr.rel (0) target = $region201
    $region200: #{forward.1} parent=1 // pred_region
      _
    $region201: #{forward.1} parent=1 // pred_fallthru
      _
    // Predicated region
    $region202: #{forward.1} parent=1 // pred_check
      _
    $region203: #{forward.1} parent=1 // pred_check_branch
      %3752 = sbr.rel (0) target = $region205
    $region204: #{forward.1} parent=1 // pred_region
      _
    $region205: #{forward.1} parent=1 // pred_fallthru
      _
    %3753 = vsyncpa [#allocation4], 1
    %3754 = vsyncpa [#allocation6], 1

// kernel: custom-call.64
$region0: #{custom-call.64}
  %s0 = inlined_call_operand.vmem [shape: f32[8,1,3,3], index: 0, kind: input, shape index: {}]
  %s1 = inlined_call_operand.vmem [shape: f32[8,1,3,3], index: 1, kind: output, shape index: {}]
  $region1: #{custom-call.64} parent=0
    #allocation0 [shape = 'u8[4096]{0}', space=vmem, size = 0x1000, scoped, tag = 'operand span for operand 0']
    #allocation1 [shape = 'u8[4096]{0}', space=vmem, size = 0x1000, scoped, tag = 'packed  for operand 0']
    #allocation2 [shape = 'u8[4096]{0}', space=vmem, size = 0x1000, scoped, tag = 'operand span for operand 1']
    #allocation3 [shape = 'u8[4096]{0}', space=vmem, size = 0x1000, scoped, tag = 'packed  for operand 1']
    loop: start=0, step=1, limit=10
    $region2: #{custom-call.64} parent=1 // loop_pre_header
      _
    $region3: #{custom-call.64} parent=1 // loop_header
      %s3 = sphi 0, %s7
      %p4 = scmp.ge.s32.totalorder %s3, 10
      %s10 = sphi 0, %s36
      %s11 = sphi 0, %s32
      %s12 = sphi 0, %s28
      %s13 = sphi 0, %s24
      %s14 = sphi 0, %s10
      %s15 = sphi 0, %s11
      %s16 = sphi 0, %s12
      %s17 = sphi 0, %s13
      %s18 = sphi 0, %s14
      %s19 = sphi 0, %s15
      %s20 = sphi 0, %s16
      %s21 = sphi 0, %s17
    $region4: #{custom-call.64} parent=1 // loop_header_branch
      %6 = sbr.rel (%p4) target = $region8
    $region5: #{custom-call.64} parent=1 // loop_body
      %s8 = ssub.s32 %s3, 1
      %s9 = ssub.s32 %s3, 2
      %s22 = sadd.s32 1, %s13
      %p23 = scmp.ge.s32.totalorder %s22, 1
      %s24 = scalar_select %p23, 0, %s22
      %s25 = sadd.s32 1, %s12
      %s26 = scalar_select %p23, %s25, %s12
      %p27 = scmp.ge.s32.totalorder %s26, 1
      %s28 = scalar_select %p27, 0, %s26
      %s29 = sadd.s32 1, %s11
      %s30 = scalar_select %p27, %s29, %s11
      %p31 = scmp.ge.s32.totalorder %s30, 1
      %s32 = scalar_select %p31, 0, %s30
      %s33 = sadd.s32 1, %s10
      %s34 = scalar_select %p31, %s33, %s10
      %p35 = scmp.ge.s32.totalorder %s34, 8
      %s36 = scalar_select %p35, 0, %s34
      %p37 = scmp.le.s32.totalorder 1, %s3
      %p38 = scmp.lt.s32.totalorder %s3, 9
      %p39 = pnand %p37, %p38
      %p40 = pneg %p39
      // Predicated region
      $region9: #{custom-call.64} parent=5 // pred_check
        _
      $region10: #{custom-call.64} parent=5 // pred_check_branch
        %42 = sbr.rel (%p39) target = $region12
      $region11: #{custom-call.64} parent=5 // pred_region
        %s43 = ssub.s32 %s3, 1
      $region12: #{custom-call.64} parent=5 // pred_fallthru
        _
      %p44 = scmp.lt.s32.totalorder %s3, 8
      // Predicated region
      $region13: #{custom-call.64} parent=5 // pred_check
        %p45 = pneg %p44
      $region14: #{custom-call.64} parent=5 // pred_check_branch
        %47 = sbr.rel (%p45) target = $region16
      $region15: #{custom-call.64} parent=5 // pred_region
        %s48 = sand.u32 %s3, 1
        %s49 = sand.u32 %s3, 1
        %s50 = smul.addr %s49, 4
        %s51 = scalar_lea.vmem [#allocation1], %s50
        %s52 = sadd.s32 %s13, %s12
        %s53 = sadd.s32 %s52, %s11
        %s54 = sadd.s32 %s53, %s10
        %s55 = smul.addr %s54, 4
        %s56 = scalar_lea.vmem %s0, %s55
        // Predicated region
        $region17: #{custom-call.64} parent=15 // pred_check
          _
        $region18: #{custom-call.64} parent=15 // pred_check_branch
          %58 = sbr.rel (0) target = $region20
        $region19: #{custom-call.64} parent=15 // pred_region
          // Predicated region
          $region21: #{custom-call.64} parent=19 // pred_check
            _
          $region22: #{custom-call.64} parent=19 // pred_check_branch
            %60 = sbr.rel target = $region24
          $region23: #{custom-call.64} parent=19 // pred_region
            // Predicated region
            $region36: #{custom-call.64} parent=23 // pred_check
              _
            $region37: #{custom-call.64} parent=23 // pred_check_branch
              %76 = sbr.rel (0) target = $region39
            $region38: #{custom-call.64} parent=23 // pred_region
              %s78 = ssub.s32 16, 1
              loop: start=0, step=1, limit=1
              $region40: #{custom-call.64} parent=38 // loop_pre_header
                _
              $region41: #{custom-call.64} parent=38 // loop_header
                %s80 = sphi 0, %s84
                %p81 = scmp.ge.s32.totalorder %s80, 1
                %s85 = sphi %s56, %s56
                %s86 = sphi %s51, %s51
              $region42: #{custom-call.64} parent=38 // loop_header_branch
                %83 = sbr.rel (%p81) target = $region46
              $region43: #{custom-call.64} parent=38 // loop_body
                %v87 = vld [vmem:[%s85] sm:%s78]
                %88 = vst [vmem:[%s86] sm:%s78] %v87
              $region44: #{custom-call.64} parent=38 // loop_footer
                %s84 = sadd.s32 1, %s80
              $region45: #{custom-call.64} parent=38 // loop_footer_branch
                %79 = sbr.rel target = $region41
              $region46: #{custom-call.64} parent=38 // loop_exit
                _
            $region39: #{custom-call.64} parent=23 // pred_fallthru
              _
          $region24: #{custom-call.64} parent=19 // pred_fallthru
            _
          // Predicated region
          $region25: #{custom-call.64} parent=19 // pred_check
            _
          $region26: #{custom-call.64} parent=19 // pred_check_branch
            %62 = sbr.rel (0) target = $region28
          $region27: #{custom-call.64} parent=19 // pred_region
            %s64 = ssub.s32 16, 1
            loop: start=0, step=1, limit=1
            $region29: #{custom-call.64} parent=27 // loop_pre_header
              _
            $region30: #{custom-call.64} parent=27 // loop_header
              %s66 = sphi 0, %s70
              %p67 = scmp.ge.s32.totalorder %s66, 1
              %s71 = sphi %s56, %s56
              %s72 = sphi %s51, %s51
            $region31: #{custom-call.64} parent=27 // loop_header_branch
              %69 = sbr.rel (%p67) target = $region35
            $region32: #{custom-call.64} parent=27 // loop_body
              %v73 = vld [vmem:[%s71] sm:%s64]
              %74 = vst [vmem:[%s72] sm:%s64] %v73
            $region33: #{custom-call.64} parent=27 // loop_footer
              %s70 = sadd.s32 1, %s66
            $region34: #{custom-call.64} parent=27 // loop_footer_branch
              %65 = sbr.rel target = $region30
            $region35: #{custom-call.64} parent=27 // loop_exit
              _
          $region28: #{custom-call.64} parent=19 // pred_fallthru
            _
        $region20: #{custom-call.64} parent=15 // pred_fallthru
          _
        %89 = vnop
      $region16: #{custom-call.64} parent=5 // pred_fallthru
        _
      %p90 = scmp.le.s32.totalorder 1, %s3
      %p91 = scmp.lt.s32.totalorder %s3, 9
      %p92 = pnand %p90, %p91
      %p93 = pneg %p92
      // Predicated region
      $region47: #{custom-call.64} parent=5 // pred_check
        _
      $region48: #{custom-call.64} parent=5 // pred_check_branch
        %95 = sbr.rel (%p92) target = $region50
      $region49: #{custom-call.64} parent=5 // pred_region
        #allocation4 [shape = 'f32[3,3]{1,0}', space=vmem, size = 0x1000, scoped, tag = 'rescaled input a']
        %s96 = ssub.s32 %s3, 1
        %s97 = sand.u32 %s8, 1
        %s98 = sand.u32 %s8, 1
        %s99 = smul.addr %s98, 4
        %s100 = scalar_lea.vmem [#allocation1], %s99
        %s101 = sand.u32 %s8, 1
        %s102 = sand.u32 %s8, 1
        %s103 = smul.addr %s102, 4
        %s104 = scalar_lea.vmem [#allocation1], %s103
        %s105 = sand.u32 %s8, 1
        %s106 = sand.u32 %s8, 1
        %s107 = smul.addr %s106, 4
        %s108 = scalar_lea.vmem [#allocation3], %s107
        %s110 = ssub.s32 16, 1
        %v111 = vld [vmem:[%s104] sm:%s110]
        %112 = vst [vmem:[#allocation0] sm:%s110] %v111
        %v113 = vlaneseq
        %v114 = vand.u32 %v113, 127
        %vm115 = vcmp.lt.s32.totalorder %v114, 3
        %v116 = vlaneseq
        %v117 = vshrl.u32 %v116, 7
        %vm119 = vcmp.eq.s32.totalorder %v117, %v114
        %v120 = vld [vmem:[#allocation0] sm:$0xff]
        %v121 = vsel %vm119, %v120, 0.0
        %122 = vadd.xlane.f32.xlu0 %v121
        %v123 = vpop.xlane.xlu0 %122
        %vm124 = vcmp.ge.s32.totalorder %v117, %v114
        %vm125 = vmand %vm124, %vm115
        %v126 = vsel %vm125, %v120, 0.0
        %v127 = vrcp.pop %v123
        %v128 = vmul.f32 %v123, %v127
        %v129 = vsub.f32 1.0, %v128
        %v130 = vmul.f32 %v127, %v129
        %v131 = vadd.f32 %v127, %v130
        %vm132 = vweird.f32 %v123
        %vm133 = vweird.f32 %v127
        %vm134 = vmor %vm132, %vm133
        %v135 = vsel %vm134, %v127, %v131
        %v136 = vand.u32 2147483647, %v123
        %vm137 = vcmp.eq.f32.partialorder %v136, 8.507059e+37
        %v138 = vand.u32 %v123, 2147483648
        %v139 = vor.u32 1.1754944e-38, %v138
        %v140 = vsel %vm137, %v139, %v135
        %v141 = vmul.f32 %v126, %v140
        %142 = vst [vmem:[#allocation4] sm:$0xff] %v141
        %v143 = vlaneseq
        %v144 = vand.u32 %v143, 127
        %v145 = vlaneseq
        %v146 = vshrl.u32 %v145, 7
        %vm148 = vcmp.eq.s32.totalorder %v144, %v146
        %v149 = vlaneseq
        %v150 = vand.u32 %v149, 127
        %vm151 = vcmp.eq.s32.totalorder %v150, 0
        %v152 = vsel %vm151, 1.0, -1.0
        %v153 = vsel %vm148, %v152, 0.0
        %s154 = scalar_lea.vmem [#allocation4], 1
        %v155 = vld [vmem:[%s154] ss:$0 sm:$0xff]
        %v156 = vxor.u32 %v155, 2147483648
        %v157 = vlaneseq
        %v158 = vand.u32 %v157, 127
        %vm159 = vcmp.eq.s32.totalorder %v158, 1
        %v160 = vmul.f32 %v156, %v153
        %161 = vadd.xlane.f32.xlu0 %v160
        %v162 = vpop.xlane.xlu0 %161
        %v163 = vsel %vm159, %v162, %v153
        %s164 = scalar_lea.vmem [#allocation4], 2
        %v165 = vld [vmem:[%s164] ss:$0 sm:$0xff]
        %v166 = vxor.u32 %v165, 2147483648
        %v167 = vlaneseq
        %v168 = vand.u32 %v167, 127
        %vm169 = vcmp.eq.s32.totalorder %v168, 2
        %v170 = vmul.f32 %v166, %v163
        %171 = vadd.xlane.f32.xlu0 %v170
        %v172 = vpop.xlane.xlu0 %171
        %v173 = vsel %vm169, %v172, %v163
        %v174 = vrcp.pop %v123
        %v175 = vmul.f32 %v123, %v174
        %v176 = vsub.f32 1.0, %v175
        %v177 = vmul.f32 %v174, %v176
        %v178 = vadd.f32 %v174, %v177
        %vm179 = vweird.f32 %v123
        %vm180 = vweird.f32 %v174
        %vm181 = vmor %vm179, %vm180
        %v182 = vsel %vm181, %v174, %v178
        %v183 = vand.u32 2147483647, %v123
        %vm184 = vcmp.eq.f32.partialorder %v183, 8.507059e+37
        %v185 = vand.u32 %v123, 2147483648
        %v186 = vor.u32 1.1754944e-38, %v185
        %v187 = vsel %vm184, %v186, %v182
        %v188 = vmul.f32 %v173, %v187
        %vm189 = vweird.f32 %v123
        %v190 = vsel %vm189, %v173, %v188
        %191 = vst [vmem:[#allocation2] sm:$0xff] %v190
        %s193 = ssub.s32 16, 1
        %v194 = vld [vmem:[#allocation2] sm:%s193]
        %s196 = ssub.s32 16, 1
        %197 = vst [vmem:[%s108] sm:%s196] %v194
        %s198 = sand.u32 %s8, 1
        %s199 = sand.u32 %s8, 1
        %s200 = smul.addr %s199, 4
        %s201 = scalar_lea.vmem [#allocation3], %s200
        %s202 = sadd.s32 %s17, %s16
        %s203 = sadd.s32 %s202, %s15
        %s204 = sadd.s32 %s203, %s14
        %s205 = smul.addr %s204, 4
        %s206 = scalar_lea.vmem %s1, %s205
        // Predicated region
        $region51: #{custom-call.64} parent=49 // pred_check
          _
        $region52: #{custom-call.64} parent=49 // pred_check_branch
          %208 = sbr.rel (0) target = $region54
        $region53: #{custom-call.64} parent=49 // pred_region
          // Predicated region
          $region55: #{custom-call.64} parent=53 // pred_check
            _
          $region56: #{custom-call.64} parent=53 // pred_check_branch
            %210 = sbr.rel target = $region58
          $region57: #{custom-call.64} parent=53 // pred_region
            // Predicated region
            $region70: #{custom-call.64} parent=57 // pred_check
              _
            $region71: #{custom-call.64} parent=57 // pred_check_branch
              %226 = sbr.rel (0) target = $region73
            $region72: #{custom-call.64} parent=57 // pred_region
              %s228 = ssub.s32 16, 1
              loop: start=0, step=1, limit=1
              $region74: #{custom-call.64} parent=72 // loop_pre_header
                _
              $region75: #{custom-call.64} parent=72 // loop_header
                %s230 = sphi 0, %s234
                %p231 = scmp.ge.s32.totalorder %s230, 1
                %s235 = sphi %s201, %s201
                %s236 = sphi %s206, %s206
              $region76: #{custom-call.64} parent=72 // loop_header_branch
                %233 = sbr.rel (%p231) target = $region80
              $region77: #{custom-call.64} parent=72 // loop_body
                %v237 = vld [vmem:[%s235] sm:%s228]
                %238 = vst [vmem:[%s236] sm:%s228] %v237
              $region78: #{custom-call.64} parent=72 // loop_footer
                %s234 = sadd.s32 1, %s230
              $region79: #{custom-call.64} parent=72 // loop_footer_branch
                %229 = sbr.rel target = $region75
              $region80: #{custom-call.64} parent=72 // loop_exit
                _
            $region73: #{custom-call.64} parent=57 // pred_fallthru
              _
          $region58: #{custom-call.64} parent=53 // pred_fallthru
            _
          // Predicated region
          $region59: #{custom-call.64} parent=53 // pred_check
            _
          $region60: #{custom-call.64} parent=53 // pred_check_branch
            %212 = sbr.rel (0) target = $region62
          $region61: #{custom-call.64} parent=53 // pred_region
            %s214 = ssub.s32 16, 1
            loop: start=0, step=1, limit=1
            $region63: #{custom-call.64} parent=61 // loop_pre_header
              _
            $region64: #{custom-call.64} parent=61 // loop_header
              %s216 = sphi 0, %s220
              %p217 = scmp.ge.s32.totalorder %s216, 1
              %s221 = sphi %s201, %s201
              %s222 = sphi %s206, %s206
            $region65: #{custom-call.64} parent=61 // loop_header_branch
              %219 = sbr.rel (%p217) target = $region69
            $region66: #{custom-call.64} parent=61 // loop_body
              %v223 = vld [vmem:[%s221] sm:%s214]
              %224 = vst [vmem:[%s222] sm:%s214] %v223
            $region67: #{custom-call.64} parent=61 // loop_footer
              %s220 = sadd.s32 1, %s216
            $region68: #{custom-call.64} parent=61 // loop_footer_branch
              %215 = sbr.rel target = $region64
            $region69: #{custom-call.64} parent=61 // loop_exit
              _
          $region62: #{custom-call.64} parent=53 // pred_fallthru
            _
        $region54: #{custom-call.64} parent=49 // pred_fallthru
          _
        %239 = vnop
      $region50: #{custom-call.64} parent=5 // pred_fallthru
        _
      %p240 = scmp.le.s32.totalorder 2, %s3
      // Predicated region
      $region81: #{custom-call.64} parent=5 // pred_check
        %p241 = pneg %p240
      $region82: #{custom-call.64} parent=5 // pred_check_branch
        %243 = sbr.rel (%p241) target = $region84
      $region83: #{custom-call.64} parent=5 // pred_region
        %s244 = ssub.s32 %s3, 2
        %s245 = sand.u32 %s9, 1
        %s246 = sand.u32 %s9, 1
        %s247 = smul.addr %s246, 4
        %s248 = scalar_lea.vmem [#allocation3], %s247
      $region84: #{custom-call.64} parent=5 // pred_fallthru
        _
    $region6: #{custom-call.64} parent=1 // loop_footer
      %s7 = sadd.s32 1, %s3
    $region7: #{custom-call.64} parent=1 // loop_footer_branch
      %2 = sbr.rel target = $region3
    $region8: #{custom-call.64} parent=1 // loop_exit
      _

// kernel: custom-call.22
$region0: #{custom-call.22}
  %s0 = inlined_call_operand.vmem [shape: f32[8,2,2], index: 0, kind: input, shape index: {}]
  %s1 = inlined_call_operand.vmem [shape: f32[8,2,2], index: 1, kind: input, shape index: {}]
  %s2 = inlined_call_operand.vmem [shape: f32[8,2,2], index: 2, kind: input, shape index: {}]
  %s3 = inlined_call_operand.vmem [shape: f32[8,2,2], index: 3, kind: input, shape index: {}]
  %s4 = inlined_call_operand.vmem [shape: f32[8,2], index: 4, kind: output, shape index: {0}]
  %s5 = inlined_call_operand.vmem [shape: f32[8,2], index: 5, kind: output, shape index: {1}]
  %s6 = inlined_call_operand.vmem [shape: f32[8,2,2], index: 6, kind: output, shape index: {2}]
  %s7 = inlined_call_operand.vmem [shape: f32[8,2,2], index: 7, kind: output, shape index: {3}]
  %s8 = inlined_call_operand.vmem [shape: f32[8,2,2], index: 8, kind: output, shape index: {4}]
  %s9 = inlined_call_operand.vmem [shape: f32[8,2,2], index: 9, kind: output, shape index: {5}]
  %10 = xla_tuple %s4, %s5, %s6, %s7, %s8, %s9
  $region1: #{custom-call.22} parent=0
    #allocation0 [shape = 'u8[4096]{0}', space=vmem, size = 0x1000, scoped, tag = 'operand span for operand 0']
    #allocation1 [shape = 'u8[2048]{0}', space=vmem, size = 0x800, scoped, tag = 'packed  for operand 0']
    #allocation2 [shape = 'u8[4096]{0}', space=vmem, size = 0x1000, scoped, tag = 'operand span for operand 1']
    #allocation3 [shape = 'u8[2048]{0}', space=vmem, size = 0x800, scoped, tag = 'packed  for operand 1']
    #allocation4 [shape = 'u8[4096]{0}', space=vmem, size = 0x1000, scoped, tag = 'operand span for operand 2']
    #allocation5 [shape = 'u8[2048]{0}', space=vmem, size = 0x800, scoped, tag = 'packed  for operand 2']
    #allocation6 [shape = 'u8[4096]{0}', space=vmem, size = 0x1000, scoped, tag = 'operand span for operand 3']
    #allocation7 [shape = 'u8[2048]{0}', space=vmem, size = 0x800, scoped, tag = 'packed  for operand 3']
    #allocation8 [shape = 'u8[8192]{0}', space=vmem, size = 0x2000, scoped, tag = 'operand span for operand 4']
    #allocation9 [shape = 'u8[8192]{0}', space=vmem, size = 0x2000, scoped, tag = 'operand span for operand 5']
    #allocation10 [shape = 'u8[4096]{0}', space=vmem, size = 0x1000, scoped, tag = 'operand span for operand 6']
    #allocation11 [shape = 'u8[2048]{0}', space=vmem, size = 0x800, scoped, tag = 'packed  for operand 6']
    #allocation12 [shape = 'u8[4096]{0}', space=vmem, size = 0x1000, scoped, tag = 'operand span for operand 7']
    #allocation13 [shape = 'u8[2048]{0}', space=vmem, size = 0x800, scoped, tag = 'packed  for operand 7']
    #allocation14 [shape = 'u8[4096]{0}', space=vmem, size = 0x1000, scoped, tag = 'operand span for operand 8']
    #allocation15 [shape = 'u8[2048]{0}', space=vmem, size = 0x800, scoped, tag = 'packed  for operand 8']
    #allocation16 [shape = 'u8[4096]{0}', space=vmem, size = 0x1000, scoped, tag = 'operand span for operand 9']
    #allocation17 [shape = 'u8[2048]{0}', space=vmem, size = 0x800, scoped, tag = 'packed  for operand 9']
    loop: start=0, step=1, limit=10
    $region2: #{custom-call.22} parent=1 // loop_pre_header
      _
    $region3: #{custom-call.22} parent=1 // loop_header
      %s12 = sphi 0, %s16
      %p13 = scmp.ge.s32.totalorder %s12, 10
      %s24 = sphi 0, %s26
      %s27 = sphi 0, %s24
      %s28 = sphi 0, %s27
      %s44 = sphi 0, %s28
      %s52 = sphi 0, %s54
      %s55 = sphi 0, %s52
      %s56 = sphi 0, %s55
      %s72 = sphi 0, %s56
    $region4: #{custom-call.22} parent=1 // loop_header_branch
      %15 = sbr.rel (%p13) target = $region8
    $region5: #{custom-call.22} parent=1 // loop_body
      %s17 = ssub.s32 %s12, 1
      %s18 = ssub.s32 %s12, 2
      %s19 = sadd.s32 %s12, 1
      %s20 = sshrl.u32 %s12, 3
      %s21 = sshrl.u32 %s19, 3
      %s22 = ssub.s32 %s20, %s21
      %p23 = scmp.eq.s32.totalorder %s22, 0
      %s25 = sadd.s32 %s24, 1
      %s26 = scalar_select %p23, %s24, %s25
      %p29 = pneg %p23
      %p30 = scmp.eq.s32.totalorder %s12, 7
      %p31 = por %p29, %p30
      %p32 = scmp.ne.s32.totalorder %s24, %s27
      %p33 = scmp.eq.s32.totalorder %s12, 0
      %p34 = por %p32, %p33
      %p35 = scmp.ne.s32.totalorder %s24, %s27
      %p36 = scmp.eq.s32.totalorder %s17, 7
      %p37 = por %p35, %p36
      %p38 = scmp.ne.s32.totalorder %s27, %s28
      %p39 = scmp.eq.s32.totalorder %s17, 0
      %p40 = por %p38, %p39
      %p41 = scmp.ne.s32.totalorder %s27, %s28
      %p42 = scmp.eq.s32.totalorder %s18, 7
      %p43 = por %p41, %p42
      %p45 = scmp.ne.s32.totalorder %s28, %s44
      %p46 = scmp.eq.s32.totalorder %s18, 0
      %p47 = por %p45, %p46
      %s48 = sshrl.u32 %s12, 3
      %s49 = sshrl.u32 %s19, 3
      %s50 = ssub.s32 %s48, %s49
      %p51 = scmp.eq.s32.totalorder %s50, 0
      %s53 = sadd.s32 %s52, 1
      %s54 = scalar_select %p51, %s52, %s53
      %p57 = pneg %p51
      %p58 = scmp.eq.s32.totalorder %s12, 7
      %p59 = por %p57, %p58
      %p60 = scmp.ne.s32.totalorder %s52, %s55
      %p61 = scmp.eq.s32.totalorder %s12, 0
      %p62 = por %p60, %p61
      %p63 = scmp.ne.s32.totalorder %s52, %s55
      %p64 = scmp.eq.s32.totalorder %s17, 7
      %p65 = por %p63, %p64
      %p66 = scmp.ne.s32.totalorder %s55, %s56
      %p67 = scmp.eq.s32.totalorder %s17, 0
      %p68 = por %p66, %p67
      %p69 = scmp.ne.s32.totalorder %s55, %s56
      %p70 = scmp.eq.s32.totalorder %s18, 7
      %p71 = por %p69, %p70
      %p73 = scmp.ne.s32.totalorder %s56, %s72
      %p74 = scmp.eq.s32.totalorder %s18, 0
      %p75 = por %p73, %p74
      %p76 = scmp.le.s32.totalorder 1, %s12
      %p77 = scmp.lt.s32.totalorder %s12, 9
      %p78 = pnand %p76, %p77
      %p79 = pneg %p78
      // Predicated region
      $region9: #{custom-call.22} parent=5 // pred_check
        _
      $region10: #{custom-call.22} parent=5 // pred_check_branch
        %81 = sbr.rel (%p78) target = $region12
      $region11: #{custom-call.22} parent=5 // pred_region
        %s82 = ssub.s32 %s12, 1
      $region12: #{custom-call.22} parent=5 // pred_fallthru
        _
      %p83 = scmp.lt.s32.totalorder %s12, 8
      // Predicated region
      $region13: #{custom-call.22} parent=5 // pred_check
        %p84 = pneg %p83
      $region14: #{custom-call.22} parent=5 // pred_check_branch
        %86 = sbr.rel (%p84) target = $region16
      $region15: #{custom-call.22} parent=5 // pred_region
        %s87 = sand.u32 %s12, 1
        %s88 = sand.u32 %s12, 1
        %s89 = smul.addr %s88, 2
        %s90 = scalar_lea.vmem [#allocation1], %s89
        %s91 = smul.addr %s12, 2
        %s92 = scalar_lea.vmem %s0, %s91
        // Predicated region
        $region17: #{custom-call.22} parent=15 // pred_check
          _
        $region18: #{custom-call.22} parent=15 // pred_check_branch
          %94 = sbr.rel (0) target = $region20
        $region19: #{custom-call.22} parent=15 // pred_region
          // Predicated region
          $region21: #{custom-call.22} parent=19 // pred_check
            _
          $region22: #{custom-call.22} parent=19 // pred_check_branch
            %96 = sbr.rel target = $region24
          $region23: #{custom-call.22} parent=19 // pred_region
            // Predicated region
            $region36: #{custom-call.22} parent=23 // pred_check
              _
            $region37: #{custom-call.22} parent=23 // pred_check_branch
              %112 = sbr.rel (0) target = $region39
            $region38: #{custom-call.22} parent=23 // pred_region
              %s114 = ssub.s32 4, 1
              loop: start=0, step=1, limit=1
              $region40: #{custom-call.22} parent=38 // loop_pre_header
                _
              $region41: #{custom-call.22} parent=38 // loop_header
                %s116 = sphi 0, %s120
                %p117 = scmp.ge.s32.totalorder %s116, 1
                %s121 = sphi %s92, %s92
                %s122 = sphi %s90, %s90
              $region42: #{custom-call.22} parent=38 // loop_header_branch
                %119 = sbr.rel (%p117) target = $region46
              $region43: #{custom-call.22} parent=38 // loop_body
                %v123 = vld [vmem:[%s121] sm:%s114]
                %124 = vst [vmem:[%s122] sm:%s114] %v123
              $region44: #{custom-call.22} parent=38 // loop_footer
                %s120 = sadd.s32 1, %s116
              $region45: #{custom-call.22} parent=38 // loop_footer_branch
                %115 = sbr.rel target = $region41
              $region46: #{custom-call.22} parent=38 // loop_exit
                _
            $region39: #{custom-call.22} parent=23 // pred_fallthru
              _
          $region24: #{custom-call.22} parent=19 // pred_fallthru
            _
          // Predicated region
          $region25: #{custom-call.22} parent=19 // pred_check
            _
          $region26: #{custom-call.22} parent=19 // pred_check_branch
            %98 = sbr.rel (0) target = $region28
          $region27: #{custom-call.22} parent=19 // pred_region
            %s100 = ssub.s32 4, 1
            loop: start=0, step=1, limit=1
            $region29: #{custom-call.22} parent=27 // loop_pre_header
              _
            $region30: #{custom-call.22} parent=27 // loop_header
              %s102 = sphi 0, %s106
              %p103 = scmp.ge.s32.totalorder %s102, 1
              %s107 = sphi %s92, %s92
              %s108 = sphi %s90, %s90
            $region31: #{custom-call.22} parent=27 // loop_header_branch
              %105 = sbr.rel (%p103) target = $region35
            $region32: #{custom-call.22} parent=27 // loop_body
              %v109 = vld [vmem:[%s107] sm:%s100]
              %110 = vst [vmem:[%s108] sm:%s100] %v109
            $region33: #{custom-call.22} parent=27 // loop_footer
              %s106 = sadd.s32 1, %s102
            $region34: #{custom-call.22} parent=27 // loop_footer_branch
              %101 = sbr.rel target = $region30
            $region35: #{custom-call.22} parent=27 // loop_exit
              _
          $region28: #{custom-call.22} parent=19 // pred_fallthru
            _
        $region20: #{custom-call.22} parent=15 // pred_fallthru
          _
        %125 = vnop
        %s126 = sand.u32 %s12, 1
        %s127 = sand.u32 %s12, 1
        %s128 = smul.addr %s127, 2
        %s129 = scalar_lea.vmem [#allocation3], %s128
        %s130 = smul.addr %s12, 2
        %s131 = scalar_lea.vmem %s1, %s130
        // Predicated region
        $region47: #{custom-call.22} parent=15 // pred_check
          _
        $region48: #{custom-call.22} parent=15 // pred_check_branch
          %133 = sbr.rel (0) target = $region50
        $region49: #{custom-call.22} parent=15 // pred_region
          // Predicated region
          $region51: #{custom-call.22} parent=49 // pred_check
            _
          $region52: #{custom-call.22} parent=49 // pred_check_branch
            %135 = sbr.rel target = $region54
          $region53: #{custom-call.22} parent=49 // pred_region
            // Predicated region
            $region66: #{custom-call.22} parent=53 // pred_check
              _
            $region67: #{custom-call.22} parent=53 // pred_check_branch
              %151 = sbr.rel (0) target = $region69
            $region68: #{custom-call.22} parent=53 // pred_region
              %s153 = ssub.s32 4, 1
              loop: start=0, step=1, limit=1
              $region70: #{custom-call.22} parent=68 // loop_pre_header
                _
              $region71: #{custom-call.22} parent=68 // loop_header
                %s155 = sphi 0, %s159
                %p156 = scmp.ge.s32.totalorder %s155, 1
                %s160 = sphi %s131, %s131
                %s161 = sphi %s129, %s129
              $region72: #{custom-call.22} parent=68 // loop_header_branch
                %158 = sbr.rel (%p156) target = $region76
              $region73: #{custom-call.22} parent=68 // loop_body
                %v162 = vld [vmem:[%s160] sm:%s153]
                %163 = vst [vmem:[%s161] sm:%s153] %v162
              $region74: #{custom-call.22} parent=68 // loop_footer
                %s159 = sadd.s32 1, %s155
              $region75: #{custom-call.22} parent=68 // loop_footer_branch
                %154 = sbr.rel target = $region71
              $region76: #{custom-call.22} parent=68 // loop_exit
                _
            $region69: #{custom-call.22} parent=53 // pred_fallthru
              _
          $region54: #{custom-call.22} parent=49 // pred_fallthru
            _
          // Predicated region
          $region55: #{custom-call.22} parent=49 // pred_check
            _
          $region56: #{custom-call.22} parent=49 // pred_check_branch
            %137 = sbr.rel (0) target = $region58
          $region57: #{custom-call.22} parent=49 // pred_region
            %s139 = ssub.s32 4, 1
            loop: start=0, step=1, limit=1
            $region59: #{custom-call.22} parent=57 // loop_pre_header
              _
            $region60: #{custom-call.22} parent=57 // loop_header
              %s141 = sphi 0, %s145
              %p142 = scmp.ge.s32.totalorder %s141, 1
              %s146 = sphi %s131, %s131
              %s147 = sphi %s129, %s129
            $region61: #{custom-call.22} parent=57 // loop_header_branch
              %144 = sbr.rel (%p142) target = $region65
            $region62: #{custom-call.22} parent=57 // loop_body
              %v148 = vld [vmem:[%s146] sm:%s139]
              %149 = vst [vmem:[%s147] sm:%s139] %v148
            $region63: #{custom-call.22} parent=57 // loop_footer
              %s145 = sadd.s32 1, %s141
            $region64: #{custom-call.22} parent=57 // loop_footer_branch
              %140 = sbr.rel target = $region60
            $region65: #{custom-call.22} parent=57 // loop_exit
              _
          $region58: #{custom-call.22} parent=49 // pred_fallthru
            _
        $region50: #{custom-call.22} parent=15 // pred_fallthru
          _
        %164 = vnop
        %s165 = sand.u32 %s12, 1
        %s166 = sand.u32 %s12, 1
        %s167 = smul.addr %s166, 2
        %s168 = scalar_lea.vmem [#allocation5], %s167
        %s169 = smul.addr %s12, 2
        %s170 = scalar_lea.vmem %s2, %s169
        // Predicated region
        $region77: #{custom-call.22} parent=15 // pred_check
          _
        $region78: #{custom-call.22} parent=15 // pred_check_branch
          %172 = sbr.rel (0) target = $region80
        $region79: #{custom-call.22} parent=15 // pred_region
          // Predicated region
          $region81: #{custom-call.22} parent=79 // pred_check
            _
          $region82: #{custom-call.22} parent=79 // pred_check_branch
            %174 = sbr.rel target = $region84
          $region83: #{custom-call.22} parent=79 // pred_region
            // Predicated region
            $region96: #{custom-call.22} parent=83 // pred_check
              _
            $region97: #{custom-call.22} parent=83 // pred_check_branch
              %190 = sbr.rel (0) target = $region99
            $region98: #{custom-call.22} parent=83 // pred_region
              %s192 = ssub.s32 4, 1
              loop: start=0, step=1, limit=1
              $region100: #{custom-call.22} parent=98 // loop_pre_header
                _
              $region101: #{custom-call.22} parent=98 // loop_header
                %s194 = sphi 0, %s198
                %p195 = scmp.ge.s32.totalorder %s194, 1
                %s199 = sphi %s170, %s170
                %s200 = sphi %s168, %s168
              $region102: #{custom-call.22} parent=98 // loop_header_branch
                %197 = sbr.rel (%p195) target = $region106
              $region103: #{custom-call.22} parent=98 // loop_body
                %v201 = vld [vmem:[%s199] sm:%s192]
                %202 = vst [vmem:[%s200] sm:%s192] %v201
              $region104: #{custom-call.22} parent=98 // loop_footer
                %s198 = sadd.s32 1, %s194
              $region105: #{custom-call.22} parent=98 // loop_footer_branch
                %193 = sbr.rel target = $region101
              $region106: #{custom-call.22} parent=98 // loop_exit
                _
            $region99: #{custom-call.22} parent=83 // pred_fallthru
              _
          $region84: #{custom-call.22} parent=79 // pred_fallthru
            _
          // Predicated region
          $region85: #{custom-call.22} parent=79 // pred_check
            _
          $region86: #{custom-call.22} parent=79 // pred_check_branch
            %176 = sbr.rel (0) target = $region88
          $region87: #{custom-call.22} parent=79 // pred_region
            %s178 = ssub.s32 4, 1
            loop: start=0, step=1, limit=1
            $region89: #{custom-call.22} parent=87 // loop_pre_header
              _
            $region90: #{custom-call.22} parent=87 // loop_header
              %s180 = sphi 0, %s184
              %p181 = scmp.ge.s32.totalorder %s180, 1
              %s185 = sphi %s170, %s170
              %s186 = sphi %s168, %s168
            $region91: #{custom-call.22} parent=87 // loop_header_branch
              %183 = sbr.rel (%p181) target = $region95
            $region92: #{custom-call.22} parent=87 // loop_body
              %v187 = vld [vmem:[%s185] sm:%s178]
              %188 = vst [vmem:[%s186] sm:%s178] %v187
            $region93: #{custom-call.22} parent=87 // loop_footer
              %s184 = sadd.s32 1, %s180
            $region94: #{custom-call.22} parent=87 // loop_footer_branch
              %179 = sbr.rel target = $region90
            $region95: #{custom-call.22} parent=87 // loop_exit
              _
          $region88: #{custom-call.22} parent=79 // pred_fallthru
            _
        $region80: #{custom-call.22} parent=15 // pred_fallthru
          _
        %203 = vnop
        %s204 = sand.u32 %s12, 1
        %s205 = sand.u32 %s12, 1
        %s206 = smul.addr %s205, 2
        %s207 = scalar_lea.vmem [#allocation7], %s206
        %s208 = smul.addr %s12, 2
        %s209 = scalar_lea.vmem %s3, %s208
        // Predicated region
        $region107: #{custom-call.22} parent=15 // pred_check
          _
        $region108: #{custom-call.22} parent=15 // pred_check_branch
          %211 = sbr.rel (0) target = $region110
        $region109: #{custom-call.22} parent=15 // pred_region
          // Predicated region
          $region111: #{custom-call.22} parent=109 // pred_check
            _
          $region112: #{custom-call.22} parent=109 // pred_check_branch
            %213 = sbr.rel target = $region114
          $region113: #{custom-call.22} parent=109 // pred_region
            // Predicated region
            $region126: #{custom-call.22} parent=113 // pred_check
              _
            $region127: #{custom-call.22} parent=113 // pred_check_branch
              %229 = sbr.rel (0) target = $region129
            $region128: #{custom-call.22} parent=113 // pred_region
              %s231 = ssub.s32 4, 1
              loop: start=0, step=1, limit=1
              $region130: #{custom-call.22} parent=128 // loop_pre_header
                _
              $region131: #{custom-call.22} parent=128 // loop_header
                %s233 = sphi 0, %s237
                %p234 = scmp.ge.s32.totalorder %s233, 1
                %s238 = sphi %s209, %s209
                %s239 = sphi %s207, %s207
              $region132: #{custom-call.22} parent=128 // loop_header_branch
                %236 = sbr.rel (%p234) target = $region136
              $region133: #{custom-call.22} parent=128 // loop_body
                %v240 = vld [vmem:[%s238] sm:%s231]
                %241 = vst [vmem:[%s239] sm:%s231] %v240
              $region134: #{custom-call.22} parent=128 // loop_footer
                %s237 = sadd.s32 1, %s233
              $region135: #{custom-call.22} parent=128 // loop_footer_branch
                %232 = sbr.rel target = $region131
              $region136: #{custom-call.22} parent=128 // loop_exit
                _
            $region129: #{custom-call.22} parent=113 // pred_fallthru
              _
          $region114: #{custom-call.22} parent=109 // pred_fallthru
            _
          // Predicated region
          $region115: #{custom-call.22} parent=109 // pred_check
            _
          $region116: #{custom-call.22} parent=109 // pred_check_branch
            %215 = sbr.rel (0) target = $region118
          $region117: #{custom-call.22} parent=109 // pred_region
            %s217 = ssub.s32 4, 1
            loop: start=0, step=1, limit=1
            $region119: #{custom-call.22} parent=117 // loop_pre_header
              _
            $region120: #{custom-call.22} parent=117 // loop_header
              %s219 = sphi 0, %s223
              %p220 = scmp.ge.s32.totalorder %s219, 1
              %s224 = sphi %s209, %s209
              %s225 = sphi %s207, %s207
            $region121: #{custom-call.22} parent=117 // loop_header_branch
              %222 = sbr.rel (%p220) target = $region125
            $region122: #{custom-call.22} parent=117 // loop_body
              %v226 = vld [vmem:[%s224] sm:%s217]
              %227 = vst [vmem:[%s225] sm:%s217] %v226
            $region123: #{custom-call.22} parent=117 // loop_footer
              %s223 = sadd.s32 1, %s219
            $region124: #{custom-call.22} parent=117 // loop_footer_branch
              %218 = sbr.rel target = $region120
            $region125: #{custom-call.22} parent=117 // loop_exit
              _
          $region118: #{custom-call.22} parent=109 // pred_fallthru
            _
        $region110: #{custom-call.22} parent=15 // pred_fallthru
          _
        %242 = vnop
      $region16: #{custom-call.22} parent=5 // pred_fallthru
        _
      %p243 = scmp.le.s32.totalorder 1, %s12
      %p244 = scmp.lt.s32.totalorder %s12, 9
      %p245 = pnand %p243, %p244
      %p246 = pneg %p245
      // Predicated region
      $region137: #{custom-call.22} parent=5 // pred_check
        _
      $region138: #{custom-call.22} parent=5 // pred_check_branch
        %248 = sbr.rel (%p245) target = $region140
      $region139: #{custom-call.22} parent=5 // pred_region
        #allocation18 [shape = 'f32[2,2]{1,0}', space=vmem, size = 0x1000, scoped, tag = 'a top-left matrix']
        #allocation19 [shape = 'f32[2,2]{1,0}', space=vmem, size = 0x1000, scoped, tag = 'a top-right matrix']
        #allocation20 [shape = 'f32[2,2]{1,0}', space=vmem, size = 0x1000, scoped, tag = 'a bottom-left matrix']
        #allocation21 [shape = 'f32[2,2]{1,0}', space=vmem, size = 0x1000, scoped, tag = 'a bottom-right matrix']
        %s249 = ssub.s32 %s12, 1
        %s250 = sand.u32 %s17, 1
        %s251 = sand.u32 %s17, 1
        %s252 = smul.addr %s251, 2
        %s253 = scalar_lea.vmem [#allocation1], %s252
        %s254 = sand.u32 %s17, 1
        %s255 = sand.u32 %s17, 1
        %s256 = smul.addr %s255, 2
        %s257 = scalar_lea.vmem [#allocation3], %s256
        %s258 = sand.u32 %s17, 1
        %s259 = sand.u32 %s17, 1
        %s260 = smul.addr %s259, 2
        %s261 = scalar_lea.vmem [#allocation5], %s260
        %s262 = sand.u32 %s17, 1
        %s263 = sand.u32 %s17, 1
        %s264 = smul.addr %s263, 2
        %s265 = scalar_lea.vmem [#allocation7], %s264
        %s266 = sand.u32 %s17, 1
        %s267 = sand.u32 %s17, 1
        %s268 = smul.addr %s267, 2
        %s269 = scalar_lea.vmem [#allocation1], %s268
        %s270 = sand.u32 %s17, 1
        %s271 = sand.u32 %s17, 1
        %s272 = smul.addr %s271, 2
        %s273 = scalar_lea.vmem [#allocation3], %s272
        %s274 = sand.u32 %s17, 1
        %s275 = sand.u32 %s17, 1
        %s276 = smul.addr %s275, 2
        %s277 = scalar_lea.vmem [#allocation5], %s276
        %s278 = sand.u32 %s17, 1
        %s279 = sand.u32 %s17, 1
        %s280 = smul.addr %s279, 2
        %s281 = scalar_lea.vmem [#allocation7], %s280
        %p282 = pneg %p40
        %p283 = pneg %p37
        %s284 = sand.u32 %s27, 1
        %s285 = sand.u32 %s27, 1
        %s286 = smul.addr %s285, 8
        %s287 = scalar_lea.vmem [#allocation8], %s286
        %p288 = pneg %p68
        %p289 = pneg %p65
        %s290 = sand.u32 %s55, 1
        %s291 = sand.u32 %s55, 1
        %s292 = smul.addr %s291, 8
        %s293 = scalar_lea.vmem [#allocation9], %s292
        %s294 = sand.u32 %s17, 1
        %s295 = sand.u32 %s17, 1
        %s296 = smul.addr %s295, 2
        %s297 = scalar_lea.vmem [#allocation11], %s296
        %s298 = sand.u32 %s17, 1
        %s299 = sand.u32 %s17, 1
        %s300 = smul.addr %s299, 2
        %s301 = scalar_lea.vmem [#allocation13], %s300
        %s302 = sand.u32 %s17, 1
        %s303 = sand.u32 %s17, 1
        %s304 = smul.addr %s303, 2
        %s305 = scalar_lea.vmem [#allocation15], %s304
        %s306 = sand.u32 %s17, 1
        %s307 = sand.u32 %s17, 1
        %s308 = smul.addr %s307, 2
        %s309 = scalar_lea.vmem [#allocation17], %s308
        %s311 = ssub.s32 4, 1
        %v312 = vld [vmem:[%s269] sm:%s311]
        %313 = vst [vmem:[#allocation0] sm:%s311] %v312
        %s315 = ssub.s32 4, 1
        %v316 = vld [vmem:[%s273] sm:%s315]
        %317 = vst [vmem:[#allocation2] sm:%s315] %v316
        %s319 = ssub.s32 4, 1
        %v320 = vld [vmem:[%s277] sm:%s319]
        %321 = vst [vmem:[#allocation4] sm:%s319] %v320
        %s323 = ssub.s32 4, 1
        %v324 = vld [vmem:[%s281] sm:%s323]
        %325 = vst [vmem:[#allocation6] sm:%s323] %v324
        %s326 = sshrl.u32 %s17, 3
        %s327 = sshrl.u32 %s17, 3
        %s328 = smov [#allocation18]
        %v329 = vld [vmem:[#allocation0] sm:$0xff]
        %330 = vst [vmem:[%s328] sm:$0xff] %v329
        %s331 = smov [#allocation19]
        %v332 = vld [vmem:[#allocation2] sm:$0xff]
        %333 = vst [vmem:[%s331] sm:$0xff] %v332
        %s334 = smov [#allocation20]
        %v335 = vld [vmem:[#allocation4] sm:$0xff]
        %336 = vst [vmem:[%s334] sm:$0xff] %v335
        %s337 = smov [#allocation21]
        %v338 = vld [vmem:[#allocation6] sm:$0xff]
        %339 = vst [vmem:[%s337] sm:$0xff] %v338
        %340 = vst [vmem:[#allocation10] sm:$0xff] 0.0
        %341 = vst [vmem:[#allocation12] sm:$0xff] 0.0
        %342 = vst [vmem:[#allocation14] sm:$0xff] 0.0
        %343 = vst [vmem:[#allocation16] sm:$0xff] 0.0
        %s344 = smov [#allocation10]
        %v345 = vlaneseq
        %v346 = vand.u32 %v345, 127
        %v347 = vmov %v346
        %v348 = vlaneseq
        %v349 = vshrl.u32 %v348, 7
        %v350 = vmov %v349
        %v351 = vld [vmem:[%s344] sm:$0x3]
        %vm354 = vcmp.eq.s32.totalorder %v350, %v347
        %v355 = vsel %vm354, 1.0, %v351
        %356 = vst [vmem:[%s344] sm:$0x3] %v355
        %s357 = smov [#allocation16]
        %v358 = vlaneseq
        %v359 = vand.u32 %v358, 127
        %v360 = vmov %v359
        %v361 = vlaneseq
        %v362 = vshrl.u32 %v361, 7
        %v363 = vmov %v362
        %v364 = vld [vmem:[%s357] sm:$0x3]
        %vm367 = vcmp.eq.s32.totalorder %v363, %v360
        %v368 = vsel %vm367, 1.0, %v364
        %369 = vst [vmem:[%s357] sm:$0x3] %v368
        // While loop
        $region141: #{custom-call.22} parent=139 // loop_pre_header
          _
        $region142: #{custom-call.22} parent=139 // loop_header
          %s371 = sphi 0, %s953
          %v372 = vlaneseq
          %v373 = vand.u32 %v372, 127
          %v374 = vmov %v373
          %v375 = vlaneseq
          %v376 = vshrl.u32 %v375, 7
          %v377 = vmov %v376
          %s378 = smov [#allocation18]
          %v379 = vlaneseq
          %v380 = vand.u32 %v379, 127
          %vm381 = vcmp.ge.s32.totalorder %v380, 0
          %vm382 = vcmp.lt.s32.totalorder %v380, 2
          %vm383 = vmand %vm381, %vm382
          %v384 = vld [vmem:[%s378] sm:$0x3]
          %v385 = vsel %vm383, %v384, 0.0
          %v386 = vmul.f32 %v385, %v385
          %vm389 = vcmp.eq.s32.totalorder %v377, %v374
          %v390 = vsel %vm389, 0.0, %v386
          %v391 = vlaneseq
          %v392 = vand.u32 %v391, 127
          %v393 = vmov %v392
          %v394 = vlaneseq
          %v395 = vshrl.u32 %v394, 7
          %v396 = vmov %v395
          %s397 = smov [#allocation19]
          %v398 = vlaneseq
          %v399 = vand.u32 %v398, 127
          %vm400 = vcmp.ge.s32.totalorder %v399, 0
          %vm401 = vcmp.lt.s32.totalorder %v399, 2
          %vm402 = vmand %vm400, %vm401
          %v403 = vld [vmem:[%s397] sm:$0x3]
          %v404 = vsel %vm402, %v403, 0.0
          %v405 = vmul.f32 %v404, %v404
          %v406 = vadd.f32 %v390, %v405
          %v407 = vadd.f32 %v386, %v405
          %v408 = vlaneseq
          %v409 = vand.u32 %v408, 127
          %v410 = vmov %v409
          %v411 = vlaneseq
          %v412 = vshrl.u32 %v411, 7
          %v413 = vmov %v412
          %s414 = smov [#allocation20]
          %v415 = vlaneseq
          %v416 = vand.u32 %v415, 127
          %vm417 = vcmp.ge.s32.totalorder %v416, 0
          %vm418 = vcmp.lt.s32.totalorder %v416, 2
          %vm419 = vmand %vm417, %vm418
          %v420 = vld [vmem:[%s414] sm:$0x3]
          %v421 = vsel %vm419, %v420, 0.0
          %v422 = vmul.f32 %v421, %v421
          %v423 = vadd.f32 %v406, %v422
          %v424 = vadd.f32 %v407, %v422
          %v425 = vlaneseq
          %v426 = vand.u32 %v425, 127
          %v427 = vmov %v426
          %v428 = vlaneseq
          %v429 = vshrl.u32 %v428, 7
          %v430 = vmov %v429
          %s431 = smov [#allocation21]
          %v432 = vlaneseq
          %v433 = vand.u32 %v432, 127
          %vm434 = vcmp.ge.s32.totalorder %v433, 0
          %vm435 = vcmp.lt.s32.totalorder %v433, 2
          %vm436 = vmand %vm434, %vm435
          %v437 = vld [vmem:[%s431] sm:$0x3]
          %v438 = vsel %vm436, %v437, 0.0
          %v439 = vmul.f32 %v438, %v438
          %vm442 = vcmp.eq.s32.totalorder %v430, %v427
          %v443 = vsel %vm442, 0.0, %v439
          %v444 = vadd.f32 %v423, %v443
          %v445 = vadd.f32 %v424, %v439
          %446 = vadd.xlane.f32.xlu0 %v445
          %v447 = vpop.xlane.xlu0 %446
          %v448 = vrot.slane %v447, 4
          %v449 = vadd.f32 %v447, %v448
          %v450 = vrot.slane %v449, 2
          %v451 = vadd.f32 %v449, %v450
          %v452 = vrot.slane %v451, 1
          %v453 = vadd.f32 %v451, %v452
          %454 = vadd.xlane.f32.xlu0 %v444
          %v455 = vpop.xlane.xlu0 %454
          %v456 = vrot.slane %v455, 4
          %v457 = vadd.f32 %v455, %v456
          %v458 = vrot.slane %v457, 2
          %v459 = vadd.f32 %v457, %v458
          %v460 = vrot.slane %v459, 1
          %v461 = vadd.f32 %v459, %v460
          %s462 = vtos %v461
          %s463 = vtos %v453
          %s464 = smul.f32 1e-10, %s463
          %p465 = scmp.le.f32.partialorder %s462, %s464
          %p466 = scmp.ge.s32.totalorder %s371, 15
          %p467 = por %p465, %p466
        $region143: #{custom-call.22} parent=139 // loop_header_branch
          %955 = sbr.rel (%p467) target = $region147
        $region144: #{custom-call.22} parent=139 // loop_body
          loop: start=0, step=1, limit=3
          $region148: #{custom-call.22} parent=144 // loop_pre_header
            _
          $region149: #{custom-call.22} parent=144 // loop_header
            %s469 = sphi 0, %s473
            %p470 = scmp.ge.s32.totalorder %s469, 3
          $region150: #{custom-call.22} parent=144 // loop_header_branch
            %472 = sbr.rel (%p470) target = $region154
          $region151: #{custom-call.22} parent=144 // loop_body
            #allocation22 [shape = 'f32[1024]{0}', space=vmem, size = 0x1000, scoped, tag = 'a_tl_diag vmem']
            #allocation23 [shape = 'f32[1024]{0}', space=vmem, size = 0x1000, scoped, tag = 'a_tr_diag vmem']
            #allocation24 [shape = 'f32[1024]{0}', space=vmem, size = 0x1000, scoped, tag = 'a_br_diag vmem']
            #allocation25 [shape = 'f32[1024]{0}', space=vmem, size = 0x1000, scoped, tag = 'rt1 vmem']
            #allocation26 [shape = 'f32[1024]{0}', space=vmem, size = 0x1000, scoped, tag = 'rt2 vmem']
            #allocation27 [shape = 'f32[1024]{0}', space=vmem, size = 0x1000, scoped, tag = 'c vmem']
            #allocation28 [shape = 'f32[1024]{0}', space=vmem, size = 0x1000, scoped, tag = 's vmem']
            #allocation29 [shape = 'f32[4096]{0}', space=vmem, size = 0x4000, scoped, tag = 'c broadcast']
            #allocation30 [shape = 'f32[4096]{0}', space=vmem, size = 0x4000, scoped, tag = 's broadcast']
            %s474 = smov [#allocation18]
            %s475 = smov [#allocation22]
            %v476 = vlaneseq
            %v477 = vand.u32 %v476, 127
            %v478 = vmov %v477
            %v479 = vlaneseq
            %v480 = vshrl.u32 %v479, 7
            %v481 = vmov %v480
            %v482 = vld [vmem:[%s474] sm:$0x3]
            %vm485 = vcmp.eq.s32.totalorder %v481, %v478
            %v486 = vsel %vm485, %v482, 0.0
            %v487 = vrot.slane %v486, 4
            %v488 = vadd.f32 %v486, %v487
            %v489 = vrot.slane %v488, 2
            %v490 = vadd.f32 %v488, %v489
            %v491 = vrot.slane %v490, 1
            %v492 = vadd.f32 %v490, %v491
            %493 = vst [vmem:[%s475] sm:$0x1] %v492
            %s494 = smov [#allocation19]
            %s495 = smov [#allocation23]
            %v496 = vlaneseq
            %v497 = vand.u32 %v496, 127
            %v498 = vmov %v497
            %v499 = vlaneseq
            %v500 = vshrl.u32 %v499, 7
            %v501 = vmov %v500
            %v502 = vld [vmem:[%s494] sm:$0x3]
            %vm505 = vcmp.eq.s32.totalorder %v501, %v498
            %v506 = vsel %vm505, %v502, 0.0
            %v507 = vrot.slane %v506, 4
            %v508 = vadd.f32 %v506, %v507
            %v509 = vrot.slane %v508, 2
            %v510 = vadd.f32 %v508, %v509
            %v511 = vrot.slane %v510, 1
            %v512 = vadd.f32 %v510, %v511
            %513 = vst [vmem:[%s495] sm:$0x1] %v512
            %s514 = smov [#allocation21]
            %s515 = smov [#allocation24]
            %v516 = vlaneseq
            %v517 = vand.u32 %v516, 127
            %v518 = vmov %v517
            %v519 = vlaneseq
            %v520 = vshrl.u32 %v519, 7
            %v521 = vmov %v520
            %v522 = vld [vmem:[%s514] sm:$0x3]
            %vm525 = vcmp.eq.s32.totalorder %v521, %v518
            %v526 = vsel %vm525, %v522, 0.0
            %v527 = vrot.slane %v526, 4
            %v528 = vadd.f32 %v526, %v527
            %v529 = vrot.slane %v528, 2
            %v530 = vadd.f32 %v528, %v529
            %v531 = vrot.slane %v530, 1
            %v532 = vadd.f32 %v530, %v531
            %533 = vst [vmem:[%s515] sm:$0x1] %v532
            %s534 = smov [#allocation27]
            %s535 = smov [#allocation28]
            %s536 = smov [#allocation22]
            %v537 = vld [vmem:[%s536] sm:$0xff]
            %s538 = smov [#allocation23]
            %v539 = vld [vmem:[%s538] sm:$0xff]
            %s540 = smov [#allocation24]
            %v541 = vld [vmem:[%s540] sm:$0xff]
            %v542 = vsub.f32 %v541, %v537
            %v543 = vmul.f32 2.0, %v539
            %v544 = vrcp.pop %v543
            %v545 = vmul.f32 %v543, %v544
            %v546 = vsub.f32 1.0, %v545
            %v547 = vmul.f32 %v544, %v546
            %v548 = vadd.f32 %v544, %v547
            %vm549 = vweird.f32 %v543
            %vm550 = vweird.f32 %v544
            %vm551 = vmor %vm549, %vm550
            %v552 = vsel %vm551, %v544, %v548
            %v553 = vand.u32 2147483647, %v543
            %vm554 = vcmp.eq.f32.partialorder %v553, 8.507059e+37
            %v555 = vand.u32 %v543, 2147483648
            %v556 = vor.u32 1.1754944e-38, %v555
            %v557 = vsel %vm554, %v556, %v552
            %v558 = vmul.f32 %v542, %v557
            %vm559 = vcmp.ge.f32.partialorder %v558, 0.0
            %v560 = vmul.f32 %v558, %v558
            %v561 = vadd.f32 1.0, %v560
            %v562 = vrsqrt.pop %v561
            %v563 = vmul.f32 %v562, %v561
            %v564 = vmul.f32 %v563, %v562
            %v565 = vmul.f32 0.5, %v564
            %v566 = vsub.f32 1.5, %v565
            %v567 = vmul.f32 %v562, %v566
            %v568 = vmul.f32 %v561, %v567
            %vm569 = vcmp.eq.f32.partialorder %v561, inf
            %v570 = vsel %vm569, %v561, %v568
            %vm571 = vcmp.eq.f32.partialorder %v561, 0.0
            %v572 = vand.u32 %v561, 2147483648
            %v573 = vsel %vm571, %v572, %v570
            %v574 = vxor.u32 %v573, 2147483648
            %v575 = vsel %vm559, %v573, %v574
            %v576 = vadd.f32 %v558, %v575
            %v577 = vrcp.pop %v576
            %v578 = vmul.f32 %v576, %v577
            %v579 = vsub.f32 1.0, %v578
            %v580 = vmul.f32 %v577, %v579
            %v581 = vadd.f32 %v577, %v580
            %vm582 = vweird.f32 %v576
            %vm583 = vweird.f32 %v577
            %vm584 = vmor %vm582, %vm583
            %v585 = vsel %vm584, %v577, %v581
            %v586 = vand.u32 2147483647, %v576
            %vm587 = vcmp.eq.f32.partialorder %v586, 8.507059e+37
            %v588 = vand.u32 %v576, 2147483648
            %v589 = vor.u32 1.1754944e-38, %v588
            %v590 = vsel %vm587, %v589, %v585
            %v591 = vand.u32 2147483647, %v537
            %v592 = vand.u32 2147483647, %v539
            %v593 = vand.u32 2147483647, %v541
            %v594 = vmin.f32 %v591, %v593
            %v595 = vmul.f32 1.1920929e-08, %v594
            %vm596 = vcmp.le.f32.partialorder %v592, %v595
            %v597 = vsel %vm596, 0.0, %v590
            %v598 = vmul.f32 %v597, %v597
            %v599 = vadd.f32 1.0, %v598
            %v600 = vrsqrt.pop %v599
            %v601 = vmul.f32 %v600, %v599
            %v602 = vmul.f32 %v601, %v600
            %v603 = vmul.f32 0.5, %v602
            %v604 = vsub.f32 1.5, %v603
            %v605 = vmul.f32 %v600, %v604
            %vm606 = vweird.f32 %v599
            %vm607 = vweird.f32 %v600
            %vm608 = vmor %vm606, %vm607
            %v609 = vsel %vm608, %v600, %v605
            %v610 = vmul.f32 %v597, %v609
            %v611 = vmul.f32 %v597, %v539
            %v612 = vsub.f32 %v537, %v611
            %v613 = vmul.f32 %v597, %v539
            %v614 = vadd.f32 %v541, %v613
            %s615 = smov [#allocation25]
            %616 = vst [vmem:[%s615] sm:$0xff] %v612
            %s617 = smov [#allocation26]
            %618 = vst [vmem:[%s617] sm:$0xff] %v614
            %s619 = smov %s534
            %620 = vst [vmem:[%s619] sm:$0xff] %v609
            %s621 = smov %s535
            %622 = vst [vmem:[%s621] sm:$0xff] %v610
            %s623 = smov [#allocation27]
            %v624 = vld [vmem:[%s623] ss:$0 sm:$0xff]
            %v625 = vlaneseq
            %v626 = vand.u32 %v625, 127
            %v627 = vmov %v626
            %v628 = vlaneseq
            %v629 = vshrl.u32 %v628, 7
            %v630 = vmov %v629
            %vm632 = vcmp.eq.s32.totalorder %v630, %v627
            %v633 = vsel %vm632, %v624, 0.0
            %634 = vadd.xlane.f32.xlu0 %v633
            %v635 = vpop.xlane.xlu0 %634
            %s636 = smov [#allocation29]
            %637 = vst [vmem:[%s636] sm:$0xff] %v635
            %s638 = smov [#allocation28]
            %v639 = vld [vmem:[%s638] ss:$0 sm:$0xff]
            %v640 = vlaneseq
            %v641 = vand.u32 %v640, 127
            %v642 = vmov %v641
            %v643 = vlaneseq
            %v644 = vshrl.u32 %v643, 7
            %v645 = vmov %v644
            %vm647 = vcmp.eq.s32.totalorder %v645, %v642
            %v648 = vsel %vm647, %v639, 0.0
            %649 = vadd.xlane.f32.xlu0 %v648
            %v650 = vpop.xlane.xlu0 %649
            %s651 = smov [#allocation30]
            %652 = vst [vmem:[%s651] sm:$0xff] %v650
            %s653 = smov [#allocation29]
            %v654 = vld [vmem:[%s653] sm:$0xff]
            %s655 = smov [#allocation30]
            %v656 = vld [vmem:[%s655] sm:$0xff]
            %s657 = smov [#allocation18]
            %s658 = smov [#allocation19]
            %s659 = smov [#allocation20]
            %s660 = smov [#allocation21]
            %v661 = vld [vmem:[%s657] sm:$0x3]
            %v662 = vld [vmem:[%s658] sm:$0x3]
            %v663 = vld [vmem:[%s659] sm:$0x3]
            %v664 = vld [vmem:[%s660] sm:$0x3]
            %v665 = vmul.f32 %v654, %v661
            %v666 = vmul.f32 %v656, %v663
            %v667 = vsub.f32 %v665, %v666
            %v668 = vmul.f32 %v654, %v662
            %v669 = vmul.f32 %v656, %v664
            %v670 = vsub.f32 %v668, %v669
            %v671 = vmul.f32 %v656, %v661
            %v672 = vmul.f32 %v654, %v663
            %v673 = vadd.f32 %v671, %v672
            %v674 = vmul.f32 %v656, %v662
            %v675 = vmul.f32 %v654, %v664
            %v676 = vadd.f32 %v674, %v675
            %677 = vst [vmem:[%s657] sm:$0x3] %v667
            %678 = vst [vmem:[%s658] sm:$0x3] %v670
            %679 = vst [vmem:[%s659] sm:$0x3] %v673
            %680 = vst [vmem:[%s660] sm:$0x3] %v676
            %s681 = smov [#allocation27]
            %v682 = vld [vmem:[%s681] ss:$0 sm:$0xff]
            %s683 = smov [#allocation28]
            %v684 = vld [vmem:[%s683] ss:$0 sm:$0xff]
            %s685 = smov [#allocation18]
            %s686 = smov [#allocation19]
            %s687 = smov [#allocation20]
            %s688 = smov [#allocation21]
            %v689 = vld [vmem:[%s685] sm:$0x3]
            %v690 = vld [vmem:[%s686] sm:$0x3]
            %v691 = vld [vmem:[%s687] sm:$0x3]
            %v692 = vld [vmem:[%s688] sm:$0x3]
            %v693 = vmul.f32 %v682, %v689
            %v694 = vmul.f32 %v684, %v690
            %v695 = vsub.f32 %v693, %v694
            %v696 = vmul.f32 %v684, %v689
            %v697 = vmul.f32 %v682, %v690
            %v698 = vadd.f32 %v696, %v697
            %v699 = vmul.f32 %v682, %v691
            %v700 = vmul.f32 %v684, %v692
            %v701 = vsub.f32 %v699, %v700
            %v702 = vmul.f32 %v684, %v691
            %v703 = vmul.f32 %v682, %v692
            %v704 = vadd.f32 %v702, %v703
            %705 = vst [vmem:[%s685] sm:$0x3] %v695
            %706 = vst [vmem:[%s686] sm:$0x3] %v698
            %707 = vst [vmem:[%s687] sm:$0x3] %v701
            %708 = vst [vmem:[%s688] sm:$0x3] %v704
            %s709 = smov [#allocation18]
            %s710 = smov [#allocation25]
            %v711 = vlaneseq
            %v712 = vand.u32 %v711, 127
            %v713 = vmov %v712
            %v714 = vlaneseq
            %v715 = vshrl.u32 %v714, 7
            %v716 = vmov %v715
            %v717 = vld [vmem:[%s710] ss:$0 sm:$0xff]
            %v718 = vld [vmem:[%s709] sm:$0x3]
            %vm721 = vcmp.eq.s32.totalorder %v716, %v713
            %v722 = vsel %vm721, %v717, %v718
            %723 = vst [vmem:[%s709] sm:$0x3] %v722
            %s724 = smov [#allocation19]
            %v725 = vlaneseq
            %v726 = vand.u32 %v725, 127
            %v727 = vmov %v726
            %v728 = vlaneseq
            %v729 = vshrl.u32 %v728, 7
            %v730 = vmov %v729
            %v731 = vld [vmem:[%s724] sm:$0x3]
            %vm734 = vcmp.eq.s32.totalorder %v730, %v727
            %v735 = vsel %vm734, 0.0, %v731
            %736 = vst [vmem:[%s724] sm:$0x3] %v735
            %s737 = smov [#allocation20]
            %v738 = vlaneseq
            %v739 = vand.u32 %v738, 127
            %v740 = vmov %v739
            %v741 = vlaneseq
            %v742 = vshrl.u32 %v741, 7
            %v743 = vmov %v742
            %v744 = vld [vmem:[%s737] sm:$0x3]
            %vm747 = vcmp.eq.s32.totalorder %v743, %v740
            %v748 = vsel %vm747, 0.0, %v744
            %749 = vst [vmem:[%s737] sm:$0x3] %v748
            %s750 = smov [#allocation21]
            %s751 = smov [#allocation26]
            %v752 = vlaneseq
            %v753 = vand.u32 %v752, 127
            %v754 = vmov %v753
            %v755 = vlaneseq
            %v756 = vshrl.u32 %v755, 7
            %v757 = vmov %v756
            %v758 = vld [vmem:[%s751] ss:$0 sm:$0xff]
            %v759 = vld [vmem:[%s750] sm:$0x3]
            %vm762 = vcmp.eq.s32.totalorder %v757, %v754
            %v763 = vsel %vm762, %v758, %v759
            %764 = vst [vmem:[%s750] sm:$0x3] %v763
            %s765 = smov [#allocation18]
            %s766 = smov [#allocation19]
            %v767 = vld [vmem:[%s766] sm:$0x3]
            %768 = vrot.lane.b32.xlu0 %v767, 1
            %v769 = vpop.permute.xlu0 %768
            %v770 = vld [vmem:[%s765] sm:$0x3]
            %v771 = vld [vmem:[%s765] sm:$0x3]
            %772 = vrot.lane.b32.xlu0 %v771, 1
            %v773 = vpop.permute.xlu0 %772
            %v774 = vlaneseq
            %v775 = vand.u32 %v774, 127
            %vm776 = vcmp.eq.s32.totalorder %v775, 0
            %v777 = vsel %vm776, %v771, %v773
            %v778 = vlaneseq
            %v779 = vand.u32 %v778, 127
            %vm780 = vcmp.eq.s32.totalorder %v779, 1
            %v781 = vsel %vm780, %v769, %v777
            %v782 = vlaneseq
            %v783 = vand.u32 %v782, 127
            %vm784 = vcmp.ge.s32.totalorder %v783, 0
            %vm785 = vcmp.lt.s32.totalorder %v783, 2
            %vm786 = vmand %vm784, %vm785
            %v787 = vsel %vm786, %v781, 0.0
            %v788 = vld [vmem:[%s766] sm:$0x3]
            %789 = vrot.lane.b32.xlu0 %v788, 127
            %v790 = vpop.permute.xlu0 %789
            %v791 = vlaneseq
            %v792 = vand.u32 %v791, 127
            %vm793 = vcmp.eq.s32.totalorder %v792, 1
            %v794 = vsel %vm793, %v770, %v790
            %795 = vst [vmem:[%s765] sm:$0x3] %v787
            %796 = vst [vmem:[%s766] sm:$0x3] %v794
            %s797 = smov [#allocation20]
            %s798 = smov [#allocation21]
            %v799 = vld [vmem:[%s798] sm:$0x3]
            %800 = vrot.lane.b32.xlu0 %v799, 1
            %v801 = vpop.permute.xlu0 %800
            %v802 = vld [vmem:[%s797] sm:$0x3]
            %v803 = vld [vmem:[%s797] sm:$0x3]
            %804 = vrot.lane.b32.xlu0 %v803, 1
            %v805 = vpop.permute.xlu0 %804
            %v806 = vlaneseq
            %v807 = vand.u32 %v806, 127
            %vm808 = vcmp.eq.s32.totalorder %v807, 0
            %v809 = vsel %vm808, %v803, %v805
            %v810 = vlaneseq
            %v811 = vand.u32 %v810, 127
            %vm812 = vcmp.eq.s32.totalorder %v811, 1
            %v813 = vsel %vm812, %v801, %v809
            %v814 = vlaneseq
            %v815 = vand.u32 %v814, 127
            %vm816 = vcmp.ge.s32.totalorder %v815, 0
            %vm817 = vcmp.lt.s32.totalorder %v815, 2
            %vm818 = vmand %vm816, %vm817
            %v819 = vsel %vm818, %v813, 0.0
            %v820 = vld [vmem:[%s798] sm:$0x3]
            %821 = vrot.lane.b32.xlu0 %v820, 127
            %v822 = vpop.permute.xlu0 %821
            %v823 = vlaneseq
            %v824 = vand.u32 %v823, 127
            %vm825 = vcmp.eq.s32.totalorder %v824, 1
            %v826 = vsel %vm825, %v802, %v822
            %827 = vst [vmem:[%s797] sm:$0x3] %v819
            %828 = vst [vmem:[%s798] sm:$0x3] %v826
            %s829 = smov [#allocation18]
            %s830 = smov [#allocation20]
            %v831 = vld [vmem:[%s829] ss:$0 sm:$0xff]
            %s833 = scalar_lea.vmem %s829, 4294967295
            %v834 = vld [vmem:[%s833] sm:$0x2]
            %v835 = vlaneseq
            %v836 = vshrl.u32 %v835, 7
            %vm837 = vcmp.eq.s32.totalorder %v836, 0
            %v838 = vsel %vm837, %v831, %v834
            %s839 = scalar_lea.vmem %s829, 1
            %v840 = vld [vmem:[%s839] ss:$0 sm:$0xff]
            %841 = vst [vmem:[%s829] sm:$0x3] %v838
            %v842 = vld [vmem:[%s830] ss:$0 sm:$0xff]
            %s843 = scalar_lea.vmem %s829, 1
            %844 = vst [vmem:[%s843] sm:$0x1] %v842
            %s845 = scalar_lea.vmem %s830, 1
            %v846 = vld [vmem:[%s845] sm:$0x1]
            %v847 = vlaneseq
            %v848 = vshrl.u32 %v847, 7
            %vm849 = vcmp.eq.s32.totalorder %v848, 1
            %v850 = vsel %vm849, %v840, %v846
            %v851 = vld [vmem:[%s830] ss:$0 sm:$0xff]
            %852 = vst [vmem:[%s830] sm:$0x3] %v850
            %s853 = smov [#allocation19]
            %s854 = smov [#allocation21]
            %v855 = vld [vmem:[%s853] ss:$0 sm:$0xff]
            %s857 = scalar_lea.vmem %s853, 4294967295
            %v858 = vld [vmem:[%s857] sm:$0x2]
            %v859 = vlaneseq
            %v860 = vshrl.u32 %v859, 7
            %vm861 = vcmp.eq.s32.totalorder %v860, 0
            %v862 = vsel %vm861, %v855, %v858
            %s863 = scalar_lea.vmem %s853, 1
            %v864 = vld [vmem:[%s863] ss:$0 sm:$0xff]
            %865 = vst [vmem:[%s853] sm:$0x3] %v862
            %v866 = vld [vmem:[%s854] ss:$0 sm:$0xff]
            %s867 = scalar_lea.vmem %s853, 1
            %868 = vst [vmem:[%s867] sm:$0x1] %v866
            %s869 = scalar_lea.vmem %s854, 1
            %v870 = vld [vmem:[%s869] sm:$0x1]
            %v871 = vlaneseq
            %v872 = vshrl.u32 %v871, 7
            %vm873 = vcmp.eq.s32.totalorder %v872, 1
            %v874 = vsel %vm873, %v864, %v870
            %v875 = vld [vmem:[%s854] ss:$0 sm:$0xff]
            %876 = vst [vmem:[%s854] sm:$0x3] %v874
            %s877 = smov [#allocation29]
            %v878 = vld [vmem:[%s877] sm:$0xff]
            %s879 = smov [#allocation30]
            %v880 = vld [vmem:[%s879] sm:$0xff]
            %s881 = smov [#allocation10]
            %s882 = smov [#allocation12]
            %s883 = smov [#allocation14]
            %s884 = smov [#allocation16]
            %v885 = vld [vmem:[%s881] sm:$0x3]
            %v886 = vld [vmem:[%s882] sm:$0x3]
            %v887 = vld [vmem:[%s883] sm:$0x3]
            %v888 = vld [vmem:[%s884] sm:$0x3]
            %v889 = vmul.f32 %v878, %v885
            %v890 = vmul.f32 %v880, %v887
            %v891 = vsub.f32 %v889, %v890
            %v892 = vmul.f32 %v878, %v886
            %v893 = vmul.f32 %v880, %v888
            %v894 = vsub.f32 %v892, %v893
            %v895 = vmul.f32 %v880, %v885
            %v896 = vmul.f32 %v878, %v887
            %v897 = vadd.f32 %v895, %v896
            %v898 = vmul.f32 %v880, %v886
            %v899 = vmul.f32 %v878, %v888
            %v900 = vadd.f32 %v898, %v899
            %901 = vst [vmem:[%s881] sm:$0x3] %v891
            %902 = vst [vmem:[%s882] sm:$0x3] %v894
            %903 = vst [vmem:[%s883] sm:$0x3] %v897
            %904 = vst [vmem:[%s884] sm:$0x3] %v900
            %s905 = smov [#allocation10]
            %s906 = smov [#allocation14]
            %v907 = vld [vmem:[%s905] ss:$0 sm:$0xff]
            %s909 = scalar_lea.vmem %s905, 4294967295
            %v910 = vld [vmem:[%s909] sm:$0x2]
            %v911 = vlaneseq
            %v912 = vshrl.u32 %v911, 7
            %vm913 = vcmp.eq.s32.totalorder %v912, 0
            %v914 = vsel %vm913, %v907, %v910
            %s915 = scalar_lea.vmem %s905, 1
            %v916 = vld [vmem:[%s915] ss:$0 sm:$0xff]
            %917 = vst [vmem:[%s905] sm:$0x3] %v914
            %v918 = vld [vmem:[%s906] ss:$0 sm:$0xff]
            %s919 = scalar_lea.vmem %s905, 1
            %920 = vst [vmem:[%s919] sm:$0x1] %v918
            %s921 = scalar_lea.vmem %s906, 1
            %v922 = vld [vmem:[%s921] sm:$0x1]
            %v923 = vlaneseq
            %v924 = vshrl.u32 %v923, 7
            %vm925 = vcmp.eq.s32.totalorder %v924, 1
            %v926 = vsel %vm925, %v916, %v922
            %v927 = vld [vmem:[%s906] ss:$0 sm:$0xff]
            %928 = vst [vmem:[%s906] sm:$0x3] %v926
            %s929 = smov [#allocation12]
            %s930 = smov [#allocation16]
            %v931 = vld [vmem:[%s929] ss:$0 sm:$0xff]
            %s933 = scalar_lea.vmem %s929, 4294967295
            %v934 = vld [vmem:[%s933] sm:$0x2]
            %v935 = vlaneseq
            %v936 = vshrl.u32 %v935, 7
            %vm937 = vcmp.eq.s32.totalorder %v936, 0
            %v938 = vsel %vm937, %v931, %v934
            %s939 = scalar_lea.vmem %s929, 1
            %v940 = vld [vmem:[%s939] ss:$0 sm:$0xff]
            %941 = vst [vmem:[%s929] sm:$0x3] %v938
            %v942 = vld [vmem:[%s930] ss:$0 sm:$0xff]
            %s943 = scalar_lea.vmem %s929, 1
            %944 = vst [vmem:[%s943] sm:$0x1] %v942
            %s945 = scalar_lea.vmem %s930, 1
            %v946 = vld [vmem:[%s945] sm:$0x1]
            %v947 = vlaneseq
            %v948 = vshrl.u32 %v947, 7
            %vm949 = vcmp.eq.s32.totalorder %v948, 1
            %v950 = vsel %vm949, %v940, %v946
            %v951 = vld [vmem:[%s930] ss:$0 sm:$0xff]
            %952 = vst [vmem:[%s930] sm:$0x3] %v950
          $region152: #{custom-call.22} parent=144 // loop_footer
            %s473 = sadd.s32 1, %s469
          $region153: #{custom-call.22} parent=144 // loop_footer_branch
            %468 = sbr.rel target = $region149
          $region154: #{custom-call.22} parent=144 // loop_exit
            _
          %s953 = sadd.s32 %s371, 1
        $region145: #{custom-call.22} parent=139 // loop_footer
          _
        $region146: #{custom-call.22} parent=139 // loop_footer_branch
          %370 = sbr.rel target = $region142
        $region147: #{custom-call.22} parent=139 // loop_exit
          _
        %s956 = sand.u32 %s17, 7
        %s957 = scalar_lea.vmem %s287, %s956 [#allocation8]
        %s958 = sand.u32 %s17, 7
        %s959 = scalar_lea.vmem %s293, %s958 [#allocation9]
        %s960 = smov [#allocation18]
        %s961 = smov %s957
        %v962 = vlaneseq
        %v963 = vand.u32 %v962, 127
        %v964 = vmov %v963
        %v965 = vlaneseq
        %v966 = vshrl.u32 %v965, 7
        %v967 = vmov %v966
        %v968 = vld [vmem:[%s960] sm:$0x3]
        %vm971 = vcmp.eq.s32.totalorder %v967, %v964
        %v972 = vsel %vm971, %v968, 0.0
        %v973 = vrot.slane %v972, 4
        %v974 = vadd.f32 %v972, %v973
        %v975 = vrot.slane %v974, 2
        %v976 = vadd.f32 %v974, %v975
        %v977 = vrot.slane %v976, 1
        %v978 = vadd.f32 %v976, %v977
        %979 = vst [vmem:[%s961] sm:$0x1] %v978
        %s980 = smov [#allocation21]
        %s981 = smov %s959
        %v982 = vlaneseq
        %v983 = vand.u32 %v982, 127
        %v984 = vmov %v983
        %v985 = vlaneseq
        %v986 = vshrl.u32 %v985, 7
        %v987 = vmov %v986
        %v988 = vld [vmem:[%s980] sm:$0x3]
        %vm991 = vcmp.eq.s32.totalorder %v987, %v984
        %v992 = vsel %vm991, %v988, 0.0
        %v993 = vrot.slane %v992, 4
        %v994 = vadd.f32 %v992, %v993
        %v995 = vrot.slane %v994, 2
        %v996 = vadd.f32 %v994, %v995
        %v997 = vrot.slane %v996, 1
        %v998 = vadd.f32 %v996, %v997
        %999 = vst [vmem:[%s981] sm:$0x1] %v998
        %s1001 = ssub.s32 4, 1
        %v1002 = vld [vmem:[#allocation10] sm:%s1001]
        %s1004 = ssub.s32 4, 1
        %1005 = vst [vmem:[%s297] sm:%s1004] %v1002
        %s1007 = ssub.s32 4, 1
        %v1008 = vld [vmem:[#allocation12] sm:%s1007]
        %s1010 = ssub.s32 4, 1
        %1011 = vst [vmem:[%s301] sm:%s1010] %v1008
        %s1013 = ssub.s32 4, 1
        %v1014 = vld [vmem:[#allocation14] sm:%s1013]
        %s1016 = ssub.s32 4, 1
        %1017 = vst [vmem:[%s305] sm:%s1016] %v1014
        %s1019 = ssub.s32 4, 1
        %v1020 = vld [vmem:[#allocation16] sm:%s1019]
        %s1022 = ssub.s32 4, 1
        %1023 = vst [vmem:[%s309] sm:%s1022] %v1020
        %s1024 = sand.u32 %s27, 1
        %s1025 = sand.u32 %s27, 1
        %s1026 = smul.addr %s1025, 8
        %s1027 = scalar_lea.vmem [#allocation8], %s1026
        %s1028 = sand.u32 %s55, 1
        %s1029 = sand.u32 %s55, 1
        %s1030 = smul.addr %s1029, 8
        %s1031 = scalar_lea.vmem [#allocation9], %s1030
        %s1032 = sand.u32 %s17, 1
        %s1033 = sand.u32 %s17, 1
        %s1034 = smul.addr %s1033, 2
        %s1035 = scalar_lea.vmem [#allocation11], %s1034
        %s1036 = sand.u32 %s17, 1
        %s1037 = sand.u32 %s17, 1
        %s1038 = smul.addr %s1037, 2
        %s1039 = scalar_lea.vmem [#allocation13], %s1038
        %s1040 = sand.u32 %s17, 1
        %s1041 = sand.u32 %s17, 1
        %s1042 = smul.addr %s1041, 2
        %s1043 = scalar_lea.vmem [#allocation15], %s1042
        %s1044 = sand.u32 %s17, 1
        %s1045 = sand.u32 %s17, 1
        %s1046 = smul.addr %s1045, 2
        %s1047 = scalar_lea.vmem [#allocation17], %s1046
        // Predicated region
        $region155: #{custom-call.22} parent=139 // pred_check
          %p1048 = pneg %p37
        $region156: #{custom-call.22} parent=139 // pred_check_branch
          %1050 = sbr.rel (%p1048) target = $region158
        $region157: #{custom-call.22} parent=139 // pred_region
          %s1051 = sshrl.u32 %s17, 3
          %s1052 = smul.addr %s1051, 8
          %s1053 = scalar_lea.vmem %s4, %s1052
          // Predicated region
          $region159: #{custom-call.22} parent=157 // pred_check
            _
          $region160: #{custom-call.22} parent=157 // pred_check_branch
            %1055 = sbr.rel (0) target = $region162
          $region161: #{custom-call.22} parent=157 // pred_region
            // Predicated region
            $region163: #{custom-call.22} parent=161 // pred_check
              _
            $region164: #{custom-call.22} parent=161 // pred_check_branch
              %1057 = sbr.rel (0) target = $region166
            $region165: #{custom-call.22} parent=161 // pred_region
              // Predicated region
              $region178: #{custom-call.22} parent=165 // pred_check
                _
              $region179: #{custom-call.22} parent=165 // pred_check_branch
                %1073 = sbr.rel (0) target = $region181
              $region180: #{custom-call.22} parent=165 // pred_region
                loop: start=0, step=1, limit=1
                $region182: #{custom-call.22} parent=180 // loop_pre_header
                  _
                $region183: #{custom-call.22} parent=180 // loop_header
                  %s1075 = sphi 0, %s1079
                  %p1076 = scmp.ge.s32.totalorder %s1075, 1
                  %s1080 = sphi %s1027, %s1027
                  %s1081 = sphi %s1053, %s1053
                $region184: #{custom-call.22} parent=180 // loop_header_branch
                  %1078 = sbr.rel (%p1076) target = $region188
                $region185: #{custom-call.22} parent=180 // loop_body
                  %v1082 = vld [vmem:[%s1080] sm:$0xff]
                  %1083 = vst [vmem:[%s1081] sm:$0xff] %v1082
                $region186: #{custom-call.22} parent=180 // loop_footer
                  %s1079 = sadd.s32 1, %s1075
                $region187: #{custom-call.22} parent=180 // loop_footer_branch
                  %1074 = sbr.rel target = $region183
                $region188: #{custom-call.22} parent=180 // loop_exit
                  _
              $region181: #{custom-call.22} parent=165 // pred_fallthru
                _
              // Predicated region
              $region189: #{custom-call.22} parent=165 // pred_check
                _
              $region190: #{custom-call.22} parent=165 // pred_check_branch
                %1085 = sbr.rel target = $region192
              $region191: #{custom-call.22} parent=165 // pred_region
                _
              $region192: #{custom-call.22} parent=165 // pred_fallthru
                _
            $region166: #{custom-call.22} parent=161 // pred_fallthru
              _
            // Predicated region
            $region167: #{custom-call.22} parent=161 // pred_check
              _
            $region168: #{custom-call.22} parent=161 // pred_check_branch
              %1059 = sbr.rel target = $region170
            $region169: #{custom-call.22} parent=161 // pred_region
              %s1061 = ssub.s32 256, 1
              loop: start=0, step=1, limit=1
              $region171: #{custom-call.22} parent=169 // loop_pre_header
                _
              $region172: #{custom-call.22} parent=169 // loop_header
                %s1063 = sphi 0, %s1067
                %p1064 = scmp.ge.s32.totalorder %s1063, 1
                %s1068 = sphi %s1027, %s1027
                %s1069 = sphi %s1053, %s1053
              $region173: #{custom-call.22} parent=169 // loop_header_branch
                %1066 = sbr.rel (%p1064) target = $region177
              $region174: #{custom-call.22} parent=169 // loop_body
                %v1070 = vld [vmem:[%s1068] sm:%s1061]
                %1071 = vst [vmem:[%s1069] sm:%s1061] %v1070
              $region175: #{custom-call.22} parent=169 // loop_footer
                %s1067 = sadd.s32 1, %s1063
              $region176: #{custom-call.22} parent=169 // loop_footer_branch
                %1062 = sbr.rel target = $region172
              $region177: #{custom-call.22} parent=169 // loop_exit
                _
            $region170: #{custom-call.22} parent=161 // pred_fallthru
              _
          $region162: #{custom-call.22} parent=157 // pred_fallthru
            _
          %1086 = vnop
        $region158: #{custom-call.22} parent=139 // pred_fallthru
          _
        // Predicated region
        $region193: #{custom-call.22} parent=139 // pred_check
          %p1087 = pneg %p65
        $region194: #{custom-call.22} parent=139 // pred_check_branch
          %1089 = sbr.rel (%p1087) target = $region196
        $region195: #{custom-call.22} parent=139 // pred_region
          %s1090 = sshrl.u32 %s17, 3
          %s1091 = smul.addr %s1090, 8
          %s1092 = scalar_lea.vmem %s5, %s1091
          // Predicated region
          $region197: #{custom-call.22} parent=195 // pred_check
            _
          $region198: #{custom-call.22} parent=195 // pred_check_branch
            %1094 = sbr.rel (0) target = $region200
          $region199: #{custom-call.22} parent=195 // pred_region
            // Predicated region
            $region201: #{custom-call.22} parent=199 // pred_check
              _
            $region202: #{custom-call.22} parent=199 // pred_check_branch
              %1096 = sbr.rel (0) target = $region204
            $region203: #{custom-call.22} parent=199 // pred_region
              // Predicated region
              $region216: #{custom-call.22} parent=203 // pred_check
                _
              $region217: #{custom-call.22} parent=203 // pred_check_branch
                %1112 = sbr.rel (0) target = $region219
              $region218: #{custom-call.22} parent=203 // pred_region
                loop: start=0, step=1, limit=1
                $region220: #{custom-call.22} parent=218 // loop_pre_header
                  _
                $region221: #{custom-call.22} parent=218 // loop_header
                  %s1114 = sphi 0, %s1118
                  %p1115 = scmp.ge.s32.totalorder %s1114, 1
                  %s1119 = sphi %s1031, %s1031
                  %s1120 = sphi %s1092, %s1092
                $region222: #{custom-call.22} parent=218 // loop_header_branch
                  %1117 = sbr.rel (%p1115) target = $region226
                $region223: #{custom-call.22} parent=218 // loop_body
                  %v1121 = vld [vmem:[%s1119] sm:$0xff]
                  %1122 = vst [vmem:[%s1120] sm:$0xff] %v1121
                $region224: #{custom-call.22} parent=218 // loop_footer
                  %s1118 = sadd.s32 1, %s1114
                $region225: #{custom-call.22} parent=218 // loop_footer_branch
                  %1113 = sbr.rel target = $region221
                $region226: #{custom-call.22} parent=218 // loop_exit
                  _
              $region219: #{custom-call.22} parent=203 // pred_fallthru
                _
              // Predicated region
              $region227: #{custom-call.22} parent=203 // pred_check
                _
              $region228: #{custom-call.22} parent=203 // pred_check_branch
                %1124 = sbr.rel target = $region230
              $region229: #{custom-call.22} parent=203 // pred_region
                _
              $region230: #{custom-call.22} parent=203 // pred_fallthru
                _
            $region204: #{custom-call.22} parent=199 // pred_fallthru
              _
            // Predicated region
            $region205: #{custom-call.22} parent=199 // pred_check
              _
            $region206: #{custom-call.22} parent=199 // pred_check_branch
              %1098 = sbr.rel target = $region208
            $region207: #{custom-call.22} parent=199 // pred_region
              %s1100 = ssub.s32 256, 1
              loop: start=0, step=1, limit=1
              $region209: #{custom-call.22} parent=207 // loop_pre_header
                _
              $region210: #{custom-call.22} parent=207 // loop_header
                %s1102 = sphi 0, %s1106
                %p1103 = scmp.ge.s32.totalorder %s1102, 1
                %s1107 = sphi %s1031, %s1031
                %s1108 = sphi %s1092, %s1092
              $region211: #{custom-call.22} parent=207 // loop_header_branch
                %1105 = sbr.rel (%p1103) target = $region215
              $region212: #{custom-call.22} parent=207 // loop_body
                %v1109 = vld [vmem:[%s1107] sm:%s1100]
                %1110 = vst [vmem:[%s1108] sm:%s1100] %v1109
              $region213: #{custom-call.22} parent=207 // loop_footer
                %s1106 = sadd.s32 1, %s1102
              $region214: #{custom-call.22} parent=207 // loop_footer_branch
                %1101 = sbr.rel target = $region210
              $region215: #{custom-call.22} parent=207 // loop_exit
                _
            $region208: #{custom-call.22} parent=199 // pred_fallthru
              _
          $region200: #{custom-call.22} parent=195 // pred_fallthru
            _
          %1125 = vnop
        $region196: #{custom-call.22} parent=139 // pred_fallthru
          _
        %s1126 = smul.addr %s17, 2
        %s1127 = scalar_lea.vmem %s6, %s1126
        // Predicated region
        $region231: #{custom-call.22} parent=139 // pred_check
          _
        $region232: #{custom-call.22} parent=139 // pred_check_branch
          %1129 = sbr.rel (0) target = $region234
        $region233: #{custom-call.22} parent=139 // pred_region
          // Predicated region
          $region235: #{custom-call.22} parent=233 // pred_check
            _
          $region236: #{custom-call.22} parent=233 // pred_check_branch
            %1131 = sbr.rel target = $region238
          $region237: #{custom-call.22} parent=233 // pred_region
            // Predicated region
            $region250: #{custom-call.22} parent=237 // pred_check
              _
            $region251: #{custom-call.22} parent=237 // pred_check_branch
              %1147 = sbr.rel (0) target = $region253
            $region252: #{custom-call.22} parent=237 // pred_region
              %s1149 = ssub.s32 4, 1
              loop: start=0, step=1, limit=1
              $region254: #{custom-call.22} parent=252 // loop_pre_header
                _
              $region255: #{custom-call.22} parent=252 // loop_header
                %s1151 = sphi 0, %s1155
                %p1152 = scmp.ge.s32.totalorder %s1151, 1
                %s1156 = sphi %s1035, %s1035
                %s1157 = sphi %s1127, %s1127
              $region256: #{custom-call.22} parent=252 // loop_header_branch
                %1154 = sbr.rel (%p1152) target = $region260
              $region257: #{custom-call.22} parent=252 // loop_body
                %v1158 = vld [vmem:[%s1156] sm:%s1149]
                %1159 = vst [vmem:[%s1157] sm:%s1149] %v1158
              $region258: #{custom-call.22} parent=252 // loop_footer
                %s1155 = sadd.s32 1, %s1151
              $region259: #{custom-call.22} parent=252 // loop_footer_branch
                %1150 = sbr.rel target = $region255
              $region260: #{custom-call.22} parent=252 // loop_exit
                _
            $region253: #{custom-call.22} parent=237 // pred_fallthru
              _
          $region238: #{custom-call.22} parent=233 // pred_fallthru
            _
          // Predicated region
          $region239: #{custom-call.22} parent=233 // pred_check
            _
          $region240: #{custom-call.22} parent=233 // pred_check_branch
            %1133 = sbr.rel (0) target = $region242
          $region241: #{custom-call.22} parent=233 // pred_region
            %s1135 = ssub.s32 4, 1
            loop: start=0, step=1, limit=1
            $region243: #{custom-call.22} parent=241 // loop_pre_header
              _
            $region244: #{custom-call.22} parent=241 // loop_header
              %s1137 = sphi 0, %s1141
              %p1138 = scmp.ge.s32.totalorder %s1137, 1
              %s1142 = sphi %s1035, %s1035
              %s1143 = sphi %s1127, %s1127
            $region245: #{custom-call.22} parent=241 // loop_header_branch
              %1140 = sbr.rel (%p1138) target = $region249
            $region246: #{custom-call.22} parent=241 // loop_body
              %v1144 = vld [vmem:[%s1142] sm:%s1135]
              %1145 = vst [vmem:[%s1143] sm:%s1135] %v1144
            $region247: #{custom-call.22} parent=241 // loop_footer
              %s1141 = sadd.s32 1, %s1137
            $region248: #{custom-call.22} parent=241 // loop_footer_branch
              %1136 = sbr.rel target = $region244
            $region249: #{custom-call.22} parent=241 // loop_exit
              _
          $region242: #{custom-call.22} parent=233 // pred_fallthru
            _
        $region234: #{custom-call.22} parent=139 // pred_fallthru
          _
        %1160 = vnop
        %s1161 = smul.addr %s17, 2
        %s1162 = scalar_lea.vmem %s7, %s1161
        // Predicated region
        $region261: #{custom-call.22} parent=139 // pred_check
          _
        $region262: #{custom-call.22} parent=139 // pred_check_branch
          %1164 = sbr.rel (0) target = $region264
        $region263: #{custom-call.22} parent=139 // pred_region
          // Predicated region
          $region265: #{custom-call.22} parent=263 // pred_check
            _
          $region266: #{custom-call.22} parent=263 // pred_check_branch
            %1166 = sbr.rel target = $region268
          $region267: #{custom-call.22} parent=263 // pred_region
            // Predicated region
            $region280: #{custom-call.22} parent=267 // pred_check
              _
            $region281: #{custom-call.22} parent=267 // pred_check_branch
              %1182 = sbr.rel (0) target = $region283
            $region282: #{custom-call.22} parent=267 // pred_region
              %s1184 = ssub.s32 4, 1
              loop: start=0, step=1, limit=1
              $region284: #{custom-call.22} parent=282 // loop_pre_header
                _
              $region285: #{custom-call.22} parent=282 // loop_header
                %s1186 = sphi 0, %s1190
                %p1187 = scmp.ge.s32.totalorder %s1186, 1
                %s1191 = sphi %s1039, %s1039
                %s1192 = sphi %s1162, %s1162
              $region286: #{custom-call.22} parent=282 // loop_header_branch
                %1189 = sbr.rel (%p1187) target = $region290
              $region287: #{custom-call.22} parent=282 // loop_body
                %v1193 = vld [vmem:[%s1191] sm:%s1184]
                %1194 = vst [vmem:[%s1192] sm:%s1184] %v1193
              $region288: #{custom-call.22} parent=282 // loop_footer
                %s1190 = sadd.s32 1, %s1186
              $region289: #{custom-call.22} parent=282 // loop_footer_branch
                %1185 = sbr.rel target = $region285
              $region290: #{custom-call.22} parent=282 // loop_exit
                _
            $region283: #{custom-call.22} parent=267 // pred_fallthru
              _
          $region268: #{custom-call.22} parent=263 // pred_fallthru
            _
          // Predicated region
          $region269: #{custom-call.22} parent=263 // pred_check
            _
          $region270: #{custom-call.22} parent=263 // pred_check_branch
            %1168 = sbr.rel (0) target = $region272
          $region271: #{custom-call.22} parent=263 // pred_region
            %s1170 = ssub.s32 4, 1
            loop: start=0, step=1, limit=1
            $region273: #{custom-call.22} parent=271 // loop_pre_header
              _
            $region274: #{custom-call.22} parent=271 // loop_header
              %s1172 = sphi 0, %s1176
              %p1173 = scmp.ge.s32.totalorder %s1172, 1
              %s1177 = sphi %s1039, %s1039
              %s1178 = sphi %s1162, %s1162
            $region275: #{custom-call.22} parent=271 // loop_header_branch
              %1175 = sbr.rel (%p1173) target = $region279
            $region276: #{custom-call.22} parent=271 // loop_body
              %v1179 = vld [vmem:[%s1177] sm:%s1170]
              %1180 = vst [vmem:[%s1178] sm:%s1170] %v1179
            $region277: #{custom-call.22} parent=271 // loop_footer
              %s1176 = sadd.s32 1, %s1172
            $region278: #{custom-call.22} parent=271 // loop_footer_branch
              %1171 = sbr.rel target = $region274
            $region279: #{custom-call.22} parent=271 // loop_exit
              _
          $region272: #{custom-call.22} parent=263 // pred_fallthru
            _
        $region264: #{custom-call.22} parent=139 // pred_fallthru
          _
        %1195 = vnop
        %s1196 = smul.addr %s17, 2
        %s1197 = scalar_lea.vmem %s8, %s1196
        // Predicated region
        $region291: #{custom-call.22} parent=139 // pred_check
          _
        $region292: #{custom-call.22} parent=139 // pred_check_branch
          %1199 = sbr.rel (0) target = $region294
        $region293: #{custom-call.22} parent=139 // pred_region
          // Predicated region
          $region295: #{custom-call.22} parent=293 // pred_check
            _
          $region296: #{custom-call.22} parent=293 // pred_check_branch
            %1201 = sbr.rel target = $region298
          $region297: #{custom-call.22} parent=293 // pred_region
            // Predicated region
            $region310: #{custom-call.22} parent=297 // pred_check
              _
            $region311: #{custom-call.22} parent=297 // pred_check_branch
              %1217 = sbr.rel (0) target = $region313
            $region312: #{custom-call.22} parent=297 // pred_region
              %s1219 = ssub.s32 4, 1
              loop: start=0, step=1, limit=1
              $region314: #{custom-call.22} parent=312 // loop_pre_header
                _
              $region315: #{custom-call.22} parent=312 // loop_header
                %s1221 = sphi 0, %s1225
                %p1222 = scmp.ge.s32.totalorder %s1221, 1
                %s1226 = sphi %s1043, %s1043
                %s1227 = sphi %s1197, %s1197
              $region316: #{custom-call.22} parent=312 // loop_header_branch
                %1224 = sbr.rel (%p1222) target = $region320
              $region317: #{custom-call.22} parent=312 // loop_body
                %v1228 = vld [vmem:[%s1226] sm:%s1219]
                %1229 = vst [vmem:[%s1227] sm:%s1219] %v1228
              $region318: #{custom-call.22} parent=312 // loop_footer
                %s1225 = sadd.s32 1, %s1221
              $region319: #{custom-call.22} parent=312 // loop_footer_branch
                %1220 = sbr.rel target = $region315
              $region320: #{custom-call.22} parent=312 // loop_exit
                _
            $region313: #{custom-call.22} parent=297 // pred_fallthru
              _
          $region298: #{custom-call.22} parent=293 // pred_fallthru
            _
          // Predicated region
          $region299: #{custom-call.22} parent=293 // pred_check
            _
          $region300: #{custom-call.22} parent=293 // pred_check_branch
            %1203 = sbr.rel (0) target = $region302
          $region301: #{custom-call.22} parent=293 // pred_region
            %s1205 = ssub.s32 4, 1
            loop: start=0, step=1, limit=1
            $region303: #{custom-call.22} parent=301 // loop_pre_header
              _
            $region304: #{custom-call.22} parent=301 // loop_header
              %s1207 = sphi 0, %s1211
              %p1208 = scmp.ge.s32.totalorder %s1207, 1
              %s1212 = sphi %s1043, %s1043
              %s1213 = sphi %s1197, %s1197
            $region305: #{custom-call.22} parent=301 // loop_header_branch
              %1210 = sbr.rel (%p1208) target = $region309
            $region306: #{custom-call.22} parent=301 // loop_body
              %v1214 = vld [vmem:[%s1212] sm:%s1205]
              %1215 = vst [vmem:[%s1213] sm:%s1205] %v1214
            $region307: #{custom-call.22} parent=301 // loop_footer
              %s1211 = sadd.s32 1, %s1207
            $region308: #{custom-call.22} parent=301 // loop_footer_branch
              %1206 = sbr.rel target = $region304
            $region309: #{custom-call.22} parent=301 // loop_exit
              _
          $region302: #{custom-call.22} parent=293 // pred_fallthru
            _
        $region294: #{custom-call.22} parent=139 // pred_fallthru
          _
        %1230 = vnop
        %s1231 = smul.addr %s17, 2
        %s1232 = scalar_lea.vmem %s9, %s1231
        // Predicated region
        $region321: #{custom-call.22} parent=139 // pred_check
          _
        $region322: #{custom-call.22} parent=139 // pred_check_branch
          %1234 = sbr.rel (0) target = $region324
        $region323: #{custom-call.22} parent=139 // pred_region
          // Predicated region
          $region325: #{custom-call.22} parent=323 // pred_check
            _
          $region326: #{custom-call.22} parent=323 // pred_check_branch
            %1236 = sbr.rel target = $region328
          $region327: #{custom-call.22} parent=323 // pred_region
            // Predicated region
            $region340: #{custom-call.22} parent=327 // pred_check
              _
            $region341: #{custom-call.22} parent=327 // pred_check_branch
              %1252 = sbr.rel (0) target = $region343
            $region342: #{custom-call.22} parent=327 // pred_region
              %s1254 = ssub.s32 4, 1
              loop: start=0, step=1, limit=1
              $region344: #{custom-call.22} parent=342 // loop_pre_header
                _
              $region345: #{custom-call.22} parent=342 // loop_header
                %s1256 = sphi 0, %s1260
                %p1257 = scmp.ge.s32.totalorder %s1256, 1
                %s1261 = sphi %s1047, %s1047
                %s1262 = sphi %s1232, %s1232
              $region346: #{custom-call.22} parent=342 // loop_header_branch
                %1259 = sbr.rel (%p1257) target = $region350
              $region347: #{custom-call.22} parent=342 // loop_body
                %v1263 = vld [vmem:[%s1261] sm:%s1254]
                %1264 = vst [vmem:[%s1262] sm:%s1254] %v1263
              $region348: #{custom-call.22} parent=342 // loop_footer
                %s1260 = sadd.s32 1, %s1256
              $region349: #{custom-call.22} parent=342 // loop_footer_branch
                %1255 = sbr.rel target = $region345
              $region350: #{custom-call.22} parent=342 // loop_exit
                _
            $region343: #{custom-call.22} parent=327 // pred_fallthru
              _
          $region328: #{custom-call.22} parent=323 // pred_fallthru
            _
          // Predicated region
          $region329: #{custom-call.22} parent=323 // pred_check
            _
          $region330: #{custom-call.22} parent=323 // pred_check_branch
            %1238 = sbr.rel (0) target = $region332
          $region331: #{custom-call.22} parent=323 // pred_region
            %s1240 = ssub.s32 4, 1
            loop: start=0, step=1, limit=1
            $region333: #{custom-call.22} parent=331 // loop_pre_header
              _
            $region334: #{custom-call.22} parent=331 // loop_header
              %s1242 = sphi 0, %s1246
              %p1243 = scmp.ge.s32.totalorder %s1242, 1
              %s1247 = sphi %s1047, %s1047
              %s1248 = sphi %s1232, %s1232
            $region335: #{custom-call.22} parent=331 // loop_header_branch
              %1245 = sbr.rel (%p1243) target = $region339
            $region336: #{custom-call.22} parent=331 // loop_body
              %v1249 = vld [vmem:[%s1247] sm:%s1240]
              %1250 = vst [vmem:[%s1248] sm:%s1240] %v1249
            $region337: #{custom-call.22} parent=331 // loop_footer
              %s1246 = sadd.s32 1, %s1242
            $region338: #{custom-call.22} parent=331 // loop_footer_branch
              %1241 = sbr.rel target = $region334
            $region339: #{custom-call.22} parent=331 // loop_exit
              _
          $region332: #{custom-call.22} parent=323 // pred_fallthru
            _
        $region324: #{custom-call.22} parent=139 // pred_fallthru
          _
        %1265 = vnop
      $region140: #{custom-call.22} parent=5 // pred_fallthru
        _
      %p1266 = scmp.le.s32.totalorder 2, %s12
      // Predicated region
      $region351: #{custom-call.22} parent=5 // pred_check
        %p1267 = pneg %p1266
      $region352: #{custom-call.22} parent=5 // pred_check_branch
        %1269 = sbr.rel (%p1267) target = $region354
      $region353: #{custom-call.22} parent=5 // pred_region
        %s1270 = ssub.s32 %s12, 2
        // Predicated region
        $region355: #{custom-call.22} parent=353 // pred_check
          %p1271 = pneg %p43
        $region356: #{custom-call.22} parent=353 // pred_check_branch
          %1273 = sbr.rel (%p1271) target = $region358
        $region357: #{custom-call.22} parent=353 // pred_region
          %s1274 = sand.u32 %s28, 1
          %s1275 = sand.u32 %s28, 1
          %s1276 = smul.addr %s1275, 8
          %s1277 = scalar_lea.vmem [#allocation8], %s1276
        $region358: #{custom-call.22} parent=353 // pred_fallthru
          _
        // Predicated region
        $region359: #{custom-call.22} parent=353 // pred_check
          %p1278 = pneg %p71
        $region360: #{custom-call.22} parent=353 // pred_check_branch
          %1280 = sbr.rel (%p1278) target = $region362
        $region361: #{custom-call.22} parent=353 // pred_region
          %s1281 = sand.u32 %s56, 1
          %s1282 = sand.u32 %s56, 1
          %s1283 = smul.addr %s1282, 8
          %s1284 = scalar_lea.vmem [#allocation9], %s1283
        $region362: #{custom-call.22} parent=353 // pred_fallthru
          _
        %s1285 = sand.u32 %s18, 1
        %s1286 = sand.u32 %s18, 1
        %s1287 = smul.addr %s1286, 2
        %s1288 = scalar_lea.vmem [#allocation11], %s1287
        %s1289 = sand.u32 %s18, 1
        %s1290 = sand.u32 %s18, 1
        %s1291 = smul.addr %s1290, 2
        %s1292 = scalar_lea.vmem [#allocation13], %s1291
        %s1293 = sand.u32 %s18, 1
        %s1294 = sand.u32 %s18, 1
        %s1295 = smul.addr %s1294, 2
        %s1296 = scalar_lea.vmem [#allocation15], %s1295
        %s1297 = sand.u32 %s18, 1
        %s1298 = sand.u32 %s18, 1
        %s1299 = smul.addr %s1298, 2
        %s1300 = scalar_lea.vmem [#allocation17], %s1299
      $region354: #{custom-call.22} parent=5 // pred_fallthru
        _
    $region6: #{custom-call.22} parent=1 // loop_footer
      %s16 = sadd.s32 1, %s12
    $region7: #{custom-call.22} parent=1 // loop_footer_branch
      %11 = sbr.rel target = $region3
    $region8: #{custom-call.22} parent=1 // loop_exit
      _

// kernel: reverse
$region0: #{reverse}
  %s0 = inlined_call_operand.vmem [shape: f32[8,3], index: 0, kind: input, shape index: {}]
  %s1 = inlined_call_operand.vmem [shape: f32[8,3], index: 1, kind: output, shape index: {}]
  %v2 = vlaneseq
  %v3 = vsub.s32 2, %v2
  %4 = vset.pattern.permute.xlu0 %v3
  $region1: #{reverse} parent=0
    #allocation0 [shape = 'u8[4096]{0}', space=vmem, size = 0x1000, scoped, tag = 'operand span for operand 0']
    #allocation1 [shape = 'u8[4096]{0}', space=vmem, size = 0x1000, scoped, tag = 'operand span for operand 1']
    // Predicated region
    $region2: #{reverse} parent=1 // pred_check
      _
    $region3: #{reverse} parent=1 // pred_check_branch
      %6 = sbr.rel (0) target = $region5
    $region4: #{reverse} parent=1 // pred_region
      // Predicated region
      $region6: #{reverse} parent=4 // pred_check
        _
      $region7: #{reverse} parent=4 // pred_check_branch
        %8 = sbr.rel (0) target = $region9
      $region8: #{reverse} parent=4 // pred_region
        // Predicated region
        $region21: #{reverse} parent=8 // pred_check
          _
        $region22: #{reverse} parent=8 // pred_check_branch
          %24 = sbr.rel (0) target = $region24
        $region23: #{reverse} parent=8 // pred_region
          loop: start=0, step=1, limit=1
          $region25: #{reverse} parent=23 // loop_pre_header
            _
          $region26: #{reverse} parent=23 // loop_header
            %s26 = sphi 0, %s30
            %p27 = scmp.ge.s32.totalorder %s26, 1
            %s31 = sphi %s0, %s0
            %s32 = sphi [#allocation0], [#allocation0]
          $region27: #{reverse} parent=23 // loop_header_branch
            %29 = sbr.rel (%p27) target = $region31
          $region28: #{reverse} parent=23 // loop_body
            %v33 = vld [vmem:[%s31] sm:$0xff]
            %34 = vst [vmem:[%s32] sm:$0xff] %v33
          $region29: #{reverse} parent=23 // loop_footer
            %s30 = sadd.s32 1, %s26
          $region30: #{reverse} parent=23 // loop_footer_branch
            %25 = sbr.rel target = $region26
          $region31: #{reverse} parent=23 // loop_exit
            _
        $region24: #{reverse} parent=8 // pred_fallthru
          _
        // Predicated region
        $region32: #{reverse} parent=8 // pred_check
          _
        $region33: #{reverse} parent=8 // pred_check_branch
          %36 = sbr.rel target = $region35
        $region34: #{reverse} parent=8 // pred_region
          _
        $region35: #{reverse} parent=8 // pred_fallthru
          _
      $region9: #{reverse} parent=4 // pred_fallthru
        _
      // Predicated region
      $region10: #{reverse} parent=4 // pred_check
        _
      $region11: #{reverse} parent=4 // pred_check_branch
        %10 = sbr.rel target = $region13
      $region12: #{reverse} parent=4 // pred_region
        %s12 = ssub.s32 256, 1
        loop: start=0, step=1, limit=1
        $region14: #{reverse} parent=12 // loop_pre_header
          _
        $region15: #{reverse} parent=12 // loop_header
          %s14 = sphi 0, %s18
          %p15 = scmp.ge.s32.totalorder %s14, 1
          %s19 = sphi %s0, %s0
          %s20 = sphi [#allocation0], [#allocation0]
        $region16: #{reverse} parent=12 // loop_header_branch
          %17 = sbr.rel (%p15) target = $region20
        $region17: #{reverse} parent=12 // loop_body
          %v21 = vld [vmem:[%s19] sm:%s12]
          %22 = vst [vmem:[%s20] sm:%s12] %v21
        $region18: #{reverse} parent=12 // loop_footer
          %s18 = sadd.s32 1, %s14
        $region19: #{reverse} parent=12 // loop_footer_branch
          %13 = sbr.rel target = $region15
        $region20: #{reverse} parent=12 // loop_exit
          _
      $region13: #{reverse} parent=4 // pred_fallthru
        _
    $region5: #{reverse} parent=1 // pred_fallthru
      _
    %37 = vnop
    %v38 = vld [vmem:[#allocation0] sm:$0xff]
    %39 = vperm.xlu0 %4, %v38
    %v40 = vpop.permute.xlu0 %39
    %41 = vst [vmem:[#allocation1] sm:$0xff] %v40
    // Predicated region
    $region36: #{reverse} parent=1 // pred_check
      _
    $region37: #{reverse} parent=1 // pred_check_branch
      %43 = sbr.rel (0) target = $region39
    $region38: #{reverse} parent=1 // pred_region
      // Predicated region
      $region40: #{reverse} parent=38 // pred_check
        _
      $region41: #{reverse} parent=38 // pred_check_branch
        %45 = sbr.rel (0) target = $region43
      $region42: #{reverse} parent=38 // pred_region
        // Predicated region
        $region55: #{reverse} parent=42 // pred_check
          _
        $region56: #{reverse} parent=42 // pred_check_branch
          %61 = sbr.rel (0) target = $region58
        $region57: #{reverse} parent=42 // pred_region
          loop: start=0, step=1, limit=1
          $region59: #{reverse} parent=57 // loop_pre_header
            _
          $region60: #{reverse} parent=57 // loop_header
            %s63 = sphi 0, %s67
            %p64 = scmp.ge.s32.totalorder %s63, 1
            %s68 = sphi [#allocation1], [#allocation1]
            %s69 = sphi %s1, %s1
          $region61: #{reverse} parent=57 // loop_header_branch
            %66 = sbr.rel (%p64) target = $region65
          $region62: #{reverse} parent=57 // loop_body
            %v70 = vld [vmem:[%s68] sm:$0xff]
            %71 = vst [vmem:[%s69] sm:$0xff] %v70
          $region63: #{reverse} parent=57 // loop_footer
            %s67 = sadd.s32 1, %s63
          $region64: #{reverse} parent=57 // loop_footer_branch
            %62 = sbr.rel target = $region60
          $region65: #{reverse} parent=57 // loop_exit
            _
        $region58: #{reverse} parent=42 // pred_fallthru
          _
        // Predicated region
        $region66: #{reverse} parent=42 // pred_check
          _
        $region67: #{reverse} parent=42 // pred_check_branch
          %73 = sbr.rel target = $region69
        $region68: #{reverse} parent=42 // pred_region
          _
        $region69: #{reverse} parent=42 // pred_fallthru
          _
      $region43: #{reverse} parent=38 // pred_fallthru
        _
      // Predicated region
      $region44: #{reverse} parent=38 // pred_check
        _
      $region45: #{reverse} parent=38 // pred_check_branch
        %47 = sbr.rel target = $region47
      $region46: #{reverse} parent=38 // pred_region
        %s49 = ssub.s32 256, 1
        loop: start=0, step=1, limit=1
        $region48: #{reverse} parent=46 // loop_pre_header
          _
        $region49: #{reverse} parent=46 // loop_header
          %s51 = sphi 0, %s55
          %p52 = scmp.ge.s32.totalorder %s51, 1
          %s56 = sphi [#allocation1], [#allocation1]
          %s57 = sphi %s1, %s1
        $region50: #{reverse} parent=46 // loop_header_branch
          %54 = sbr.rel (%p52) target = $region54
        $region51: #{reverse} parent=46 // loop_body
          %v58 = vld [vmem:[%s56] sm:%s49]
          %59 = vst [vmem:[%s57] sm:%s49] %v58
        $region52: #{reverse} parent=46 // loop_footer
          %s55 = sadd.s32 1, %s51
        $region53: #{reverse} parent=46 // loop_footer_branch
          %50 = sbr.rel target = $region49
        $region54: #{reverse} parent=46 // loop_exit
          _
      $region47: #{reverse} parent=38 // pred_fallthru
        _
    $region39: #{reverse} parent=1 // pred_fallthru
      _
    %74 = vnop

// kernel: custom-call.16
$region0: #{custom-call.16}
  %s0 = inlined_call_operand.vmem [shape: f32[8,3,3], index: 0, kind: input, shape index: {}]
  %s1 = inlined_call_operand.vmem [shape: f32[8,3,3], index: 1, kind: output, shape index: {0}]
  %s2 = inlined_call_operand.vmem [shape: f32[8,3], index: 2, kind: output, shape index: {1}]
  %3 = xla_tuple %s1, %s2
  $region1: #{custom-call.16} parent=0
    #allocation0 [shape = 'u8[4096]{0}', space=vmem, size = 0x1000, scoped, tag = 'operand span for operand 0']
    #allocation1 [shape = 'u8[4096]{0}', space=vmem, size = 0x1000, scoped, tag = 'packed  for operand 0']
    #allocation2 [shape = 'u8[4096]{0}', space=vmem, size = 0x1000, scoped, tag = 'operand span for operand 1']
    #allocation3 [shape = 'u8[4096]{0}', space=vmem, size = 0x1000, scoped, tag = 'packed  for operand 1']
    #allocation4 [shape = 'u8[8192]{0}', space=vmem, size = 0x2000, scoped, tag = 'operand span for operand 2']
    loop: start=0, step=1, limit=10
    $region2: #{custom-call.16} parent=1 // loop_pre_header
      _
    $region3: #{custom-call.16} parent=1 // loop_header
      %s5 = sphi 0, %s9
      %p6 = scmp.ge.s32.totalorder %s5, 10
      %s12 = sphi 0, %s31
      %s13 = sphi 0, %s27
      %s14 = sphi 0, %s23
      %s15 = sphi 0, %s12
      %s16 = sphi 0, %s13
      %s17 = sphi 0, %s14
      %s18 = sphi 0, %s15
      %s19 = sphi 0, %s16
      %s20 = sphi 0, %s17
      %s46 = sphi 0, %s48
      %s49 = sphi 0, %s46
      %s50 = sphi 0, %s49
      %s66 = sphi 0, %s50
    $region4: #{custom-call.16} parent=1 // loop_header_branch
      %8 = sbr.rel (%p6) target = $region8
    $region5: #{custom-call.16} parent=1 // loop_body
      %s10 = ssub.s32 %s5, 1
      %s11 = ssub.s32 %s5, 2
      %s21 = sadd.s32 1, %s14
      %p22 = scmp.ge.s32.totalorder %s21, 1
      %s23 = scalar_select %p22, 0, %s21
      %s24 = sadd.s32 1, %s13
      %s25 = scalar_select %p22, %s24, %s13
      %p26 = scmp.ge.s32.totalorder %s25, 1
      %s27 = scalar_select %p26, 0, %s25
      %s28 = sadd.s32 1, %s12
      %s29 = scalar_select %p26, %s28, %s12
      %p30 = scmp.ge.s32.totalorder %s29, 8
      %s31 = scalar_select %p30, 0, %s29
      %p32 = scmp.lt.s32.totalorder %s12, 0
      %s33 = ssub.s32 0, %s12
      %s34 = scalar_select %p32, %s33, %s12
      %s35 = sshrl.u32 %s34, 3
      %s36 = ssub.s32 0, %s35
      %s37 = scalar_select %p32, %s36, %s35
      %p38 = scmp.lt.s32.totalorder %s31, 0
      %s39 = ssub.s32 0, %s31
      %s40 = scalar_select %p38, %s39, %s31
      %s41 = sshrl.u32 %s40, 3
      %s42 = ssub.s32 0, %s41
      %s43 = scalar_select %p38, %s42, %s41
      %s44 = ssub.s32 %s37, %s43
      %p45 = scmp.eq.s32.totalorder %s44, 0
      %s47 = sadd.s32 %s46, 1
      %s48 = scalar_select %p45, %s46, %s47
      %p51 = pneg %p45
      %p52 = scmp.eq.s32.totalorder %s5, 7
      %p53 = por %p51, %p52
      %p54 = scmp.ne.s32.totalorder %s46, %s49
      %p55 = scmp.eq.s32.totalorder %s5, 0
      %p56 = por %p54, %p55
      %p57 = scmp.ne.s32.totalorder %s46, %s49
      %p58 = scmp.eq.s32.totalorder %s10, 7
      %p59 = por %p57, %p58
      %p60 = scmp.ne.s32.totalorder %s49, %s50
      %p61 = scmp.eq.s32.totalorder %s10, 0
      %p62 = por %p60, %p61
      %p63 = scmp.ne.s32.totalorder %s49, %s50
      %p64 = scmp.eq.s32.totalorder %s11, 7
      %p65 = por %p63, %p64
      %p67 = scmp.ne.s32.totalorder %s50, %s66
      %p68 = scmp.eq.s32.totalorder %s11, 0
      %p69 = por %p67, %p68
      %p70 = scmp.le.s32.totalorder 1, %s5
      %p71 = scmp.lt.s32.totalorder %s5, 9
      %p72 = pnand %p70, %p71
      %p73 = pneg %p72
      // Predicated region
      $region9: #{custom-call.16} parent=5 // pred_check
        _
      $region10: #{custom-call.16} parent=5 // pred_check_branch
        %75 = sbr.rel (%p72) target = $region12
      $region11: #{custom-call.16} parent=5 // pred_region
        %s76 = ssub.s32 %s5, 1
      $region12: #{custom-call.16} parent=5 // pred_fallthru
        _
      %p77 = scmp.lt.s32.totalorder %s5, 8
      // Predicated region
      $region13: #{custom-call.16} parent=5 // pred_check
        %p78 = pneg %p77
      $region14: #{custom-call.16} parent=5 // pred_check_branch
        %80 = sbr.rel (%p78) target = $region16
      $region15: #{custom-call.16} parent=5 // pred_region
        %s81 = sand.u32 %s5, 1
        %s82 = sand.u32 %s5, 1
        %s83 = smul.addr %s82, 4
        %s84 = scalar_lea.vmem [#allocation1], %s83
        %s85 = sadd.s32 %s14, %s13
        %s86 = sadd.s32 %s85, %s12
        %s87 = smul.addr %s86, 4
        %s88 = scalar_lea.vmem %s0, %s87
        // Predicated region
        $region17: #{custom-call.16} parent=15 // pred_check
          _
        $region18: #{custom-call.16} parent=15 // pred_check_branch
          %90 = sbr.rel (0) target = $region20
        $region19: #{custom-call.16} parent=15 // pred_region
          // Predicated region
          $region21: #{custom-call.16} parent=19 // pred_check
            _
          $region22: #{custom-call.16} parent=19 // pred_check_branch
            %92 = sbr.rel target = $region24
          $region23: #{custom-call.16} parent=19 // pred_region
            // Predicated region
            $region36: #{custom-call.16} parent=23 // pred_check
              _
            $region37: #{custom-call.16} parent=23 // pred_check_branch
              %108 = sbr.rel (0) target = $region39
            $region38: #{custom-call.16} parent=23 // pred_region
              %s110 = ssub.s32 16, 1
              loop: start=0, step=1, limit=1
              $region40: #{custom-call.16} parent=38 // loop_pre_header
                _
              $region41: #{custom-call.16} parent=38 // loop_header
                %s112 = sphi 0, %s116
                %p113 = scmp.ge.s32.totalorder %s112, 1
                %s117 = sphi %s88, %s88
                %s118 = sphi %s84, %s84
              $region42: #{custom-call.16} parent=38 // loop_header_branch
                %115 = sbr.rel (%p113) target = $region46
              $region43: #{custom-call.16} parent=38 // loop_body
                %v119 = vld [vmem:[%s117] sm:%s110]
                %120 = vst [vmem:[%s118] sm:%s110] %v119
              $region44: #{custom-call.16} parent=38 // loop_footer
                %s116 = sadd.s32 1, %s112
              $region45: #{custom-call.16} parent=38 // loop_footer_branch
                %111 = sbr.rel target = $region41
              $region46: #{custom-call.16} parent=38 // loop_exit
                _
            $region39: #{custom-call.16} parent=23 // pred_fallthru
              _
          $region24: #{custom-call.16} parent=19 // pred_fallthru
            _
          // Predicated region
          $region25: #{custom-call.16} parent=19 // pred_check
            _
          $region26: #{custom-call.16} parent=19 // pred_check_branch
            %94 = sbr.rel (0) target = $region28
          $region27: #{custom-call.16} parent=19 // pred_region
            %s96 = ssub.s32 16, 1
            loop: start=0, step=1, limit=1
            $region29: #{custom-call.16} parent=27 // loop_pre_header
              _
            $region30: #{custom-call.16} parent=27 // loop_header
              %s98 = sphi 0, %s102
              %p99 = scmp.ge.s32.totalorder %s98, 1
              %s103 = sphi %s88, %s88
              %s104 = sphi %s84, %s84
            $region31: #{custom-call.16} parent=27 // loop_header_branch
              %101 = sbr.rel (%p99) target = $region35
            $region32: #{custom-call.16} parent=27 // loop_body
              %v105 = vld [vmem:[%s103] sm:%s96]
              %106 = vst [vmem:[%s104] sm:%s96] %v105
            $region33: #{custom-call.16} parent=27 // loop_footer
              %s102 = sadd.s32 1, %s98
            $region34: #{custom-call.16} parent=27 // loop_footer_branch
              %97 = sbr.rel target = $region30
            $region35: #{custom-call.16} parent=27 // loop_exit
              _
          $region28: #{custom-call.16} parent=19 // pred_fallthru
            _
        $region20: #{custom-call.16} parent=15 // pred_fallthru
          _
        %121 = vnop
      $region16: #{custom-call.16} parent=5 // pred_fallthru
        _
      %p122 = scmp.le.s32.totalorder 1, %s5
      %p123 = scmp.lt.s32.totalorder %s5, 9
      %p124 = pnand %p122, %p123
      %p125 = pneg %p124
      // Predicated region
      $region47: #{custom-call.16} parent=5 // pred_check
        _
      $region48: #{custom-call.16} parent=5 // pred_check_branch
        %127 = sbr.rel (%p124) target = $region50
      $region49: #{custom-call.16} parent=5 // pred_region
        #allocation5 [shape = 'f32[3,128]{1,0}', space=vmem, size = 0x1000, scoped, tag = 'scratch for Householder reflectors']
        %s128 = ssub.s32 %s5, 1
        %s129 = sand.u32 %s10, 1
        %s130 = sand.u32 %s10, 1
        %s131 = smul.addr %s130, 4
        %s132 = scalar_lea.vmem [#allocation1], %s131
        %s133 = sand.u32 %s10, 1
        %s134 = sand.u32 %s10, 1
        %s135 = smul.addr %s134, 4
        %s136 = scalar_lea.vmem [#allocation1], %s135
        %s137 = sand.u32 %s10, 1
        %s138 = sand.u32 %s10, 1
        %s139 = smul.addr %s138, 4
        %s140 = scalar_lea.vmem [#allocation3], %s139
        %p141 = pneg %p62
        %p142 = pneg %p59
        %s143 = sand.u32 %s49, 1
        %s144 = sand.u32 %s49, 1
        %s145 = smul.addr %s144, 8
        %s146 = scalar_lea.vmem [#allocation4], %s145
        %s148 = ssub.s32 16, 1
        %v149 = vld [vmem:[%s136] sm:%s148]
        %150 = vst [vmem:[#allocation0] sm:%s148] %v149
        %p151 = scmp.lt.s32.totalorder %s15, 0
        %s152 = ssub.s32 0, %s15
        %s153 = scalar_select %p151, %s152, %s15
        %s154 = sshrl.u32 %s153, 3
        %s155 = ssub.s32 0, %s154
        %s156 = scalar_select %p151, %s155, %s154
        %s157 = sand.u32 %s15, 7
        %s158 = scalar_lea.vmem %s146, %s157 [#allocation4]
        %v159 = vld [vmem:[#allocation0] sm:$0xff]
        %160 = vst [vmem:[#allocation2] sm:$0xff] %v159
        %161 = vst [vmem:[%s158] sm:$0x1] 0.0
        loop: start=0, step=1, limit=3
        $region51: #{custom-call.16} parent=49 // loop_pre_header
          _
        $region52: #{custom-call.16} parent=49 // loop_header
          %s163 = sphi 0, %s167
          %p164 = scmp.ge.s32.totalorder %s163, 3
        $region53: #{custom-call.16} parent=49 // loop_header_branch
          %166 = sbr.rel (%p164) target = $region57
        $region54: #{custom-call.16} parent=49 // loop_body
          %v168 = vld [vmem:[#allocation2] sm:$0xff]
          %v169 = vlaneseq
          %v170 = vshrl.u32 %v169, 7
          %v172 = vstv %s163
          %vm173 = vcmp.gt.s32.totalorder %v170, %v172
          %vm174 = vcmp.lt.s32.totalorder %v170, 3
          %vm175 = vmand %vm173, %vm174
          %v176 = vsel %vm175, %v168, 0.0
          %v177 = vmul.f32 %v176, %v176
          %v178 = vrot.slane %v177, 4
          %v179 = vadd.f32 %v177, %v178
          %v180 = vrot.slane %v179, 2
          %v181 = vadd.f32 %v179, %v180
          %v182 = vrot.slane %v181, 1
          %v183 = vadd.f32 %v181, %v182
          %v184 = vrsqrt.pop %v183
          %v185 = vmul.f32 %v184, %v183
          %v186 = vmul.f32 %v185, %v184
          %v187 = vmul.f32 0.5, %v186
          %v188 = vsub.f32 1.5, %v187
          %v189 = vmul.f32 %v184, %v188
          %v190 = vmul.f32 %v183, %v189
          %vm191 = vcmp.eq.f32.partialorder %v183, inf
          %v192 = vsel %vm191, %v183, %v190
          %vm193 = vcmp.eq.f32.partialorder %v183, 0.0
          %v194 = vand.u32 %v183, 2147483648
          %v195 = vsel %vm193, %v194, %v192
          %vm196 = vcmp.eq.f32.partialorder %v183, 0.0
          %s197 = sshrl.u32 %s163, 3
          %s198 = sand.u32 %s163, 7
          %s199 = smul.addr %s197, 8
          %s200 = sadd.s32 %s198, %s199
          %s201 = scalar_lea.vmem [#allocation2], %s200
          %v202 = vld [vmem:[%s201] ss:$0 sm:$0xff]
          %v203 = vand.u32 2147483647, %v202
          %v204 = vmax.f32 %v203, 0.0
          %v205 = vand.u32 2147483647, %v195
          %v206 = vmax.f32 %v204, %v205
          %v207 = vrcp.pop %v206
          %v208 = vmul.f32 %v206, %v207
          %v209 = vsub.f32 1.0, %v208
          %v210 = vmul.f32 %v207, %v209
          %v211 = vadd.f32 %v207, %v210
          %vm212 = vweird.f32 %v206
          %vm213 = vweird.f32 %v207
          %vm214 = vmor %vm212, %vm213
          %v215 = vsel %vm214, %v207, %v211
          %v216 = vand.u32 2147483647, %v206
          %vm217 = vcmp.eq.f32.partialorder %v216, 8.507059e+37
          %v218 = vand.u32 %v206, 2147483648
          %v219 = vor.u32 1.1754944e-38, %v218
          %v220 = vsel %vm217, %v219, %v215
          %v221 = vmul.f32 %v203, %v220
          %v222 = vmul.f32 %v221, %v221
          %v223 = vrcp.pop %v206
          %v224 = vmul.f32 %v206, %v223
          %v225 = vsub.f32 1.0, %v224
          %v226 = vmul.f32 %v223, %v225
          %v227 = vadd.f32 %v223, %v226
          %vm228 = vweird.f32 %v206
          %vm229 = vweird.f32 %v223
          %vm230 = vmor %vm228, %vm229
          %v231 = vsel %vm230, %v223, %v227
          %v232 = vand.u32 2147483647, %v206
          %vm233 = vcmp.eq.f32.partialorder %v232, 8.507059e+37
          %v234 = vand.u32 %v206, 2147483648
          %v235 = vor.u32 1.1754944e-38, %v234
          %v236 = vsel %vm233, %v235, %v231
          %v237 = vmul.f32 0.0, %v236
          %v238 = vmul.f32 %v237, %v237
          %v239 = vadd.f32 %v222, %v238
          %v240 = vrcp.pop %v206
          %v241 = vmul.f32 %v206, %v240
          %v242 = vsub.f32 1.0, %v241
          %v243 = vmul.f32 %v240, %v242
          %v244 = vadd.f32 %v240, %v243
          %vm245 = vweird.f32 %v206
          %vm246 = vweird.f32 %v240
          %vm247 = vmor %vm245, %vm246
          %v248 = vsel %vm247, %v240, %v244
          %v249 = vand.u32 2147483647, %v206
          %vm250 = vcmp.eq.f32.partialorder %v249, 8.507059e+37
          %v251 = vand.u32 %v206, 2147483648
          %v252 = vor.u32 1.1754944e-38, %v251
          %v253 = vsel %vm250, %v252, %v248
          %v254 = vmul.f32 %v205, %v253
          %v255 = vmul.f32 %v254, %v254
          %v256 = vadd.f32 %v239, %v255
          %vm257 = vcmp.eq.f32.partialorder %v206, 0.0
          %v258 = vrsqrt.pop %v256
          %v259 = vmul.f32 %v258, %v256
          %v260 = vmul.f32 %v259, %v258
          %v261 = vmul.f32 0.5, %v260
          %v262 = vsub.f32 1.5, %v261
          %v263 = vmul.f32 %v258, %v262
          %v264 = vmul.f32 %v256, %v263
          %vm265 = vcmp.eq.f32.partialorder %v256, inf
          %v266 = vsel %vm265, %v256, %v264
          %vm267 = vcmp.eq.f32.partialorder %v256, 0.0
          %v268 = vand.u32 %v256, 2147483648
          %v269 = vsel %vm267, %v268, %v266
          %v270 = vmul.f32 %v206, %v269
          %v271 = vsel %vm257, 0.0, %v270
          %vm272 = vcmp.lt.f32.partialorder %v202, 0.0
          %v273 = vxor.u32 %v271, 2147483648
          %v274 = vsel %vm272, %v271, %v273
          %v275 = vsub.f32 %v274, %v202
          %v276 = vrcp.pop %v274
          %v277 = vmul.f32 %v274, %v276
          %v278 = vsub.f32 1.0, %v277
          %v279 = vmul.f32 %v276, %v278
          %v280 = vadd.f32 %v276, %v279
          %vm281 = vweird.f32 %v274
          %vm282 = vweird.f32 %v276
          %vm283 = vmor %vm281, %vm282
          %v284 = vsel %vm283, %v276, %v280
          %v285 = vand.u32 2147483647, %v274
          %vm286 = vcmp.eq.f32.partialorder %v285, 8.507059e+37
          %v287 = vand.u32 %v274, 2147483648
          %v288 = vor.u32 1.1754944e-38, %v287
          %v289 = vsel %vm286, %v288, %v284
          %v290 = vmul.f32 %v275, %v289
          %v291 = vsel %vm196, %v202, %v274
          %v292 = vsel %vm196, 0.0, %v290
          %v293 = vsub.f32 %v202, %v291
          %s294 = smov [#allocation2]
          %v295 = vlaneseq
          %v296 = vshrl.u32 %v295, 7
          %v297 = vmov %v296
          %v298 = vld [vmem:[%s294] sm:$0xff]
          %v300 = vstv %s163
          %vm301 = vcmp.gt.s32.totalorder %v297, %v300
          %vm302 = vcmp.lt.s32.totalorder %v297, 3
          %vm303 = vmand %vm301, %vm302
          %v304 = vsel %vm303, %v298, 0.0
          %v305 = vrcp.pop %v293
          %v306 = vmul.f32 %v293, %v305
          %v307 = vsub.f32 1.0, %v306
          %v308 = vmul.f32 %v305, %v307
          %v309 = vadd.f32 %v305, %v308
          %vm310 = vweird.f32 %v293
          %vm311 = vweird.f32 %v305
          %vm312 = vmor %vm310, %vm311
          %v313 = vsel %vm312, %v305, %v309
          %v314 = vand.u32 2147483647, %v293
          %vm315 = vcmp.eq.f32.partialorder %v314, 8.507059e+37
          %v316 = vand.u32 %v293, 2147483648
          %v317 = vor.u32 1.1754944e-38, %v316
          %v318 = vsel %vm315, %v317, %v313
          %v319 = vmul.f32 %v304, %v318
          %v320 = vsel %vm196, 0.0, %v319
          %v321 = vstv %s163
          %v322 = vlaneseq
          %v323 = vand.u32 %v322, 127
          %vm324 = vcmp.eq.s32.totalorder %v323, %v321
          %v325 = vsel %vm324, %v320, 0.0
          %326 = vadd.xlane.f32.xlu0 %v325
          %v327 = vpop.xlane.xlu0 %326
          %328 = vst [vmem:[#allocation5] sm:$0xff] %v327
          %s329 = scalar_lea.vmem [#allocation5], %s163
          %330 = vst [vmem:[%s329] sm:$0x1] 1.0
          %v331 = vstv %s163
          %v332 = vlaneseq
          %v333 = vand.u32 %v332, 127
          %vm334 = vcmp.eq.s32.totalorder %v333, %v331
          %v335 = vsel %vm334, %v292, 0.0
          %336 = vadd.xlane.f32.xlu0 %v335
          %v337 = vpop.xlane.xlu0 %336
          %v338 = vstv %s163
          %v339 = vlaneseq
          %v340 = vand.u32 %v339, 127
          %vm341 = vcmp.eq.s32.totalorder %v340, %v338
          %v342 = vld [vmem:[%s158] ss:$0 sm:$0xff]
          %v343 = vsel %vm341, %v337, %v342
          %344 = vst [vmem:[%s158] sm:$0x1] %v343
          %s345 = smov [#allocation2]
          %s346 = smov [#allocation5]
          %v347 = vlaneseq
          %v348 = vshrl.u32 %v347, 7
          %v349 = vmov %v348
          %v351 = vld [vmem:[%s346] sm:$0xff]
          %v352 = vld [vmem:[%s345] sm:$0xff]
          %v353 = vmul.f32 %v351, %v352
          %vm354 = vcmp.lt.s32.totalorder %v349, 3
          %v355 = vsel %vm354, %v353, 0.0
          %v356 = vrot.slane %v355, 4
          %v357 = vadd.f32 %v355, %v356
          %v358 = vrot.slane %v357, 2
          %v359 = vadd.f32 %v357, %v358
          %v360 = vrot.slane %v359, 1
          %v361 = vadd.f32 %v359, %v360
          %s362 = smov %s345
          %s363 = smov %s346
          %v364 = vlaneseq
          %v365 = vshrl.u32 %v364, 7
          %v366 = vmov %v365
          %v367 = vmul.f32 %v361, %v337
          %v369 = vlaneseq
          %v370 = vand.u32 %v369, 127
          %v371 = vld [vmem:[%s363] sm:$0xff]
          %v372 = vmul.f32 %v371, %v367
          %v373 = vld [vmem:[%s362] sm:$0xff]
          %v374 = vstv %s163
          %vm375 = vcmp.gt.s32.totalorder %v370, %v374
          %v376 = vsub.f32 %v373, %v372
          %v377 = vsel %vm375, %v376, %v373
          %v378 = vstv %s163
          %v379 = vlaneseq
          %v380 = vand.u32 %v379, 127
          %vm381 = vcmp.eq.s32.totalorder %v380, %v378
          %v382 = vstv %s163
          %vm383 = vcmp.ge.s32.totalorder %v366, %v382
          %vm384 = vmand %vm381, %vm383
          %v385 = vsel %vm384, %v371, %v377
          %386 = vst [vmem:[%s362] sm:$0xff] %v385
          %s387 = scalar_lea.vmem %s362, %s163
          %v388 = vld [vmem:[%s387] ss:$0 sm:$0xff]
          %v389 = vstv %s163
          %v390 = vlaneseq
          %v391 = vand.u32 %v390, 127
          %vm392 = vcmp.eq.s32.totalorder %v391, %v389
          %v393 = vsel %vm392, %v291, %v388
          %394 = vst [vmem:[%s387] sm:$0x1] %v393
        $region55: #{custom-call.16} parent=49 // loop_footer
          %s167 = sadd.s32 1, %s163
        $region56: #{custom-call.16} parent=49 // loop_footer_branch
          %162 = sbr.rel target = $region52
        $region57: #{custom-call.16} parent=49 // loop_exit
          _
        %s396 = ssub.s32 16, 1
        %v397 = vld [vmem:[#allocation2] sm:%s396]
        %s399 = ssub.s32 16, 1
        %400 = vst [vmem:[%s140] sm:%s399] %v397
        %s401 = sand.u32 %s10, 1
        %s402 = sand.u32 %s10, 1
        %s403 = smul.addr %s402, 4
        %s404 = scalar_lea.vmem [#allocation3], %s403
        %s405 = sand.u32 %s49, 1
        %s406 = sand.u32 %s49, 1
        %s407 = smul.addr %s406, 8
        %s408 = scalar_lea.vmem [#allocation4], %s407
        %s409 = sadd.s32 %s17, %s16
        %s410 = sadd.s32 %s409, %s15
        %s411 = smul.addr %s410, 4
        %s412 = scalar_lea.vmem %s1, %s411
        // Predicated region
        $region58: #{custom-call.16} parent=49 // pred_check
          _
        $region59: #{custom-call.16} parent=49 // pred_check_branch
          %414 = sbr.rel (0) target = $region61
        $region60: #{custom-call.16} parent=49 // pred_region
          // Predicated region
          $region62: #{custom-call.16} parent=60 // pred_check
            _
          $region63: #{custom-call.16} parent=60 // pred_check_branch
            %416 = sbr.rel target = $region65
          $region64: #{custom-call.16} parent=60 // pred_region
            // Predicated region
            $region77: #{custom-call.16} parent=64 // pred_check
              _
            $region78: #{custom-call.16} parent=64 // pred_check_branch
              %432 = sbr.rel (0) target = $region80
            $region79: #{custom-call.16} parent=64 // pred_region
              %s434 = ssub.s32 16, 1
              loop: start=0, step=1, limit=1
              $region81: #{custom-call.16} parent=79 // loop_pre_header
                _
              $region82: #{custom-call.16} parent=79 // loop_header
                %s436 = sphi 0, %s440
                %p437 = scmp.ge.s32.totalorder %s436, 1
                %s441 = sphi %s404, %s404
                %s442 = sphi %s412, %s412
              $region83: #{custom-call.16} parent=79 // loop_header_branch
                %439 = sbr.rel (%p437) target = $region87
              $region84: #{custom-call.16} parent=79 // loop_body
                %v443 = vld [vmem:[%s441] sm:%s434]
                %444 = vst [vmem:[%s442] sm:%s434] %v443
              $region85: #{custom-call.16} parent=79 // loop_footer
                %s440 = sadd.s32 1, %s436
              $region86: #{custom-call.16} parent=79 // loop_footer_branch
                %435 = sbr.rel target = $region82
              $region87: #{custom-call.16} parent=79 // loop_exit
                _
            $region80: #{custom-call.16} parent=64 // pred_fallthru
              _
          $region65: #{custom-call.16} parent=60 // pred_fallthru
            _
          // Predicated region
          $region66: #{custom-call.16} parent=60 // pred_check
            _
          $region67: #{custom-call.16} parent=60 // pred_check_branch
            %418 = sbr.rel (0) target = $region69
          $region68: #{custom-call.16} parent=60 // pred_region
            %s420 = ssub.s32 16, 1
            loop: start=0, step=1, limit=1
            $region70: #{custom-call.16} parent=68 // loop_pre_header
              _
            $region71: #{custom-call.16} parent=68 // loop_header
              %s422 = sphi 0, %s426
              %p423 = scmp.ge.s32.totalorder %s422, 1
              %s427 = sphi %s404, %s404
              %s428 = sphi %s412, %s412
            $region72: #{custom-call.16} parent=68 // loop_header_branch
              %425 = sbr.rel (%p423) target = $region76
            $region73: #{custom-call.16} parent=68 // loop_body
              %v429 = vld [vmem:[%s427] sm:%s420]
              %430 = vst [vmem:[%s428] sm:%s420] %v429
            $region74: #{custom-call.16} parent=68 // loop_footer
              %s426 = sadd.s32 1, %s422
            $region75: #{custom-call.16} parent=68 // loop_footer_branch
              %421 = sbr.rel target = $region71
            $region76: #{custom-call.16} parent=68 // loop_exit
              _
          $region69: #{custom-call.16} parent=60 // pred_fallthru
            _
        $region61: #{custom-call.16} parent=49 // pred_fallthru
          _
        %445 = vnop
        // Predicated region
        $region88: #{custom-call.16} parent=49 // pred_check
          %p446 = pneg %p59
        $region89: #{custom-call.16} parent=49 // pred_check_branch
          %448 = sbr.rel (%p446) target = $region91
        $region90: #{custom-call.16} parent=49 // pred_region
          %p449 = scmp.lt.s32.totalorder %s15, 0
          %s450 = ssub.s32 0, %s15
          %s451 = scalar_select %p449, %s450, %s15
          %s452 = sshrl.u32 %s451, 3
          %s453 = ssub.s32 0, %s452
          %s454 = scalar_select %p449, %s453, %s452
          %s455 = smul.addr %s454, 8
          %s456 = scalar_lea.vmem %s2, %s455
          // Predicated region
          $region92: #{custom-call.16} parent=90 // pred_check
            _
          $region93: #{custom-call.16} parent=90 // pred_check_branch
            %458 = sbr.rel (0) target = $region95
          $region94: #{custom-call.16} parent=90 // pred_region
            // Predicated region
            $region96: #{custom-call.16} parent=94 // pred_check
              _
            $region97: #{custom-call.16} parent=94 // pred_check_branch
              %460 = sbr.rel (0) target = $region99
            $region98: #{custom-call.16} parent=94 // pred_region
              // Predicated region
              $region111: #{custom-call.16} parent=98 // pred_check
                _
              $region112: #{custom-call.16} parent=98 // pred_check_branch
                %476 = sbr.rel (0) target = $region114
              $region113: #{custom-call.16} parent=98 // pred_region
                loop: start=0, step=1, limit=1
                $region115: #{custom-call.16} parent=113 // loop_pre_header
                  _
                $region116: #{custom-call.16} parent=113 // loop_header
                  %s478 = sphi 0, %s482
                  %p479 = scmp.ge.s32.totalorder %s478, 1
                  %s483 = sphi %s408, %s408
                  %s484 = sphi %s456, %s456
                $region117: #{custom-call.16} parent=113 // loop_header_branch
                  %481 = sbr.rel (%p479) target = $region121
                $region118: #{custom-call.16} parent=113 // loop_body
                  %v485 = vld [vmem:[%s483] sm:$0xff]
                  %486 = vst [vmem:[%s484] sm:$0xff] %v485
                $region119: #{custom-call.16} parent=113 // loop_footer
                  %s482 = sadd.s32 1, %s478
                $region120: #{custom-call.16} parent=113 // loop_footer_branch
                  %477 = sbr.rel target = $region116
                $region121: #{custom-call.16} parent=113 // loop_exit
                  _
              $region114: #{custom-call.16} parent=98 // pred_fallthru
                _
              // Predicated region
              $region122: #{custom-call.16} parent=98 // pred_check
                _
              $region123: #{custom-call.16} parent=98 // pred_check_branch
                %488 = sbr.rel target = $region125
              $region124: #{custom-call.16} parent=98 // pred_region
                _
              $region125: #{custom-call.16} parent=98 // pred_fallthru
                _
            $region99: #{custom-call.16} parent=94 // pred_fallthru
              _
            // Predicated region
            $region100: #{custom-call.16} parent=94 // pred_check
              _
            $region101: #{custom-call.16} parent=94 // pred_check_branch
              %462 = sbr.rel target = $region103
            $region102: #{custom-call.16} parent=94 // pred_region
              %s464 = ssub.s32 256, 1
              loop: start=0, step=1, limit=1
              $region104: #{custom-call.16} parent=102 // loop_pre_header
                _
              $region105: #{custom-call.16} parent=102 // loop_header
                %s466 = sphi 0, %s470
                %p467 = scmp.ge.s32.totalorder %s466, 1
                %s471 = sphi %s408, %s408
                %s472 = sphi %s456, %s456
              $region106: #{custom-call.16} parent=102 // loop_header_branch
                %469 = sbr.rel (%p467) target = $region110
              $region107: #{custom-call.16} parent=102 // loop_body
                %v473 = vld [vmem:[%s471] sm:%s464]
                %474 = vst [vmem:[%s472] sm:%s464] %v473
              $region108: #{custom-call.16} parent=102 // loop_footer
                %s470 = sadd.s32 1, %s466
              $region109: #{custom-call.16} parent=102 // loop_footer_branch
                %465 = sbr.rel target = $region105
              $region110: #{custom-call.16} parent=102 // loop_exit
                _
            $region103: #{custom-call.16} parent=94 // pred_fallthru
              _
          $region95: #{custom-call.16} parent=90 // pred_fallthru
            _
          %489 = vnop
        $region91: #{custom-call.16} parent=49 // pred_fallthru
          _
      $region50: #{custom-call.16} parent=5 // pred_fallthru
        _
      %p490 = scmp.le.s32.totalorder 2, %s5
      // Predicated region
      $region126: #{custom-call.16} parent=5 // pred_check
        %p491 = pneg %p490
      $region127: #{custom-call.16} parent=5 // pred_check_branch
        %493 = sbr.rel (%p491) target = $region129
      $region128: #{custom-call.16} parent=5 // pred_region
        %s494 = ssub.s32 %s5, 2
        %s495 = sand.u32 %s11, 1
        %s496 = sand.u32 %s11, 1
        %s497 = smul.addr %s496, 4
        %s498 = scalar_lea.vmem [#allocation3], %s497
        // Predicated region
        $region130: #{custom-call.16} parent=128 // pred_check
          %p499 = pneg %p65
        $region131: #{custom-call.16} parent=128 // pred_check_branch
          %501 = sbr.rel (%p499) target = $region133
        $region132: #{custom-call.16} parent=128 // pred_region
          %s502 = sand.u32 %s50, 1
          %s503 = sand.u32 %s50, 1
          %s504 = smul.addr %s503, 8
          %s505 = scalar_lea.vmem [#allocation4], %s504
        $region133: #{custom-call.16} parent=128 // pred_fallthru
          _
      $region129: #{custom-call.16} parent=5 // pred_fallthru
        _
    $region6: #{custom-call.16} parent=1 // loop_footer
      %s9 = sadd.s32 1, %s5
    $region7: #{custom-call.16} parent=1 // loop_footer_branch
      %4 = sbr.rel target = $region3
    $region8: #{custom-call.16} parent=1 // loop_exit
      _

// kernel: sub.18
$region0: #{sub.18}
  #allocation0 [shape = 's32[1]{0}', space=sflag, size = 0x4, scoped, tag = 'scoped memory for sub.18']
  %s0 = inlined_call_operand.vmem [shape: f32[8,3], index: 0, kind: input, shape index: {}]
  %s1 = inlined_call_operand.vmem [shape: f32[8,3], index: 1, kind: input, shape index: {}]
  %s2 = inlined_call_operand.vmem [shape: f32[8,3], index: 2, kind: output, shape index: {}]
  %v3 = vld [vmem:[%s0] sm:$0xff]
  %v4 = vld [vmem:[%s1] sm:$0xff]
  %5 = xla_tuple %v3, %v4
  %6 = xla_tuple %5
  %v7 = vsub.f32 %v3, %v4
  %8 = xla_tuple %v7
  %9 = vst [vmem:[%s2] sm:$0xff] %v7

</llo_original>
